<compile_context>
chip_gen: v5e
topology: v5e:2x2
jax: 0.10.0
libtpu: 0.0.40
codegen_flags: <defaults>
</compile_context>

<pallas_src>
import functools

import jax
import jax.numpy as jnp
from jax.experimental import pallas as pl
from jax.experimental.pallas import tpu as pltpu

_BN_EPS = 1e-5
_BN_SCALE = 1.0 / (1.0 + _BN_EPS) ** 0.5  # eval-mode BN with default stats


# ------------------------------ helpers -------------------------------------

def _round_up(x, m):
    return -(-x // m) * m


def _row_tile(rows, cap=512):
    r8 = _round_up(rows, 8)
    return r8 if r8 <= cap else cap


def _im2col_3x3(x, dilation, stride):
    """x: (N,H,W,C) -> (N, Ho*Wo, 9*C), tap-major / channel-minor ordering."""
    n, h, w, c = x.shape
    pad = dilation
    xp = jnp.pad(x, ((0, 0), (pad, pad), (pad, pad), (0, 0)))
    ho = (h - 1) // stride + 1
    wo = (w - 1) // stride + 1
    taps = []
    for kh in range(3):
        for kw in range(3):
            r0 = kh * dilation
            c0 = kw * dilation
            taps.append(xp[:, r0:r0 + (ho - 1) * stride + 1:stride,
                              c0:c0 + (wo - 1) * stride + 1:stride, :])
    cols = jnp.stack(taps, axis=3)                      # (N, Ho, Wo, 9, C)
    return cols.reshape(n, ho * wo, 9 * c), ho, wo


def _expand_grouped(w, C, G, k):
    """Grouped conv weight (G,k,k,cin_g,cout_g) -> dense block-diag (k*k*C, C)."""
    cg = C // G
    dense = jnp.zeros((k, k, C, C), jnp.float32)
    for g in range(G):
        dense = dense.at[:, :, g * cg:(g + 1) * cg, g * cg:(g + 1) * cg].set(w[g])
    return dense.reshape(k * k * C, C)


# ------------------------------ kernels -------------------------------------

def _conv1_kernel(x_ref, w_ref, b_ref, o_ref):
    y = jnp.dot(x_ref[0], w_ref[...], preferred_element_type=jnp.float32)
    y = y + b_ref[...]
    o_ref[0] = jnp.maximum(y, 0.0).astype(o_ref.dtype)


def _sk_branch_kernel(c0_ref, c1_ref, w0_ref, w1_ref, b0_ref, b1_ref,
                      f0_ref, f1_ref, s_ref, *, rows, tr, inv_rows):
    i = pl.program_id(1)
    y0 = jnp.dot(c0_ref[0], w0_ref[...], preferred_element_type=jnp.float32) + b0_ref[...]
    y0 = jnp.maximum(y0, 0.0)
    y1 = jnp.dot(c1_ref[0], w1_ref[...], preferred_element_type=jnp.float32) + b1_ref[...]
    y1 = jnp.maximum(y1, 0.0)
    f0_ref[0] = y0.astype(f0_ref.dtype)
    f1_ref[0] = y1.astype(f1_ref.dtype)

    # global average pool of fea_U = y0 + y1, accumulated in the revisited
    # (1,1,C) output block across the row-tile axis; padded rows masked out.
    @pl.when(i == 0)
    def _():
        s_ref[...] = jnp.zeros_like(s_ref)

    row_idx = i * tr + jax.lax.broadcasted_iota(jnp.int32, (tr, 1), 0)
    u = jnp.where(row_idx < rows, y0 + y1, 0.0)
    s_ref[...] += jnp.sum(u, axis=0).reshape(1, 1, -1)

    @pl.when(i == pl.num_programs(1) - 1)
    def _():
        s_ref[...] = s_ref[...] * inv_rows


def _attn_kernel(s_ref, wfc_ref, bfc_ref, w0_ref, b0_ref, w1_ref, b1_ref,
                 a0_ref, a1_ref):
    z = jnp.dot(s_ref[...], wfc_ref[...], preferred_element_type=jnp.float32) + bfc_ref[...]
    v0 = jnp.dot(z, w0_ref[...], preferred_element_type=jnp.float32) + b0_ref[...]
    v1 = jnp.dot(z, w1_ref[...], preferred_element_type=jnp.float32) + b1_ref[...]
    m = jnp.maximum(v0, v1)
    e0 = jnp.exp(v0 - m)
    e1 = jnp.exp(v1 - m)
    inv = pl.reciprocal(e0 + e1, approx=True)
    a0_ref[...] = e0 * inv
    a1_ref[...] = e1 * inv


def _conv3_id_kernel(f0_ref, f1_ref, a0_ref, a1_ref, x_ref, w3_ref, b3_ref, o_ref):
    fv = f0_ref[0].astype(jnp.float32) * a0_ref[0] + f1_ref[0].astype(jnp.float32) * a1_ref[0]
    y = jnp.dot(fv.astype(w3_ref.dtype), w3_ref[...],
                preferred_element_type=jnp.float32) + b3_ref[...]
    y = y + x_ref[0].astype(jnp.float32)
    o_ref[0] = jnp.maximum(y, 0.0)


def _conv3_proj_kernel(f0_ref, f1_ref, a0_ref, a1_ref, x_ref, w3_ref, b3_ref,
                       ws_ref, bs_ref, o_ref):
    fv = f0_ref[0].astype(jnp.float32) * a0_ref[0] + f1_ref[0].astype(jnp.float32) * a1_ref[0]
    y = jnp.dot(fv.astype(w3_ref.dtype), w3_ref[...],
                preferred_element_type=jnp.float32) + b3_ref[...]
    res = jnp.dot(x_ref[0], ws_ref[...], preferred_element_type=jnp.float32) + bs_ref[...]
    o_ref[0] = jnp.maximum(y + res, 0.0)


# --------------------------- kernel wrappers ---------------------------------

def conv1_call(x, w, b):
    """x: (N, HW, Cin) bf16 -> relu(x @ w + b) : (N, HW, Cmid) bf16."""
    n, rows, cin = x.shape
    cmid = w.shape[1]
    tr = _row_tile(rows)
    rp = _round_up(rows, tr)
    if rp != rows:
        x = jnp.pad(x, ((0, 0), (0, rp - rows), (0, 0)))
    cost = pl.CostEstimate(flops=2 * n * rp * cin * cmid, transcendentals=0,
                           bytes_accessed=int(n * rp * cin * 2 + cin * cmid * 2 +
                                              n * rp * cmid * 2))
    out = pl.pallas_call(
        _conv1_kernel,
        out_shape=jax.ShapeDtypeStruct((n, rp, cmid), jnp.bfloat16),
        grid=(n, rp // tr),
        in_specs=[pl.BlockSpec((1, tr, cin), lambda b_, i: (b_, i, 0)),
                  pl.BlockSpec((cin, cmid), lambda b_, i: (0, 0)),
                  pl.BlockSpec((1, cmid), lambda b_, i: (0, 0))],
        out_specs=pl.BlockSpec((1, tr, cmid), lambda b_, i: (b_, i, 0)),
        compiler_params=pltpu.CompilerParams(
            dimension_semantics=("parallel", "parallel")),
        cost_estimate=cost,
    )(x, w, b.reshape(1, cmid))
    return out[:, :rows, :]


def sk_branches_call(cols0, cols1, w0, w1, b0, b1):
    """Both SK branch convs + fea_U global average pool in one kernel."""
    n, rows, k0 = cols0.shape
    k1 = cols1.shape[2]
    c = w0.shape[1]
    tr = _row_tile(rows)
    rp = _round_up(rows, tr)
    if rp != rows:
        pad = ((0, 0), (0, rp - rows), (0, 0))
        cols0 = jnp.pad(cols0, pad)
        cols1 = jnp.pad(cols1, pad)
    kernel = functools.partial(_sk_branch_kernel, rows=rows, tr=tr, inv_rows=1.0 / rows)
    cost = pl.CostEstimate(
        flops=2 * n * rp * (k0 + k1) * c, transcendentals=0,
        bytes_accessed=int(n * rp * (k0 + k1) * 2 + (k0 + k1) * c * 2 +
                           2 * n * rp * c * 2 + n * c * 4))
    f0, f1, s = pl.pallas_call(
        kernel,
        out_shape=(jax.ShapeDtypeStruct((n, rp, c), jnp.bfloat16),
                   jax.ShapeDtypeStruct((n, rp, c), jnp.bfloat16),
                   jax.ShapeDtypeStruct((n, 1, c), jnp.float32)),
        grid=(n, rp // tr),
        in_specs=[pl.BlockSpec((1, tr, k0), lambda b_, i: (b_, i, 0)),
                  pl.BlockSpec((1, tr, k1), lambda b_, i: (b_, i, 0)),
                  pl.BlockSpec((k0, c), lambda b_, i: (0, 0)),
                  pl.BlockSpec((k1, c), lambda b_, i: (0, 0)),
                  pl.BlockSpec((1, c), lambda b_, i: (0, 0)),
                  pl.BlockSpec((1, c), lambda b_, i: (0, 0))],
        out_specs=(pl.BlockSpec((1, tr, c), lambda b_, i: (b_, i, 0)),
                   pl.BlockSpec((1, tr, c), lambda b_, i: (b_, i, 0)),
                   pl.BlockSpec((1, 1, c), lambda b_, i: (b_, 0, 0))),
        compiler_params=pltpu.CompilerParams(
            dimension_semantics=("parallel", "arbitrary")),
        cost_estimate=cost,
    )(cols0, cols1, w0, w1, b0.reshape(1, c), b1.reshape(1, c))
    return f0[:, :rows, :], f1[:, :rows, :], s.reshape(n, c)


def attention_call(s, wfc, bfc, w0, b0, w1, b1):
    n, c = s.shape
    d = wfc.shape[1]
    a0, a1 = pl.pallas_call(
        _attn_kernel,
        out_shape=(jax.ShapeDtypeStruct((n, c), jnp.float32),
                   jax.ShapeDtypeStruct((n, c), jnp.float32)),
        grid=(1,),
        in_specs=[pl.BlockSpec((n, c), lambda i: (0, 0)),
                  pl.BlockSpec((c, d), lambda i: (0, 0)),
                  pl.BlockSpec((1, d), lambda i: (0, 0)),
                  pl.BlockSpec((d, c), lambda i: (0, 0)),
                  pl.BlockSpec((1, c), lambda i: (0, 0)),
                  pl.BlockSpec((d, c), lambda i: (0, 0)),
                  pl.BlockSpec((1, c), lambda i: (0, 0))],
        out_specs=(pl.BlockSpec((n, c), lambda i: (0, 0)),
                   pl.BlockSpec((n, c), lambda i: (0, 0))),
    )(s, wfc, bfc.reshape(1, d), w0, b0.reshape(1, c), w1, b1.reshape(1, c))
    return a0, a1


def conv3_call(f0, f1, a0, a1, x_res, w3, b3, ws=None, bs=None):
    """fea_v = a0*f0 + a1*f1; out = relu(fea_v @ w3 + b3 + shortcut(x))."""
    n, rows, cmid = f0.shape
    cin = x_res.shape[2]
    cout = w3.shape[1]
    tr = _row_tile(rows)
    rp = _round_up(rows, tr)
    if rp != rows:
        pad = ((0, 0), (0, rp - rows), (0, 0))
        f0 = jnp.pad(f0, pad)
        f1 = jnp.pad(f1, pad)
        x_res = jnp.pad(x_res, pad)
    row_mid = pl.BlockSpec((1, tr, cmid), lambda b_, i: (b_, i, 0))
    a_spec = pl.BlockSpec((1, 1, cmid), lambda b_, i: (b_, 0, 0))
    b_spec = pl.BlockSpec((1, cout), lambda b_, i: (0, 0))
    in_specs = [row_mid, row_mid, a_spec, a_spec,
                pl.BlockSpec((1, tr, cin), lambda b_, i: (b_, i, 0)),
                pl.BlockSpec((cmid, cout), lambda b_, i: (0, 0)),
                b_spec]
    args = [f0, f1, a0.reshape(n, 1, cmid), a1.reshape(n, 1, cmid),
            x_res, w3, b3.reshape(1, cout)]
    flops = 2 * n * rp * cmid * cout
    if ws is None:
        kernel = _conv3_id_kernel
    else:
        kernel = _conv3_proj_kernel
        in_specs += [pl.BlockSpec((cin, cout), lambda b_, i: (0, 0)), b_spec]
        args += [ws, bs.reshape(1, cout)]
        flops += 2 * n * rp * cin * cout
    cost = pl.CostEstimate(flops=flops, transcendentals=0,
                           bytes_accessed=int(2 * n * rp * cmid * 2 + n * rp * cin * 2 +
                                              cmid * cout * 2 + n * rp * cout * 4))
    out = pl.pallas_call(
        kernel,
        out_shape=jax.ShapeDtypeStruct((n, rp, cout), jnp.float32),
        grid=(n, rp // tr),
        in_specs=in_specs,
        out_specs=pl.BlockSpec((1, tr, cout), lambda b_, i: (b_, i, 0)),
        compiler_params=pltpu.CompilerParams(
            dimension_semantics=("parallel", "parallel")),
        cost_estimate=cost,
    )(*args)
    return out[:, :rows, :]


# ------------------------------ parameters ----------------------------------

def make_skunit_params(key, in_features, mid_features, out_features,
                       M=2, G=32, r=16, stride=1, L=32, use_1x1=False):
    assert M == 2, "TODO(synk): only M=2 branches implemented (module default)."
    assert mid_features % G == 0
    d = max(int(mid_features / r), L)
    cg = mid_features // G
    s = _BN_SCALE
    keys = jax.random.split(key, 12)

    def u(k, shape, fan_in):
        bound = 1.0 / (fan_in ** 0.5)
        return jax.random.uniform(k, shape, jnp.float32, -bound, bound)

    p = {"stride": stride, "use_1x1": use_1x1}

    # conv1: 1x1 (Cin->Cmid), bias=False, BN folded (scale into weights)
    p["w1"] = (u(keys[0], (in_features, mid_features), in_features) * s).astype(jnp.bfloat16)
    p["b1"] = jnp.zeros((mid_features,), jnp.float32)

    # SK branch convs: grouped, bias=True, BN folded, stored as block-diag dense
    def branch(kw, kb, ksize):
        fan_in = cg * ksize * ksize
        wg = u(kw, (G, ksize, ksize, cg, cg), fan_in)
        bb = u(kb, (mid_features,), fan_in)
        dense = _expand_grouped(wg, mid_features, G, ksize) * s
        return dense.astype(jnp.bfloat16), bb * s

    k0 = 1 if use_1x1 else 3
    p["wb0"], p["bb0"] = branch(keys[1], keys[2], k0)
    p["wb1"], p["bb1"] = branch(keys[3], keys[4], 3)

    # fc: Conv1d(Cmid->d, bias=True) + BN1d folded (no ReLU in the reference)
    p["wfc"] = u(keys[5], (mid_features, d), mid_features) * s
    p["bfc"] = u(keys[6], (d,), mid_features) * s
    # fcs: Conv1d(d->Cmid, bias=True) x2
    p["wfc0"] = u(keys[7], (d, mid_features), d)
    p["bfc0"] = u(keys[8], (mid_features,), d)
    p["wfc1"] = u(keys[9], (d, mid_features), d)
    p["bfc1"] = u(keys[10], (mid_features,), d)

    # conv3 + shortcut, bias=False, BN folded
    k3, ks = jax.random.split(keys[11])
    p["w3"] = (u(k3, (mid_features, out_features), mid_features) * s).astype(jnp.bfloat16)
    p["b3"] = jnp.zeros((out_features,), jnp.float32)
    if in_features == out_features:
        assert stride == 1, "identity shortcut requires stride 1"
        p["ws"], p["bs"] = None, None
    else:
        p["ws"] = (u(ks, (in_features, out_features), in_features) * s).astype(jnp.bfloat16)
        p["bs"] = jnp.zeros((out_features,), jnp.float32)
    return p


# ------------------------------ forward pass --------------------------------

def skunit_forward(x, p):
    """x: (N, H, W, Cin) float32, NHWC."""
    n, h, w, cin = x.shape
    stride = p["stride"]
    xb = x.astype(jnp.bfloat16)

    # conv1: 1x1 + BN + ReLU
    fea = conv1_call(xb.reshape(n, h * w, cin), p["w1"], p["b1"])
    cmid = fea.shape[2]
    fea = fea.reshape(n, h, w, cmid)

    # SK branches: grouped dilated 3x3 (or 1x1) convs via im2col + block-diag matmul
    if p["use_1x1"]:
        xs = fea[:, ::stride, ::stride, :]
        ho, wo = xs.shape[1], xs.shape[2]
        cols0 = xs.reshape(n, ho * wo, cmid)
    else:
        cols0, ho, wo = _im2col_3x3(fea, dilation=1, stride=stride)
    cols1, _, _ = _im2col_3x3(fea, dilation=2, stride=stride)
    rows = ho * wo

    f0, f1, pooled = sk_branches_call(cols0, cols1, p["wb0"], p["wb1"],
                                      p["bb0"], p["bb1"])

    # attention over the two branches
    a0, a1 = attention_call(pooled, p["wfc"], p["bfc"],
                            p["wfc0"], p["bfc0"], p["wfc1"], p["bfc1"])

    # conv3 + branch selection + shortcut + ReLU (fused)
    x_res = xb[:, ::stride, ::stride, :].reshape(n, rows, cin)
    if p["ws"] is None:
        out = conv3_call(f0, f1, a0, a1, x_res, p["w3"], p["b3"])
    else:
        out = conv3_call(f0, f1, a0, a1, x_res, p["w3"], p["b3"], p["ws"], p["bs"])
    cout = p["w3"].shape[1]
    return out.reshape(n, ho, wo, cout)


if __name__ == "__main__":
    key = jax.random.PRNGKey(0)
    kx, kp = jax.random.split(key)
    N, H, W = 2, 16, 16
    IN_F, MID_F, OUT_F = 64, 128, 256   # channels >= G=32 and lane-dense (>=128) outputs
    x = jax.random.normal(kx, (N, H, W, IN_F), jnp.float32)   # NHWC (PyTorch ref is NCHW)
    params = make_skunit_params(kp, IN_F, MID_F, OUT_F,
                                M=2, G=32, r=16, stride=1, L=32, use_1x1=False)
    fwd = jax.jit(lambda inp: skunit_forward(inp, params))
    out = fwd(x)
    jax.block_until_ready(out)
    assert out.shape == (N, H, W, OUT_F), out.shape
    print("KERNEL_OK")
</pallas_src>

<mosaic_0001>
module attributes {stable_mosaic.version = 11 : i64} {
  func.func @_conv1_kernel(%arg0: i32, %arg1: i32, %arg2: memref<1x256x64xbf16, #tpu.memory_space<vmem>>, %arg3: memref<64x128xbf16, #tpu.memory_space<vmem>>, %arg4: memref<1x128xf32, #tpu.memory_space<vmem>>, %arg5: memref<1x256x128xbf16, #tpu.memory_space<vmem>>) attributes {dimension_semantics = [#tpu.dimension_semantics<parallel>, #tpu.dimension_semantics<parallel>], iteration_bounds = array<i64: 2, 1>, scalar_prefetch = 0 : i64, scratch_operands = 0 : i64, tpu.core_type = #tpu.core_type<tc>, window_params = [{transform_indices = @transform_0, window_bounds = array<i64: 1, 256, 64>}, {pipeline_mode = #tpu.pipeline_mode<synchronous>, transform_indices = @transform_1, window_bounds = array<i64: 64, 128>}, {pipeline_mode = #tpu.pipeline_mode<synchronous>, transform_indices = @transform_2, window_bounds = array<i64: 1, 128>}, {transform_indices = @transform_3, window_bounds = array<i64: 1, 256, 128>}]} {
    %c0 = arith.constant 0 : index
    %c0_0 = arith.constant 0 : index
    %c0_1 = arith.constant 0 : index
    %0 = vector.load %arg2[%c0, %c0_0, %c0_1] : memref<1x256x64xbf16, #tpu.memory_space<vmem>>, vector<1x256x64xbf16>
    %1 = vector.shape_cast %0 : vector<1x256x64xbf16> to vector<256x64xbf16>
    %c0_2 = arith.constant 0 : index
    %c0_3 = arith.constant 0 : index
    %2 = vector.load %arg3[%c0_2, %c0_3] : memref<64x128xbf16, #tpu.memory_space<vmem>>, vector<64x128xbf16>
    %cst = arith.constant dense<0.000000e+00> : vector<256x128xf32>
    %3 = tpu.matmul %1, %2, %cst {dimension_numbers = #tpu.dot_dimension_numbers<[1], [0], [0], [1], [0, 0, 1, 1], [], []>} : vector<256x64xbf16>, vector<64x128xbf16>, vector<256x128xf32> -> vector<256x128xf32>
    %c0_4 = arith.constant 0 : index
    %c0_5 = arith.constant 0 : index
    %4 = vector.load %arg4[%c0_4, %c0_5] : memref<1x128xf32, #tpu.memory_space<vmem>>, vector<1x128xf32>
    %5 = vector.broadcast %4 : vector<1x128xf32> to vector<256x128xf32>
    %6 = arith.addf %3, %5 : vector<256x128xf32>
    %cst_6 = arith.constant 0.000000e+00 : f32
    %7 = vector.broadcast %cst_6 : f32 to vector<256x128xf32>
    %8 = arith.maximumf %6, %7 : vector<256x128xf32>
    %9 = arith.truncf %8 : vector<256x128xf32> to vector<256x128xbf16>
    %c0_7 = arith.constant 0 : index
    %c0_8 = arith.constant 0 : index
    %c0_9 = arith.constant 0 : index
    %10 = vector.load %arg5[%c0_7, %c0_8, %c0_9] : memref<1x256x128xbf16, #tpu.memory_space<vmem>>, vector<1x256x128xbf16>
    %11 = vector.shape_cast %10 : vector<1x256x128xbf16> to vector<256x128xbf16>
    %12 = vector.shape_cast %9 : vector<256x128xbf16> to vector<1x256x128xbf16>
    tpu.vector_store %arg5[%c0_7, %c0_8, %c0_9], %12 {strides = array<i32>} : memref<1x256x128xbf16, #tpu.memory_space<vmem>>, vector<1x256x128xbf16>,
    return
  }
  func.func @transform_0(%arg0: i32, %arg1: i32) -> (i32, i32, i32) {
    %c0_i32 = arith.constant 0 : i32
    %c0_i32_0 = arith.constant 0 : i32
    return %arg0, %arg1, %c0_i32 : i32, i32, i32
  }
  func.func @transform_1(%arg0: i32, %arg1: i32) -> (i32, i32) {
    %c0_i32 = arith.constant 0 : i32
    %c0_i32_0 = arith.constant 0 : i32
    %c0_i32_1 = arith.constant 0 : i32
    return %c0_i32, %c0_i32_0 : i32, i32
  }
  func.func @transform_2(%arg0: i32, %arg1: i32) -> (i32, i32) {
    %c0_i32 = arith.constant 0 : i32
    %c0_i32_0 = arith.constant 0 : i32
    %c0_i32_1 = arith.constant 0 : i32
    return %c0_i32, %c0_i32_0 : i32, i32
  }
  func.func @transform_3(%arg0: i32, %arg1: i32) -> (i32, i32, i32) {
    %c0_i32 = arith.constant 0 : i32
    %c0_i32_0 = arith.constant 0 : i32
    return %arg0, %arg1, %c0_i32 : i32, i32, i32
  }
}

module attributes {stable_mosaic.version = 11 : i64} {
  func.func @_attn_kernel(%arg0: i32, %arg1: memref<2x128xf32, #tpu.memory_space<vmem>>, %arg2: memref<128x32xf32, #tpu.memory_space<vmem>>, %arg3: memref<1x32xf32, #tpu.memory_space<vmem>>, %arg4: memref<32x128xf32, #tpu.memory_space<vmem>>, %arg5: memref<1x128xf32, #tpu.memory_space<vmem>>, %arg6: memref<32x128xf32, #tpu.memory_space<vmem>>, %arg7: memref<1x128xf32, #tpu.memory_space<vmem>>, %arg8: memref<2x128xf32, #tpu.memory_space<vmem>>, %arg9: memref<2x128xf32, #tpu.memory_space<vmem>>) attributes {dimension_semantics = [#tpu.dimension_semantics<arbitrary>], iteration_bounds = array<i64: 1>, scalar_prefetch = 0 : i64, scratch_operands = 0 : i64, tpu.core_type = #tpu.core_type<tc>, window_params = [{pipeline_mode = #tpu.pipeline_mode<synchronous>, transform_indices = @transform_0, window_bounds = array<i64: 2, 128>}, {pipeline_mode = #tpu.pipeline_mode<synchronous>, transform_indices = @transform_1, window_bounds = array<i64: 128, 32>}, {pipeline_mode = #tpu.pipeline_mode<synchronous>, transform_indices = @transform_2, window_bounds = array<i64: 1, 32>}, {pipeline_mode = #tpu.pipeline_mode<synchronous>, transform_indices = @transform_3, window_bounds = array<i64: 32, 128>}, {pipeline_mode = #tpu.pipeline_mode<synchronous>, transform_indices = @transform_4, window_bounds = array<i64: 1, 128>}, {pipeline_mode = #tpu.pipeline_mode<synchronous>, transform_indices = @transform_5, window_bounds = array<i64: 32, 128>}, {pipeline_mode = #tpu.pipeline_mode<synchronous>, transform_indices = @transform_6, window_bounds = array<i64: 1, 128>}, {pipeline_mode = #tpu.pipeline_mode<synchronous>, transform_indices = @transform_7, window_bounds = array<i64: 2, 128>}, {pipeline_mode = #tpu.pipeline_mode<synchronous>, transform_indices = @transform_8, window_bounds = array<i64: 2, 128>}]} {
    %c0 = arith.constant 0 : index
    %c0_0 = arith.constant 0 : index
    %0 = vector.load %arg1[%c0, %c0_0] : memref<2x128xf32, #tpu.memory_space<vmem>>, vector<2x128xf32>
    %c0_1 = arith.constant 0 : index
    %c0_2 = arith.constant 0 : index
    %1 = vector.load %arg2[%c0_1, %c0_2] : memref<128x32xf32, #tpu.memory_space<vmem>>, vector<128x32xf32>
    %cst = arith.constant dense<0.000000e+00> : vector<2x32xf32>
    %2 = tpu.matmul %0, %1, %cst {dimension_numbers = #tpu.dot_dimension_numbers<[1], [0], [0], [1], [0, 0, 1, 1], [], []>} : vector<2x128xf32>, vector<128x32xf32>, vector<2x32xf32> -> vector<2x32xf32>
    %c0_3 = arith.constant 0 : index
    %c0_4 = arith.constant 0 : index
    %3 = vector.load %arg3[%c0_3, %c0_4] : memref<1x32xf32, #tpu.memory_space<vmem>>, vector<1x32xf32>
    %4 = vector.broadcast %3 : vector<1x32xf32> to vector<2x32xf32>
    %5 = arith.addf %2, %4 : vector<2x32xf32>
    %c0_5 = arith.constant 0 : index
    %c0_6 = arith.constant 0 : index
    %6 = vector.load %arg4[%c0_5, %c0_6] : memref<32x128xf32, #tpu.memory_space<vmem>>, vector<32x128xf32>
    %cst_7 = arith.constant dense<0.000000e+00> : vector<2x128xf32>
    %7 = tpu.matmul %5, %6, %cst_7 {dimension_numbers = #tpu.dot_dimension_numbers<[1], [0], [0], [1], [0, 0, 1, 1], [], []>} : vector<2x32xf32>, vector<32x128xf32>, vector<2x128xf32> -> vector<2x128xf32>
    %c0_8 = arith.constant 0 : index
    %c0_9 = arith.constant 0 : index
    %8 = vector.load %arg5[%c0_8, %c0_9] : memref<1x128xf32, #tpu.memory_space<vmem>>, vector<1x128xf32>
    %9 = vector.broadcast %8 : vector<1x128xf32> to vector<2x128xf32>
    %10 = arith.addf %7, %9 : vector<2x128xf32>
    %c0_10 = arith.constant 0 : index
    %c0_11 = arith.constant 0 : index
    %11 = vector.load %arg6[%c0_10, %c0_11] : memref<32x128xf32, #tpu.memory_space<vmem>>, vector<32x128xf32>
    %cst_12 = arith.constant dense<0.000000e+00> : vector<2x128xf32>
    %12 = tpu.matmul %5, %11, %cst_12 {dimension_numbers = #tpu.dot_dimension_numbers<[1], [0], [0], [1], [0, 0, 1, 1], [], []>} : vector<2x32xf32>, vector<32x128xf32>, vector<2x128xf32> -> vector<2x128xf32>
    %c0_13 = arith.constant 0 : index
    %c0_14 = arith.constant 0 : index
    %13 = vector.load %arg7[%c0_13, %c0_14] : memref<1x128xf32, #tpu.memory_space<vmem>>, vector<1x128xf32>
    %14 = vector.broadcast %13 : vector<1x128xf32> to vector<2x128xf32>
    %15 = arith.addf %12, %14 : vector<2x128xf32>
    %16 = arith.maximumf %10, %15 : vector<2x128xf32>
    %17 = arith.subf %10, %16 : vector<2x128xf32>
    %18 = math.exp %17 : vector<2x128xf32>
    %19 = arith.subf %15, %16 : vector<2x128xf32>
    %20 = math.exp %19 : vector<2x128xf32>
    %21 = arith.addf %18, %20 : vector<2x128xf32>
    %22 = tpu.reciprocal %21 {approx = true} : vector<2x128xf32> -> vector<2x128xf32>
    %23 = arith.mulf %18, %22 : vector<2x128xf32>
    %c0_15 = arith.constant 0 : index
    %c0_16 = arith.constant 0 : index
    %24 = vector.load %arg8[%c0_15, %c0_16] : memref<2x128xf32, #tpu.memory_space<vmem>>, vector<2x128xf32>
    tpu.vector_store %arg8[%c0_15, %c0_16], %23 {strides = array<i32>} : memref<2x128xf32, #tpu.memory_space<vmem>>, vector<2x128xf32>,
    %25 = arith.mulf %20, %22 : vector<2x128xf32>
    %c0_17 = arith.constant 0 : index
    %c0_18 = arith.constant 0 : index
    %26 = vector.load %arg9[%c0_17, %c0_18] : memref<2x128xf32, #tpu.memory_space<vmem>>, vector<2x128xf32>
    tpu.vector_store %arg9[%c0_17, %c0_18], %25 {strides = array<i32>} : memref<2x128xf32, #tpu.memory_space<vmem>>, vector<2x128xf32>,
    return
  }
  func.func @transform_0(%arg0: i32) -> (i32, i32) {
    %c0_i32 = arith.constant 0 : i32
    %c0_i32_0 = arith.constant 0 : i32
    %c0_i32_1 = arith.constant 0 : i32
    return %c0_i32, %c0_i32_0 : i32, i32
  }
  func.func @transform_1(%arg0: i32) -> (i32, i32) {
    %c0_i32 = arith.constant 0 : i32
    %c0_i32_0 = arith.constant 0 : i32
    %c0_i32_1 = arith.constant 0 : i32
    return %c0_i32, %c0_i32_0 : i32, i32
  }
  func.func @transform_2(%arg0: i32) -> (i32, i32) {
    %c0_i32 = arith.constant 0 : i32
    %c0_i32_0 = arith.constant 0 : i32
    %c0_i32_1 = arith.constant 0 : i32
    return %c0_i32, %c0_i32_0 : i32, i32
  }
  func.func @transform_3(%arg0: i32) -> (i32, i32) {
    %c0_i32 = arith.constant 0 : i32
    %c0_i32_0 = arith.constant 0 : i32
    %c0_i32_1 = arith.constant 0 : i32
    return %c0_i32, %c0_i32_0 : i32, i32
  }
  func.func @transform_4(%arg0: i32) -> (i32, i32) {
    %c0_i32 = arith.constant 0 : i32
    %c0_i32_0 = arith.constant 0 : i32
    %c0_i32_1 = arith.constant 0 : i32
    return %c0_i32, %c0_i32_0 : i32, i32
  }
  func.func @transform_5(%arg0: i32) -> (i32, i32) {
    %c0_i32 = arith.constant 0 : i32
    %c0_i32_0 = arith.constant 0 : i32
    %c0_i32_1 = arith.constant 0 : i32
    return %c0_i32, %c0_i32_0 : i32, i32
  }
  func.func @transform_6(%arg0: i32) -> (i32, i32) {
    %c0_i32 = arith.constant 0 : i32
    %c0_i32_0 = arith.constant 0 : i32
    %c0_i32_1 = arith.constant 0 : i32
    return %c0_i32, %c0_i32_0 : i32, i32
  }
  func.func @transform_7(%arg0: i32) -> (i32, i32) {
    %c0_i32 = arith.constant 0 : i32
    %c0_i32_0 = arith.constant 0 : i32
    %c0_i32_1 = arith.constant 0 : i32
    return %c0_i32, %c0_i32_0 : i32, i32
  }
  func.func @transform_8(%arg0: i32) -> (i32, i32) {
    %c0_i32 = arith.constant 0 : i32
    %c0_i32_0 = arith.constant 0 : i32
    %c0_i32_1 = arith.constant 0 : i32
    return %c0_i32, %c0_i32_0 : i32, i32
  }
}

module attributes {stable_mosaic.version = 11 : i64} {
  func.func @_sk_branch_kernel(%arg0: i32, %arg1: i32, %arg2: memref<1x256x1152xbf16, #tpu.memory_space<vmem>>, %arg3: memref<1x256x1152xbf16, #tpu.memory_space<vmem>>, %arg4: memref<1152x128xbf16, #tpu.memory_space<vmem>>, %arg5: memref<1152x128xbf16, #tpu.memory_space<vmem>>, %arg6: memref<1x128xf32, #tpu.memory_space<vmem>>, %arg7: memref<1x128xf32, #tpu.memory_space<vmem>>, %arg8: memref<1x256x128xbf16, #tpu.memory_space<vmem>>, %arg9: memref<1x256x128xbf16, #tpu.memory_space<vmem>>, %arg10: memref<1x1x128xf32, #tpu.memory_space<vmem>>) attributes {dimension_semantics = [#tpu.dimension_semantics<parallel>, #tpu.dimension_semantics<arbitrary>], iteration_bounds = array<i64: 2, 1>, scalar_prefetch = 0 : i64, scratch_operands = 0 : i64, tpu.core_type = #tpu.core_type<tc>, window_params = [{transform_indices = @transform_0, window_bounds = array<i64: 1, 256, 1152>}, {transform_indices = @transform_1, window_bounds = array<i64: 1, 256, 1152>}, {pipeline_mode = #tpu.pipeline_mode<synchronous>, transform_indices = @transform_2, window_bounds = array<i64: 1152, 128>}, {pipeline_mode = #tpu.pipeline_mode<synchronous>, transform_indices = @transform_3, window_bounds = array<i64: 1152, 128>}, {pipeline_mode = #tpu.pipeline_mode<synchronous>, transform_indices = @transform_4, window_bounds = array<i64: 1, 128>}, {pipeline_mode = #tpu.pipeline_mode<synchronous>, transform_indices = @transform_5, window_bounds = array<i64: 1, 128>}, {transform_indices = @transform_6, window_bounds = array<i64: 1, 256, 128>}, {transform_indices = @transform_7, window_bounds = array<i64: 1, 256, 128>}, {transform_indices = @transform_8, window_bounds = array<i64: 1, 1, 128>}]} {
    %c0 = arith.constant 0 : index
    %c0_0 = arith.constant 0 : index
    %c0_1 = arith.constant 0 : index
    %0 = vector.load %arg2[%c0, %c0_0, %c0_1] : memref<1x256x1152xbf16, #tpu.memory_space<vmem>>, vector<1x256x1152xbf16>
    %1 = vector.shape_cast %0 : vector<1x256x1152xbf16> to vector<256x1152xbf16>
    %c0_2 = arith.constant 0 : index
    %c0_3 = arith.constant 0 : index
    %2 = vector.load %arg4[%c0_2, %c0_3] : memref<1152x128xbf16, #tpu.memory_space<vmem>>, vector<1152x128xbf16>
    %cst = arith.constant dense<0.000000e+00> : vector<256x128xf32>
    %3 = tpu.matmul %1, %2, %cst {dimension_numbers = #tpu.dot_dimension_numbers<[1], [0], [0], [1], [0, 0, 1, 1], [], []>} : vector<256x1152xbf16>, vector<1152x128xbf16>, vector<256x128xf32> -> vector<256x128xf32>
    %c0_4 = arith.constant 0 : index
    %c0_5 = arith.constant 0 : index
    %4 = vector.load %arg6[%c0_4, %c0_5] : memref<1x128xf32, #tpu.memory_space<vmem>>, vector<1x128xf32>
    %5 = vector.broadcast %4 : vector<1x128xf32> to vector<256x128xf32>
    %6 = arith.addf %3, %5 : vector<256x128xf32>
    %cst_6 = arith.constant 0.000000e+00 : f32
    %7 = vector.broadcast %cst_6 : f32 to vector<256x128xf32>
    %8 = arith.maximumf %6, %7 : vector<256x128xf32>
    %c0_7 = arith.constant 0 : index
    %c0_8 = arith.constant 0 : index
    %c0_9 = arith.constant 0 : index
    %9 = vector.load %arg3[%c0_7, %c0_8, %c0_9] : memref<1x256x1152xbf16, #tpu.memory_space<vmem>>, vector<1x256x1152xbf16>
    %10 = vector.shape_cast %9 : vector<1x256x1152xbf16> to vector<256x1152xbf16>
    %c0_10 = arith.constant 0 : index
    %c0_11 = arith.constant 0 : index
    %11 = vector.load %arg5[%c0_10, %c0_11] : memref<1152x128xbf16, #tpu.memory_space<vmem>>, vector<1152x128xbf16>
    %cst_12 = arith.constant dense<0.000000e+00> : vector<256x128xf32>
    %12 = tpu.matmul %10, %11, %cst_12 {dimension_numbers = #tpu.dot_dimension_numbers<[1], [0], [0], [1], [0, 0, 1, 1], [], []>} : vector<256x1152xbf16>, vector<1152x128xbf16>, vector<256x128xf32> -> vector<256x128xf32>
    %c0_13 = arith.constant 0 : index
    %c0_14 = arith.constant 0 : index
    %13 = vector.load %arg7[%c0_13, %c0_14] : memref<1x128xf32, #tpu.memory_space<vmem>>, vector<1x128xf32>
    %14 = vector.broadcast %13 : vector<1x128xf32> to vector<256x128xf32>
    %15 = arith.addf %12, %14 : vector<256x128xf32>
    %cst_15 = arith.constant 0.000000e+00 : f32
    %16 = vector.broadcast %cst_15 : f32 to vector<256x128xf32>
    %17 = arith.maximumf %15, %16 : vector<256x128xf32>
    %18 = arith.truncf %8 : vector<256x128xf32> to vector<256x128xbf16>
    %c0_16 = arith.constant 0 : index
    %c0_17 = arith.constant 0 : index
    %c0_18 = arith.constant 0 : index
    %19 = vector.load %arg8[%c0_16, %c0_17, %c0_18] : memref<1x256x128xbf16, #tpu.memory_space<vmem>>, vector<1x256x128xbf16>
    %20 = vector.shape_cast %19 : vector<1x256x128xbf16> to vector<256x128xbf16>
    %21 = vector.shape_cast %18 : vector<256x128xbf16> to vector<1x256x128xbf16>
    tpu.vector_store %arg8[%c0_16, %c0_17, %c0_18], %21 {strides = array<i32>} : memref<1x256x128xbf16, #tpu.memory_space<vmem>>, vector<1x256x128xbf16>,
    %22 = arith.truncf %17 : vector<256x128xf32> to vector<256x128xbf16>
    %c0_19 = arith.constant 0 : index
    %c0_20 = arith.constant 0 : index
    %c0_21 = arith.constant 0 : index
    %23 = vector.load %arg9[%c0_19, %c0_20, %c0_21] : memref<1x256x128xbf16, #tpu.memory_space<vmem>>, vector<1x256x128xbf16>
    %24 = vector.shape_cast %23 : vector<1x256x128xbf16> to vector<256x128xbf16>
    %25 = vector.shape_cast %22 : vector<256x128xbf16> to vector<1x256x128xbf16>
    tpu.vector_store %arg9[%c0_19, %c0_20, %c0_21], %25 {strides = array<i32>} : memref<1x256x128xbf16, #tpu.memory_space<vmem>>, vector<1x256x128xbf16>,
    %c0_i32 = arith.constant 0 : i32
    %26 = arith.cmpi eq, %arg1, %c0_i32 : i32
    %27 = arith.extui %26 : i1 to i32
    %c0_i32_22 = arith.constant 0 : i32
    %28 = arith.cmpi ne, %27, %c0_i32_22 : i32
    scf.if %28 {
      %cst_34 = arith.constant 0.000000e+00 : f32
      %48 = vector.broadcast %cst_34 : f32 to vector<1x1x128xf32>
      %c0_35 = arith.constant 0 : index
      %c0_36 = arith.constant 0 : index
      %c0_37 = arith.constant 0 : index
      %49 = vector.load %arg10[%c0_35, %c0_36, %c0_37] : memref<1x1x128xf32, #tpu.memory_space<vmem>>, vector<1x1x128xf32>
      tpu.vector_store %arg10[%c0_35, %c0_36, %c0_37], %48 {strides = array<i32>} : memref<1x1x128xf32, #tpu.memory_space<vmem>>, vector<1x1x128xf32>,
    } else {
    }
    %c256_i32 = arith.constant 256 : i32
    %29 = arith.muli %arg1, %c256_i32 : i32
    %30 = tpu.iota {dimensions = array<i32: 0>} : vector<256x1xi32>
    %31 = vector.broadcast %29 : i32 to vector<256x1xi32>
    %32 = arith.addi %31, %30 : vector<256x1xi32>
    %c256_i32_23 = arith.constant 256 : i32
    %33 = vector.broadcast %c256_i32_23 : i32 to vector<256x1xi32>
    %34 = arith.cmpi slt, %32, %33 : vector<256x1xi32>
    %35 = arith.addf %8, %17 : vector<256x128xf32>
    %cst_24 = arith.constant 0.000000e+00 : f32
    %36 = vector.shape_cast %34 : vector<256x1xi1> to vector<256x1xi1>
    %37 = vector.broadcast %36 : vector<256x1xi1> to vector<256x128xi1>
    %38 = vector.broadcast %cst_24 : f32 to vector<256x128xf32>
    %39 = arith.select %37, %35, %38 : vector<256x128xi1>, vector<256x128xf32>
    %c0_25 = arith.constant 0 : index
    %c0_26 = arith.constant 0 : index
    %c0_27 = arith.constant 0 : index
    %40 = vector.load %arg10[%c0_25, %c0_26, %c0_27] : memref<1x1x128xf32, #tpu.memory_space<vmem>>, vector<1x1x128xf32>
    %cst_28 = arith.constant dense<0.000000e+00> : vector<128xf32>
    %41 = vector.multi_reduction <add>, %39, %cst_28 [0] : vector<256x128xf32> to vector<128xf32>
    %42 = vector.shape_cast %41 : vector<128xf32> to vector<1x1x128xf32>
    %43 = arith.addf %40, %42 : vector<1x1x128xf32>
    %c0_29 = arith.constant 0 : index
    %c0_30 = arith.constant 0 : index
    %c0_31 = arith.constant 0 : index
    %44 = vector.load %arg10[%c0_29, %c0_30, %c0_31] : memref<1x1x128xf32, #tpu.memory_space<vmem>>, vector<1x1x128xf32>
    tpu.vector_store %arg10[%c0_29, %c0_30, %c0_31], %43 {strides = array<i32>} : memref<1x1x128xf32, #tpu.memory_space<vmem>>, vector<1x1x128xf32>,
    %c0_i32_32 = arith.constant 0 : i32
    %45 = arith.cmpi eq, %arg1, %c0_i32_32 : i32
    %46 = arith.extui %45 : i1 to i32
    %c0_i32_33 = arith.constant 0 : i32
    %47 = arith.cmpi ne, %46, %c0_i32_33 : i32
    scf.if %47 {
      %c0_34 = arith.constant 0 : index
      %c0_35 = arith.constant 0 : index
      %c0_36 = arith.constant 0 : index
      %48 = vector.load %arg10[%c0_34, %c0_35, %c0_36] : memref<1x1x128xf32, #tpu.memory_space<vmem>>, vector<1x1x128xf32>
      %cst_37 = arith.constant 3.906250e-03 : f32
      %49 = vector.broadcast %cst_37 : f32 to vector<1x1x128xf32>
      %50 = arith.mulf %48, %49 : vector<1x1x128xf32>
      %c0_38 = arith.constant 0 : index
      %c0_39 = arith.constant 0 : index
      %c0_40 = arith.constant 0 : index
      %51 = vector.load %arg10[%c0_38, %c0_39, %c0_40] : memref<1x1x128xf32, #tpu.memory_space<vmem>>, vector<1x1x128xf32>
      tpu.vector_store %arg10[%c0_38, %c0_39, %c0_40], %50 {strides = array<i32>} : memref<1x1x128xf32, #tpu.memory_space<vmem>>, vector<1x1x128xf32>,
    } else {
    }
    return
  }
  func.func @transform_0(%arg0: i32, %arg1: i32) -> (i32, i32, i32) {
    %c0_i32 = arith.constant 0 : i32
    %c0_i32_0 = arith.constant 0 : i32
    return %arg0, %arg1, %c0_i32 : i32, i32, i32
  }
  func.func @transform_1(%arg0: i32, %arg1: i32) -> (i32, i32, i32) {
    %c0_i32 = arith.constant 0 : i32
    %c0_i32_0 = arith.constant 0 : i32
    return %arg0, %arg1, %c0_i32 : i32, i32, i32
  }
  func.func @transform_2(%arg0: i32, %arg1: i32) -> (i32, i32) {
    %c0_i32 = arith.constant 0 : i32
    %c0_i32_0 = arith.constant 0 : i32
    %c0_i32_1 = arith.constant 0 : i32
    return %c0_i32, %c0_i32_0 : i32, i32
  }
  func.func @transform_3(%arg0: i32, %arg1: i32) -> (i32, i32) {
    %c0_i32 = arith.constant 0 : i32
    %c0_i32_0 = arith.constant 0 : i32
    %c0_i32_1 = arith.constant 0 : i32
    return %c0_i32, %c0_i32_0 : i32, i32
  }
  func.func @transform_4(%arg0: i32, %arg1: i32) -> (i32, i32) {
    %c0_i32 = arith.constant 0 : i32
    %c0_i32_0 = arith.constant 0 : i32
    %c0_i32_1 = arith.constant 0 : i32
    return %c0_i32, %c0_i32_0 : i32, i32
  }
  func.func @transform_5(%arg0: i32, %arg1: i32) -> (i32, i32) {
    %c0_i32 = arith.constant 0 : i32
    %c0_i32_0 = arith.constant 0 : i32
    %c0_i32_1 = arith.constant 0 : i32
    return %c0_i32, %c0_i32_0 : i32, i32
  }
  func.func @transform_6(%arg0: i32, %arg1: i32) -> (i32, i32, i32) {
    %c0_i32 = arith.constant 0 : i32
    %c0_i32_0 = arith.constant 0 : i32
    return %arg0, %arg1, %c0_i32 : i32, i32, i32
  }
  func.func @transform_7(%arg0: i32, %arg1: i32) -> (i32, i32, i32) {
    %c0_i32 = arith.constant 0 : i32
    %c0_i32_0 = arith.constant 0 : i32
    return %arg0, %arg1, %c0_i32 : i32, i32, i32
  }
  func.func @transform_8(%arg0: i32, %arg1: i32) -> (i32, i32, i32) {
    %c0_i32 = arith.constant 0 : i32
    %c0_i32_0 = arith.constant 0 : i32
    %c0_i32_1 = arith.constant 0 : i32
    return %arg0, %c0_i32, %c0_i32_0 : i32, i32, i32
  }
}

module attributes {stable_mosaic.version = 11 : i64} {
  func.func @_conv3_proj_kernel(%arg0: i32, %arg1: i32, %arg2: memref<1x256x128xbf16, #tpu.memory_space<vmem>>, %arg3: memref<1x256x128xbf16, #tpu.memory_space<vmem>>, %arg4: memref<1x1x128xf32, #tpu.memory_space<vmem>>, %arg5: memref<1x1x128xf32, #tpu.memory_space<vmem>>, %arg6: memref<1x256x64xbf16, #tpu.memory_space<vmem>>, %arg7: memref<128x256xbf16, #tpu.memory_space<vmem>>, %arg8: memref<1x256xf32, #tpu.memory_space<vmem>>, %arg9: memref<64x256xbf16, #tpu.memory_space<vmem>>, %arg10: memref<1x256xf32, #tpu.memory_space<vmem>>, %arg11: memref<1x256x256xf32, #tpu.memory_space<vmem>>) attributes {dimension_semantics = [#tpu.dimension_semantics<parallel>, #tpu.dimension_semantics<parallel>], iteration_bounds = array<i64: 2, 1>, scalar_prefetch = 0 : i64, scratch_operands = 0 : i64, tpu.core_type = #tpu.core_type<tc>, window_params = [{transform_indices = @transform_0, window_bounds = array<i64: 1, 256, 128>}, {transform_indices = @transform_1, window_bounds = array<i64: 1, 256, 128>}, {transform_indices = @transform_2, window_bounds = array<i64: 1, 1, 128>}, {transform_indices = @transform_3, window_bounds = array<i64: 1, 1, 128>}, {transform_indices = @transform_4, window_bounds = array<i64: 1, 256, 64>}, {pipeline_mode = #tpu.pipeline_mode<synchronous>, transform_indices = @transform_5, window_bounds = array<i64: 128, 256>}, {pipeline_mode = #tpu.pipeline_mode<synchronous>, transform_indices = @transform_6, window_bounds = array<i64: 1, 256>}, {pipeline_mode = #tpu.pipeline_mode<synchronous>, transform_indices = @transform_7, window_bounds = array<i64: 64, 256>}, {pipeline_mode = #tpu.pipeline_mode<synchronous>, transform_indices = @transform_8, window_bounds = array<i64: 1, 256>}, {transform_indices = @transform_9, window_bounds = array<i64: 1, 256, 256>}]} {
    %c0 = arith.constant 0 : index
    %c0_0 = arith.constant 0 : index
    %c0_1 = arith.constant 0 : index
    %0 = vector.load %arg2[%c0, %c0_0, %c0_1] : memref<1x256x128xbf16, #tpu.memory_space<vmem>>, vector<1x256x128xbf16>
    %1 = vector.shape_cast %0 : vector<1x256x128xbf16> to vector<256x128xbf16>
    %2 = arith.extf %1 : vector<256x128xbf16> to vector<256x128xf32>
    %c0_2 = arith.constant 0 : index
    %c0_3 = arith.constant 0 : index
    %c0_4 = arith.constant 0 : index
    %3 = vector.load %arg4[%c0_2, %c0_3, %c0_4] : memref<1x1x128xf32, #tpu.memory_space<vmem>>, vector<1x1x128xf32>
    %4 = vector.shape_cast %3 : vector<1x1x128xf32> to vector<1x128xf32>
    %5 = vector.broadcast %4 : vector<1x128xf32> to vector<256x128xf32>
    %6 = arith.mulf %2, %5 : vector<256x128xf32>
    %c0_5 = arith.constant 0 : index
    %c0_6 = arith.constant 0 : index
    %c0_7 = arith.constant 0 : index
    %7 = vector.load %arg3[%c0_5, %c0_6, %c0_7] : memref<1x256x128xbf16, #tpu.memory_space<vmem>>, vector<1x256x128xbf16>
    %8 = vector.shape_cast %7 : vector<1x256x128xbf16> to vector<256x128xbf16>
    %9 = arith.extf %8 : vector<256x128xbf16> to vector<256x128xf32>
    %c0_8 = arith.constant 0 : index
    %c0_9 = arith.constant 0 : index
    %c0_10 = arith.constant 0 : index
    %10 = vector.load %arg5[%c0_8, %c0_9, %c0_10] : memref<1x1x128xf32, #tpu.memory_space<vmem>>, vector<1x1x128xf32>
    %11 = vector.shape_cast %10 : vector<1x1x128xf32> to vector<1x128xf32>
    %12 = vector.broadcast %11 : vector<1x128xf32> to vector<256x128xf32>
    %13 = arith.mulf %9, %12 : vector<256x128xf32>
    %14 = arith.addf %6, %13 : vector<256x128xf32>
    %15 = arith.truncf %14 : vector<256x128xf32> to vector<256x128xbf16>
    %c0_11 = arith.constant 0 : index
    %c0_12 = arith.constant 0 : index
    %16 = vector.load %arg7[%c0_11, %c0_12] : memref<128x256xbf16, #tpu.memory_space<vmem>>, vector<128x256xbf16>
    %cst = arith.constant dense<0.000000e+00> : vector<256x256xf32>
    %17 = tpu.matmul %15, %16, %cst {dimension_numbers = #tpu.dot_dimension_numbers<[1], [0], [0], [1], [0, 0, 1, 1], [], []>} : vector<256x128xbf16>, vector<128x256xbf16>, vector<256x256xf32> -> vector<256x256xf32>
    %c0_13 = arith.constant 0 : index
    %c0_14 = arith.constant 0 : index
    %18 = vector.load %arg8[%c0_13, %c0_14] : memref<1x256xf32, #tpu.memory_space<vmem>>, vector<1x256xf32>
    %19 = vector.broadcast %18 : vector<1x256xf32> to vector<256x256xf32>
    %20 = arith.addf %17, %19 : vector<256x256xf32>
    %c0_15 = arith.constant 0 : index
    %c0_16 = arith.constant 0 : index
    %c0_17 = arith.constant 0 : index
    %21 = vector.load %arg6[%c0_15, %c0_16, %c0_17] : memref<1x256x64xbf16, #tpu.memory_space<vmem>>, vector<1x256x64xbf16>
    %22 = vector.shape_cast %21 : vector<1x256x64xbf16> to vector<256x64xbf16>
    %c0_18 = arith.constant 0 : index
    %c0_19 = arith.constant 0 : index
    %23 = vector.load %arg9[%c0_18, %c0_19] : memref<64x256xbf16, #tpu.memory_space<vmem>>, vector<64x256xbf16>
    %cst_20 = arith.constant dense<0.000000e+00> : vector<256x256xf32>
    %24 = tpu.matmul %22, %23, %cst_20 {dimension_numbers = #tpu.dot_dimension_numbers<[1], [0], [0], [1], [0, 0, 1, 1], [], []>} : vector<256x64xbf16>, vector<64x256xbf16>, vector<256x256xf32> -> vector<256x256xf32>
    %c0_21 = arith.constant 0 : index
    %c0_22 = arith.constant 0 : index
    %25 = vector.load %arg10[%c0_21, %c0_22] : memref<1x256xf32, #tpu.memory_space<vmem>>, vector<1x256xf32>
    %26 = vector.broadcast %25 : vector<1x256xf32> to vector<256x256xf32>
    %27 = arith.addf %24, %26 : vector<256x256xf32>
    %28 = arith.addf %20, %27 : vector<256x256xf32>
    %cst_23 = arith.constant 0.000000e+00 : f32
    %29 = vector.broadcast %cst_23 : f32 to vector<256x256xf32>
    %30 = arith.maximumf %28, %29 : vector<256x256xf32>
    %c0_24 = arith.constant 0 : index
    %c0_25 = arith.constant 0 : index
    %c0_26 = arith.constant 0 : index
    %31 = vector.load %arg11[%c0_24, %c0_25, %c0_26] : memref<1x256x256xf32, #tpu.memory_space<vmem>>, vector<1x256x256xf32>
    %32 = vector.shape_cast %31 : vector<1x256x256xf32> to vector<256x256xf32>
    %33 = vector.shape_cast %30 : vector<256x256xf32> to vector<1x256x256xf32>
    tpu.vector_store %arg11[%c0_24, %c0_25, %c0_26], %33 {strides = array<i32>} : memref<1x256x256xf32, #tpu.memory_space<vmem>>, vector<1x256x256xf32>,
    return
  }
  func.func @transform_0(%arg0: i32, %arg1: i32) -> (i32, i32, i32) {
    %c0_i32 = arith.constant 0 : i32
    %c0_i32_0 = arith.constant 0 : i32
    return %arg0, %arg1, %c0_i32 : i32, i32, i32
  }
  func.func @transform_1(%arg0: i32, %arg1: i32) -> (i32, i32, i32) {
    %c0_i32 = arith.constant 0 : i32
    %c0_i32_0 = arith.constant 0 : i32
    return %arg0, %arg1, %c0_i32 : i32, i32, i32
  }
  func.func @transform_2(%arg0: i32, %arg1: i32) -> (i32, i32, i32) {
    %c0_i32 = arith.constant 0 : i32
    %c0_i32_0 = arith.constant 0 : i32
    %c0_i32_1 = arith.constant 0 : i32
    return %arg0, %c0_i32, %c0_i32_0 : i32, i32, i32
  }
  func.func @transform_3(%arg0: i32, %arg1: i32) -> (i32, i32, i32) {
    %c0_i32 = arith.constant 0 : i32
    %c0_i32_0 = arith.constant 0 : i32
    %c0_i32_1 = arith.constant 0 : i32
    return %arg0, %c0_i32, %c0_i32_0 : i32, i32, i32
  }
  func.func @transform_4(%arg0: i32, %arg1: i32) -> (i32, i32, i32) {
    %c0_i32 = arith.constant 0 : i32
    %c0_i32_0 = arith.constant 0 : i32
    return %arg0, %arg1, %c0_i32 : i32, i32, i32
  }
  func.func @transform_5(%arg0: i32, %arg1: i32) -> (i32, i32) {
    %c0_i32 = arith.constant 0 : i32
    %c0_i32_0 = arith.constant 0 : i32
    %c0_i32_1 = arith.constant 0 : i32
    return %c0_i32, %c0_i32_0 : i32, i32
  }
  func.func @transform_6(%arg0: i32, %arg1: i32) -> (i32, i32) {
    %c0_i32 = arith.constant 0 : i32
    %c0_i32_0 = arith.constant 0 : i32
    %c0_i32_1 = arith.constant 0 : i32
    return %c0_i32, %c0_i32_0 : i32, i32
  }
  func.func @transform_7(%arg0: i32, %arg1: i32) -> (i32, i32) {
    %c0_i32 = arith.constant 0 : i32
    %c0_i32_0 = arith.constant 0 : i32
    %c0_i32_1 = arith.constant 0 : i32
    return %c0_i32, %c0_i32_0 : i32, i32
  }
  func.func @transform_8(%arg0: i32, %arg1: i32) -> (i32, i32) {
    %c0_i32 = arith.constant 0 : i32
    %c0_i32_0 = arith.constant 0 : i32
    %c0_i32_1 = arith.constant 0 : i32
    return %c0_i32, %c0_i32_0 : i32, i32
  }
  func.func @transform_9(%arg0: i32, %arg1: i32) -> (i32, i32, i32) {
    %c0_i32 = arith.constant 0 : i32
    %c0_i32_0 = arith.constant 0 : i32
    return %arg0, %arg1, %c0_i32 : i32, i32, i32
  }
}

</mosaic_0001>

<llo_original>
// kernel: _lambda_.4
$region0: #{_lambda_.4}
  #allocation0 [shape = 'u32[]', space=smem, size = 0x4, offset = 0x4, fixed_abs, tag = 'smem constant byte address 0x4 - core index']
  #allocation1 [shape = 'u32[72,128]{1,0:T(1,128)}', space=vmem, size = 0x9000, scoped, tag = 'internal scratch']
  %s0 = inlined_call_operand.vmem [shape: bf16[2,256,64], index: 0, kind: input, shape index: {}]
  %s1 = inlined_call_operand.hbm [shape: bf16[64,128], index: 1, kind: input, shape index: {}]
  %s2 = inlined_call_operand.vmem [shape: f32[1,128], index: 2, kind: input, shape index: {}]
  %s3 = inlined_call_operand.vmem [shape: bf16[2,256,128], index: 3, kind: output, shape index: {}]
  %s4 = sld [smem:[#allocation0]]
  $region49: #{_lambda_.4} parent=0
    _
  %s6 = ssub.s32 1, %s4
  %s7 = scalar_select 0, %s6, %s4
  $region1: #{_lambda_.4} parent=0
    #allocation2 [shape = 'u8[16384]{0}', space=vmem, size = 0x4000, scoped, tag = 'input window, operand 1, single buffered']
    #allocation3 [shape = 's32[2]{0}', space=sflag, size = 0x8, scoped, tag = 'scoped memory for _lambda_.4']
    %8 = vsyncpa [#allocation3], 0
    loop: start=0, step=1, limit=4
    $region2: #{_lambda_.4} parent=1 // loop_pre_header
      _
    $region3: #{_lambda_.4} parent=1 // loop_header
      %s10 = sphi 0, %s14
      %p11 = scmp.ge.s32.totalorder %s10, 4
      %s17 = sphi 0, %s29
      %s18 = sphi 0, %s25
      %s19 = sphi 0, %s17
      %s20 = sphi 0, %s18
      %s21 = sphi 0, %s19
      %s22 = sphi 0, %s20
      %s34 = sphi 0, %s36
      %s37 = sphi 0, %s34
      %s38 = sphi 0, %s37
      %s54 = sphi 0, %s38
      %s58 = sphi 0, %s58
      %s60 = sphi 0, %s58
      %s61 = sphi 0, %s60
      %s75 = sphi 0, %s61
      %s79 = sphi 0, %s79
      %s81 = sphi 0, %s79
      %s82 = sphi 0, %s81
      %s96 = sphi 0, %s82
      %s104 = sphi 0, %s106
      %s107 = sphi 0, %s104
      %s108 = sphi 0, %s107
      %s124 = sphi 0, %s108
    $region4: #{_lambda_.4} parent=1 // loop_header_branch
      %13 = sbr.rel (%p11) target = $region8
    $region5: #{_lambda_.4} parent=1 // loop_body
      %s15 = ssub.s32 %s10, 1
      %s16 = ssub.s32 %s10, 2
      %s23 = sadd.s32 1, %s18
      %p24 = scmp.ge.s32.totalorder %s23, 1
      %s25 = scalar_select %p24, 0, %s23
      %s26 = sadd.s32 1, %s17
      %s27 = scalar_select %p24, %s26, %s17
      %p28 = scmp.ge.s32.totalorder %s27, 2
      %s29 = scalar_select %p28, 0, %s27
      %s30 = ssub.s32 %s17, %s29
      %s31 = ssub.s32 %s18, %s25
      %s32 = sor.u32 %s30, %s31
      %p33 = scmp.eq.s32.totalorder %s32, 0
      %s35 = sadd.s32 %s34, 1
      %s36 = scalar_select %p33, %s34, %s35
      %p39 = pneg %p33
      %p40 = scmp.eq.s32.totalorder %s10, 1
      %p41 = por %p39, %p40
      %p42 = scmp.ne.s32.totalorder %s34, %s37
      %p43 = scmp.eq.s32.totalorder %s10, 0
      %p44 = por %p42, %p43
      %p45 = scmp.ne.s32.totalorder %s34, %s37
      %p46 = scmp.eq.s32.totalorder %s15, 1
      %p47 = por %p45, %p46
      %p48 = scmp.ne.s32.totalorder %s37, %s38
      %p49 = scmp.eq.s32.totalorder %s15, 0
      %p50 = por %p48, %p49
      %p51 = scmp.ne.s32.totalorder %s37, %s38
      %p52 = scmp.eq.s32.totalorder %s16, 1
      %p53 = por %p51, %p52
      %p55 = scmp.ne.s32.totalorder %s38, %s54
      %p56 = scmp.eq.s32.totalorder %s16, 0
      %p57 = por %p55, %p56
      %s59 = sadd.s32 %s58, 1
      %p62 = scmp.eq.s32.totalorder %s10, 1
      %p63 = scmp.ne.s32.totalorder %s58, %s60
      %p64 = scmp.eq.s32.totalorder %s10, 0
      %p65 = por %p63, %p64
      %p66 = scmp.ne.s32.totalorder %s58, %s60
      %p67 = scmp.eq.s32.totalorder %s15, 1
      %p68 = por %p66, %p67
      %p69 = scmp.ne.s32.totalorder %s60, %s61
      %p70 = scmp.eq.s32.totalorder %s15, 0
      %p71 = por %p69, %p70
      %p72 = scmp.ne.s32.totalorder %s60, %s61
      %p73 = scmp.eq.s32.totalorder %s16, 1
      %p74 = por %p72, %p73
      %p76 = scmp.ne.s32.totalorder %s61, %s75
      %p77 = scmp.eq.s32.totalorder %s16, 0
      %p78 = por %p76, %p77
      %s80 = sadd.s32 %s79, 1
      %p83 = scmp.eq.s32.totalorder %s10, 1
      %p84 = scmp.ne.s32.totalorder %s79, %s81
      %p85 = scmp.eq.s32.totalorder %s10, 0
      %p86 = por %p84, %p85
      %p87 = scmp.ne.s32.totalorder %s79, %s81
      %p88 = scmp.eq.s32.totalorder %s15, 1
      %p89 = por %p87, %p88
      %p90 = scmp.ne.s32.totalorder %s81, %s82
      %p91 = scmp.eq.s32.totalorder %s15, 0
      %p92 = por %p90, %p91
      %p93 = scmp.ne.s32.totalorder %s81, %s82
      %p94 = scmp.eq.s32.totalorder %s16, 1
      %p95 = por %p93, %p94
      %p97 = scmp.ne.s32.totalorder %s82, %s96
      %p98 = scmp.eq.s32.totalorder %s16, 0
      %p99 = por %p97, %p98
      %s100 = ssub.s32 %s17, %s29
      %s101 = ssub.s32 %s18, %s25
      %s102 = sor.u32 %s100, %s101
      %p103 = scmp.eq.s32.totalorder %s102, 0
      %s105 = sadd.s32 %s104, 1
      %s106 = scalar_select %p103, %s104, %s105
      %p109 = pneg %p103
      %p110 = scmp.eq.s32.totalorder %s10, 1
      %p111 = por %p109, %p110
      %p112 = scmp.ne.s32.totalorder %s104, %s107
      %p113 = scmp.eq.s32.totalorder %s10, 0
      %p114 = por %p112, %p113
      %p115 = scmp.ne.s32.totalorder %s104, %s107
      %p116 = scmp.eq.s32.totalorder %s15, 1
      %p117 = por %p115, %p116
      %p118 = scmp.ne.s32.totalorder %s107, %s108
      %p119 = scmp.eq.s32.totalorder %s15, 0
      %p120 = por %p118, %p119
      %p121 = scmp.ne.s32.totalorder %s107, %s108
      %p122 = scmp.eq.s32.totalorder %s16, 1
      %p123 = por %p121, %p122
      %p125 = scmp.ne.s32.totalorder %s108, %s124
      %p126 = scmp.eq.s32.totalorder %s16, 0
      %p127 = por %p125, %p126
      %p128 = scmp.le.s32.totalorder 1, %s10
      %p129 = scmp.lt.s32.totalorder %s10, 3
      %p130 = pnand %p128, %p129
      %p131 = pneg %p130
      // Predicated region
      $region9: #{_lambda_.4} parent=5 // pred_check
        _
      $region10: #{_lambda_.4} parent=5 // pred_check_branch
        %133 = sbr.rel (%p130) target = $region12
      $region11: #{_lambda_.4} parent=5 // pred_region
        %s134 = ssub.s32 %s10, 1
        // Predicated region
        $region13: #{_lambda_.4} parent=11 // pred_check
          %p135 = pneg %p71
        $region14: #{_lambda_.4} parent=11 // pred_check_branch
          %137 = sbr.rel (%p135) target = $region16
        $region15: #{_lambda_.4} parent=11 // pred_region
          %139 = vsyncadd [#allocation3], 0
          %s140 = sshll.u32 %s1, 4
          %s141 = int_to_ptr.hbm [resolvable:$true] %s140
          %s142 = sshll.u32 [#allocation2], 4
          %s143 = int_to_ptr.vmem [resolvable:$true] %s142
          %148 = dma.hbm_to_vmem [thread:$0]  %s141, 512, %s143, [#allocation3], 64, 64, 4
        $region16: #{_lambda_.4} parent=11 // pred_fallthru
          _
        // Predicated region
        $region17: #{_lambda_.4} parent=11 // pred_check
          %p149 = pneg %p92
        $region18: #{_lambda_.4} parent=11 // pred_check_branch
          %151 = sbr.rel (%p149) target = $region20
        $region19: #{_lambda_.4} parent=11 // pred_region
          _
        $region20: #{_lambda_.4} parent=11 // pred_fallthru
          _
      $region12: #{_lambda_.4} parent=5 // pred_fallthru
        _
      %p152 = scmp.lt.s32.totalorder %s10, 2
      // Predicated region
      $region21: #{_lambda_.4} parent=5 // pred_check
        %p153 = pneg %p152
      $region22: #{_lambda_.4} parent=5 // pred_check_branch
        %155 = sbr.rel (%p153) target = $region24
      $region23: #{_lambda_.4} parent=5 // pred_region
        // Predicated region
        $region25: #{_lambda_.4} parent=23 // pred_check
          %p156 = pneg %p44
        $region26: #{_lambda_.4} parent=23 // pred_check_branch
          %158 = sbr.rel (%p156) target = $region28
        $region27: #{_lambda_.4} parent=23 // pred_region
          %s159 = smul.u32 32, %s18
          %p160 = scmp.lt.s32.totalorder %s17, 1
          %s161 = scalar_select %p160, %s17, 1
          %p162 = scmp.lt.s32.totalorder %s159, 31
          %s163 = scalar_select %p162, %s159, 31
          %s164 = smul.addr %s161, 32
          %s165 = sadd.s32 %s163, %s164
          %s166 = smul.addr %s165, 4
          %s167 = scalar_lea.vmem %s0, %s166
          %s168 = smul.u32 32, %s18
        $region28: #{_lambda_.4} parent=23 // pred_fallthru
          _
      $region24: #{_lambda_.4} parent=5 // pred_fallthru
        _
      %p169 = scmp.le.s32.totalorder 1, %s10
      %p170 = scmp.lt.s32.totalorder %s10, 3
      %p171 = pnand %p169, %p170
      %p172 = pneg %p171
      // Predicated region
      $region29: #{_lambda_.4} parent=5 // pred_check
        _
      $region30: #{_lambda_.4} parent=5 // pred_check_branch
        %174 = sbr.rel (%p171) target = $region32
      $region31: #{_lambda_.4} parent=5 // pred_region
        %s175 = ssub.s32 %s10, 1
        // Predicated region
        $region33: #{_lambda_.4} parent=31 // pred_check
          %p176 = pneg %p71
        $region34: #{_lambda_.4} parent=31 // pred_check_branch
          %178 = sbr.rel (%p176) target = $region36
        $region35: #{_lambda_.4} parent=31 // pred_region
          %180 = dma.done [#allocation3], 512
        $region36: #{_lambda_.4} parent=31 // pred_fallthru
          _
        %s181 = smul.u32 32, %s20
        %p182 = scmp.lt.s32.totalorder %s19, 1
        %s183 = scalar_select %p182, %s19, 1
        %p184 = scmp.lt.s32.totalorder %s181, 31
        %s185 = scalar_select %p184, %s181, 31
        %s186 = smul.addr %s183, 32
        %s187 = sadd.s32 %s185, %s186
        %s188 = smul.addr %s187, 4
        %s189 = scalar_lea.vmem %s0, %s188
        %p190 = pneg %p50
        %p191 = pneg %p47
        %p192 = pneg %p71
        %p193 = pneg %p68
        %p194 = pneg %p92
        %p195 = pneg %p89
        %p196 = pneg %p120
        %p197 = pneg %p117
        %s198 = smul.u32 32, %s20
        %p199 = scmp.lt.s32.totalorder %s19, 1
        %s200 = scalar_select %p199, %s19, 1
        %p201 = scmp.lt.s32.totalorder %s198, 31
        %s202 = scalar_select %p201, %s198, 31
        %s203 = smul.addr %s200, 32
        %s204 = sadd.s32 %s202, %s203
        %s205 = smul.addr %s204, 4
        %s206 = scalar_lea.vmem %s3, %s205
        %s207 = smul.u32 32, %s20
        %p208 = scmp.lt.s32.totalorder %s19, 1
        %s209 = scalar_select %p208, %s19, 1
        %p210 = scmp.lt.s32.totalorder %s207, 31
        %s211 = scalar_select %p210, %s207, 31
        %s212 = smul.addr %s209, 32
        %s213 = sadd.s32 %s211, %s212
        %s214 = smul.addr %s213, 4
        %s215 = scalar_lea.vmem %s0, %s214
        %s216 = smul.u32 32, %s20
        %s217 = smul.u32 32, %s20
        %p218 = scmp.lt.s32.totalorder %s19, 1
        %s219 = scalar_select %p218, %s19, 1
        %p220 = scmp.lt.s32.totalorder %s217, 31
        %s221 = scalar_select %p220, %s217, 31
        %s222 = smul.addr %s219, 32
        %s223 = sadd.s32 %s221, %s222
        %s224 = smul.addr %s223, 4
        %s225 = scalar_lea.vmem %s3, %s224
        %s226 = smul.u32 32, %s20
        %v228 = vld [vmem:[%s215] sm:$0xf]
        %v229 = vld [vmem:[%s215 + $0x4] sm:$0xf]
        %v230 = vld [vmem:[%s215 + $0x8] sm:$0xf]
        %v231 = vld [vmem:[%s215 + $0xc] sm:$0xf]
        %v232 = vld [vmem:[%s215 + $0x10] sm:$0xf]
        %v233 = vld [vmem:[%s215 + $0x14] sm:$0xf]
        %v234 = vld [vmem:[%s215 + $0x18] sm:$0xf]
        %v235 = vld [vmem:[%s215 + $0x1c] sm:$0xf]
        %v236 = vld [vmem:[%s215 + $0x20] sm:$0xf]
        %v237 = vld [vmem:[%s215 + $0x24] sm:$0xf]
        %v238 = vld [vmem:[%s215 + $0x28] sm:$0xf]
        %v239 = vld [vmem:[%s215 + $0x2c] sm:$0xf]
        %v240 = vld [vmem:[%s215 + $0x30] sm:$0xf]
        %v241 = vld [vmem:[%s215 + $0x34] sm:$0xf]
        %v242 = vld [vmem:[%s215 + $0x38] sm:$0xf]
        %v243 = vld [vmem:[%s215 + $0x3c] sm:$0xf]
        %v244 = vld [vmem:[%s215 + $0x40] sm:$0xf]
        %v245 = vld [vmem:[%s215 + $0x44] sm:$0xf]
        %v246 = vld [vmem:[%s215 + $0x48] sm:$0xf]
        %v247 = vld [vmem:[%s215 + $0x4c] sm:$0xf]
        %v248 = vld [vmem:[%s215 + $0x50] sm:$0xf]
        %v249 = vld [vmem:[%s215 + $0x54] sm:$0xf]
        %v250 = vld [vmem:[%s215 + $0x58] sm:$0xf]
        %v251 = vld [vmem:[%s215 + $0x5c] sm:$0xf]
        %v252 = vld [vmem:[%s215 + $0x60] sm:$0xf]
        %v253 = vld [vmem:[%s215 + $0x64] sm:$0xf]
        %v254 = vld [vmem:[%s215 + $0x68] sm:$0xf]
        %v255 = vld [vmem:[%s215 + $0x6c] sm:$0xf]
        %v256 = vld [vmem:[%s215 + $0x70] sm:$0xf]
        %v257 = vld [vmem:[%s215 + $0x74] sm:$0xf]
        %v258 = vld [vmem:[%s215 + $0x78] sm:$0xf]
        %v259 = vld [vmem:[%s215 + $0x7c] sm:$0xf]
        %v260 = vld [vmem:[#allocation2] sm:$0xf]
        %v261 = vld [vmem:[#allocation2 + $0x4] sm:$0xf]
        %v262 = vld [vmem:[#allocation2 + $0x8] sm:$0xf]
        %v263 = vld [vmem:[#allocation2 + $0xc] sm:$0xf]
        %v264 = vld [vmem:[#allocation2 + $0x10] sm:$0xf]
        %v265 = vld [vmem:[#allocation2 + $0x14] sm:$0xf]
        %v266 = vld [vmem:[#allocation2 + $0x18] sm:$0xf]
        %v267 = vld [vmem:[#allocation2 + $0x1c] sm:$0xf]
        %v268 = vld [vmem:[%s2] sm:$0x1]
        %v270 = vperm.slane %v268, 0
        %v304 = vunpack.c.l.b16 %v228
        %v305 = vunpack.c.l.b16 %v229
        %v306 = vunpack.c.l.b16 %v230
        %v307 = vunpack.c.l.b16 %v231
        %v308 = vunpack.c.l.b16 %v232
        %v309 = vunpack.c.l.b16 %v233
        %v310 = vunpack.c.l.b16 %v234
        %v311 = vunpack.c.l.b16 %v235
        %v312 = vunpack.c.l.b16 %v236
        %v313 = vunpack.c.l.b16 %v237
        %v314 = vunpack.c.l.b16 %v238
        %v315 = vunpack.c.l.b16 %v239
        %v316 = vunpack.c.l.b16 %v240
        %v317 = vunpack.c.l.b16 %v241
        %v318 = vunpack.c.l.b16 %v242
        %v319 = vunpack.c.l.b16 %v243
        %v320 = vunpack.c.l.b16 %v244
        %v321 = vunpack.c.l.b16 %v245
        %v322 = vunpack.c.l.b16 %v246
        %v323 = vunpack.c.l.b16 %v247
        %v324 = vunpack.c.l.b16 %v248
        %v325 = vunpack.c.l.b16 %v249
        %v326 = vunpack.c.l.b16 %v250
        %v327 = vunpack.c.l.b16 %v251
        %v328 = vunpack.c.l.b16 %v252
        %v329 = vunpack.c.l.b16 %v253
        %v330 = vunpack.c.l.b16 %v254
        %v331 = vunpack.c.l.b16 %v255
        %v332 = vunpack.c.l.b16 %v256
        %v333 = vunpack.c.l.b16 %v257
        %v334 = vunpack.c.l.b16 %v258
        %v335 = vunpack.c.l.b16 %v259
        %v336 = vpack.c.b16 %v305, %v304
        %v337 = vpack.c.b16 %v307, %v306
        %v338 = vpack.c.b16 %v309, %v308
        %v339 = vpack.c.b16 %v311, %v310
        %v340 = vpack.c.b16 %v313, %v312
        %v341 = vpack.c.b16 %v315, %v314
        %v342 = vpack.c.b16 %v317, %v316
        %v343 = vpack.c.b16 %v319, %v318
        %v344 = vpack.c.b16 %v321, %v320
        %v345 = vpack.c.b16 %v323, %v322
        %v346 = vpack.c.b16 %v325, %v324
        %v347 = vpack.c.b16 %v327, %v326
        %v348 = vpack.c.b16 %v329, %v328
        %v349 = vpack.c.b16 %v331, %v330
        %v350 = vpack.c.b16 %v333, %v332
        %v351 = vpack.c.b16 %v335, %v334
        %v360 = vunpack.c.l.b16 %v260
        %v361 = vunpack.c.l.b16 %v261
        %v362 = vunpack.c.l.b16 %v262
        %v363 = vunpack.c.l.b16 %v263
        %v364 = vunpack.c.l.b16 %v264
        %v365 = vunpack.c.l.b16 %v265
        %v366 = vunpack.c.l.b16 %v266
        %v367 = vunpack.c.l.b16 %v267
        %v368 = vpack.c.b16 %v361, %v360
        %v369 = vpack.c.b16 %v363, %v362
        %v370 = vpack.c.b16 %v365, %v364
        %v371 = vpack.c.b16 %v367, %v366
        %vm376 = vcmask 523264
        %v378 = vsel %vm376, %v336, 0
        %v381 = vsel %vm376, %v337, 0
        %v384 = vsel %vm376, %v338, 0
        %v387 = vsel %vm376, %v339, 0
        %v390 = vsel %vm376, %v340, 0
        %v393 = vsel %vm376, %v341, 0
        %v396 = vsel %vm376, %v342, 0
        %v399 = vsel %vm376, %v343, 0
        %v402 = vsel %vm376, %v344, 0
        %v405 = vsel %vm376, %v345, 0
        %v408 = vsel %vm376, %v346, 0
        %v411 = vsel %vm376, %v347, 0
        %v414 = vsel %vm376, %v348, 0
        %v417 = vsel %vm376, %v349, 0
        %v420 = vsel %vm376, %v350, 0
        %v423 = vsel %vm376, %v351, 0
        %425 = vmatpush.bf16.msra.mxu0 0
        %426 = vmatpush.bf16.msra.mxu0 0
        %427 = vmatpush.bf16.msra.mxu0 0
        %428 = vmatpush.bf16.msra.mxu0 0
        %429 = vmatpush.bf16.msra.mxu0 %v371
        %430 = vmatpush.bf16.msra.mxu0 %v370
        %431 = vmatpush.bf16.msra.mxu0 %v369
        %432 = vmatpush.bf16.msra.mxu0 %v368
        %433 = vmatmul.bf16.gmra.mxu0 %v378
        %v434 = vpop.f32.mrf.mxu0
        %v435 = vadd.f32 %v270, %v434
        %v436 = vpop.f32.mrf.mxu0
        %v437 = vadd.f32 %v270, %v436
        %438 = vmatmul.bf16.gmra.mxu0 %v381
        %v439 = vpop.f32.mrf.mxu0
        %v440 = vadd.f32 %v270, %v439
        %v441 = vpop.f32.mrf.mxu0
        %v442 = vadd.f32 %v270, %v441
        %443 = vmatmul.bf16.gmra.mxu0 %v384
        %v444 = vpop.f32.mrf.mxu0
        %v445 = vadd.f32 %v270, %v444
        %v446 = vpop.f32.mrf.mxu0
        %v447 = vadd.f32 %v270, %v446
        %448 = vmatmul.bf16.gmra.mxu0 %v387
        %v449 = vpop.f32.mrf.mxu0
        %v450 = vadd.f32 %v270, %v449
        %v451 = vpop.f32.mrf.mxu0
        %v452 = vadd.f32 %v270, %v451
        %453 = vmatmul.bf16.gmra.mxu0 %v390
        %v454 = vpop.f32.mrf.mxu0
        %v455 = vadd.f32 %v270, %v454
        %v456 = vpop.f32.mrf.mxu0
        %v457 = vadd.f32 %v270, %v456
        %458 = vmatmul.bf16.gmra.mxu0 %v393
        %v459 = vpop.f32.mrf.mxu0
        %v460 = vadd.f32 %v270, %v459
        %v461 = vpop.f32.mrf.mxu0
        %v462 = vadd.f32 %v270, %v461
        %463 = vmatmul.bf16.gmra.mxu0 %v396
        %v464 = vpop.f32.mrf.mxu0
        %v465 = vadd.f32 %v270, %v464
        %v466 = vpop.f32.mrf.mxu0
        %v467 = vadd.f32 %v270, %v466
        %468 = vmatmul.bf16.gmra.mxu0 %v399
        %v469 = vpop.f32.mrf.mxu0
        %v470 = vadd.f32 %v270, %v469
        %v471 = vpop.f32.mrf.mxu0
        %v472 = vadd.f32 %v270, %v471
        %473 = vmatmul.bf16.gmra.mxu0 %v402
        %v474 = vpop.f32.mrf.mxu0
        %v475 = vadd.f32 %v270, %v474
        %v476 = vpop.f32.mrf.mxu0
        %v477 = vadd.f32 %v270, %v476
        %478 = vmatmul.bf16.gmra.mxu0 %v405
        %v479 = vpop.f32.mrf.mxu0
        %v480 = vadd.f32 %v270, %v479
        %v481 = vpop.f32.mrf.mxu0
        %v482 = vadd.f32 %v270, %v481
        %483 = vmatmul.bf16.gmra.mxu0 %v408
        %v484 = vpop.f32.mrf.mxu0
        %v485 = vadd.f32 %v270, %v484
        %v486 = vpop.f32.mrf.mxu0
        %v487 = vadd.f32 %v270, %v486
        %488 = vmatmul.bf16.gmra.mxu0 %v411
        %v489 = vpop.f32.mrf.mxu0
        %v490 = vadd.f32 %v270, %v489
        %v491 = vpop.f32.mrf.mxu0
        %v492 = vadd.f32 %v270, %v491
        %493 = vmatmul.bf16.gmra.mxu0 %v414
        %v494 = vpop.f32.mrf.mxu0
        %v495 = vadd.f32 %v270, %v494
        %v496 = vpop.f32.mrf.mxu0
        %v497 = vadd.f32 %v270, %v496
        %498 = vmatmul.bf16.gmra.mxu0 %v417
        %v499 = vpop.f32.mrf.mxu0
        %v500 = vadd.f32 %v270, %v499
        %v501 = vpop.f32.mrf.mxu0
        %v502 = vadd.f32 %v270, %v501
        %503 = vmatmul.bf16.gmra.mxu0 %v420
        %v504 = vpop.f32.mrf.mxu0
        %v505 = vadd.f32 %v270, %v504
        %v506 = vpop.f32.mrf.mxu0
        %v507 = vadd.f32 %v270, %v506
        %508 = vmatmul.bf16.gmra.mxu0 %v423
        %v509 = vpop.f32.mrf.mxu0
        %v510 = vadd.f32 %v270, %v509
        %v511 = vpop.f32.mrf.mxu0
        %v512 = vadd.f32 %v270, %v511
        %513 = vdwg.mxu0
        %v514 = vmax.f32 %v435, 0.0
        %v515 = vmax.f32 %v437, 0.0
        %v516 = vmax.f32 %v440, 0.0
        %v517 = vmax.f32 %v442, 0.0
        %v518 = vmax.f32 %v445, 0.0
        %v519 = vmax.f32 %v447, 0.0
        %v520 = vmax.f32 %v450, 0.0
        %v521 = vmax.f32 %v452, 0.0
        %v522 = vmax.f32 %v455, 0.0
        %v523 = vmax.f32 %v457, 0.0
        %v524 = vmax.f32 %v460, 0.0
        %v525 = vmax.f32 %v462, 0.0
        %v526 = vmax.f32 %v465, 0.0
        %v527 = vmax.f32 %v467, 0.0
        %v528 = vmax.f32 %v470, 0.0
        %v529 = vmax.f32 %v472, 0.0
        %v530 = vmax.f32 %v475, 0.0
        %v531 = vmax.f32 %v477, 0.0
        %v532 = vmax.f32 %v480, 0.0
        %v533 = vmax.f32 %v482, 0.0
        %v534 = vmax.f32 %v485, 0.0
        %v535 = vmax.f32 %v487, 0.0
        %v536 = vmax.f32 %v490, 0.0
        %v537 = vmax.f32 %v492, 0.0
        %v538 = vmax.f32 %v495, 0.0
        %v539 = vmax.f32 %v497, 0.0
        %v540 = vmax.f32 %v500, 0.0
        %v541 = vmax.f32 %v502, 0.0
        %v542 = vmax.f32 %v505, 0.0
        %v543 = vmax.f32 %v507, 0.0
        %v544 = vmax.f32 %v510, 0.0
        %v545 = vmax.f32 %v512, 0.0
        %v546 = vpack.c.bf16 %v514, %v514
        %v547 = vpack.c.bf16 %v515, %v515
        %v548 = vpack.c.bf16 %v516, %v516
        %v549 = vpack.c.bf16 %v517, %v517
        %v550 = vpack.c.bf16 %v518, %v518
        %v551 = vpack.c.bf16 %v519, %v519
        %v552 = vpack.c.bf16 %v520, %v520
        %v553 = vpack.c.bf16 %v521, %v521
        %v554 = vpack.c.bf16 %v522, %v522
        %v555 = vpack.c.bf16 %v523, %v523
        %v556 = vpack.c.bf16 %v524, %v524
        %v557 = vpack.c.bf16 %v525, %v525
        %v558 = vpack.c.bf16 %v526, %v526
        %v559 = vpack.c.bf16 %v527, %v527
        %v560 = vpack.c.bf16 %v528, %v528
        %v561 = vpack.c.bf16 %v529, %v529
        %v562 = vpack.c.bf16 %v530, %v530
        %v563 = vpack.c.bf16 %v531, %v531
        %v564 = vpack.c.bf16 %v532, %v532
        %v565 = vpack.c.bf16 %v533, %v533
        %v566 = vpack.c.bf16 %v534, %v534
        %v567 = vpack.c.bf16 %v535, %v535
        %v568 = vpack.c.bf16 %v536, %v536
        %v569 = vpack.c.bf16 %v537, %v537
        %v570 = vpack.c.bf16 %v538, %v538
        %v571 = vpack.c.bf16 %v539, %v539
        %v572 = vpack.c.bf16 %v540, %v540
        %v573 = vpack.c.bf16 %v541, %v541
        %v574 = vpack.c.bf16 %v542, %v542
        %v575 = vpack.c.bf16 %v543, %v543
        %v576 = vpack.c.bf16 %v544, %v544
        %v577 = vpack.c.bf16 %v545, %v545
        %578 = vst [vmem:[%s225] sm:$0xf] %v546
        %579 = vst [vmem:[%s225 + $0x4] sm:$0xf] %v547
        %580 = vst [vmem:[%s225 + $0x8] sm:$0xf] %v548
        %581 = vst [vmem:[%s225 + $0xc] sm:$0xf] %v549
        %582 = vst [vmem:[%s225 + $0x10] sm:$0xf] %v550
        %583 = vst [vmem:[%s225 + $0x14] sm:$0xf] %v551
        %584 = vst [vmem:[%s225 + $0x18] sm:$0xf] %v552
        %585 = vst [vmem:[%s225 + $0x1c] sm:$0xf] %v553
        %586 = vst [vmem:[%s225 + $0x20] sm:$0xf] %v554
        %587 = vst [vmem:[%s225 + $0x24] sm:$0xf] %v555
        %588 = vst [vmem:[%s225 + $0x28] sm:$0xf] %v556
        %589 = vst [vmem:[%s225 + $0x2c] sm:$0xf] %v557
        %590 = vst [vmem:[%s225 + $0x30] sm:$0xf] %v558
        %591 = vst [vmem:[%s225 + $0x34] sm:$0xf] %v559
        %592 = vst [vmem:[%s225 + $0x38] sm:$0xf] %v560
        %593 = vst [vmem:[%s225 + $0x3c] sm:$0xf] %v561
        %594 = vst [vmem:[%s225 + $0x40] sm:$0xf] %v562
        %595 = vst [vmem:[%s225 + $0x44] sm:$0xf] %v563
        %596 = vst [vmem:[%s225 + $0x48] sm:$0xf] %v564
        %597 = vst [vmem:[%s225 + $0x4c] sm:$0xf] %v565
        %598 = vst [vmem:[%s225 + $0x50] sm:$0xf] %v566
        %599 = vst [vmem:[%s225 + $0x54] sm:$0xf] %v567
        %600 = vst [vmem:[%s225 + $0x58] sm:$0xf] %v568
        %601 = vst [vmem:[%s225 + $0x5c] sm:$0xf] %v569
        %602 = vst [vmem:[%s225 + $0x60] sm:$0xf] %v570
        %603 = vst [vmem:[%s225 + $0x64] sm:$0xf] %v571
        %604 = vst [vmem:[%s225 + $0x68] sm:$0xf] %v572
        %605 = vst [vmem:[%s225 + $0x6c] sm:$0xf] %v573
        %606 = vst [vmem:[%s225 + $0x70] sm:$0xf] %v574
        %607 = vst [vmem:[%s225 + $0x74] sm:$0xf] %v575
        %608 = vst [vmem:[%s225 + $0x78] sm:$0xf] %v576
        %609 = vst [vmem:[%s225 + $0x7c] sm:$0xf] %v577
        %s610 = smul.u32 32, %s20
        %p611 = scmp.lt.s32.totalorder %s19, 1
        %s612 = scalar_select %p611, %s19, 1
        %p613 = scmp.lt.s32.totalorder %s610, 31
        %s614 = scalar_select %p613, %s610, 31
        %s615 = smul.addr %s612, 32
        %s616 = sadd.s32 %s614, %s615
        %s617 = smul.addr %s616, 4
        %s618 = scalar_lea.vmem %s3, %s617
        // Predicated region
        $region37: #{_lambda_.4} parent=31 // pred_check
          %p619 = pneg %p117
        $region38: #{_lambda_.4} parent=31 // pred_check_branch
          %621 = sbr.rel (%p619) target = $region40
        $region39: #{_lambda_.4} parent=31 // pred_region
          %s622 = smul.u32 32, %s20
        $region40: #{_lambda_.4} parent=31 // pred_fallthru
          _
      $region32: #{_lambda_.4} parent=5 // pred_fallthru
        _
      %p623 = scmp.le.s32.totalorder 2, %s10
      // Predicated region
      $region41: #{_lambda_.4} parent=5 // pred_check
        %p624 = pneg %p623
      $region42: #{_lambda_.4} parent=5 // pred_check_branch
        %626 = sbr.rel (%p624) target = $region44
      $region43: #{_lambda_.4} parent=5 // pred_region
        %s627 = ssub.s32 %s10, 2
        // Predicated region
        $region45: #{_lambda_.4} parent=43 // pred_check
          %p628 = pneg %p123
        $region46: #{_lambda_.4} parent=43 // pred_check_branch
          %630 = sbr.rel (%p628) target = $region48
        $region47: #{_lambda_.4} parent=43 // pred_region
          %s631 = smul.u32 32, %s22
          %p632 = scmp.lt.s32.totalorder %s21, 1
          %s633 = scalar_select %p632, %s21, 1
          %p634 = scmp.lt.s32.totalorder %s631, 31
          %s635 = scalar_select %p634, %s631, 31
          %s636 = smul.addr %s633, 32
          %s637 = sadd.s32 %s635, %s636
          %s638 = smul.addr %s637, 4
          %s639 = scalar_lea.vmem %s3, %s638
        $region48: #{_lambda_.4} parent=43 // pred_fallthru
          _
      $region44: #{_lambda_.4} parent=5 // pred_fallthru
        _
    $region6: #{_lambda_.4} parent=1 // loop_footer
      %s14 = sadd.s32 1, %s10
    $region7: #{_lambda_.4} parent=1 // loop_footer_branch
      %9 = sbr.rel target = $region3
    $region8: #{_lambda_.4} parent=1 // loop_exit
      _
    %640 = vsyncpa [#allocation3], 1
    %s641 = scalar_lea.sflag [#allocation3], 1
    %642 = vsyncpa %s641, 1

// kernel: _lambda_.6
$region0: #{_lambda_.6}
  #allocation0 [shape = 'u32[]', space=smem, size = 0x4, offset = 0x4, fixed_abs, tag = 'smem constant byte address 0x4 - core index']
  #allocation1 [shape = 'u32[72,128]{1,0:T(1,128)}', space=vmem, size = 0x9000, scoped, tag = 'internal scratch']
  %s0 = inlined_call_operand.vmem [shape: f32[2,128], index: 0, kind: input, shape index: {}]
  %s1 = inlined_call_operand.vmem [shape: f32[128,32], index: 1, kind: input, shape index: {}]
  %s2 = inlined_call_operand.vmem [shape: f32[1,32], index: 2, kind: input, shape index: {}]
  %s3 = inlined_call_operand.vmem [shape: f32[32,128], index: 3, kind: input, shape index: {}]
  %s4 = inlined_call_operand.vmem [shape: f32[1,128], index: 4, kind: input, shape index: {}]
  %s5 = inlined_call_operand.vmem [shape: f32[32,128], index: 5, kind: input, shape index: {}]
  %s6 = inlined_call_operand.vmem [shape: f32[1,128], index: 6, kind: input, shape index: {}]
  %s7 = inlined_call_operand.vmem [shape: f32[2,128], index: 7, kind: output, shape index: {0}]
  %s8 = inlined_call_operand.vmem [shape: f32[2,128], index: 8, kind: output, shape index: {1}]
  %9 = xla_tuple %s7, %s8
  %s10 = sld [smem:[#allocation0]]
  $region46: #{_lambda_.6} parent=0
    _
  %s12 = ssub.s32 1, %s10
  %s13 = scalar_select 0, %s12, %s10
  // Predicated region
  $region2: #{_lambda_.6} parent=0 // pred_check
    _
  $region3: #{_lambda_.6} parent=0 // pred_check_branch
    %15 = sbr.rel (0) target = $region5
  $region4: #{_lambda_.6} parent=0 // pred_region
    _
  $region5: #{_lambda_.6} parent=0 // pred_fallthru
    _
  // Predicated region
  $region6: #{_lambda_.6} parent=0 // pred_check
    _
  $region7: #{_lambda_.6} parent=0 // pred_check_branch
    %17 = sbr.rel (0) target = $region9
  $region8: #{_lambda_.6} parent=0 // pred_region
    _
  $region9: #{_lambda_.6} parent=0 // pred_fallthru
    _
  // Predicated region
  $region10: #{_lambda_.6} parent=0 // pred_check
    _
  $region11: #{_lambda_.6} parent=0 // pred_check_branch
    %19 = sbr.rel (0) target = $region13
  $region12: #{_lambda_.6} parent=0 // pred_region
    _
  $region13: #{_lambda_.6} parent=0 // pred_fallthru
    _
  // Predicated region
  $region14: #{_lambda_.6} parent=0 // pred_check
    _
  $region15: #{_lambda_.6} parent=0 // pred_check_branch
    %21 = sbr.rel (0) target = $region17
  $region16: #{_lambda_.6} parent=0 // pred_region
    _
  $region17: #{_lambda_.6} parent=0 // pred_fallthru
    _
  // Predicated region
  $region18: #{_lambda_.6} parent=0 // pred_check
    _
  $region19: #{_lambda_.6} parent=0 // pred_check_branch
    %23 = sbr.rel (0) target = $region21
  $region20: #{_lambda_.6} parent=0 // pred_region
    _
  $region21: #{_lambda_.6} parent=0 // pred_fallthru
    _
  // Predicated region
  $region22: #{_lambda_.6} parent=0 // pred_check
    _
  $region23: #{_lambda_.6} parent=0 // pred_check_branch
    %25 = sbr.rel (0) target = $region25
  $region24: #{_lambda_.6} parent=0 // pred_region
    _
  $region25: #{_lambda_.6} parent=0 // pred_fallthru
    _
  // Predicated region
  $region26: #{_lambda_.6} parent=0 // pred_check
    _
  $region27: #{_lambda_.6} parent=0 // pred_check_branch
    %27 = sbr.rel (0) target = $region29
  $region28: #{_lambda_.6} parent=0 // pred_region
    _
  $region29: #{_lambda_.6} parent=0 // pred_fallthru
    _
  %v28 = vld [vmem:[%s0] sm:$0x3]
  %v29 = vld [vmem:[%s1] sm:$0xff]
  %v30 = vld [vmem:[%s1 + $0x8] sm:$0xff]
  %v31 = vld [vmem:[%s1 + $0x10] sm:$0xff]
  %v32 = vld [vmem:[%s1 + $0x18] sm:$0xff]
  %v33 = vld [vmem:[%s1 + $0x20] sm:$0xff]
  %v34 = vld [vmem:[%s1 + $0x28] sm:$0xff]
  %v35 = vld [vmem:[%s1 + $0x30] sm:$0xff]
  %v36 = vld [vmem:[%s1 + $0x38] sm:$0xff]
  %v37 = vld [vmem:[%s1 + $0x40] sm:$0xff]
  %v38 = vld [vmem:[%s1 + $0x48] sm:$0xff]
  %v39 = vld [vmem:[%s1 + $0x50] sm:$0xff]
  %v40 = vld [vmem:[%s1 + $0x58] sm:$0xff]
  %v41 = vld [vmem:[%s1 + $0x60] sm:$0xff]
  %v42 = vld [vmem:[%s1 + $0x68] sm:$0xff]
  %v43 = vld [vmem:[%s1 + $0x70] sm:$0xff]
  %v44 = vld [vmem:[%s1 + $0x78] sm:$0xff]
  %v45 = vld [vmem:[%s2] sm:$0x1]
  %v47 = vperm.slane %v45, 0
  %49 = vmatpush.msra.mxu0 %v44
  %50 = vmatpush.msra.mxu0 %v43
  %51 = vmatpush.msra.mxu0 %v42
  %52 = vmatpush.msra.mxu0 %v41
  %53 = vmatpush.msra.mxu0 %v40
  %54 = vmatpush.msra.mxu0 %v39
  %55 = vmatpush.msra.mxu0 %v38
  %56 = vmatpush.msra.mxu0 %v37
  %57 = vmatpush.msra.mxu0 %v36
  %58 = vmatpush.msra.mxu0 %v35
  %59 = vmatpush.msra.mxu0 %v34
  %60 = vmatpush.msra.mxu0 %v33
  %61 = vmatpush.msra.mxu0 %v32
  %62 = vmatpush.msra.mxu0 %v31
  %63 = vmatpush.msra.mxu0 %v30
  %64 = vmatpush.msra.mxu0 %v29
  %65 = vmatmul.f32.gmra.mxu0 %v28
  %v66 = vpop.f32.mrf.mxu0
  %v67 = vadd.f32 %v47, %v66
  %68 = vdwg.mxu0
  %v69 = vld [vmem:[%s3] sm:$0xff]
  %v70 = vld [vmem:[%s3 + $0x8] sm:$0xff]
  %v71 = vld [vmem:[%s3 + $0x10] sm:$0xff]
  %v72 = vld [vmem:[%s3 + $0x18] sm:$0xff]
  %v73 = vld [vmem:[%s4] sm:$0x1]
  %v75 = vperm.slane %v73, 0
  %vm77 = vcmask 261120
  %v79 = vsel %vm77, %v67, 0
  %81 = vmatpush.msra.mxu0 0.0
  %82 = vmatpush.msra.mxu0 0.0
  %83 = vmatpush.msra.mxu0 0.0
  %84 = vmatpush.msra.mxu0 0.0
  %85 = vmatpush.msra.mxu0 0.0
  %86 = vmatpush.msra.mxu0 0.0
  %87 = vmatpush.msra.mxu0 0.0
  %88 = vmatpush.msra.mxu0 0.0
  %89 = vmatpush.msra.mxu0 0.0
  %90 = vmatpush.msra.mxu0 0.0
  %91 = vmatpush.msra.mxu0 0.0
  %92 = vmatpush.msra.mxu0 0.0
  %93 = vmatpush.msra.mxu0 %v72
  %94 = vmatpush.msra.mxu0 %v71
  %95 = vmatpush.msra.mxu0 %v70
  %96 = vmatpush.msra.mxu0 %v69
  %97 = vmatmul.f32.gmra.mxu0 %v79
  %v98 = vpop.f32.mrf.mxu0
  %v99 = vadd.f32 %v75, %v98
  %100 = vdwg.mxu0
  %v101 = vld [vmem:[%s5] sm:$0xff]
  %v102 = vld [vmem:[%s5 + $0x8] sm:$0xff]
  %v103 = vld [vmem:[%s5 + $0x10] sm:$0xff]
  %v104 = vld [vmem:[%s5 + $0x18] sm:$0xff]
  %v105 = vld [vmem:[%s6] sm:$0x1]
  %v107 = vperm.slane %v105, 0
  %109 = vmatpush.msra.mxu0 0.0
  %110 = vmatpush.msra.mxu0 0.0
  %111 = vmatpush.msra.mxu0 0.0
  %112 = vmatpush.msra.mxu0 0.0
  %113 = vmatpush.msra.mxu0 0.0
  %114 = vmatpush.msra.mxu0 0.0
  %115 = vmatpush.msra.mxu0 0.0
  %116 = vmatpush.msra.mxu0 0.0
  %117 = vmatpush.msra.mxu0 0.0
  %118 = vmatpush.msra.mxu0 0.0
  %119 = vmatpush.msra.mxu0 0.0
  %120 = vmatpush.msra.mxu0 0.0
  %121 = vmatpush.msra.mxu0 %v104
  %122 = vmatpush.msra.mxu0 %v103
  %123 = vmatpush.msra.mxu0 %v102
  %124 = vmatpush.msra.mxu0 %v101
  %125 = vmatmul.f32.gmra.mxu0 %v79
  %v126 = vpop.f32.mrf.mxu0
  %v127 = vadd.f32 %v107, %v126
  %128 = vdwg.mxu0
  %v129 = vmax.f32 %v99, %v127
  %v130 = vsub.f32 %v99, %v129
  %v131 = vmul.f32 %v130, 1.442695
  %v132 = vpow.pop %v131
  %v133 = vsub.f32 %v127, %v129
  %v134 = vmul.f32 %v133, 1.442695
  %v135 = vpow.pop %v134
  %v136 = vadd.f32 %v132, %v135
  %v137 = vrcp.pop %v136
  %v138 = vmul.f32 %v132, %v137
  %139 = vst [vmem:[%s7] sm:$0x3] %v138
  %v140 = vmul.f32 %v135, %v137
  %141 = vst [vmem:[%s8] sm:$0x3] %v140
  // Predicated region
  $region30: #{_lambda_.6} parent=0 // pred_check
    _
  $region31: #{_lambda_.6} parent=0 // pred_check_branch
    %143 = sbr.rel (0) target = $region33
  $region32: #{_lambda_.6} parent=0 // pred_region
    _
  $region33: #{_lambda_.6} parent=0 // pred_fallthru
    _
  // Predicated region
  $region34: #{_lambda_.6} parent=0 // pred_check
    _
  $region35: #{_lambda_.6} parent=0 // pred_check_branch
    %145 = sbr.rel (0) target = $region37
  $region36: #{_lambda_.6} parent=0 // pred_region
    _
  $region37: #{_lambda_.6} parent=0 // pred_fallthru
    _
  // Predicated region
  $region38: #{_lambda_.6} parent=0 // pred_check
    _
  $region39: #{_lambda_.6} parent=0 // pred_check_branch
    %147 = sbr.rel (0) target = $region41
  $region40: #{_lambda_.6} parent=0 // pred_region
    _
  $region41: #{_lambda_.6} parent=0 // pred_fallthru
    _
  // Predicated region
  $region42: #{_lambda_.6} parent=0 // pred_check
    _
  $region43: #{_lambda_.6} parent=0 // pred_check_branch
    %149 = sbr.rel (0) target = $region45
  $region44: #{_lambda_.6} parent=0 // pred_region
    _
  $region45: #{_lambda_.6} parent=0 // pred_fallthru
    _

// kernel: _lambda_.7
$region0: #{_lambda_.7}
  #allocation0 [shape = 'u32[]', space=smem, size = 0x4, offset = 0x4, fixed_abs, tag = 'smem constant byte address 0x4 - core index']
  #allocation1 [shape = 'u32[72,128]{1,0:T(1,128)}', space=vmem, size = 0x9000, scoped, tag = 'internal scratch']
  %s0 = inlined_call_operand.vmem [shape: bf16[2,256,128], index: 0, kind: input, shape index: {}]
  %s1 = inlined_call_operand.vmem [shape: bf16[2,256,128], index: 1, kind: input, shape index: {}]
  %s2 = inlined_call_operand.vmem [shape: f32[2,1,128], index: 2, kind: input, shape index: {}]
  %s3 = inlined_call_operand.vmem [shape: f32[2,1,128], index: 3, kind: input, shape index: {}]
  %s4 = inlined_call_operand.vmem [shape: bf16[2,256,64], index: 4, kind: input, shape index: {}]
  %s5 = inlined_call_operand.vmem [shape: bf16[128,256], index: 5, kind: input, shape index: {}]
  %s6 = inlined_call_operand.vmem [shape: f32[1,256], index: 6, kind: input, shape index: {}, may-alias: {6,8}]
  %s7 = inlined_call_operand.vmem [shape: bf16[64,256], index: 7, kind: input, shape index: {}]
  %s8 = inlined_call_operand.vmem [shape: f32[1,256], index: 8, kind: input, shape index: {}, may-alias: {6,8}]
  %s9 = inlined_call_operand.hbm [shape: f32[2,256,256], index: 9, kind: output, shape index: {}]
  %s10 = sld [smem:[#allocation0]]
  $region69: #{_lambda_.7} parent=0
    _
  %s12 = ssub.s32 1, %s10
  %s13 = scalar_select 0, %s12, %s10
  $region1: #{_lambda_.7} parent=0
    #allocation2 [shape = 'u8[524288]{0}', space=vmem, size = 0x80000, scoped, tag = 'output window, operand 0']
    #allocation3 [shape = 's32[2]{0}', space=sflag, size = 0x8, scoped, tag = 'scoped memory for _lambda_.7']
    %14 = vsyncpa [#allocation3], 0
    %s15 = scalar_lea.sflag [#allocation3], 1
    %16 = vsyncpa %s15, 0
    loop: start=0, step=1, limit=4
    $region2: #{_lambda_.7} parent=1 // loop_pre_header
      _
    $region3: #{_lambda_.7} parent=1 // loop_header
      %s18 = sphi 0, %s22
      %p19 = scmp.ge.s32.totalorder %s18, 4
      %s25 = sphi 0, %s37
      %s26 = sphi 0, %s33
      %s27 = sphi 0, %s25
      %s28 = sphi 0, %s26
      %s29 = sphi 0, %s27
      %s30 = sphi 0, %s28
      %s42 = sphi 0, %s44
      %s45 = sphi 0, %s42
      %s46 = sphi 0, %s45
      %s62 = sphi 0, %s46
      %s70 = sphi 0, %s72
      %s73 = sphi 0, %s70
      %s74 = sphi 0, %s73
      %s90 = sphi 0, %s74
      %s96 = sphi 0, %s98
      %s99 = sphi 0, %s96
      %s100 = sphi 0, %s99
      %s116 = sphi 0, %s100
      %s122 = sphi 0, %s124
      %s125 = sphi 0, %s122
      %s126 = sphi 0, %s125
      %s142 = sphi 0, %s126
      %s150 = sphi 0, %s152
      %s153 = sphi 0, %s150
      %s154 = sphi 0, %s153
      %s170 = sphi 0, %s154
      %s174 = sphi 0, %s174
      %s176 = sphi 0, %s174
      %s177 = sphi 0, %s176
      %s191 = sphi 0, %s177
      %s195 = sphi 0, %s195
      %s197 = sphi 0, %s195
      %s198 = sphi 0, %s197
      %s212 = sphi 0, %s198
      %s216 = sphi 0, %s216
      %s218 = sphi 0, %s216
      %s219 = sphi 0, %s218
      %s233 = sphi 0, %s219
      %s237 = sphi 0, %s237
      %s239 = sphi 0, %s237
      %s240 = sphi 0, %s239
      %s254 = sphi 0, %s240
      %s262 = sphi 0, %s264
      %s265 = sphi 0, %s262
      %s266 = sphi 0, %s265
      %s282 = sphi 0, %s266
    $region4: #{_lambda_.7} parent=1 // loop_header_branch
      %21 = sbr.rel (%p19) target = $region8
    $region5: #{_lambda_.7} parent=1 // loop_body
      %s23 = ssub.s32 %s18, 1
      %s24 = ssub.s32 %s18, 2
      %s31 = sadd.s32 1, %s26
      %p32 = scmp.ge.s32.totalorder %s31, 1
      %s33 = scalar_select %p32, 0, %s31
      %s34 = sadd.s32 1, %s25
      %s35 = scalar_select %p32, %s34, %s25
      %p36 = scmp.ge.s32.totalorder %s35, 2
      %s37 = scalar_select %p36, 0, %s35
      %s38 = ssub.s32 %s25, %s37
      %s39 = ssub.s32 %s26, %s33
      %s40 = sor.u32 %s38, %s39
      %p41 = scmp.eq.s32.totalorder %s40, 0
      %s43 = sadd.s32 %s42, 1
      %s44 = scalar_select %p41, %s42, %s43
      %p47 = pneg %p41
      %p48 = scmp.eq.s32.totalorder %s18, 1
      %p49 = por %p47, %p48
      %p50 = scmp.ne.s32.totalorder %s42, %s45
      %p51 = scmp.eq.s32.totalorder %s18, 0
      %p52 = por %p50, %p51
      %p53 = scmp.ne.s32.totalorder %s42, %s45
      %p54 = scmp.eq.s32.totalorder %s23, 1
      %p55 = por %p53, %p54
      %p56 = scmp.ne.s32.totalorder %s45, %s46
      %p57 = scmp.eq.s32.totalorder %s23, 0
      %p58 = por %p56, %p57
      %p59 = scmp.ne.s32.totalorder %s45, %s46
      %p60 = scmp.eq.s32.totalorder %s24, 1
      %p61 = por %p59, %p60
      %p63 = scmp.ne.s32.totalorder %s46, %s62
      %p64 = scmp.eq.s32.totalorder %s24, 0
      %p65 = por %p63, %p64
      %s66 = ssub.s32 %s25, %s37
      %s67 = ssub.s32 %s26, %s33
      %s68 = sor.u32 %s66, %s67
      %p69 = scmp.eq.s32.totalorder %s68, 0
      %s71 = sadd.s32 %s70, 1
      %s72 = scalar_select %p69, %s70, %s71
      %p75 = pneg %p69
      %p76 = scmp.eq.s32.totalorder %s18, 1
      %p77 = por %p75, %p76
      %p78 = scmp.ne.s32.totalorder %s70, %s73
      %p79 = scmp.eq.s32.totalorder %s18, 0
      %p80 = por %p78, %p79
      %p81 = scmp.ne.s32.totalorder %s70, %s73
      %p82 = scmp.eq.s32.totalorder %s23, 1
      %p83 = por %p81, %p82
      %p84 = scmp.ne.s32.totalorder %s73, %s74
      %p85 = scmp.eq.s32.totalorder %s23, 0
      %p86 = por %p84, %p85
      %p87 = scmp.ne.s32.totalorder %s73, %s74
      %p88 = scmp.eq.s32.totalorder %s24, 1
      %p89 = por %p87, %p88
      %p91 = scmp.ne.s32.totalorder %s74, %s90
      %p92 = scmp.eq.s32.totalorder %s24, 0
      %p93 = por %p91, %p92
      %s94 = ssub.s32 %s25, %s37
      %p95 = scmp.eq.s32.totalorder %s94, 0
      %s97 = sadd.s32 %s96, 1
      %s98 = scalar_select %p95, %s96, %s97
      %p101 = pneg %p95
      %p102 = scmp.eq.s32.totalorder %s18, 1
      %p103 = por %p101, %p102
      %p104 = scmp.ne.s32.totalorder %s96, %s99
      %p105 = scmp.eq.s32.totalorder %s18, 0
      %p106 = por %p104, %p105
      %p107 = scmp.ne.s32.totalorder %s96, %s99
      %p108 = scmp.eq.s32.totalorder %s23, 1
      %p109 = por %p107, %p108
      %p110 = scmp.ne.s32.totalorder %s99, %s100
      %p111 = scmp.eq.s32.totalorder %s23, 0
      %p112 = por %p110, %p111
      %p113 = scmp.ne.s32.totalorder %s99, %s100
      %p114 = scmp.eq.s32.totalorder %s24, 1
      %p115 = por %p113, %p114
      %p117 = scmp.ne.s32.totalorder %s100, %s116
      %p118 = scmp.eq.s32.totalorder %s24, 0
      %p119 = por %p117, %p118
      %s120 = ssub.s32 %s25, %s37
      %p121 = scmp.eq.s32.totalorder %s120, 0
      %s123 = sadd.s32 %s122, 1
      %s124 = scalar_select %p121, %s122, %s123
      %p127 = pneg %p121
      %p128 = scmp.eq.s32.totalorder %s18, 1
      %p129 = por %p127, %p128
      %p130 = scmp.ne.s32.totalorder %s122, %s125
      %p131 = scmp.eq.s32.totalorder %s18, 0
      %p132 = por %p130, %p131
      %p133 = scmp.ne.s32.totalorder %s122, %s125
      %p134 = scmp.eq.s32.totalorder %s23, 1
      %p135 = por %p133, %p134
      %p136 = scmp.ne.s32.totalorder %s125, %s126
      %p137 = scmp.eq.s32.totalorder %s23, 0
      %p138 = por %p136, %p137
      %p139 = scmp.ne.s32.totalorder %s125, %s126
      %p140 = scmp.eq.s32.totalorder %s24, 1
      %p141 = por %p139, %p140
      %p143 = scmp.ne.s32.totalorder %s126, %s142
      %p144 = scmp.eq.s32.totalorder %s24, 0
      %p145 = por %p143, %p144
      %s146 = ssub.s32 %s25, %s37
      %s147 = ssub.s32 %s26, %s33
      %s148 = sor.u32 %s146, %s147
      %p149 = scmp.eq.s32.totalorder %s148, 0
      %s151 = sadd.s32 %s150, 1
      %s152 = scalar_select %p149, %s150, %s151
      %p155 = pneg %p149
      %p156 = scmp.eq.s32.totalorder %s18, 1
      %p157 = por %p155, %p156
      %p158 = scmp.ne.s32.totalorder %s150, %s153
      %p159 = scmp.eq.s32.totalorder %s18, 0
      %p160 = por %p158, %p159
      %p161 = scmp.ne.s32.totalorder %s150, %s153
      %p162 = scmp.eq.s32.totalorder %s23, 1
      %p163 = por %p161, %p162
      %p164 = scmp.ne.s32.totalorder %s153, %s154
      %p165 = scmp.eq.s32.totalorder %s23, 0
      %p166 = por %p164, %p165
      %p167 = scmp.ne.s32.totalorder %s153, %s154
      %p168 = scmp.eq.s32.totalorder %s24, 1
      %p169 = por %p167, %p168
      %p171 = scmp.ne.s32.totalorder %s154, %s170
      %p172 = scmp.eq.s32.totalorder %s24, 0
      %p173 = por %p171, %p172
      %s175 = sadd.s32 %s174, 1
      %p178 = scmp.eq.s32.totalorder %s18, 1
      %p179 = scmp.ne.s32.totalorder %s174, %s176
      %p180 = scmp.eq.s32.totalorder %s18, 0
      %p181 = por %p179, %p180
      %p182 = scmp.ne.s32.totalorder %s174, %s176
      %p183 = scmp.eq.s32.totalorder %s23, 1
      %p184 = por %p182, %p183
      %p185 = scmp.ne.s32.totalorder %s176, %s177
      %p186 = scmp.eq.s32.totalorder %s23, 0
      %p187 = por %p185, %p186
      %p188 = scmp.ne.s32.totalorder %s176, %s177
      %p189 = scmp.eq.s32.totalorder %s24, 1
      %p190 = por %p188, %p189
      %p192 = scmp.ne.s32.totalorder %s177, %s191
      %p193 = scmp.eq.s32.totalorder %s24, 0
      %p194 = por %p192, %p193
      %s196 = sadd.s32 %s195, 1
      %p199 = scmp.eq.s32.totalorder %s18, 1
      %p200 = scmp.ne.s32.totalorder %s195, %s197
      %p201 = scmp.eq.s32.totalorder %s18, 0
      %p202 = por %p200, %p201
      %p203 = scmp.ne.s32.totalorder %s195, %s197
      %p204 = scmp.eq.s32.totalorder %s23, 1
      %p205 = por %p203, %p204
      %p206 = scmp.ne.s32.totalorder %s197, %s198
      %p207 = scmp.eq.s32.totalorder %s23, 0
      %p208 = por %p206, %p207
      %p209 = scmp.ne.s32.totalorder %s197, %s198
      %p210 = scmp.eq.s32.totalorder %s24, 1
      %p211 = por %p209, %p210
      %p213 = scmp.ne.s32.totalorder %s198, %s212
      %p214 = scmp.eq.s32.totalorder %s24, 0
      %p215 = por %p213, %p214
      %s217 = sadd.s32 %s216, 1
      %p220 = scmp.eq.s32.totalorder %s18, 1
      %p221 = scmp.ne.s32.totalorder %s216, %s218
      %p222 = scmp.eq.s32.totalorder %s18, 0
      %p223 = por %p221, %p222
      %p224 = scmp.ne.s32.totalorder %s216, %s218
      %p225 = scmp.eq.s32.totalorder %s23, 1
      %p226 = por %p224, %p225
      %p227 = scmp.ne.s32.totalorder %s218, %s219
      %p228 = scmp.eq.s32.totalorder %s23, 0
      %p229 = por %p227, %p228
      %p230 = scmp.ne.s32.totalorder %s218, %s219
      %p231 = scmp.eq.s32.totalorder %s24, 1
      %p232 = por %p230, %p231
      %p234 = scmp.ne.s32.totalorder %s219, %s233
      %p235 = scmp.eq.s32.totalorder %s24, 0
      %p236 = por %p234, %p235
      %s238 = sadd.s32 %s237, 1
      %p241 = scmp.eq.s32.totalorder %s18, 1
      %p242 = scmp.ne.s32.totalorder %s237, %s239
      %p243 = scmp.eq.s32.totalorder %s18, 0
      %p244 = por %p242, %p243
      %p245 = scmp.ne.s32.totalorder %s237, %s239
      %p246 = scmp.eq.s32.totalorder %s23, 1
      %p247 = por %p245, %p246
      %p248 = scmp.ne.s32.totalorder %s239, %s240
      %p249 = scmp.eq.s32.totalorder %s23, 0
      %p250 = por %p248, %p249
      %p251 = scmp.ne.s32.totalorder %s239, %s240
      %p252 = scmp.eq.s32.totalorder %s24, 1
      %p253 = por %p251, %p252
      %p255 = scmp.ne.s32.totalorder %s240, %s254
      %p256 = scmp.eq.s32.totalorder %s24, 0
      %p257 = por %p255, %p256
      %s258 = ssub.s32 %s25, %s37
      %s259 = ssub.s32 %s26, %s33
      %s260 = sor.u32 %s258, %s259
      %p261 = scmp.eq.s32.totalorder %s260, 0
      %s263 = sadd.s32 %s262, 1
      %s264 = scalar_select %p261, %s262, %s263
      %p267 = pneg %p261
      %p268 = scmp.eq.s32.totalorder %s18, 1
      %p269 = por %p267, %p268
      %p270 = scmp.ne.s32.totalorder %s262, %s265
      %p271 = scmp.eq.s32.totalorder %s18, 0
      %p272 = por %p270, %p271
      %p273 = scmp.ne.s32.totalorder %s262, %s265
      %p274 = scmp.eq.s32.totalorder %s23, 1
      %p275 = por %p273, %p274
      %p276 = scmp.ne.s32.totalorder %s265, %s266
      %p277 = scmp.eq.s32.totalorder %s23, 0
      %p278 = por %p276, %p277
      %p279 = scmp.ne.s32.totalorder %s265, %s266
      %p280 = scmp.eq.s32.totalorder %s24, 1
      %p281 = por %p279, %p280
      %p283 = scmp.ne.s32.totalorder %s266, %s282
      %p284 = scmp.eq.s32.totalorder %s24, 0
      %p285 = por %p283, %p284
      %p286 = scmp.le.s32.totalorder 1, %s18
      %p287 = scmp.lt.s32.totalorder %s18, 3
      %p288 = pnand %p286, %p287
      %p289 = pneg %p288
      // Predicated region
      $region9: #{_lambda_.7} parent=5 // pred_check
        _
      $region10: #{_lambda_.7} parent=5 // pred_check_branch
        %291 = sbr.rel (%p288) target = $region12
      $region11: #{_lambda_.7} parent=5 // pred_region
        %s292 = ssub.s32 %s18, 1
        // Predicated region
        $region13: #{_lambda_.7} parent=11 // pred_check
          %p293 = pneg %p187
        $region14: #{_lambda_.7} parent=11 // pred_check_branch
          %295 = sbr.rel (%p293) target = $region16
        $region15: #{_lambda_.7} parent=11 // pred_region
          _
        $region16: #{_lambda_.7} parent=11 // pred_fallthru
          _
        // Predicated region
        $region17: #{_lambda_.7} parent=11 // pred_check
          %p296 = pneg %p208
        $region18: #{_lambda_.7} parent=11 // pred_check_branch
          %298 = sbr.rel (%p296) target = $region20
        $region19: #{_lambda_.7} parent=11 // pred_region
          _
        $region20: #{_lambda_.7} parent=11 // pred_fallthru
          _
        // Predicated region
        $region21: #{_lambda_.7} parent=11 // pred_check
          %p299 = pneg %p229
        $region22: #{_lambda_.7} parent=11 // pred_check_branch
          %301 = sbr.rel (%p299) target = $region24
        $region23: #{_lambda_.7} parent=11 // pred_region
          _
        $region24: #{_lambda_.7} parent=11 // pred_fallthru
          _
        // Predicated region
        $region25: #{_lambda_.7} parent=11 // pred_check
          %p302 = pneg %p250
        $region26: #{_lambda_.7} parent=11 // pred_check_branch
          %304 = sbr.rel (%p302) target = $region28
        $region27: #{_lambda_.7} parent=11 // pred_region
          _
        $region28: #{_lambda_.7} parent=11 // pred_fallthru
          _
      $region12: #{_lambda_.7} parent=5 // pred_fallthru
        _
      %p305 = scmp.lt.s32.totalorder %s18, 2
      // Predicated region
      $region29: #{_lambda_.7} parent=5 // pred_check
        %p306 = pneg %p305
      $region30: #{_lambda_.7} parent=5 // pred_check_branch
        %308 = sbr.rel (%p306) target = $region32
      $region31: #{_lambda_.7} parent=5 // pred_region
        // Predicated region
        $region33: #{_lambda_.7} parent=31 // pred_check
          %p309 = pneg %p52
        $region34: #{_lambda_.7} parent=31 // pred_check_branch
          %311 = sbr.rel (%p309) target = $region36
        $region35: #{_lambda_.7} parent=31 // pred_region
          %s312 = smul.u32 32, %s26
          %p313 = scmp.lt.s32.totalorder %s25, 1
          %s314 = scalar_select %p313, %s25, 1
          %p315 = scmp.lt.s32.totalorder %s312, 31
          %s316 = scalar_select %p315, %s312, 31
          %s317 = smul.addr %s314, 32
          %s318 = sadd.s32 %s316, %s317
          %s319 = smul.addr %s318, 4
          %s320 = scalar_lea.vmem %s0, %s319
          %s321 = smul.u32 32, %s26
        $region36: #{_lambda_.7} parent=31 // pred_fallthru
          _
        // Predicated region
        $region37: #{_lambda_.7} parent=31 // pred_check
          %p322 = pneg %p80
        $region38: #{_lambda_.7} parent=31 // pred_check_branch
          %324 = sbr.rel (%p322) target = $region40
        $region39: #{_lambda_.7} parent=31 // pred_region
          %s325 = smul.u32 32, %s26
          %p326 = scmp.lt.s32.totalorder %s25, 1
          %s327 = scalar_select %p326, %s25, 1
          %p328 = scmp.lt.s32.totalorder %s325, 31
          %s329 = scalar_select %p328, %s325, 31
          %s330 = smul.addr %s327, 32
          %s331 = sadd.s32 %s329, %s330
          %s332 = smul.addr %s331, 4
          %s333 = scalar_lea.vmem %s1, %s332
          %s334 = smul.u32 32, %s26
        $region40: #{_lambda_.7} parent=31 // pred_fallthru
          _
        // Predicated region
        $region41: #{_lambda_.7} parent=31 // pred_check
          %p335 = pneg %p106
        $region42: #{_lambda_.7} parent=31 // pred_check_branch
          %337 = sbr.rel (%p335) target = $region44
        $region43: #{_lambda_.7} parent=31 // pred_region
          %p338 = scmp.lt.s32.totalorder %s25, 1
          %s339 = scalar_select %p338, %s25, 1
          %s340 = scalar_lea.vmem %s2, %s339
        $region44: #{_lambda_.7} parent=31 // pred_fallthru
          _
        // Predicated region
        $region45: #{_lambda_.7} parent=31 // pred_check
          %p341 = pneg %p132
        $region46: #{_lambda_.7} parent=31 // pred_check_branch
          %343 = sbr.rel (%p341) target = $region48
        $region47: #{_lambda_.7} parent=31 // pred_region
          %p344 = scmp.lt.s32.totalorder %s25, 1
          %s345 = scalar_select %p344, %s25, 1
          %s346 = scalar_lea.vmem %s3, %s345
        $region48: #{_lambda_.7} parent=31 // pred_fallthru
          _
        // Predicated region
        $region49: #{_lambda_.7} parent=31 // pred_check
          %p347 = pneg %p160
        $region50: #{_lambda_.7} parent=31 // pred_check_branch
          %349 = sbr.rel (%p347) target = $region52
        $region51: #{_lambda_.7} parent=31 // pred_region
          %s350 = smul.u32 32, %s26
          %p351 = scmp.lt.s32.totalorder %s25, 1
          %s352 = scalar_select %p351, %s25, 1
          %p353 = scmp.lt.s32.totalorder %s350, 31
          %s354 = scalar_select %p353, %s350, 31
          %s355 = smul.addr %s352, 32
          %s356 = sadd.s32 %s354, %s355
          %s357 = smul.addr %s356, 4
          %s358 = scalar_lea.vmem %s4, %s357
          %s359 = smul.u32 32, %s26
        $region52: #{_lambda_.7} parent=31 // pred_fallthru
          _
      $region32: #{_lambda_.7} parent=5 // pred_fallthru
        _
      %p360 = scmp.le.s32.totalorder 1, %s18
      %p361 = scmp.lt.s32.totalorder %s18, 3
      %p362 = pnand %p360, %p361
      %p363 = pneg %p362
      // Predicated region
      $region53: #{_lambda_.7} parent=5 // pred_check
        _
      $region54: #{_lambda_.7} parent=5 // pred_check_branch
        %365 = sbr.rel (%p362) target = $region56
      $region55: #{_lambda_.7} parent=5 // pred_region
        %s366 = ssub.s32 %s18, 1
        %s367 = smul.u32 32, %s28
        %p368 = scmp.lt.s32.totalorder %s27, 1
        %s369 = scalar_select %p368, %s27, 1
        %p370 = scmp.lt.s32.totalorder %s367, 31
        %s371 = scalar_select %p370, %s367, 31
        %s372 = smul.addr %s369, 32
        %s373 = sadd.s32 %s371, %s372
        %s374 = smul.addr %s373, 4
        %s375 = scalar_lea.vmem %s0, %s374
        %p376 = pneg %p58
        %p377 = pneg %p55
        %s378 = smul.u32 32, %s28
        %p379 = scmp.lt.s32.totalorder %s27, 1
        %s380 = scalar_select %p379, %s27, 1
        %p381 = scmp.lt.s32.totalorder %s378, 31
        %s382 = scalar_select %p381, %s378, 31
        %s383 = smul.addr %s380, 32
        %s384 = sadd.s32 %s382, %s383
        %s385 = smul.addr %s384, 4
        %s386 = scalar_lea.vmem %s1, %s385
        %p387 = pneg %p86
        %p388 = pneg %p83
        %p389 = scmp.lt.s32.totalorder %s27, 1
        %s390 = scalar_select %p389, %s27, 1
        %s391 = scalar_lea.vmem %s2, %s390
        %p392 = pneg %p112
        %p393 = pneg %p109
        %p394 = scmp.lt.s32.totalorder %s27, 1
        %s395 = scalar_select %p394, %s27, 1
        %s396 = scalar_lea.vmem %s3, %s395
        %p397 = pneg %p138
        %p398 = pneg %p135
        %s399 = smul.u32 32, %s28
        %p400 = scmp.lt.s32.totalorder %s27, 1
        %s401 = scalar_select %p400, %s27, 1
        %p402 = scmp.lt.s32.totalorder %s399, 31
        %s403 = scalar_select %p402, %s399, 31
        %s404 = smul.addr %s401, 32
        %s405 = sadd.s32 %s403, %s404
        %s406 = smul.addr %s405, 4
        %s407 = scalar_lea.vmem %s4, %s406
        %p408 = pneg %p166
        %p409 = pneg %p163
        %p410 = pneg %p187
        %p411 = pneg %p184
        %p412 = pneg %p208
        %p413 = pneg %p205
        %p414 = pneg %p229
        %p415 = pneg %p226
        %p416 = pneg %p250
        %p417 = pneg %p247
        %p418 = pneg %p278
        %p419 = pneg %p275
        %s420 = sand.u32 %s265, 1
        %s421 = scalar_lea.sflag [#allocation3], %s420
        %s422 = sand.u32 %s265, 1
        %s423 = smul.addr %s422, 512
        %s424 = scalar_lea.vmem [#allocation2], %s423
        %s425 = smul.u32 32, %s28
        %p426 = scmp.lt.s32.totalorder %s27, 1
        %s427 = scalar_select %p426, %s27, 1
        %p428 = scmp.lt.s32.totalorder %s425, 31
        %s429 = scalar_select %p428, %s425, 31
        %s430 = smul.addr %s427, 32
        %s431 = sadd.s32 %s429, %s430
        %s432 = smul.addr %s431, 4
        %s433 = scalar_lea.vmem %s0, %s432
        %s434 = smul.u32 32, %s28
        %s435 = smul.u32 32, %s28
        %p436 = scmp.lt.s32.totalorder %s27, 1
        %s437 = scalar_select %p436, %s27, 1
        %p438 = scmp.lt.s32.totalorder %s435, 31
        %s439 = scalar_select %p438, %s435, 31
        %s440 = smul.addr %s437, 32
        %s441 = sadd.s32 %s439, %s440
        %s442 = smul.addr %s441, 4
        %s443 = scalar_lea.vmem %s1, %s442
        %s444 = smul.u32 32, %s28
        %p445 = scmp.lt.s32.totalorder %s27, 1
        %s446 = scalar_select %p445, %s27, 1
        %s447 = scalar_lea.vmem %s2, %s446
        %p448 = scmp.lt.s32.totalorder %s27, 1
        %s449 = scalar_select %p448, %s27, 1
        %s450 = scalar_lea.vmem %s3, %s449
        %s451 = smul.u32 32, %s28
        %p452 = scmp.lt.s32.totalorder %s27, 1
        %s453 = scalar_select %p452, %s27, 1
        %p454 = scmp.lt.s32.totalorder %s451, 31
        %s455 = scalar_select %p454, %s451, 31
        %s456 = smul.addr %s453, 32
        %s457 = sadd.s32 %s455, %s456
        %s458 = smul.addr %s457, 4
        %s459 = scalar_lea.vmem %s4, %s458
        %s460 = smul.u32 32, %s28
        %s461 = smul.u32 32, %s28
        %v463 = vld [vmem:[%s433] sm:$0xf]
        %v464 = vld [vmem:[%s433 + $0x4] sm:$0xf]
        %v465 = vld [vmem:[%s433 + $0x8] sm:$0xf]
        %v466 = vld [vmem:[%s433 + $0xc] sm:$0xf]
        %v467 = vld [vmem:[%s433 + $0x10] sm:$0xf]
        %v468 = vld [vmem:[%s433 + $0x14] sm:$0xf]
        %v469 = vld [vmem:[%s433 + $0x18] sm:$0xf]
        %v470 = vld [vmem:[%s433 + $0x1c] sm:$0xf]
        %v471 = vld [vmem:[%s433 + $0x20] sm:$0xf]
        %v472 = vld [vmem:[%s433 + $0x24] sm:$0xf]
        %v473 = vld [vmem:[%s433 + $0x28] sm:$0xf]
        %v474 = vld [vmem:[%s433 + $0x2c] sm:$0xf]
        %v475 = vld [vmem:[%s433 + $0x30] sm:$0xf]
        %v476 = vld [vmem:[%s433 + $0x34] sm:$0xf]
        %v477 = vld [vmem:[%s433 + $0x38] sm:$0xf]
        %v478 = vld [vmem:[%s433 + $0x3c] sm:$0xf]
        %v479 = vld [vmem:[%s433 + $0x40] sm:$0xf]
        %v480 = vld [vmem:[%s433 + $0x44] sm:$0xf]
        %v481 = vld [vmem:[%s433 + $0x48] sm:$0xf]
        %v482 = vld [vmem:[%s433 + $0x4c] sm:$0xf]
        %v483 = vld [vmem:[%s433 + $0x50] sm:$0xf]
        %v484 = vld [vmem:[%s433 + $0x54] sm:$0xf]
        %v485 = vld [vmem:[%s433 + $0x58] sm:$0xf]
        %v486 = vld [vmem:[%s433 + $0x5c] sm:$0xf]
        %v487 = vld [vmem:[%s433 + $0x60] sm:$0xf]
        %v488 = vld [vmem:[%s433 + $0x64] sm:$0xf]
        %v489 = vld [vmem:[%s433 + $0x68] sm:$0xf]
        %v490 = vld [vmem:[%s433 + $0x6c] sm:$0xf]
        %v491 = vld [vmem:[%s433 + $0x70] sm:$0xf]
        %v492 = vld [vmem:[%s433 + $0x74] sm:$0xf]
        %v493 = vld [vmem:[%s433 + $0x78] sm:$0xf]
        %v494 = vld [vmem:[%s433 + $0x7c] sm:$0xf]
        %v495 = vunpack.c.l.bf16 %v463
        %v496 = vunpack.c.l.bf16 %v464
        %v497 = vunpack.c.l.bf16 %v465
        %v498 = vunpack.c.l.bf16 %v466
        %v499 = vunpack.c.l.bf16 %v467
        %v500 = vunpack.c.l.bf16 %v468
        %v501 = vunpack.c.l.bf16 %v469
        %v502 = vunpack.c.l.bf16 %v470
        %v503 = vunpack.c.l.bf16 %v471
        %v504 = vunpack.c.l.bf16 %v472
        %v505 = vunpack.c.l.bf16 %v473
        %v506 = vunpack.c.l.bf16 %v474
        %v507 = vunpack.c.l.bf16 %v475
        %v508 = vunpack.c.l.bf16 %v476
        %v509 = vunpack.c.l.bf16 %v477
        %v510 = vunpack.c.l.bf16 %v478
        %v511 = vunpack.c.l.bf16 %v479
        %v512 = vunpack.c.l.bf16 %v480
        %v513 = vunpack.c.l.bf16 %v481
        %v514 = vunpack.c.l.bf16 %v482
        %v515 = vunpack.c.l.bf16 %v483
        %v516 = vunpack.c.l.bf16 %v484
        %v517 = vunpack.c.l.bf16 %v485
        %v518 = vunpack.c.l.bf16 %v486
        %v519 = vunpack.c.l.bf16 %v487
        %v520 = vunpack.c.l.bf16 %v488
        %v521 = vunpack.c.l.bf16 %v489
        %v522 = vunpack.c.l.bf16 %v490
        %v523 = vunpack.c.l.bf16 %v491
        %v524 = vunpack.c.l.bf16 %v492
        %v525 = vunpack.c.l.bf16 %v493
        %v526 = vunpack.c.l.bf16 %v494
        %v527 = vld [vmem:[%s447] sm:$0x1]
        %v529 = vperm.slane %v527, 0
        %v531 = vmul.f32 %v495, %v529
        %v532 = vmul.f32 %v496, %v529
        %v533 = vmul.f32 %v497, %v529
        %v534 = vmul.f32 %v498, %v529
        %v535 = vmul.f32 %v499, %v529
        %v536 = vmul.f32 %v500, %v529
        %v537 = vmul.f32 %v501, %v529
        %v538 = vmul.f32 %v502, %v529
        %v539 = vmul.f32 %v503, %v529
        %v540 = vmul.f32 %v504, %v529
        %v541 = vmul.f32 %v505, %v529
        %v542 = vmul.f32 %v506, %v529
        %v543 = vmul.f32 %v507, %v529
        %v544 = vmul.f32 %v508, %v529
        %v545 = vmul.f32 %v509, %v529
        %v546 = vmul.f32 %v510, %v529
        %v547 = vmul.f32 %v511, %v529
        %v548 = vmul.f32 %v512, %v529
        %v549 = vmul.f32 %v513, %v529
        %v550 = vmul.f32 %v514, %v529
        %v551 = vmul.f32 %v515, %v529
        %v552 = vmul.f32 %v516, %v529
        %v553 = vmul.f32 %v517, %v529
        %v554 = vmul.f32 %v518, %v529
        %v555 = vmul.f32 %v519, %v529
        %v556 = vmul.f32 %v520, %v529
        %v557 = vmul.f32 %v521, %v529
        %v558 = vmul.f32 %v522, %v529
        %v559 = vmul.f32 %v523, %v529
        %v560 = vmul.f32 %v524, %v529
        %v561 = vmul.f32 %v525, %v529
        %v562 = vmul.f32 %v526, %v529
        %v563 = vld [vmem:[%s443] sm:$0xf]
        %v564 = vld [vmem:[%s443 + $0x4] sm:$0xf]
        %v565 = vld [vmem:[%s443 + $0x8] sm:$0xf]
        %v566 = vld [vmem:[%s443 + $0xc] sm:$0xf]
        %v567 = vld [vmem:[%s443 + $0x10] sm:$0xf]
        %v568 = vld [vmem:[%s443 + $0x14] sm:$0xf]
        %v569 = vld [vmem:[%s443 + $0x18] sm:$0xf]
        %v570 = vld [vmem:[%s443 + $0x1c] sm:$0xf]
        %v571 = vld [vmem:[%s443 + $0x20] sm:$0xf]
        %v572 = vld [vmem:[%s443 + $0x24] sm:$0xf]
        %v573 = vld [vmem:[%s443 + $0x28] sm:$0xf]
        %v574 = vld [vmem:[%s443 + $0x2c] sm:$0xf]
        %v575 = vld [vmem:[%s443 + $0x30] sm:$0xf]
        %v576 = vld [vmem:[%s443 + $0x34] sm:$0xf]
        %v577 = vld [vmem:[%s443 + $0x38] sm:$0xf]
        %v578 = vld [vmem:[%s443 + $0x3c] sm:$0xf]
        %v579 = vld [vmem:[%s443 + $0x40] sm:$0xf]
        %v580 = vld [vmem:[%s443 + $0x44] sm:$0xf]
        %v581 = vld [vmem:[%s443 + $0x48] sm:$0xf]
        %v582 = vld [vmem:[%s443 + $0x4c] sm:$0xf]
        %v583 = vld [vmem:[%s443 + $0x50] sm:$0xf]
        %v584 = vld [vmem:[%s443 + $0x54] sm:$0xf]
        %v585 = vld [vmem:[%s443 + $0x58] sm:$0xf]
        %v586 = vld [vmem:[%s443 + $0x5c] sm:$0xf]
        %v587 = vld [vmem:[%s443 + $0x60] sm:$0xf]
        %v588 = vld [vmem:[%s443 + $0x64] sm:$0xf]
        %v589 = vld [vmem:[%s443 + $0x68] sm:$0xf]
        %v590 = vld [vmem:[%s443 + $0x6c] sm:$0xf]
        %v591 = vld [vmem:[%s443 + $0x70] sm:$0xf]
        %v592 = vld [vmem:[%s443 + $0x74] sm:$0xf]
        %v593 = vld [vmem:[%s443 + $0x78] sm:$0xf]
        %v594 = vld [vmem:[%s443 + $0x7c] sm:$0xf]
        %v595 = vunpack.c.l.bf16 %v563
        %v596 = vunpack.c.l.bf16 %v564
        %v597 = vunpack.c.l.bf16 %v565
        %v598 = vunpack.c.l.bf16 %v566
        %v599 = vunpack.c.l.bf16 %v567
        %v600 = vunpack.c.l.bf16 %v568
        %v601 = vunpack.c.l.bf16 %v569
        %v602 = vunpack.c.l.bf16 %v570
        %v603 = vunpack.c.l.bf16 %v571
        %v604 = vunpack.c.l.bf16 %v572
        %v605 = vunpack.c.l.bf16 %v573
        %v606 = vunpack.c.l.bf16 %v574
        %v607 = vunpack.c.l.bf16 %v575
        %v608 = vunpack.c.l.bf16 %v576
        %v609 = vunpack.c.l.bf16 %v577
        %v610 = vunpack.c.l.bf16 %v578
        %v611 = vunpack.c.l.bf16 %v579
        %v612 = vunpack.c.l.bf16 %v580
        %v613 = vunpack.c.l.bf16 %v581
        %v614 = vunpack.c.l.bf16 %v582
        %v615 = vunpack.c.l.bf16 %v583
        %v616 = vunpack.c.l.bf16 %v584
        %v617 = vunpack.c.l.bf16 %v585
        %v618 = vunpack.c.l.bf16 %v586
        %v619 = vunpack.c.l.bf16 %v587
        %v620 = vunpack.c.l.bf16 %v588
        %v621 = vunpack.c.l.bf16 %v589
        %v622 = vunpack.c.l.bf16 %v590
        %v623 = vunpack.c.l.bf16 %v591
        %v624 = vunpack.c.l.bf16 %v592
        %v625 = vunpack.c.l.bf16 %v593
        %v626 = vunpack.c.l.bf16 %v594
        %v627 = vld [vmem:[%s450] sm:$0x1]
        %v629 = vperm.slane %v627, 0
        %v631 = vmul.f32 %v595, %v629
        %v632 = vmul.f32 %v596, %v629
        %v633 = vmul.f32 %v597, %v629
        %v634 = vmul.f32 %v598, %v629
        %v635 = vmul.f32 %v599, %v629
        %v636 = vmul.f32 %v600, %v629
        %v637 = vmul.f32 %v601, %v629
        %v638 = vmul.f32 %v602, %v629
        %v639 = vmul.f32 %v603, %v629
        %v640 = vmul.f32 %v604, %v629
        %v641 = vmul.f32 %v605, %v629
        %v642 = vmul.f32 %v606, %v629
        %v643 = vmul.f32 %v607, %v629
        %v644 = vmul.f32 %v608, %v629
        %v645 = vmul.f32 %v609, %v629
        %v646 = vmul.f32 %v610, %v629
        %v647 = vmul.f32 %v611, %v629
        %v648 = vmul.f32 %v612, %v629
        %v649 = vmul.f32 %v613, %v629
        %v650 = vmul.f32 %v614, %v629
        %v651 = vmul.f32 %v615, %v629
        %v652 = vmul.f32 %v616, %v629
        %v653 = vmul.f32 %v617, %v629
        %v654 = vmul.f32 %v618, %v629
        %v655 = vmul.f32 %v619, %v629
        %v656 = vmul.f32 %v620, %v629
        %v657 = vmul.f32 %v621, %v629
        %v658 = vmul.f32 %v622, %v629
        %v659 = vmul.f32 %v623, %v629
        %v660 = vmul.f32 %v624, %v629
        %v661 = vmul.f32 %v625, %v629
        %v662 = vmul.f32 %v626, %v629
        %v663 = vadd.f32 %v531, %v631
        %v664 = vadd.f32 %v532, %v632
        %v665 = vadd.f32 %v533, %v633
        %v666 = vadd.f32 %v534, %v634
        %v667 = vadd.f32 %v535, %v635
        %v668 = vadd.f32 %v536, %v636
        %v669 = vadd.f32 %v537, %v637
        %v670 = vadd.f32 %v538, %v638
        %v671 = vadd.f32 %v539, %v639
        %v672 = vadd.f32 %v540, %v640
        %v673 = vadd.f32 %v541, %v641
        %v674 = vadd.f32 %v542, %v642
        %v675 = vadd.f32 %v543, %v643
        %v676 = vadd.f32 %v544, %v644
        %v677 = vadd.f32 %v545, %v645
        %v678 = vadd.f32 %v546, %v646
        %v679 = vadd.f32 %v547, %v647
        %v680 = vadd.f32 %v548, %v648
        %v681 = vadd.f32 %v549, %v649
        %v682 = vadd.f32 %v550, %v650
        %v683 = vadd.f32 %v551, %v651
        %v684 = vadd.f32 %v552, %v652
        %v685 = vadd.f32 %v553, %v653
        %v686 = vadd.f32 %v554, %v654
        %v687 = vadd.f32 %v555, %v655
        %v688 = vadd.f32 %v556, %v656
        %v689 = vadd.f32 %v557, %v657
        %v690 = vadd.f32 %v558, %v658
        %v691 = vadd.f32 %v559, %v659
        %v692 = vadd.f32 %v560, %v660
        %v693 = vadd.f32 %v561, %v661
        %v694 = vadd.f32 %v562, %v662
        %v695 = vpack.c.bf16 %v664, %v663
        %v696 = vpack.c.bf16 %v666, %v665
        %v697 = vpack.c.bf16 %v668, %v667
        %v698 = vpack.c.bf16 %v670, %v669
        %v699 = vpack.c.bf16 %v672, %v671
        %v700 = vpack.c.bf16 %v674, %v673
        %v701 = vpack.c.bf16 %v676, %v675
        %v702 = vpack.c.bf16 %v678, %v677
        %v703 = vpack.c.bf16 %v680, %v679
        %v704 = vpack.c.bf16 %v682, %v681
        %v705 = vpack.c.bf16 %v684, %v683
        %v706 = vpack.c.bf16 %v686, %v685
        %v707 = vpack.c.bf16 %v688, %v687
        %v708 = vpack.c.bf16 %v690, %v689
        %v709 = vpack.c.bf16 %v692, %v691
        %v710 = vpack.c.bf16 %v694, %v693
        %v711 = vld [vmem:[%s5] sm:$0xff]
        %v712 = vld [vmem:[%s5 + $0x8] sm:$0xff]
        %v713 = vld [vmem:[%s5 + $0x10] sm:$0xff]
        %v714 = vld [vmem:[%s5 + $0x18] sm:$0xff]
        %v715 = vld [vmem:[%s5 + $0x20] sm:$0xff]
        %v716 = vld [vmem:[%s5 + $0x28] sm:$0xff]
        %v717 = vld [vmem:[%s5 + $0x30] sm:$0xff]
        %v718 = vld [vmem:[%s5 + $0x38] sm:$0xff]
        %v719 = vld [vmem:[%s5 + $0x40] sm:$0xff]
        %v720 = vld [vmem:[%s5 + $0x48] sm:$0xff]
        %v721 = vld [vmem:[%s5 + $0x50] sm:$0xff]
        %v722 = vld [vmem:[%s5 + $0x58] sm:$0xff]
        %v723 = vld [vmem:[%s5 + $0x60] sm:$0xff]
        %v724 = vld [vmem:[%s5 + $0x68] sm:$0xff]
        %v725 = vld [vmem:[%s5 + $0x70] sm:$0xff]
        %v726 = vld [vmem:[%s5 + $0x78] sm:$0xff]
        %v727 = vld [vmem:[%s6] sm:$0x3]
        %v729 = vperm.slane %v727, 0
        %v730 = vperm.slane %v727, 1
        %v749 = vunpack.c.l.b16 %v711
        %v750 = vunpack.c.h.b16 %v711
        %v751 = vunpack.c.l.b16 %v712
        %v752 = vunpack.c.h.b16 %v712
        %v753 = vunpack.c.l.b16 %v713
        %v754 = vunpack.c.h.b16 %v713
        %v755 = vunpack.c.l.b16 %v714
        %v756 = vunpack.c.h.b16 %v714
        %v757 = vunpack.c.l.b16 %v715
        %v758 = vunpack.c.h.b16 %v715
        %v759 = vunpack.c.l.b16 %v716
        %v760 = vunpack.c.h.b16 %v716
        %v761 = vunpack.c.l.b16 %v717
        %v762 = vunpack.c.h.b16 %v717
        %v763 = vunpack.c.l.b16 %v718
        %v764 = vunpack.c.h.b16 %v718
        %v765 = vunpack.c.l.b16 %v719
        %v766 = vunpack.c.h.b16 %v719
        %v767 = vunpack.c.l.b16 %v720
        %v768 = vunpack.c.h.b16 %v720
        %v769 = vunpack.c.l.b16 %v721
        %v770 = vunpack.c.h.b16 %v721
        %v771 = vunpack.c.l.b16 %v722
        %v772 = vunpack.c.h.b16 %v722
        %v773 = vunpack.c.l.b16 %v723
        %v774 = vunpack.c.h.b16 %v723
        %v775 = vunpack.c.l.b16 %v724
        %v776 = vunpack.c.h.b16 %v724
        %v777 = vunpack.c.l.b16 %v725
        %v778 = vunpack.c.h.b16 %v725
        %v779 = vunpack.c.l.b16 %v726
        %v780 = vunpack.c.h.b16 %v726
        %v781 = vpack.c.b16 %v751, %v749
        %v782 = vpack.c.b16 %v752, %v750
        %v783 = vpack.c.b16 %v755, %v753
        %v784 = vpack.c.b16 %v756, %v754
        %v785 = vpack.c.b16 %v759, %v757
        %v786 = vpack.c.b16 %v760, %v758
        %v787 = vpack.c.b16 %v763, %v761
        %v788 = vpack.c.b16 %v764, %v762
        %v789 = vpack.c.b16 %v767, %v765
        %v790 = vpack.c.b16 %v768, %v766
        %v791 = vpack.c.b16 %v771, %v769
        %v792 = vpack.c.b16 %v772, %v770
        %v793 = vpack.c.b16 %v775, %v773
        %v794 = vpack.c.b16 %v776, %v774
        %v795 = vpack.c.b16 %v779, %v777
        %v796 = vpack.c.b16 %v780, %v778
        %813 = vmatpush.bf16.msra.mxu0 %v795
        %814 = vmatpush.bf16.msra.mxu0 %v793
        %815 = vmatpush.bf16.msra.mxu0 %v791
        %816 = vmatpush.bf16.msra.mxu0 %v789
        %817 = vmatpush.bf16.msra.mxu0 %v787
        %818 = vmatpush.bf16.msra.mxu0 %v785
        %819 = vmatpush.bf16.msra.mxu0 %v783
        %820 = vmatpush.bf16.msra.mxu0 %v781
        %821 = vmatmul.bf16.gmra.mxu0 %v695
        %v822 = vpop.f32.mrf.mxu0
        %v823 = vadd.f32 %v729, %v822
        %v824 = vpop.f32.mrf.mxu0
        %v825 = vadd.f32 %v729, %v824
        %826 = vmatmul.bf16.gmra.mxu0 %v696
        %v827 = vpop.f32.mrf.mxu0
        %v828 = vadd.f32 %v729, %v827
        %v829 = vpop.f32.mrf.mxu0
        %v830 = vadd.f32 %v729, %v829
        %831 = vmatmul.bf16.gmra.mxu0 %v697
        %v832 = vpop.f32.mrf.mxu0
        %v833 = vadd.f32 %v729, %v832
        %v834 = vpop.f32.mrf.mxu0
        %v835 = vadd.f32 %v729, %v834
        %836 = vmatmul.bf16.gmra.mxu0 %v698
        %v837 = vpop.f32.mrf.mxu0
        %v838 = vadd.f32 %v729, %v837
        %v839 = vpop.f32.mrf.mxu0
        %v840 = vadd.f32 %v729, %v839
        %841 = vmatmul.bf16.gmra.mxu0 %v699
        %v842 = vpop.f32.mrf.mxu0
        %v843 = vadd.f32 %v729, %v842
        %v844 = vpop.f32.mrf.mxu0
        %v845 = vadd.f32 %v729, %v844
        %846 = vmatmul.bf16.gmra.mxu0 %v700
        %v847 = vpop.f32.mrf.mxu0
        %v848 = vadd.f32 %v729, %v847
        %v849 = vpop.f32.mrf.mxu0
        %v850 = vadd.f32 %v729, %v849
        %851 = vmatmul.bf16.gmra.mxu0 %v701
        %v852 = vpop.f32.mrf.mxu0
        %v853 = vadd.f32 %v729, %v852
        %v854 = vpop.f32.mrf.mxu0
        %v855 = vadd.f32 %v729, %v854
        %856 = vmatmul.bf16.gmra.mxu0 %v702
        %v857 = vpop.f32.mrf.mxu0
        %v858 = vadd.f32 %v729, %v857
        %v859 = vpop.f32.mrf.mxu0
        %v860 = vadd.f32 %v729, %v859
        %861 = vmatmul.bf16.gmra.mxu0 %v703
        %v862 = vpop.f32.mrf.mxu0
        %v863 = vadd.f32 %v729, %v862
        %v864 = vpop.f32.mrf.mxu0
        %v865 = vadd.f32 %v729, %v864
        %866 = vmatmul.bf16.gmra.mxu0 %v704
        %v867 = vpop.f32.mrf.mxu0
        %v868 = vadd.f32 %v729, %v867
        %v869 = vpop.f32.mrf.mxu0
        %v870 = vadd.f32 %v729, %v869
        %871 = vmatmul.bf16.gmra.mxu0 %v705
        %v872 = vpop.f32.mrf.mxu0
        %v873 = vadd.f32 %v729, %v872
        %v874 = vpop.f32.mrf.mxu0
        %v875 = vadd.f32 %v729, %v874
        %876 = vmatmul.bf16.gmra.mxu0 %v706
        %v877 = vpop.f32.mrf.mxu0
        %v878 = vadd.f32 %v729, %v877
        %v879 = vpop.f32.mrf.mxu0
        %v880 = vadd.f32 %v729, %v879
        %881 = vmatmul.bf16.gmra.mxu0 %v707
        %v882 = vpop.f32.mrf.mxu0
        %v883 = vadd.f32 %v729, %v882
        %v884 = vpop.f32.mrf.mxu0
        %v885 = vadd.f32 %v729, %v884
        %886 = vmatmul.bf16.gmra.mxu0 %v708
        %v887 = vpop.f32.mrf.mxu0
        %v888 = vadd.f32 %v729, %v887
        %v889 = vpop.f32.mrf.mxu0
        %v890 = vadd.f32 %v729, %v889
        %891 = vmatmul.bf16.gmra.mxu0 %v709
        %v892 = vpop.f32.mrf.mxu0
        %v893 = vadd.f32 %v729, %v892
        %v894 = vpop.f32.mrf.mxu0
        %v895 = vadd.f32 %v729, %v894
        %896 = vmatmul.bf16.gmra.mxu0 %v710
        %v897 = vpop.f32.mrf.mxu0
        %v898 = vadd.f32 %v729, %v897
        %v899 = vpop.f32.mrf.mxu0
        %v900 = vadd.f32 %v729, %v899
        %901 = vdwg.mxu0
        %902 = vmatpush.bf16.msra.mxu0 %v796
        %903 = vmatpush.bf16.msra.mxu0 %v794
        %904 = vmatpush.bf16.msra.mxu0 %v792
        %905 = vmatpush.bf16.msra.mxu0 %v790
        %906 = vmatpush.bf16.msra.mxu0 %v788
        %907 = vmatpush.bf16.msra.mxu0 %v786
        %908 = vmatpush.bf16.msra.mxu0 %v784
        %909 = vmatpush.bf16.msra.mxu0 %v782
        %910 = vmatmul.bf16.gmra.mxu0 %v695
        %v911 = vpop.f32.mrf.mxu0
        %v912 = vadd.f32 %v730, %v911
        %v913 = vpop.f32.mrf.mxu0
        %v914 = vadd.f32 %v730, %v913
        %915 = vmatmul.bf16.gmra.mxu0 %v696
        %v916 = vpop.f32.mrf.mxu0
        %v917 = vadd.f32 %v730, %v916
        %v918 = vpop.f32.mrf.mxu0
        %v919 = vadd.f32 %v730, %v918
        %920 = vmatmul.bf16.gmra.mxu0 %v697
        %v921 = vpop.f32.mrf.mxu0
        %v922 = vadd.f32 %v730, %v921
        %v923 = vpop.f32.mrf.mxu0
        %v924 = vadd.f32 %v730, %v923
        %925 = vmatmul.bf16.gmra.mxu0 %v698
        %v926 = vpop.f32.mrf.mxu0
        %v927 = vadd.f32 %v730, %v926
        %v928 = vpop.f32.mrf.mxu0
        %v929 = vadd.f32 %v730, %v928
        %930 = vmatmul.bf16.gmra.mxu0 %v699
        %v931 = vpop.f32.mrf.mxu0
        %v932 = vadd.f32 %v730, %v931
        %v933 = vpop.f32.mrf.mxu0
        %v934 = vadd.f32 %v730, %v933
        %935 = vmatmul.bf16.gmra.mxu0 %v700
        %v936 = vpop.f32.mrf.mxu0
        %v937 = vadd.f32 %v730, %v936
        %v938 = vpop.f32.mrf.mxu0
        %v939 = vadd.f32 %v730, %v938
        %940 = vmatmul.bf16.gmra.mxu0 %v701
        %v941 = vpop.f32.mrf.mxu0
        %v942 = vadd.f32 %v730, %v941
        %v943 = vpop.f32.mrf.mxu0
        %v944 = vadd.f32 %v730, %v943
        %945 = vmatmul.bf16.gmra.mxu0 %v702
        %v946 = vpop.f32.mrf.mxu0
        %v947 = vadd.f32 %v730, %v946
        %v948 = vpop.f32.mrf.mxu0
        %v949 = vadd.f32 %v730, %v948
        %950 = vmatmul.bf16.gmra.mxu0 %v703
        %v951 = vpop.f32.mrf.mxu0
        %v952 = vadd.f32 %v730, %v951
        %v953 = vpop.f32.mrf.mxu0
        %v954 = vadd.f32 %v730, %v953
        %955 = vmatmul.bf16.gmra.mxu0 %v704
        %v956 = vpop.f32.mrf.mxu0
        %v957 = vadd.f32 %v730, %v956
        %v958 = vpop.f32.mrf.mxu0
        %v959 = vadd.f32 %v730, %v958
        %960 = vmatmul.bf16.gmra.mxu0 %v705
        %v961 = vpop.f32.mrf.mxu0
        %v962 = vadd.f32 %v730, %v961
        %v963 = vpop.f32.mrf.mxu0
        %v964 = vadd.f32 %v730, %v963
        %965 = vmatmul.bf16.gmra.mxu0 %v706
        %v966 = vpop.f32.mrf.mxu0
        %v967 = vadd.f32 %v730, %v966
        %v968 = vpop.f32.mrf.mxu0
        %v969 = vadd.f32 %v730, %v968
        %970 = vmatmul.bf16.gmra.mxu0 %v707
        %v971 = vpop.f32.mrf.mxu0
        %v972 = vadd.f32 %v730, %v971
        %v973 = vpop.f32.mrf.mxu0
        %v974 = vadd.f32 %v730, %v973
        %975 = vmatmul.bf16.gmra.mxu0 %v708
        %v976 = vpop.f32.mrf.mxu0
        %v977 = vadd.f32 %v730, %v976
        %v978 = vpop.f32.mrf.mxu0
        %v979 = vadd.f32 %v730, %v978
        %980 = vmatmul.bf16.gmra.mxu0 %v709
        %v981 = vpop.f32.mrf.mxu0
        %v982 = vadd.f32 %v730, %v981
        %v983 = vpop.f32.mrf.mxu0
        %v984 = vadd.f32 %v730, %v983
        %985 = vmatmul.bf16.gmra.mxu0 %v710
        %v986 = vpop.f32.mrf.mxu0
        %v987 = vadd.f32 %v730, %v986
        %v988 = vpop.f32.mrf.mxu0
        %v989 = vadd.f32 %v730, %v988
        %990 = vdwg.mxu0
        %v991 = vld [vmem:[%s459] sm:$0xf]
        %v992 = vld [vmem:[%s459 + $0x4] sm:$0xf]
        %v993 = vld [vmem:[%s459 + $0x8] sm:$0xf]
        %v994 = vld [vmem:[%s459 + $0xc] sm:$0xf]
        %v995 = vld [vmem:[%s459 + $0x10] sm:$0xf]
        %v996 = vld [vmem:[%s459 + $0x14] sm:$0xf]
        %v997 = vld [vmem:[%s459 + $0x18] sm:$0xf]
        %v998 = vld [vmem:[%s459 + $0x1c] sm:$0xf]
        %v999 = vld [vmem:[%s459 + $0x20] sm:$0xf]
        %v1000 = vld [vmem:[%s459 + $0x24] sm:$0xf]
        %v1001 = vld [vmem:[%s459 + $0x28] sm:$0xf]
        %v1002 = vld [vmem:[%s459 + $0x2c] sm:$0xf]
        %v1003 = vld [vmem:[%s459 + $0x30] sm:$0xf]
        %v1004 = vld [vmem:[%s459 + $0x34] sm:$0xf]
        %v1005 = vld [vmem:[%s459 + $0x38] sm:$0xf]
        %v1006 = vld [vmem:[%s459 + $0x3c] sm:$0xf]
        %v1007 = vld [vmem:[%s459 + $0x40] sm:$0xf]
        %v1008 = vld [vmem:[%s459 + $0x44] sm:$0xf]
        %v1009 = vld [vmem:[%s459 + $0x48] sm:$0xf]
        %v1010 = vld [vmem:[%s459 + $0x4c] sm:$0xf]
        %v1011 = vld [vmem:[%s459 + $0x50] sm:$0xf]
        %v1012 = vld [vmem:[%s459 + $0x54] sm:$0xf]
        %v1013 = vld [vmem:[%s459 + $0x58] sm:$0xf]
        %v1014 = vld [vmem:[%s459 + $0x5c] sm:$0xf]
        %v1015 = vld [vmem:[%s459 + $0x60] sm:$0xf]
        %v1016 = vld [vmem:[%s459 + $0x64] sm:$0xf]
        %v1017 = vld [vmem:[%s459 + $0x68] sm:$0xf]
        %v1018 = vld [vmem:[%s459 + $0x6c] sm:$0xf]
        %v1019 = vld [vmem:[%s459 + $0x70] sm:$0xf]
        %v1020 = vld [vmem:[%s459 + $0x74] sm:$0xf]
        %v1021 = vld [vmem:[%s459 + $0x78] sm:$0xf]
        %v1022 = vld [vmem:[%s459 + $0x7c] sm:$0xf]
        %v1023 = vld [vmem:[%s7] sm:$0xff]
        %v1024 = vld [vmem:[%s7 + $0x8] sm:$0xff]
        %v1025 = vld [vmem:[%s7 + $0x10] sm:$0xff]
        %v1026 = vld [vmem:[%s7 + $0x18] sm:$0xff]
        %v1027 = vld [vmem:[%s7 + $0x20] sm:$0xff]
        %v1028 = vld [vmem:[%s7 + $0x28] sm:$0xff]
        %v1029 = vld [vmem:[%s7 + $0x30] sm:$0xff]
        %v1030 = vld [vmem:[%s7 + $0x38] sm:$0xff]
        %v1031 = vld [vmem:[%s8] sm:$0x3]
        %v1033 = vperm.slane %v1031, 0
        %v1034 = vperm.slane %v1031, 1
        %v1069 = vunpack.c.l.b16 %v991
        %v1070 = vunpack.c.l.b16 %v992
        %v1071 = vunpack.c.l.b16 %v993
        %v1072 = vunpack.c.l.b16 %v994
        %v1073 = vunpack.c.l.b16 %v995
        %v1074 = vunpack.c.l.b16 %v996
        %v1075 = vunpack.c.l.b16 %v997
        %v1076 = vunpack.c.l.b16 %v998
        %v1077 = vunpack.c.l.b16 %v999
        %v1078 = vunpack.c.l.b16 %v1000
        %v1079 = vunpack.c.l.b16 %v1001
        %v1080 = vunpack.c.l.b16 %v1002
        %v1081 = vunpack.c.l.b16 %v1003
        %v1082 = vunpack.c.l.b16 %v1004
        %v1083 = vunpack.c.l.b16 %v1005
        %v1084 = vunpack.c.l.b16 %v1006
        %v1085 = vunpack.c.l.b16 %v1007
        %v1086 = vunpack.c.l.b16 %v1008
        %v1087 = vunpack.c.l.b16 %v1009
        %v1088 = vunpack.c.l.b16 %v1010
        %v1089 = vunpack.c.l.b16 %v1011
        %v1090 = vunpack.c.l.b16 %v1012
        %v1091 = vunpack.c.l.b16 %v1013
        %v1092 = vunpack.c.l.b16 %v1014
        %v1093 = vunpack.c.l.b16 %v1015
        %v1094 = vunpack.c.l.b16 %v1016
        %v1095 = vunpack.c.l.b16 %v1017
        %v1096 = vunpack.c.l.b16 %v1018
        %v1097 = vunpack.c.l.b16 %v1019
        %v1098 = vunpack.c.l.b16 %v1020
        %v1099 = vunpack.c.l.b16 %v1021
        %v1100 = vunpack.c.l.b16 %v1022
        %v1101 = vpack.c.b16 %v1070, %v1069
        %v1102 = vpack.c.b16 %v1072, %v1071
        %v1103 = vpack.c.b16 %v1074, %v1073
        %v1104 = vpack.c.b16 %v1076, %v1075
        %v1105 = vpack.c.b16 %v1078, %v1077
        %v1106 = vpack.c.b16 %v1080, %v1079
        %v1107 = vpack.c.b16 %v1082, %v1081
        %v1108 = vpack.c.b16 %v1084, %v1083
        %v1109 = vpack.c.b16 %v1086, %v1085
        %v1110 = vpack.c.b16 %v1088, %v1087
        %v1111 = vpack.c.b16 %v1090, %v1089
        %v1112 = vpack.c.b16 %v1092, %v1091
        %v1113 = vpack.c.b16 %v1094, %v1093
        %v1114 = vpack.c.b16 %v1096, %v1095
        %v1115 = vpack.c.b16 %v1098, %v1097
        %v1116 = vpack.c.b16 %v1100, %v1099
        %v1125 = vunpack.c.l.b16 %v1023
        %v1126 = vunpack.c.h.b16 %v1023
        %v1127 = vunpack.c.l.b16 %v1024
        %v1128 = vunpack.c.h.b16 %v1024
        %v1129 = vunpack.c.l.b16 %v1025
        %v1130 = vunpack.c.h.b16 %v1025
        %v1131 = vunpack.c.l.b16 %v1026
        %v1132 = vunpack.c.h.b16 %v1026
        %v1133 = vunpack.c.l.b16 %v1027
        %v1134 = vunpack.c.h.b16 %v1027
        %v1135 = vunpack.c.l.b16 %v1028
        %v1136 = vunpack.c.h.b16 %v1028
        %v1137 = vunpack.c.l.b16 %v1029
        %v1138 = vunpack.c.h.b16 %v1029
        %v1139 = vunpack.c.l.b16 %v1030
        %v1140 = vunpack.c.h.b16 %v1030
        %v1141 = vpack.c.b16 %v1127, %v1125
        %v1142 = vpack.c.b16 %v1128, %v1126
        %v1143 = vpack.c.b16 %v1131, %v1129
        %v1144 = vpack.c.b16 %v1132, %v1130
        %v1145 = vpack.c.b16 %v1135, %v1133
        %v1146 = vpack.c.b16 %v1136, %v1134
        %v1147 = vpack.c.b16 %v1139, %v1137
        %v1148 = vpack.c.b16 %v1140, %v1138
        %vm1157 = vcmask 523264
        %v1159 = vsel %vm1157, %v1101, 0
        %v1162 = vsel %vm1157, %v1102, 0
        %v1165 = vsel %vm1157, %v1103, 0
        %v1168 = vsel %vm1157, %v1104, 0
        %v1171 = vsel %vm1157, %v1105, 0
        %v1174 = vsel %vm1157, %v1106, 0
        %v1177 = vsel %vm1157, %v1107, 0
        %v1180 = vsel %vm1157, %v1108, 0
        %v1183 = vsel %vm1157, %v1109, 0
        %v1186 = vsel %vm1157, %v1110, 0
        %v1189 = vsel %vm1157, %v1111, 0
        %v1192 = vsel %vm1157, %v1112, 0
        %v1195 = vsel %vm1157, %v1113, 0
        %v1198 = vsel %vm1157, %v1114, 0
        %v1201 = vsel %vm1157, %v1115, 0
        %v1204 = vsel %vm1157, %v1116, 0
        %1206 = vmatpush.bf16.msra.mxu0 0
        %1207 = vmatpush.bf16.msra.mxu0 0
        %1208 = vmatpush.bf16.msra.mxu0 0
        %1209 = vmatpush.bf16.msra.mxu0 0
        %1210 = vmatpush.bf16.msra.mxu0 %v1147
        %1211 = vmatpush.bf16.msra.mxu0 %v1145
        %1212 = vmatpush.bf16.msra.mxu0 %v1143
        %1213 = vmatpush.bf16.msra.mxu0 %v1141
        %1214 = vmatmul.bf16.gmra.mxu0 %v1159
        %v1215 = vpop.f32.mrf.mxu0
        %v1216 = vadd.f32 %v1033, %v1215
        %v1217 = vpop.f32.mrf.mxu0
        %v1218 = vadd.f32 %v1033, %v1217
        %1219 = vmatmul.bf16.gmra.mxu0 %v1162
        %v1220 = vpop.f32.mrf.mxu0
        %v1221 = vadd.f32 %v1033, %v1220
        %v1222 = vpop.f32.mrf.mxu0
        %v1223 = vadd.f32 %v1033, %v1222
        %1224 = vmatmul.bf16.gmra.mxu0 %v1165
        %v1225 = vpop.f32.mrf.mxu0
        %v1226 = vadd.f32 %v1033, %v1225
        %v1227 = vpop.f32.mrf.mxu0
        %v1228 = vadd.f32 %v1033, %v1227
        %1229 = vmatmul.bf16.gmra.mxu0 %v1168
        %v1230 = vpop.f32.mrf.mxu0
        %v1231 = vadd.f32 %v1033, %v1230
        %v1232 = vpop.f32.mrf.mxu0
        %v1233 = vadd.f32 %v1033, %v1232
        %1234 = vmatmul.bf16.gmra.mxu0 %v1171
        %v1235 = vpop.f32.mrf.mxu0
        %v1236 = vadd.f32 %v1033, %v1235
        %v1237 = vpop.f32.mrf.mxu0
        %v1238 = vadd.f32 %v1033, %v1237
        %1239 = vmatmul.bf16.gmra.mxu0 %v1174
        %v1240 = vpop.f32.mrf.mxu0
        %v1241 = vadd.f32 %v1033, %v1240
        %v1242 = vpop.f32.mrf.mxu0
        %v1243 = vadd.f32 %v1033, %v1242
        %1244 = vmatmul.bf16.gmra.mxu0 %v1177
        %v1245 = vpop.f32.mrf.mxu0
        %v1246 = vadd.f32 %v1033, %v1245
        %v1247 = vpop.f32.mrf.mxu0
        %v1248 = vadd.f32 %v1033, %v1247
        %1249 = vmatmul.bf16.gmra.mxu0 %v1180
        %v1250 = vpop.f32.mrf.mxu0
        %v1251 = vadd.f32 %v1033, %v1250
        %v1252 = vpop.f32.mrf.mxu0
        %v1253 = vadd.f32 %v1033, %v1252
        %1254 = vmatmul.bf16.gmra.mxu0 %v1183
        %v1255 = vpop.f32.mrf.mxu0
        %v1256 = vadd.f32 %v1033, %v1255
        %v1257 = vpop.f32.mrf.mxu0
        %v1258 = vadd.f32 %v1033, %v1257
        %1259 = vmatmul.bf16.gmra.mxu0 %v1186
        %v1260 = vpop.f32.mrf.mxu0
        %v1261 = vadd.f32 %v1033, %v1260
        %v1262 = vpop.f32.mrf.mxu0
        %v1263 = vadd.f32 %v1033, %v1262
        %1264 = vmatmul.bf16.gmra.mxu0 %v1189
        %v1265 = vpop.f32.mrf.mxu0
        %v1266 = vadd.f32 %v1033, %v1265
        %v1267 = vpop.f32.mrf.mxu0
        %v1268 = vadd.f32 %v1033, %v1267
        %1269 = vmatmul.bf16.gmra.mxu0 %v1192
        %v1270 = vpop.f32.mrf.mxu0
        %v1271 = vadd.f32 %v1033, %v1270
        %v1272 = vpop.f32.mrf.mxu0
        %v1273 = vadd.f32 %v1033, %v1272
        %1274 = vmatmul.bf16.gmra.mxu0 %v1195
        %v1275 = vpop.f32.mrf.mxu0
        %v1276 = vadd.f32 %v1033, %v1275
        %v1277 = vpop.f32.mrf.mxu0
        %v1278 = vadd.f32 %v1033, %v1277
        %1279 = vmatmul.bf16.gmra.mxu0 %v1198
        %v1280 = vpop.f32.mrf.mxu0
        %v1281 = vadd.f32 %v1033, %v1280
        %v1282 = vpop.f32.mrf.mxu0
        %v1283 = vadd.f32 %v1033, %v1282
        %1284 = vmatmul.bf16.gmra.mxu0 %v1201
        %v1285 = vpop.f32.mrf.mxu0
        %v1286 = vadd.f32 %v1033, %v1285
        %v1287 = vpop.f32.mrf.mxu0
        %v1288 = vadd.f32 %v1033, %v1287
        %1289 = vmatmul.bf16.gmra.mxu0 %v1204
        %v1290 = vpop.f32.mrf.mxu0
        %v1291 = vadd.f32 %v1033, %v1290
        %v1292 = vpop.f32.mrf.mxu0
        %v1293 = vadd.f32 %v1033, %v1292
        %1294 = vdwg.mxu0
        %1295 = vmatpush.bf16.msra.mxu0 0
        %1296 = vmatpush.bf16.msra.mxu0 0
        %1297 = vmatpush.bf16.msra.mxu0 0
        %1298 = vmatpush.bf16.msra.mxu0 0
        %1299 = vmatpush.bf16.msra.mxu0 %v1148
        %1300 = vmatpush.bf16.msra.mxu0 %v1146
        %1301 = vmatpush.bf16.msra.mxu0 %v1144
        %1302 = vmatpush.bf16.msra.mxu0 %v1142
        %1303 = vmatmul.bf16.gmra.mxu0 %v1159
        %v1304 = vpop.f32.mrf.mxu0
        %v1305 = vadd.f32 %v1034, %v1304
        %v1306 = vpop.f32.mrf.mxu0
        %v1307 = vadd.f32 %v1034, %v1306
        %1308 = vmatmul.bf16.gmra.mxu0 %v1162
        %v1309 = vpop.f32.mrf.mxu0
        %v1310 = vadd.f32 %v1034, %v1309
        %v1311 = vpop.f32.mrf.mxu0
        %v1312 = vadd.f32 %v1034, %v1311
        %1313 = vmatmul.bf16.gmra.mxu0 %v1165
        %v1314 = vpop.f32.mrf.mxu0
        %v1315 = vadd.f32 %v1034, %v1314
        %v1316 = vpop.f32.mrf.mxu0
        %v1317 = vadd.f32 %v1034, %v1316
        %1318 = vmatmul.bf16.gmra.mxu0 %v1168
        %v1319 = vpop.f32.mrf.mxu0
        %v1320 = vadd.f32 %v1034, %v1319
        %v1321 = vpop.f32.mrf.mxu0
        %v1322 = vadd.f32 %v1034, %v1321
        %1323 = vmatmul.bf16.gmra.mxu0 %v1171
        %v1324 = vpop.f32.mrf.mxu0
        %v1325 = vadd.f32 %v1034, %v1324
        %v1326 = vpop.f32.mrf.mxu0
        %v1327 = vadd.f32 %v1034, %v1326
        %1328 = vmatmul.bf16.gmra.mxu0 %v1174
        %v1329 = vpop.f32.mrf.mxu0
        %v1330 = vadd.f32 %v1034, %v1329
        %v1331 = vpop.f32.mrf.mxu0
        %v1332 = vadd.f32 %v1034, %v1331
        %1333 = vmatmul.bf16.gmra.mxu0 %v1177
        %v1334 = vpop.f32.mrf.mxu0
        %v1335 = vadd.f32 %v1034, %v1334
        %v1336 = vpop.f32.mrf.mxu0
        %v1337 = vadd.f32 %v1034, %v1336
        %1338 = vmatmul.bf16.gmra.mxu0 %v1180
        %v1339 = vpop.f32.mrf.mxu0
        %v1340 = vadd.f32 %v1034, %v1339
        %v1341 = vpop.f32.mrf.mxu0
        %v1342 = vadd.f32 %v1034, %v1341
        %1343 = vmatmul.bf16.gmra.mxu0 %v1183
        %v1344 = vpop.f32.mrf.mxu0
        %v1345 = vadd.f32 %v1034, %v1344
        %v1346 = vpop.f32.mrf.mxu0
        %v1347 = vadd.f32 %v1034, %v1346
        %1348 = vmatmul.bf16.gmra.mxu0 %v1186
        %v1349 = vpop.f32.mrf.mxu0
        %v1350 = vadd.f32 %v1034, %v1349
        %v1351 = vpop.f32.mrf.mxu0
        %v1352 = vadd.f32 %v1034, %v1351
        %1353 = vmatmul.bf16.gmra.mxu0 %v1189
        %v1354 = vpop.f32.mrf.mxu0
        %v1355 = vadd.f32 %v1034, %v1354
        %v1356 = vpop.f32.mrf.mxu0
        %v1357 = vadd.f32 %v1034, %v1356
        %1358 = vmatmul.bf16.gmra.mxu0 %v1192
        %v1359 = vpop.f32.mrf.mxu0
        %v1360 = vadd.f32 %v1034, %v1359
        %v1361 = vpop.f32.mrf.mxu0
        %v1362 = vadd.f32 %v1034, %v1361
        %1363 = vmatmul.bf16.gmra.mxu0 %v1195
        %v1364 = vpop.f32.mrf.mxu0
        %v1365 = vadd.f32 %v1034, %v1364
        %v1366 = vpop.f32.mrf.mxu0
        %v1367 = vadd.f32 %v1034, %v1366
        %1368 = vmatmul.bf16.gmra.mxu0 %v1198
        %v1369 = vpop.f32.mrf.mxu0
        %v1370 = vadd.f32 %v1034, %v1369
        %v1371 = vpop.f32.mrf.mxu0
        %v1372 = vadd.f32 %v1034, %v1371
        %1373 = vmatmul.bf16.gmra.mxu0 %v1201
        %v1374 = vpop.f32.mrf.mxu0
        %v1375 = vadd.f32 %v1034, %v1374
        %v1376 = vpop.f32.mrf.mxu0
        %v1377 = vadd.f32 %v1034, %v1376
        %1378 = vmatmul.bf16.gmra.mxu0 %v1204
        %v1379 = vpop.f32.mrf.mxu0
        %v1380 = vadd.f32 %v1034, %v1379
        %v1381 = vpop.f32.mrf.mxu0
        %v1382 = vadd.f32 %v1034, %v1381
        %1383 = vdwg.mxu0
        %v1384 = vadd.f32 %v823, %v1216
        %v1385 = vadd.f32 %v912, %v1305
        %v1386 = vadd.f32 %v825, %v1218
        %v1387 = vadd.f32 %v914, %v1307
        %v1388 = vadd.f32 %v828, %v1221
        %v1389 = vadd.f32 %v917, %v1310
        %v1390 = vadd.f32 %v830, %v1223
        %v1391 = vadd.f32 %v919, %v1312
        %v1392 = vadd.f32 %v833, %v1226
        %v1393 = vadd.f32 %v922, %v1315
        %v1394 = vadd.f32 %v835, %v1228
        %v1395 = vadd.f32 %v924, %v1317
        %v1396 = vadd.f32 %v838, %v1231
        %v1397 = vadd.f32 %v927, %v1320
        %v1398 = vadd.f32 %v840, %v1233
        %v1399 = vadd.f32 %v929, %v1322
        %v1400 = vadd.f32 %v843, %v1236
        %v1401 = vadd.f32 %v932, %v1325
        %v1402 = vadd.f32 %v845, %v1238
        %v1403 = vadd.f32 %v934, %v1327
        %v1404 = vadd.f32 %v848, %v1241
        %v1405 = vadd.f32 %v937, %v1330
        %v1406 = vadd.f32 %v850, %v1243
        %v1407 = vadd.f32 %v939, %v1332
        %v1408 = vadd.f32 %v853, %v1246
        %v1409 = vadd.f32 %v942, %v1335
        %v1410 = vadd.f32 %v855, %v1248
        %v1411 = vadd.f32 %v944, %v1337
        %v1412 = vadd.f32 %v858, %v1251
        %v1413 = vadd.f32 %v947, %v1340
        %v1414 = vadd.f32 %v860, %v1253
        %v1415 = vadd.f32 %v949, %v1342
        %v1416 = vadd.f32 %v863, %v1256
        %v1417 = vadd.f32 %v952, %v1345
        %v1418 = vadd.f32 %v865, %v1258
        %v1419 = vadd.f32 %v954, %v1347
        %v1420 = vadd.f32 %v868, %v1261
        %v1421 = vadd.f32 %v957, %v1350
        %v1422 = vadd.f32 %v870, %v1263
        %v1423 = vadd.f32 %v959, %v1352
        %v1424 = vadd.f32 %v873, %v1266
        %v1425 = vadd.f32 %v962, %v1355
        %v1426 = vadd.f32 %v875, %v1268
        %v1427 = vadd.f32 %v964, %v1357
        %v1428 = vadd.f32 %v878, %v1271
        %v1429 = vadd.f32 %v967, %v1360
        %v1430 = vadd.f32 %v880, %v1273
        %v1431 = vadd.f32 %v969, %v1362
        %v1432 = vadd.f32 %v883, %v1276
        %v1433 = vadd.f32 %v972, %v1365
        %v1434 = vadd.f32 %v885, %v1278
        %v1435 = vadd.f32 %v974, %v1367
        %v1436 = vadd.f32 %v888, %v1281
        %v1437 = vadd.f32 %v977, %v1370
        %v1438 = vadd.f32 %v890, %v1283
        %v1439 = vadd.f32 %v979, %v1372
        %v1440 = vadd.f32 %v893, %v1286
        %v1441 = vadd.f32 %v982, %v1375
        %v1442 = vadd.f32 %v895, %v1288
        %v1443 = vadd.f32 %v984, %v1377
        %v1444 = vadd.f32 %v898, %v1291
        %v1445 = vadd.f32 %v987, %v1380
        %v1446 = vadd.f32 %v900, %v1293
        %v1447 = vadd.f32 %v989, %v1382
        %v1448 = vmax.f32 %v1384, 0.0
        %v1449 = vmax.f32 %v1385, 0.0
        %v1450 = vmax.f32 %v1386, 0.0
        %v1451 = vmax.f32 %v1387, 0.0
        %v1452 = vmax.f32 %v1388, 0.0
        %v1453 = vmax.f32 %v1389, 0.0
        %v1454 = vmax.f32 %v1390, 0.0
        %v1455 = vmax.f32 %v1391, 0.0
        %v1456 = vmax.f32 %v1392, 0.0
        %v1457 = vmax.f32 %v1393, 0.0
        %v1458 = vmax.f32 %v1394, 0.0
        %v1459 = vmax.f32 %v1395, 0.0
        %v1460 = vmax.f32 %v1396, 0.0
        %v1461 = vmax.f32 %v1397, 0.0
        %v1462 = vmax.f32 %v1398, 0.0
        %v1463 = vmax.f32 %v1399, 0.0
        %v1464 = vmax.f32 %v1400, 0.0
        %v1465 = vmax.f32 %v1401, 0.0
        %v1466 = vmax.f32 %v1402, 0.0
        %v1467 = vmax.f32 %v1403, 0.0
        %v1468 = vmax.f32 %v1404, 0.0
        %v1469 = vmax.f32 %v1405, 0.0
        %v1470 = vmax.f32 %v1406, 0.0
        %v1471 = vmax.f32 %v1407, 0.0
        %v1472 = vmax.f32 %v1408, 0.0
        %v1473 = vmax.f32 %v1409, 0.0
        %v1474 = vmax.f32 %v1410, 0.0
        %v1475 = vmax.f32 %v1411, 0.0
        %v1476 = vmax.f32 %v1412, 0.0
        %v1477 = vmax.f32 %v1413, 0.0
        %v1478 = vmax.f32 %v1414, 0.0
        %v1479 = vmax.f32 %v1415, 0.0
        %v1480 = vmax.f32 %v1416, 0.0
        %v1481 = vmax.f32 %v1417, 0.0
        %v1482 = vmax.f32 %v1418, 0.0
        %v1483 = vmax.f32 %v1419, 0.0
        %v1484 = vmax.f32 %v1420, 0.0
        %v1485 = vmax.f32 %v1421, 0.0
        %v1486 = vmax.f32 %v1422, 0.0
        %v1487 = vmax.f32 %v1423, 0.0
        %v1488 = vmax.f32 %v1424, 0.0
        %v1489 = vmax.f32 %v1425, 0.0
        %v1490 = vmax.f32 %v1426, 0.0
        %v1491 = vmax.f32 %v1427, 0.0
        %v1492 = vmax.f32 %v1428, 0.0
        %v1493 = vmax.f32 %v1429, 0.0
        %v1494 = vmax.f32 %v1430, 0.0
        %v1495 = vmax.f32 %v1431, 0.0
        %v1496 = vmax.f32 %v1432, 0.0
        %v1497 = vmax.f32 %v1433, 0.0
        %v1498 = vmax.f32 %v1434, 0.0
        %v1499 = vmax.f32 %v1435, 0.0
        %v1500 = vmax.f32 %v1436, 0.0
        %v1501 = vmax.f32 %v1437, 0.0
        %v1502 = vmax.f32 %v1438, 0.0
        %v1503 = vmax.f32 %v1439, 0.0
        %v1504 = vmax.f32 %v1440, 0.0
        %v1505 = vmax.f32 %v1441, 0.0
        %v1506 = vmax.f32 %v1442, 0.0
        %v1507 = vmax.f32 %v1443, 0.0
        %v1508 = vmax.f32 %v1444, 0.0
        %v1509 = vmax.f32 %v1445, 0.0
        %v1510 = vmax.f32 %v1446, 0.0
        %v1511 = vmax.f32 %v1447, 0.0
        %1512 = vst [vmem:[%s424] sm:$0xff] %v1448
        %1513 = vst [vmem:[%s424 + $0x8] sm:$0xff] %v1449
        %1514 = vst [vmem:[%s424 + $0x10] sm:$0xff] %v1450
        %1515 = vst [vmem:[%s424 + $0x18] sm:$0xff] %v1451
        %1516 = vst [vmem:[%s424 + $0x20] sm:$0xff] %v1452
        %1517 = vst [vmem:[%s424 + $0x28] sm:$0xff] %v1453
        %1518 = vst [vmem:[%s424 + $0x30] sm:$0xff] %v1454
        %1519 = vst [vmem:[%s424 + $0x38] sm:$0xff] %v1455
        %1520 = vst [vmem:[%s424 + $0x40] sm:$0xff] %v1456
        %1521 = vst [vmem:[%s424 + $0x48] sm:$0xff] %v1457
        %1522 = vst [vmem:[%s424 + $0x50] sm:$0xff] %v1458
        %1523 = vst [vmem:[%s424 + $0x58] sm:$0xff] %v1459
        %1524 = vst [vmem:[%s424 + $0x60] sm:$0xff] %v1460
        %1525 = vst [vmem:[%s424 + $0x68] sm:$0xff] %v1461
        %1526 = vst [vmem:[%s424 + $0x70] sm:$0xff] %v1462
        %1527 = vst [vmem:[%s424 + $0x78] sm:$0xff] %v1463
        %1528 = vst [vmem:[%s424 + $0x80] sm:$0xff] %v1464
        %1529 = vst [vmem:[%s424 + $0x88] sm:$0xff] %v1465
        %1530 = vst [vmem:[%s424 + $0x90] sm:$0xff] %v1466
        %1531 = vst [vmem:[%s424 + $0x98] sm:$0xff] %v1467
        %1532 = vst [vmem:[%s424 + $0xa0] sm:$0xff] %v1468
        %1533 = vst [vmem:[%s424 + $0xa8] sm:$0xff] %v1469
        %1534 = vst [vmem:[%s424 + $0xb0] sm:$0xff] %v1470
        %1535 = vst [vmem:[%s424 + $0xb8] sm:$0xff] %v1471
        %1536 = vst [vmem:[%s424 + $0xc0] sm:$0xff] %v1472
        %1537 = vst [vmem:[%s424 + $0xc8] sm:$0xff] %v1473
        %1538 = vst [vmem:[%s424 + $0xd0] sm:$0xff] %v1474
        %1539 = vst [vmem:[%s424 + $0xd8] sm:$0xff] %v1475
        %1540 = vst [vmem:[%s424 + $0xe0] sm:$0xff] %v1476
        %1541 = vst [vmem:[%s424 + $0xe8] sm:$0xff] %v1477
        %1542 = vst [vmem:[%s424 + $0xf0] sm:$0xff] %v1478
        %1543 = vst [vmem:[%s424 + $0xf8] sm:$0xff] %v1479
        %1544 = vst [vmem:[%s424 + $0x100] sm:$0xff] %v1480
        %1545 = vst [vmem:[%s424 + $0x108] sm:$0xff] %v1481
        %1546 = vst [vmem:[%s424 + $0x110] sm:$0xff] %v1482
        %1547 = vst [vmem:[%s424 + $0x118] sm:$0xff] %v1483
        %1548 = vst [vmem:[%s424 + $0x120] sm:$0xff] %v1484
        %1549 = vst [vmem:[%s424 + $0x128] sm:$0xff] %v1485
        %1550 = vst [vmem:[%s424 + $0x130] sm:$0xff] %v1486
        %1551 = vst [vmem:[%s424 + $0x138] sm:$0xff] %v1487
        %1552 = vst [vmem:[%s424 + $0x140] sm:$0xff] %v1488
        %1553 = vst [vmem:[%s424 + $0x148] sm:$0xff] %v1489
        %1554 = vst [vmem:[%s424 + $0x150] sm:$0xff] %v1490
        %1555 = vst [vmem:[%s424 + $0x158] sm:$0xff] %v1491
        %1556 = vst [vmem:[%s424 + $0x160] sm:$0xff] %v1492
        %1557 = vst [vmem:[%s424 + $0x168] sm:$0xff] %v1493
        %1558 = vst [vmem:[%s424 + $0x170] sm:$0xff] %v1494
        %1559 = vst [vmem:[%s424 + $0x178] sm:$0xff] %v1495
        %1560 = vst [vmem:[%s424 + $0x180] sm:$0xff] %v1496
        %1561 = vst [vmem:[%s424 + $0x188] sm:$0xff] %v1497
        %1562 = vst [vmem:[%s424 + $0x190] sm:$0xff] %v1498
        %1563 = vst [vmem:[%s424 + $0x198] sm:$0xff] %v1499
        %1564 = vst [vmem:[%s424 + $0x1a0] sm:$0xff] %v1500
        %1565 = vst [vmem:[%s424 + $0x1a8] sm:$0xff] %v1501
        %1566 = vst [vmem:[%s424 + $0x1b0] sm:$0xff] %v1502
        %1567 = vst [vmem:[%s424 + $0x1b8] sm:$0xff] %v1503
        %1568 = vst [vmem:[%s424 + $0x1c0] sm:$0xff] %v1504
        %1569 = vst [vmem:[%s424 + $0x1c8] sm:$0xff] %v1505
        %1570 = vst [vmem:[%s424 + $0x1d0] sm:$0xff] %v1506
        %1571 = vst [vmem:[%s424 + $0x1d8] sm:$0xff] %v1507
        %1572 = vst [vmem:[%s424 + $0x1e0] sm:$0xff] %v1508
        %1573 = vst [vmem:[%s424 + $0x1e8] sm:$0xff] %v1509
        %1574 = vst [vmem:[%s424 + $0x1f0] sm:$0xff] %v1510
        %1575 = vst [vmem:[%s424 + $0x1f8] sm:$0xff] %v1511
        %s1576 = sand.u32 %s265, 1
        %s1577 = scalar_lea.sflag [#allocation3], %s1576
        %s1578 = sand.u32 %s265, 1
        %s1579 = smul.addr %s1578, 512
        %s1580 = scalar_lea.vmem [#allocation2], %s1579
        // Predicated region
        $region57: #{_lambda_.7} parent=55 // pred_check
          %p1581 = pneg %p275
        $region58: #{_lambda_.7} parent=55 // pred_check_branch
          %1583 = sbr.rel (%p1581) target = $region60
        $region59: #{_lambda_.7} parent=55 // pred_region
          %s1584 = smul.u32 32, %s28
          %1586 = vsyncadd %s1577, 0
          %s1587 = smul.addr %s1584, 2
          %s1588 = smul.addr %s27, 64
          %s1589 = sadd.s32 %s1587, %s1588
          %s1590 = smul.addr %s1589, 8
          %s1591 = scalar_lea.hbm %s9, %s1590
          %s1592 = sshll.u32 %s1580, 4
          %s1593 = int_to_ptr.vmem [resolvable:$true] %s1592
          %s1594 = sshll.u32 %s1591, 4
          %s1595 = int_to_ptr.hbm [resolvable:$true] %s1594
          %1600 = dma.vmem_to_hbm [thread:$0]  %s1593, 8192, %s1595, %s1577, 256, 256, 16
        $region60: #{_lambda_.7} parent=55 // pred_fallthru
          _
      $region56: #{_lambda_.7} parent=5 // pred_fallthru
        _
      %p1601 = scmp.le.s32.totalorder 2, %s18
      // Predicated region
      $region61: #{_lambda_.7} parent=5 // pred_check
        %p1602 = pneg %p1601
      $region62: #{_lambda_.7} parent=5 // pred_check_branch
        %1604 = sbr.rel (%p1602) target = $region64
      $region63: #{_lambda_.7} parent=5 // pred_region
        %s1605 = ssub.s32 %s18, 2
        // Predicated region
        $region65: #{_lambda_.7} parent=63 // pred_check
          %p1606 = pneg %p281
        $region66: #{_lambda_.7} parent=63 // pred_check_branch
          %1608 = sbr.rel (%p1606) target = $region68
        $region67: #{_lambda_.7} parent=63 // pred_region
          %s1609 = sand.u32 %s266, 1
          %s1610 = scalar_lea.sflag [#allocation3], %s1609
          %s1611 = sand.u32 %s266, 1
          %s1612 = smul.addr %s1611, 512
          %s1613 = scalar_lea.vmem [#allocation2], %s1612
          %1615 = dma.done %s1610, 8192
        $region68: #{_lambda_.7} parent=63 // pred_fallthru
          _
      $region64: #{_lambda_.7} parent=5 // pred_fallthru
        _
    $region6: #{_lambda_.7} parent=1 // loop_footer
      %s22 = sadd.s32 1, %s18
    $region7: #{_lambda_.7} parent=1 // loop_footer_branch
      %17 = sbr.rel target = $region3
    $region8: #{_lambda_.7} parent=1 // loop_exit
      _
    %1616 = vsyncpa [#allocation3], 1
    %s1617 = scalar_lea.sflag [#allocation3], 1
    %1618 = vsyncpa %s1617, 1

// kernel: _lambda_.5
$region0: #{_lambda_.5}
  #allocation0 [shape = 'u32[]', space=smem, size = 0x4, offset = 0x4, fixed_abs, tag = 'smem constant byte address 0x4 - core index']
  #allocation1 [shape = 'u32[72,128]{1,0:T(1,128)}', space=vmem, size = 0x9000, scoped, tag = 'internal scratch']
  %s0 = inlined_call_operand.vmem [shape: bf16[2,256,1152], index: 0, kind: input, shape index: {}]
  %s1 = inlined_call_operand.vmem [shape: bf16[2,256,1152], index: 1, kind: input, shape index: {}]
  %s2 = inlined_call_operand.vmem [shape: bf16[1152,128], index: 2, kind: input, shape index: {}]
  %s3 = inlined_call_operand.vmem [shape: bf16[1152,128], index: 3, kind: input, shape index: {}]
  %s4 = inlined_call_operand.vmem [shape: f32[1,128], index: 4, kind: input, shape index: {}]
  %s5 = inlined_call_operand.vmem [shape: f32[1,128], index: 5, kind: input, shape index: {}]
  %s6 = inlined_call_operand.vmem [shape: bf16[2,256,128], index: 6, kind: output, shape index: {0}]
  %s7 = inlined_call_operand.vmem [shape: bf16[2,256,128], index: 7, kind: output, shape index: {1}]
  %s8 = inlined_call_operand.vmem [shape: f32[2,1,128], index: 8, kind: output, shape index: {2}]
  %9 = xla_tuple %s6, %s7, %s8
  %s10 = sld [smem:[#allocation0]]
  $region81: #{_lambda_.5} parent=0
    _
  %s12 = ssub.s32 1, %s10
  %s13 = scalar_select 0, %s12, %s10
  loop: start=0, step=1, limit=4
  $region2: #{_lambda_.5} parent=0 // loop_pre_header
    _
  $region3: #{_lambda_.5} parent=0 // loop_header
    %s15 = sphi 0, %s19
    %p16 = scmp.ge.s32.totalorder %s15, 4
    %s22 = sphi 0, %s34
    %s23 = sphi 0, %s30
    %s24 = sphi 0, %s22
    %s25 = sphi 0, %s23
    %s26 = sphi 0, %s24
    %s27 = sphi 0, %s25
    %s39 = sphi 0, %s41
    %s42 = sphi 0, %s39
    %s43 = sphi 0, %s42
    %s59 = sphi 0, %s43
    %s67 = sphi 0, %s69
    %s70 = sphi 0, %s67
    %s71 = sphi 0, %s70
    %s87 = sphi 0, %s71
    %s91 = sphi 0, %s91
    %s93 = sphi 0, %s91
    %s94 = sphi 0, %s93
    %s108 = sphi 0, %s94
    %s112 = sphi 0, %s112
    %s114 = sphi 0, %s112
    %s115 = sphi 0, %s114
    %s129 = sphi 0, %s115
    %s133 = sphi 0, %s133
    %s135 = sphi 0, %s133
    %s136 = sphi 0, %s135
    %s150 = sphi 0, %s136
    %s154 = sphi 0, %s154
    %s156 = sphi 0, %s154
    %s157 = sphi 0, %s156
    %s171 = sphi 0, %s157
    %s179 = sphi 0, %s181
    %s182 = sphi 0, %s179
    %s183 = sphi 0, %s182
    %s199 = sphi 0, %s183
    %s207 = sphi 0, %s209
    %s210 = sphi 0, %s207
    %s211 = sphi 0, %s210
    %s227 = sphi 0, %s211
    %s233 = sphi 0, %s235
    %s236 = sphi 0, %s233
    %s237 = sphi 0, %s236
    %s253 = sphi 0, %s237
  $region4: #{_lambda_.5} parent=0 // loop_header_branch
    %18 = sbr.rel (%p16) target = $region8
  $region5: #{_lambda_.5} parent=0 // loop_body
    %s20 = ssub.s32 %s15, 1
    %s21 = ssub.s32 %s15, 2
    %s28 = sadd.s32 1, %s23
    %p29 = scmp.ge.s32.totalorder %s28, 1
    %s30 = scalar_select %p29, 0, %s28
    %s31 = sadd.s32 1, %s22
    %s32 = scalar_select %p29, %s31, %s22
    %p33 = scmp.ge.s32.totalorder %s32, 2
    %s34 = scalar_select %p33, 0, %s32
    %s35 = ssub.s32 %s22, %s34
    %s36 = ssub.s32 %s23, %s30
    %s37 = sor.u32 %s35, %s36
    %p38 = scmp.eq.s32.totalorder %s37, 0
    %s40 = sadd.s32 %s39, 1
    %s41 = scalar_select %p38, %s39, %s40
    %p44 = pneg %p38
    %p45 = scmp.eq.s32.totalorder %s15, 1
    %p46 = por %p44, %p45
    %p47 = scmp.ne.s32.totalorder %s39, %s42
    %p48 = scmp.eq.s32.totalorder %s15, 0
    %p49 = por %p47, %p48
    %p50 = scmp.ne.s32.totalorder %s39, %s42
    %p51 = scmp.eq.s32.totalorder %s20, 1
    %p52 = por %p50, %p51
    %p53 = scmp.ne.s32.totalorder %s42, %s43
    %p54 = scmp.eq.s32.totalorder %s20, 0
    %p55 = por %p53, %p54
    %p56 = scmp.ne.s32.totalorder %s42, %s43
    %p57 = scmp.eq.s32.totalorder %s21, 1
    %p58 = por %p56, %p57
    %p60 = scmp.ne.s32.totalorder %s43, %s59
    %p61 = scmp.eq.s32.totalorder %s21, 0
    %p62 = por %p60, %p61
    %s63 = ssub.s32 %s22, %s34
    %s64 = ssub.s32 %s23, %s30
    %s65 = sor.u32 %s63, %s64
    %p66 = scmp.eq.s32.totalorder %s65, 0
    %s68 = sadd.s32 %s67, 1
    %s69 = scalar_select %p66, %s67, %s68
    %p72 = pneg %p66
    %p73 = scmp.eq.s32.totalorder %s15, 1
    %p74 = por %p72, %p73
    %p75 = scmp.ne.s32.totalorder %s67, %s70
    %p76 = scmp.eq.s32.totalorder %s15, 0
    %p77 = por %p75, %p76
    %p78 = scmp.ne.s32.totalorder %s67, %s70
    %p79 = scmp.eq.s32.totalorder %s20, 1
    %p80 = por %p78, %p79
    %p81 = scmp.ne.s32.totalorder %s70, %s71
    %p82 = scmp.eq.s32.totalorder %s20, 0
    %p83 = por %p81, %p82
    %p84 = scmp.ne.s32.totalorder %s70, %s71
    %p85 = scmp.eq.s32.totalorder %s21, 1
    %p86 = por %p84, %p85
    %p88 = scmp.ne.s32.totalorder %s71, %s87
    %p89 = scmp.eq.s32.totalorder %s21, 0
    %p90 = por %p88, %p89
    %s92 = sadd.s32 %s91, 1
    %p95 = scmp.eq.s32.totalorder %s15, 1
    %p96 = scmp.ne.s32.totalorder %s91, %s93
    %p97 = scmp.eq.s32.totalorder %s15, 0
    %p98 = por %p96, %p97
    %p99 = scmp.ne.s32.totalorder %s91, %s93
    %p100 = scmp.eq.s32.totalorder %s20, 1
    %p101 = por %p99, %p100
    %p102 = scmp.ne.s32.totalorder %s93, %s94
    %p103 = scmp.eq.s32.totalorder %s20, 0
    %p104 = por %p102, %p103
    %p105 = scmp.ne.s32.totalorder %s93, %s94
    %p106 = scmp.eq.s32.totalorder %s21, 1
    %p107 = por %p105, %p106
    %p109 = scmp.ne.s32.totalorder %s94, %s108
    %p110 = scmp.eq.s32.totalorder %s21, 0
    %p111 = por %p109, %p110
    %s113 = sadd.s32 %s112, 1
    %p116 = scmp.eq.s32.totalorder %s15, 1
    %p117 = scmp.ne.s32.totalorder %s112, %s114
    %p118 = scmp.eq.s32.totalorder %s15, 0
    %p119 = por %p117, %p118
    %p120 = scmp.ne.s32.totalorder %s112, %s114
    %p121 = scmp.eq.s32.totalorder %s20, 1
    %p122 = por %p120, %p121
    %p123 = scmp.ne.s32.totalorder %s114, %s115
    %p124 = scmp.eq.s32.totalorder %s20, 0
    %p125 = por %p123, %p124
    %p126 = scmp.ne.s32.totalorder %s114, %s115
    %p127 = scmp.eq.s32.totalorder %s21, 1
    %p128 = por %p126, %p127
    %p130 = scmp.ne.s32.totalorder %s115, %s129
    %p131 = scmp.eq.s32.totalorder %s21, 0
    %p132 = por %p130, %p131
    %s134 = sadd.s32 %s133, 1
    %p137 = scmp.eq.s32.totalorder %s15, 1
    %p138 = scmp.ne.s32.totalorder %s133, %s135
    %p139 = scmp.eq.s32.totalorder %s15, 0
    %p140 = por %p138, %p139
    %p141 = scmp.ne.s32.totalorder %s133, %s135
    %p142 = scmp.eq.s32.totalorder %s20, 1
    %p143 = por %p141, %p142
    %p144 = scmp.ne.s32.totalorder %s135, %s136
    %p145 = scmp.eq.s32.totalorder %s20, 0
    %p146 = por %p144, %p145
    %p147 = scmp.ne.s32.totalorder %s135, %s136
    %p148 = scmp.eq.s32.totalorder %s21, 1
    %p149 = por %p147, %p148
    %p151 = scmp.ne.s32.totalorder %s136, %s150
    %p152 = scmp.eq.s32.totalorder %s21, 0
    %p153 = por %p151, %p152
    %s155 = sadd.s32 %s154, 1
    %p158 = scmp.eq.s32.totalorder %s15, 1
    %p159 = scmp.ne.s32.totalorder %s154, %s156
    %p160 = scmp.eq.s32.totalorder %s15, 0
    %p161 = por %p159, %p160
    %p162 = scmp.ne.s32.totalorder %s154, %s156
    %p163 = scmp.eq.s32.totalorder %s20, 1
    %p164 = por %p162, %p163
    %p165 = scmp.ne.s32.totalorder %s156, %s157
    %p166 = scmp.eq.s32.totalorder %s20, 0
    %p167 = por %p165, %p166
    %p168 = scmp.ne.s32.totalorder %s156, %s157
    %p169 = scmp.eq.s32.totalorder %s21, 1
    %p170 = por %p168, %p169
    %p172 = scmp.ne.s32.totalorder %s157, %s171
    %p173 = scmp.eq.s32.totalorder %s21, 0
    %p174 = por %p172, %p173
    %s175 = ssub.s32 %s22, %s34
    %s176 = ssub.s32 %s23, %s30
    %s177 = sor.u32 %s175, %s176
    %p178 = scmp.eq.s32.totalorder %s177, 0
    %s180 = sadd.s32 %s179, 1
    %s181 = scalar_select %p178, %s179, %s180
    %p184 = pneg %p178
    %p185 = scmp.eq.s32.totalorder %s15, 1
    %p186 = por %p184, %p185
    %p187 = scmp.ne.s32.totalorder %s179, %s182
    %p188 = scmp.eq.s32.totalorder %s15, 0
    %p189 = por %p187, %p188
    %p190 = scmp.ne.s32.totalorder %s179, %s182
    %p191 = scmp.eq.s32.totalorder %s20, 1
    %p192 = por %p190, %p191
    %p193 = scmp.ne.s32.totalorder %s182, %s183
    %p194 = scmp.eq.s32.totalorder %s20, 0
    %p195 = por %p193, %p194
    %p196 = scmp.ne.s32.totalorder %s182, %s183
    %p197 = scmp.eq.s32.totalorder %s21, 1
    %p198 = por %p196, %p197
    %p200 = scmp.ne.s32.totalorder %s183, %s199
    %p201 = scmp.eq.s32.totalorder %s21, 0
    %p202 = por %p200, %p201
    %s203 = ssub.s32 %s22, %s34
    %s204 = ssub.s32 %s23, %s30
    %s205 = sor.u32 %s203, %s204
    %p206 = scmp.eq.s32.totalorder %s205, 0
    %s208 = sadd.s32 %s207, 1
    %s209 = scalar_select %p206, %s207, %s208
    %p212 = pneg %p206
    %p213 = scmp.eq.s32.totalorder %s15, 1
    %p214 = por %p212, %p213
    %p215 = scmp.ne.s32.totalorder %s207, %s210
    %p216 = scmp.eq.s32.totalorder %s15, 0
    %p217 = por %p215, %p216
    %p218 = scmp.ne.s32.totalorder %s207, %s210
    %p219 = scmp.eq.s32.totalorder %s20, 1
    %p220 = por %p218, %p219
    %p221 = scmp.ne.s32.totalorder %s210, %s211
    %p222 = scmp.eq.s32.totalorder %s20, 0
    %p223 = por %p221, %p222
    %p224 = scmp.ne.s32.totalorder %s210, %s211
    %p225 = scmp.eq.s32.totalorder %s21, 1
    %p226 = por %p224, %p225
    %p228 = scmp.ne.s32.totalorder %s211, %s227
    %p229 = scmp.eq.s32.totalorder %s21, 0
    %p230 = por %p228, %p229
    %s231 = ssub.s32 %s22, %s34
    %p232 = scmp.eq.s32.totalorder %s231, 0
    %s234 = sadd.s32 %s233, 1
    %s235 = scalar_select %p232, %s233, %s234
    %p238 = pneg %p232
    %p239 = scmp.eq.s32.totalorder %s15, 1
    %p240 = por %p238, %p239
    %p241 = scmp.ne.s32.totalorder %s233, %s236
    %p242 = scmp.eq.s32.totalorder %s15, 0
    %p243 = por %p241, %p242
    %p244 = scmp.ne.s32.totalorder %s233, %s236
    %p245 = scmp.eq.s32.totalorder %s20, 1
    %p246 = por %p244, %p245
    %p247 = scmp.ne.s32.totalorder %s236, %s237
    %p248 = scmp.eq.s32.totalorder %s20, 0
    %p249 = por %p247, %p248
    %p250 = scmp.ne.s32.totalorder %s236, %s237
    %p251 = scmp.eq.s32.totalorder %s21, 1
    %p252 = por %p250, %p251
    %p254 = scmp.ne.s32.totalorder %s237, %s253
    %p255 = scmp.eq.s32.totalorder %s21, 0
    %p256 = por %p254, %p255
    %p257 = scmp.le.s32.totalorder 1, %s15
    %p258 = scmp.lt.s32.totalorder %s15, 3
    %p259 = pnand %p257, %p258
    %p260 = pneg %p259
    // Predicated region
    $region9: #{_lambda_.5} parent=5 // pred_check
      _
    $region10: #{_lambda_.5} parent=5 // pred_check_branch
      %262 = sbr.rel (%p259) target = $region12
    $region11: #{_lambda_.5} parent=5 // pred_region
      %s263 = ssub.s32 %s15, 1
      // Predicated region
      $region13: #{_lambda_.5} parent=11 // pred_check
        %p264 = pneg %p104
      $region14: #{_lambda_.5} parent=11 // pred_check_branch
        %266 = sbr.rel (%p264) target = $region16
      $region15: #{_lambda_.5} parent=11 // pred_region
        _
      $region16: #{_lambda_.5} parent=11 // pred_fallthru
        _
      // Predicated region
      $region17: #{_lambda_.5} parent=11 // pred_check
        %p267 = pneg %p125
      $region18: #{_lambda_.5} parent=11 // pred_check_branch
        %269 = sbr.rel (%p267) target = $region20
      $region19: #{_lambda_.5} parent=11 // pred_region
        _
      $region20: #{_lambda_.5} parent=11 // pred_fallthru
        _
      // Predicated region
      $region21: #{_lambda_.5} parent=11 // pred_check
        %p270 = pneg %p146
      $region22: #{_lambda_.5} parent=11 // pred_check_branch
        %272 = sbr.rel (%p270) target = $region24
      $region23: #{_lambda_.5} parent=11 // pred_region
        _
      $region24: #{_lambda_.5} parent=11 // pred_fallthru
        _
      // Predicated region
      $region25: #{_lambda_.5} parent=11 // pred_check
        %p273 = pneg %p167
      $region26: #{_lambda_.5} parent=11 // pred_check_branch
        %275 = sbr.rel (%p273) target = $region28
      $region27: #{_lambda_.5} parent=11 // pred_region
        _
      $region28: #{_lambda_.5} parent=11 // pred_fallthru
        _
    $region12: #{_lambda_.5} parent=5 // pred_fallthru
      _
    %p276 = scmp.lt.s32.totalorder %s15, 2
    // Predicated region
    $region29: #{_lambda_.5} parent=5 // pred_check
      %p277 = pneg %p276
    $region30: #{_lambda_.5} parent=5 // pred_check_branch
      %279 = sbr.rel (%p277) target = $region32
    $region31: #{_lambda_.5} parent=5 // pred_region
      // Predicated region
      $region33: #{_lambda_.5} parent=31 // pred_check
        %p280 = pneg %p49
      $region34: #{_lambda_.5} parent=31 // pred_check_branch
        %282 = sbr.rel (%p280) target = $region36
      $region35: #{_lambda_.5} parent=31 // pred_region
        %s283 = smul.u32 32, %s23
        %p284 = scmp.lt.s32.totalorder %s22, 1
        %s285 = scalar_select %p284, %s22, 1
        %p286 = scmp.lt.s32.totalorder %s283, 31
        %s287 = scalar_select %p286, %s283, 31
        %s288 = smul.addr %s287, 9
        %s289 = smul.addr %s285, 288
        %s290 = sadd.s32 %s288, %s289
        %s291 = smul.addr %s290, 4
        %s292 = scalar_lea.vmem %s0, %s291
        %s293 = smul.u32 32, %s23
      $region36: #{_lambda_.5} parent=31 // pred_fallthru
        _
      // Predicated region
      $region37: #{_lambda_.5} parent=31 // pred_check
        %p294 = pneg %p77
      $region38: #{_lambda_.5} parent=31 // pred_check_branch
        %296 = sbr.rel (%p294) target = $region40
      $region39: #{_lambda_.5} parent=31 // pred_region
        %s297 = smul.u32 32, %s23
        %p298 = scmp.lt.s32.totalorder %s22, 1
        %s299 = scalar_select %p298, %s22, 1
        %p300 = scmp.lt.s32.totalorder %s297, 31
        %s301 = scalar_select %p300, %s297, 31
        %s302 = smul.addr %s301, 9
        %s303 = smul.addr %s299, 288
        %s304 = sadd.s32 %s302, %s303
        %s305 = smul.addr %s304, 4
        %s306 = scalar_lea.vmem %s1, %s305
        %s307 = smul.u32 32, %s23
      $region40: #{_lambda_.5} parent=31 // pred_fallthru
        _
    $region32: #{_lambda_.5} parent=5 // pred_fallthru
      _
    %p308 = scmp.le.s32.totalorder 1, %s15
    %p309 = scmp.lt.s32.totalorder %s15, 3
    %p310 = pnand %p308, %p309
    %p311 = pneg %p310
    // Predicated region
    $region41: #{_lambda_.5} parent=5 // pred_check
      _
    $region42: #{_lambda_.5} parent=5 // pred_check_branch
      %313 = sbr.rel (%p310) target = $region44
    $region43: #{_lambda_.5} parent=5 // pred_region
      %s314 = ssub.s32 %s15, 1
      %s315 = smul.u32 32, %s25
      %p316 = scmp.lt.s32.totalorder %s24, 1
      %s317 = scalar_select %p316, %s24, 1
      %p318 = scmp.lt.s32.totalorder %s315, 31
      %s319 = scalar_select %p318, %s315, 31
      %s320 = smul.addr %s319, 9
      %s321 = smul.addr %s317, 288
      %s322 = sadd.s32 %s320, %s321
      %s323 = smul.addr %s322, 4
      %s324 = scalar_lea.vmem %s0, %s323
      %p325 = pneg %p55
      %p326 = pneg %p52
      %s327 = smul.u32 32, %s25
      %p328 = scmp.lt.s32.totalorder %s24, 1
      %s329 = scalar_select %p328, %s24, 1
      %p330 = scmp.lt.s32.totalorder %s327, 31
      %s331 = scalar_select %p330, %s327, 31
      %s332 = smul.addr %s331, 9
      %s333 = smul.addr %s329, 288
      %s334 = sadd.s32 %s332, %s333
      %s335 = smul.addr %s334, 4
      %s336 = scalar_lea.vmem %s1, %s335
      %p337 = pneg %p83
      %p338 = pneg %p80
      %p339 = pneg %p104
      %p340 = pneg %p101
      %p341 = pneg %p125
      %p342 = pneg %p122
      %p343 = pneg %p146
      %p344 = pneg %p143
      %p345 = pneg %p167
      %p346 = pneg %p164
      %p347 = pneg %p195
      %p348 = pneg %p192
      %s349 = smul.u32 32, %s25
      %p350 = scmp.lt.s32.totalorder %s24, 1
      %s351 = scalar_select %p350, %s24, 1
      %p352 = scmp.lt.s32.totalorder %s349, 31
      %s353 = scalar_select %p352, %s349, 31
      %s354 = smul.addr %s351, 32
      %s355 = sadd.s32 %s353, %s354
      %s356 = smul.addr %s355, 4
      %s357 = scalar_lea.vmem %s6, %s356
      %p358 = pneg %p223
      %p359 = pneg %p220
      %s360 = smul.u32 32, %s25
      %p361 = scmp.lt.s32.totalorder %s24, 1
      %s362 = scalar_select %p361, %s24, 1
      %p363 = scmp.lt.s32.totalorder %s360, 31
      %s364 = scalar_select %p363, %s360, 31
      %s365 = smul.addr %s362, 32
      %s366 = sadd.s32 %s364, %s365
      %s367 = smul.addr %s366, 4
      %s368 = scalar_lea.vmem %s7, %s367
      %p369 = pneg %p249
      %p370 = pneg %p246
      %p371 = scmp.lt.s32.totalorder %s24, 1
      %s372 = scalar_select %p371, %s24, 1
      %s373 = scalar_lea.vmem %s8, %s372
      %s374 = smul.u32 32, %s25
      %p375 = scmp.lt.s32.totalorder %s24, 1
      %s376 = scalar_select %p375, %s24, 1
      %p377 = scmp.lt.s32.totalorder %s374, 31
      %s378 = scalar_select %p377, %s374, 31
      %s379 = smul.addr %s378, 9
      %s380 = smul.addr %s376, 288
      %s381 = sadd.s32 %s379, %s380
      %s382 = smul.addr %s381, 4
      %s383 = scalar_lea.vmem %s0, %s382
      %s384 = smul.u32 32, %s25
      %s385 = smul.u32 32, %s25
      %p386 = scmp.lt.s32.totalorder %s24, 1
      %s387 = scalar_select %p386, %s24, 1
      %p388 = scmp.lt.s32.totalorder %s385, 31
      %s389 = scalar_select %p388, %s385, 31
      %s390 = smul.addr %s389, 9
      %s391 = smul.addr %s387, 288
      %s392 = sadd.s32 %s390, %s391
      %s393 = smul.addr %s392, 4
      %s394 = scalar_lea.vmem %s1, %s393
      %s395 = smul.u32 32, %s25
      %s396 = smul.u32 32, %s25
      %p397 = scmp.lt.s32.totalorder %s24, 1
      %s398 = scalar_select %p397, %s24, 1
      %p399 = scmp.lt.s32.totalorder %s396, 31
      %s400 = scalar_select %p399, %s396, 31
      %s401 = smul.addr %s398, 32
      %s402 = sadd.s32 %s400, %s401
      %s403 = smul.addr %s402, 4
      %s404 = scalar_lea.vmem %s6, %s403
      %s405 = smul.u32 32, %s25
      %s406 = smul.u32 32, %s25
      %p407 = scmp.lt.s32.totalorder %s24, 1
      %s408 = scalar_select %p407, %s24, 1
      %p409 = scmp.lt.s32.totalorder %s406, 31
      %s410 = scalar_select %p409, %s406, 31
      %s411 = smul.addr %s408, 32
      %s412 = sadd.s32 %s410, %s411
      %s413 = smul.addr %s412, 4
      %s414 = scalar_lea.vmem %s7, %s413
      %s415 = smul.u32 32, %s25
      %p416 = scmp.lt.s32.totalorder %s24, 1
      %s417 = scalar_select %p416, %s24, 1
      %s418 = scalar_lea.vmem %s8, %s417
      %v419 = vld [vmem:[%s383] sm:$0xff]
      %v420 = vld [vmem:[%s383 + $0x8] sm:$0xff]
      %v421 = vld [vmem:[%s383 + $0x10] sm:$0xff]
      %v422 = vld [vmem:[%s383 + $0x18] sm:$0xff]
      %v423 = vld [vmem:[%s383 + $0x20] sm:$0xf]
      %v424 = vld [vmem:[%s383 + $0x24] sm:$0xff]
      %v425 = vld [vmem:[%s383 + $0x2c] sm:$0xff]
      %v426 = vld [vmem:[%s383 + $0x34] sm:$0xff]
      %v427 = vld [vmem:[%s383 + $0x3c] sm:$0xff]
      %v428 = vld [vmem:[%s383 + $0x44] sm:$0xf]
      %v429 = vld [vmem:[%s383 + $0x48] sm:$0xff]
      %v430 = vld [vmem:[%s383 + $0x50] sm:$0xff]
      %v431 = vld [vmem:[%s383 + $0x58] sm:$0xff]
      %v432 = vld [vmem:[%s383 + $0x60] sm:$0xff]
      %v433 = vld [vmem:[%s383 + $0x68] sm:$0xf]
      %v434 = vld [vmem:[%s383 + $0x6c] sm:$0xff]
      %v435 = vld [vmem:[%s383 + $0x74] sm:$0xff]
      %v436 = vld [vmem:[%s383 + $0x7c] sm:$0xff]
      %v437 = vld [vmem:[%s383 + $0x84] sm:$0xff]
      %v438 = vld [vmem:[%s383 + $0x8c] sm:$0xf]
      %v439 = vld [vmem:[%s383 + $0x90] sm:$0xff]
      %v440 = vld [vmem:[%s383 + $0x98] sm:$0xff]
      %v441 = vld [vmem:[%s383 + $0xa0] sm:$0xff]
      %v442 = vld [vmem:[%s383 + $0xa8] sm:$0xff]
      %v443 = vld [vmem:[%s383 + $0xb0] sm:$0xf]
      %v444 = vld [vmem:[%s383 + $0xb4] sm:$0xff]
      %v445 = vld [vmem:[%s383 + $0xbc] sm:$0xff]
      %v446 = vld [vmem:[%s383 + $0xc4] sm:$0xff]
      %v447 = vld [vmem:[%s383 + $0xcc] sm:$0xff]
      %v448 = vld [vmem:[%s383 + $0xd4] sm:$0xf]
      %v449 = vld [vmem:[%s383 + $0xd8] sm:$0xff]
      %v450 = vld [vmem:[%s383 + $0xe0] sm:$0xff]
      %v451 = vld [vmem:[%s383 + $0xe8] sm:$0xff]
      %v452 = vld [vmem:[%s383 + $0xf0] sm:$0xff]
      %v453 = vld [vmem:[%s383 + $0xf8] sm:$0xf]
      %v454 = vld [vmem:[%s383 + $0xfc] sm:$0xff]
      %v455 = vld [vmem:[%s383 + $0x104] sm:$0xff]
      %v456 = vld [vmem:[%s383 + $0x10c] sm:$0xff]
      %v457 = vld [vmem:[%s383 + $0x114] sm:$0xff]
      %v458 = vld [vmem:[%s383 + $0x11c] sm:$0xf]
      %v459 = vld [vmem:[%s383 + $0x120] sm:$0xff]
      %v460 = vld [vmem:[%s383 + $0x128] sm:$0xff]
      %v461 = vld [vmem:[%s383 + $0x130] sm:$0xff]
      %v462 = vld [vmem:[%s383 + $0x138] sm:$0xff]
      %v463 = vld [vmem:[%s383 + $0x140] sm:$0xf]
      %v464 = vld [vmem:[%s383 + $0x144] sm:$0xff]
      %v465 = vld [vmem:[%s383 + $0x14c] sm:$0xff]
      %v466 = vld [vmem:[%s383 + $0x154] sm:$0xff]
      %v467 = vld [vmem:[%s383 + $0x15c] sm:$0xff]
      %v468 = vld [vmem:[%s383 + $0x164] sm:$0xf]
      %v469 = vld [vmem:[%s383 + $0x168] sm:$0xff]
      %v470 = vld [vmem:[%s383 + $0x170] sm:$0xff]
      %v471 = vld [vmem:[%s383 + $0x178] sm:$0xff]
      %v472 = vld [vmem:[%s383 + $0x180] sm:$0xff]
      %v473 = vld [vmem:[%s383 + $0x188] sm:$0xf]
      %v474 = vld [vmem:[%s383 + $0x18c] sm:$0xff]
      %v475 = vld [vmem:[%s383 + $0x194] sm:$0xff]
      %v476 = vld [vmem:[%s383 + $0x19c] sm:$0xff]
      %v477 = vld [vmem:[%s383 + $0x1a4] sm:$0xff]
      %v478 = vld [vmem:[%s383 + $0x1ac] sm:$0xf]
      %v479 = vld [vmem:[%s383 + $0x1b0] sm:$0xff]
      %v480 = vld [vmem:[%s383 + $0x1b8] sm:$0xff]
      %v481 = vld [vmem:[%s383 + $0x1c0] sm:$0xff]
      %v482 = vld [vmem:[%s383 + $0x1c8] sm:$0xff]
      %v483 = vld [vmem:[%s383 + $0x1d0] sm:$0xf]
      %v484 = vld [vmem:[%s383 + $0x1d4] sm:$0xff]
      %v485 = vld [vmem:[%s383 + $0x1dc] sm:$0xff]
      %v486 = vld [vmem:[%s383 + $0x1e4] sm:$0xff]
      %v487 = vld [vmem:[%s383 + $0x1ec] sm:$0xff]
      %v488 = vld [vmem:[%s383 + $0x1f4] sm:$0xf]
      %v489 = vld [vmem:[%s383 + $0x1f8] sm:$0xff]
      %v490 = vld [vmem:[%s383 + $0x200] sm:$0xff]
      %v491 = vld [vmem:[%s383 + $0x208] sm:$0xff]
      %v492 = vld [vmem:[%s383 + $0x210] sm:$0xff]
      %v493 = vld [vmem:[%s383 + $0x218] sm:$0xf]
      %v494 = vld [vmem:[%s383 + $0x21c] sm:$0xff]
      %v495 = vld [vmem:[%s383 + $0x224] sm:$0xff]
      %v496 = vld [vmem:[%s383 + $0x22c] sm:$0xff]
      %v497 = vld [vmem:[%s383 + $0x234] sm:$0xff]
      %v498 = vld [vmem:[%s383 + $0x23c] sm:$0xf]
      %v499 = vld [vmem:[%s383 + $0x240] sm:$0xff]
      %v500 = vld [vmem:[%s383 + $0x248] sm:$0xff]
      %v501 = vld [vmem:[%s383 + $0x250] sm:$0xff]
      %v502 = vld [vmem:[%s383 + $0x258] sm:$0xff]
      %v503 = vld [vmem:[%s383 + $0x260] sm:$0xf]
      %v504 = vld [vmem:[%s383 + $0x264] sm:$0xff]
      %v505 = vld [vmem:[%s383 + $0x26c] sm:$0xff]
      %v506 = vld [vmem:[%s383 + $0x274] sm:$0xff]
      %v507 = vld [vmem:[%s383 + $0x27c] sm:$0xff]
      %v508 = vld [vmem:[%s383 + $0x284] sm:$0xf]
      %v509 = vld [vmem:[%s383 + $0x288] sm:$0xff]
      %v510 = vld [vmem:[%s383 + $0x290] sm:$0xff]
      %v511 = vld [vmem:[%s383 + $0x298] sm:$0xff]
      %v512 = vld [vmem:[%s383 + $0x2a0] sm:$0xff]
      %v513 = vld [vmem:[%s383 + $0x2a8] sm:$0xf]
      %v514 = vld [vmem:[%s383 + $0x2ac] sm:$0xff]
      %v515 = vld [vmem:[%s383 + $0x2b4] sm:$0xff]
      %v516 = vld [vmem:[%s383 + $0x2bc] sm:$0xff]
      %v517 = vld [vmem:[%s383 + $0x2c4] sm:$0xff]
      %v518 = vld [vmem:[%s383 + $0x2cc] sm:$0xf]
      %v519 = vld [vmem:[%s383 + $0x2d0] sm:$0xff]
      %v520 = vld [vmem:[%s383 + $0x2d8] sm:$0xff]
      %v521 = vld [vmem:[%s383 + $0x2e0] sm:$0xff]
      %v522 = vld [vmem:[%s383 + $0x2e8] sm:$0xff]
      %v523 = vld [vmem:[%s383 + $0x2f0] sm:$0xf]
      %v524 = vld [vmem:[%s383 + $0x2f4] sm:$0xff]
      %v525 = vld [vmem:[%s383 + $0x2fc] sm:$0xff]
      %v526 = vld [vmem:[%s383 + $0x304] sm:$0xff]
      %v527 = vld [vmem:[%s383 + $0x30c] sm:$0xff]
      %v528 = vld [vmem:[%s383 + $0x314] sm:$0xf]
      %v529 = vld [vmem:[%s383 + $0x318] sm:$0xff]
      %v530 = vld [vmem:[%s383 + $0x320] sm:$0xff]
      %v531 = vld [vmem:[%s383 + $0x328] sm:$0xff]
      %v532 = vld [vmem:[%s383 + $0x330] sm:$0xff]
      %v533 = vld [vmem:[%s383 + $0x338] sm:$0xf]
      %v534 = vld [vmem:[%s383 + $0x33c] sm:$0xff]
      %v535 = vld [vmem:[%s383 + $0x344] sm:$0xff]
      %v536 = vld [vmem:[%s383 + $0x34c] sm:$0xff]
      %v537 = vld [vmem:[%s383 + $0x354] sm:$0xff]
      %v538 = vld [vmem:[%s383 + $0x35c] sm:$0xf]
      %v539 = vld [vmem:[%s383 + $0x360] sm:$0xff]
      %v540 = vld [vmem:[%s383 + $0x368] sm:$0xff]
      %v541 = vld [vmem:[%s383 + $0x370] sm:$0xff]
      %v542 = vld [vmem:[%s383 + $0x378] sm:$0xff]
      %v543 = vld [vmem:[%s383 + $0x380] sm:$0xf]
      %v544 = vld [vmem:[%s383 + $0x384] sm:$0xff]
      %v545 = vld [vmem:[%s383 + $0x38c] sm:$0xff]
      %v546 = vld [vmem:[%s383 + $0x394] sm:$0xff]
      %v547 = vld [vmem:[%s383 + $0x39c] sm:$0xff]
      %v548 = vld [vmem:[%s383 + $0x3a4] sm:$0xf]
      %v549 = vld [vmem:[%s383 + $0x3a8] sm:$0xff]
      %v550 = vld [vmem:[%s383 + $0x3b0] sm:$0xff]
      %v551 = vld [vmem:[%s383 + $0x3b8] sm:$0xff]
      %v552 = vld [vmem:[%s383 + $0x3c0] sm:$0xff]
      %v553 = vld [vmem:[%s383 + $0x3c8] sm:$0xf]
      %v554 = vld [vmem:[%s383 + $0x3cc] sm:$0xff]
      %v555 = vld [vmem:[%s383 + $0x3d4] sm:$0xff]
      %v556 = vld [vmem:[%s383 + $0x3dc] sm:$0xff]
      %v557 = vld [vmem:[%s383 + $0x3e4] sm:$0xff]
      %v558 = vld [vmem:[%s383 + $0x3ec] sm:$0xf]
      %v559 = vld [vmem:[%s383 + $0x3f0] sm:$0xff]
      %v560 = vld [vmem:[%s383 + $0x3f8] sm:$0xff]
      %v561 = vld [vmem:[%s383 + $0x400] sm:$0xff]
      %v562 = vld [vmem:[%s383 + $0x408] sm:$0xff]
      %v563 = vld [vmem:[%s383 + $0x410] sm:$0xf]
      %v564 = vld [vmem:[%s383 + $0x414] sm:$0xff]
      %v565 = vld [vmem:[%s383 + $0x41c] sm:$0xff]
      %v566 = vld [vmem:[%s383 + $0x424] sm:$0xff]
      %v567 = vld [vmem:[%s383 + $0x42c] sm:$0xff]
      %v568 = vld [vmem:[%s383 + $0x434] sm:$0xf]
      %v569 = vld [vmem:[%s383 + $0x438] sm:$0xff]
      %v570 = vld [vmem:[%s383 + $0x440] sm:$0xff]
      %v571 = vld [vmem:[%s383 + $0x448] sm:$0xff]
      %v572 = vld [vmem:[%s383 + $0x450] sm:$0xff]
      %v573 = vld [vmem:[%s383 + $0x458] sm:$0xf]
      %v574 = vld [vmem:[%s383 + $0x45c] sm:$0xff]
      %v575 = vld [vmem:[%s383 + $0x464] sm:$0xff]
      %v576 = vld [vmem:[%s383 + $0x46c] sm:$0xff]
      %v577 = vld [vmem:[%s383 + $0x474] sm:$0xff]
      %v578 = vld [vmem:[%s383 + $0x47c] sm:$0xf]
      %v579 = vld [vmem:[%s2] sm:$0xf]
      %v580 = vld [vmem:[%s2 + $0x4] sm:$0xf]
      %v581 = vld [vmem:[%s2 + $0x8] sm:$0xf]
      %v582 = vld [vmem:[%s2 + $0xc] sm:$0xf]
      %v583 = vld [vmem:[%s2 + $0x10] sm:$0xf]
      %v584 = vld [vmem:[%s2 + $0x14] sm:$0xf]
      %v585 = vld [vmem:[%s2 + $0x18] sm:$0xf]
      %v586 = vld [vmem:[%s2 + $0x1c] sm:$0xf]
      %v587 = vld [vmem:[%s2 + $0x20] sm:$0xf]
      %v588 = vld [vmem:[%s2 + $0x24] sm:$0xf]
      %v589 = vld [vmem:[%s2 + $0x28] sm:$0xf]
      %v590 = vld [vmem:[%s2 + $0x2c] sm:$0xf]
      %v591 = vld [vmem:[%s2 + $0x30] sm:$0xf]
      %v592 = vld [vmem:[%s2 + $0x34] sm:$0xf]
      %v593 = vld [vmem:[%s2 + $0x38] sm:$0xf]
      %v594 = vld [vmem:[%s2 + $0x3c] sm:$0xf]
      %v595 = vld [vmem:[%s2 + $0x40] sm:$0xf]
      %v596 = vld [vmem:[%s2 + $0x44] sm:$0xf]
      %v597 = vld [vmem:[%s2 + $0x48] sm:$0xf]
      %v598 = vld [vmem:[%s2 + $0x4c] sm:$0xf]
      %v599 = vld [vmem:[%s2 + $0x50] sm:$0xf]
      %v600 = vld [vmem:[%s2 + $0x54] sm:$0xf]
      %v601 = vld [vmem:[%s2 + $0x58] sm:$0xf]
      %v602 = vld [vmem:[%s2 + $0x5c] sm:$0xf]
      %v603 = vld [vmem:[%s2 + $0x60] sm:$0xf]
      %v604 = vld [vmem:[%s2 + $0x64] sm:$0xf]
      %v605 = vld [vmem:[%s2 + $0x68] sm:$0xf]
      %v606 = vld [vmem:[%s2 + $0x6c] sm:$0xf]
      %v607 = vld [vmem:[%s2 + $0x70] sm:$0xf]
      %v608 = vld [vmem:[%s2 + $0x74] sm:$0xf]
      %v609 = vld [vmem:[%s2 + $0x78] sm:$0xf]
      %v610 = vld [vmem:[%s2 + $0x7c] sm:$0xf]
      %v611 = vld [vmem:[%s2 + $0x80] sm:$0xf]
      %v612 = vld [vmem:[%s2 + $0x84] sm:$0xf]
      %v613 = vld [vmem:[%s2 + $0x88] sm:$0xf]
      %v614 = vld [vmem:[%s2 + $0x8c] sm:$0xf]
      %v615 = vld [vmem:[%s2 + $0x90] sm:$0xf]
      %v616 = vld [vmem:[%s2 + $0x94] sm:$0xf]
      %v617 = vld [vmem:[%s2 + $0x98] sm:$0xf]
      %v618 = vld [vmem:[%s2 + $0x9c] sm:$0xf]
      %v619 = vld [vmem:[%s2 + $0xa0] sm:$0xf]
      %v620 = vld [vmem:[%s2 + $0xa4] sm:$0xf]
      %v621 = vld [vmem:[%s2 + $0xa8] sm:$0xf]
      %v622 = vld [vmem:[%s2 + $0xac] sm:$0xf]
      %v623 = vld [vmem:[%s2 + $0xb0] sm:$0xf]
      %v624 = vld [vmem:[%s2 + $0xb4] sm:$0xf]
      %v625 = vld [vmem:[%s2 + $0xb8] sm:$0xf]
      %v626 = vld [vmem:[%s2 + $0xbc] sm:$0xf]
      %v627 = vld [vmem:[%s2 + $0xc0] sm:$0xf]
      %v628 = vld [vmem:[%s2 + $0xc4] sm:$0xf]
      %v629 = vld [vmem:[%s2 + $0xc8] sm:$0xf]
      %v630 = vld [vmem:[%s2 + $0xcc] sm:$0xf]
      %v631 = vld [vmem:[%s2 + $0xd0] sm:$0xf]
      %v632 = vld [vmem:[%s2 + $0xd4] sm:$0xf]
      %v633 = vld [vmem:[%s2 + $0xd8] sm:$0xf]
      %v634 = vld [vmem:[%s2 + $0xdc] sm:$0xf]
      %v635 = vld [vmem:[%s2 + $0xe0] sm:$0xf]
      %v636 = vld [vmem:[%s2 + $0xe4] sm:$0xf]
      %v637 = vld [vmem:[%s2 + $0xe8] sm:$0xf]
      %v638 = vld [vmem:[%s2 + $0xec] sm:$0xf]
      %v639 = vld [vmem:[%s2 + $0xf0] sm:$0xf]
      %v640 = vld [vmem:[%s2 + $0xf4] sm:$0xf]
      %v641 = vld [vmem:[%s2 + $0xf8] sm:$0xf]
      %v642 = vld [vmem:[%s2 + $0xfc] sm:$0xf]
      %v643 = vld [vmem:[%s2 + $0x100] sm:$0xf]
      %v644 = vld [vmem:[%s2 + $0x104] sm:$0xf]
      %v645 = vld [vmem:[%s2 + $0x108] sm:$0xf]
      %v646 = vld [vmem:[%s2 + $0x10c] sm:$0xf]
      %v647 = vld [vmem:[%s2 + $0x110] sm:$0xf]
      %v648 = vld [vmem:[%s2 + $0x114] sm:$0xf]
      %v649 = vld [vmem:[%s2 + $0x118] sm:$0xf]
      %v650 = vld [vmem:[%s2 + $0x11c] sm:$0xf]
      %v651 = vld [vmem:[%s2 + $0x120] sm:$0xf]
      %v652 = vld [vmem:[%s2 + $0x124] sm:$0xf]
      %v653 = vld [vmem:[%s2 + $0x128] sm:$0xf]
      %v654 = vld [vmem:[%s2 + $0x12c] sm:$0xf]
      %v655 = vld [vmem:[%s2 + $0x130] sm:$0xf]
      %v656 = vld [vmem:[%s2 + $0x134] sm:$0xf]
      %v657 = vld [vmem:[%s2 + $0x138] sm:$0xf]
      %v658 = vld [vmem:[%s2 + $0x13c] sm:$0xf]
      %v659 = vld [vmem:[%s2 + $0x140] sm:$0xf]
      %v660 = vld [vmem:[%s2 + $0x144] sm:$0xf]
      %v661 = vld [vmem:[%s2 + $0x148] sm:$0xf]
      %v662 = vld [vmem:[%s2 + $0x14c] sm:$0xf]
      %v663 = vld [vmem:[%s2 + $0x150] sm:$0xf]
      %v664 = vld [vmem:[%s2 + $0x154] sm:$0xf]
      %v665 = vld [vmem:[%s2 + $0x158] sm:$0xf]
      %v666 = vld [vmem:[%s2 + $0x15c] sm:$0xf]
      %v667 = vld [vmem:[%s2 + $0x160] sm:$0xf]
      %v668 = vld [vmem:[%s2 + $0x164] sm:$0xf]
      %v669 = vld [vmem:[%s2 + $0x168] sm:$0xf]
      %v670 = vld [vmem:[%s2 + $0x16c] sm:$0xf]
      %v671 = vld [vmem:[%s2 + $0x170] sm:$0xf]
      %v672 = vld [vmem:[%s2 + $0x174] sm:$0xf]
      %v673 = vld [vmem:[%s2 + $0x178] sm:$0xf]
      %v674 = vld [vmem:[%s2 + $0x17c] sm:$0xf]
      %v675 = vld [vmem:[%s2 + $0x180] sm:$0xf]
      %v676 = vld [vmem:[%s2 + $0x184] sm:$0xf]
      %v677 = vld [vmem:[%s2 + $0x188] sm:$0xf]
      %v678 = vld [vmem:[%s2 + $0x18c] sm:$0xf]
      %v679 = vld [vmem:[%s2 + $0x190] sm:$0xf]
      %v680 = vld [vmem:[%s2 + $0x194] sm:$0xf]
      %v681 = vld [vmem:[%s2 + $0x198] sm:$0xf]
      %v682 = vld [vmem:[%s2 + $0x19c] sm:$0xf]
      %v683 = vld [vmem:[%s2 + $0x1a0] sm:$0xf]
      %v684 = vld [vmem:[%s2 + $0x1a4] sm:$0xf]
      %v685 = vld [vmem:[%s2 + $0x1a8] sm:$0xf]
      %v686 = vld [vmem:[%s2 + $0x1ac] sm:$0xf]
      %v687 = vld [vmem:[%s2 + $0x1b0] sm:$0xf]
      %v688 = vld [vmem:[%s2 + $0x1b4] sm:$0xf]
      %v689 = vld [vmem:[%s2 + $0x1b8] sm:$0xf]
      %v690 = vld [vmem:[%s2 + $0x1bc] sm:$0xf]
      %v691 = vld [vmem:[%s2 + $0x1c0] sm:$0xf]
      %v692 = vld [vmem:[%s2 + $0x1c4] sm:$0xf]
      %v693 = vld [vmem:[%s2 + $0x1c8] sm:$0xf]
      %v694 = vld [vmem:[%s2 + $0x1cc] sm:$0xf]
      %v695 = vld [vmem:[%s2 + $0x1d0] sm:$0xf]
      %v696 = vld [vmem:[%s2 + $0x1d4] sm:$0xf]
      %v697 = vld [vmem:[%s2 + $0x1d8] sm:$0xf]
      %v698 = vld [vmem:[%s2 + $0x1dc] sm:$0xf]
      %v699 = vld [vmem:[%s2 + $0x1e0] sm:$0xf]
      %v700 = vld [vmem:[%s2 + $0x1e4] sm:$0xf]
      %v701 = vld [vmem:[%s2 + $0x1e8] sm:$0xf]
      %v702 = vld [vmem:[%s2 + $0x1ec] sm:$0xf]
      %v703 = vld [vmem:[%s2 + $0x1f0] sm:$0xf]
      %v704 = vld [vmem:[%s2 + $0x1f4] sm:$0xf]
      %v705 = vld [vmem:[%s2 + $0x1f8] sm:$0xf]
      %v706 = vld [vmem:[%s2 + $0x1fc] sm:$0xf]
      %v707 = vld [vmem:[%s2 + $0x200] sm:$0xf]
      %v708 = vld [vmem:[%s2 + $0x204] sm:$0xf]
      %v709 = vld [vmem:[%s2 + $0x208] sm:$0xf]
      %v710 = vld [vmem:[%s2 + $0x20c] sm:$0xf]
      %v711 = vld [vmem:[%s2 + $0x210] sm:$0xf]
      %v712 = vld [vmem:[%s2 + $0x214] sm:$0xf]
      %v713 = vld [vmem:[%s2 + $0x218] sm:$0xf]
      %v714 = vld [vmem:[%s2 + $0x21c] sm:$0xf]
      %v715 = vld [vmem:[%s2 + $0x220] sm:$0xf]
      %v716 = vld [vmem:[%s2 + $0x224] sm:$0xf]
      %v717 = vld [vmem:[%s2 + $0x228] sm:$0xf]
      %v718 = vld [vmem:[%s2 + $0x22c] sm:$0xf]
      %v719 = vld [vmem:[%s2 + $0x230] sm:$0xf]
      %v720 = vld [vmem:[%s2 + $0x234] sm:$0xf]
      %v721 = vld [vmem:[%s2 + $0x238] sm:$0xf]
      %v722 = vld [vmem:[%s2 + $0x23c] sm:$0xf]
      %v723 = vld [vmem:[%s4] sm:$0x1]
      %v725 = vperm.slane %v723, 0
      %v887 = vunpack.c.l.b16 %v419
      %v888 = vunpack.c.h.b16 %v419
      %v889 = vunpack.c.l.b16 %v420
      %v890 = vunpack.c.h.b16 %v420
      %v891 = vunpack.c.l.b16 %v421
      %v892 = vunpack.c.h.b16 %v421
      %v893 = vunpack.c.l.b16 %v422
      %v894 = vunpack.c.h.b16 %v422
      %v895 = vunpack.c.l.b16 %v423
      %v896 = vunpack.c.l.b16 %v424
      %v897 = vunpack.c.h.b16 %v424
      %v898 = vunpack.c.l.b16 %v425
      %v899 = vunpack.c.h.b16 %v425
      %v900 = vunpack.c.l.b16 %v426
      %v901 = vunpack.c.h.b16 %v426
      %v902 = vunpack.c.l.b16 %v427
      %v903 = vunpack.c.h.b16 %v427
      %v904 = vunpack.c.l.b16 %v428
      %v905 = vunpack.c.l.b16 %v429
      %v906 = vunpack.c.h.b16 %v429
      %v907 = vunpack.c.l.b16 %v430
      %v908 = vunpack.c.h.b16 %v430
      %v909 = vunpack.c.l.b16 %v431
      %v910 = vunpack.c.h.b16 %v431
      %v911 = vunpack.c.l.b16 %v432
      %v912 = vunpack.c.h.b16 %v432
      %v913 = vunpack.c.l.b16 %v433
      %v914 = vunpack.c.l.b16 %v434
      %v915 = vunpack.c.h.b16 %v434
      %v916 = vunpack.c.l.b16 %v435
      %v917 = vunpack.c.h.b16 %v435
      %v918 = vunpack.c.l.b16 %v436
      %v919 = vunpack.c.h.b16 %v436
      %v920 = vunpack.c.l.b16 %v437
      %v921 = vunpack.c.h.b16 %v437
      %v922 = vunpack.c.l.b16 %v438
      %v923 = vunpack.c.l.b16 %v439
      %v924 = vunpack.c.h.b16 %v439
      %v925 = vunpack.c.l.b16 %v440
      %v926 = vunpack.c.h.b16 %v440
      %v927 = vunpack.c.l.b16 %v441
      %v928 = vunpack.c.h.b16 %v441
      %v929 = vunpack.c.l.b16 %v442
      %v930 = vunpack.c.h.b16 %v442
      %v931 = vunpack.c.l.b16 %v443
      %v932 = vunpack.c.l.b16 %v444
      %v933 = vunpack.c.h.b16 %v444
      %v934 = vunpack.c.l.b16 %v445
      %v935 = vunpack.c.h.b16 %v445
      %v936 = vunpack.c.l.b16 %v446
      %v937 = vunpack.c.h.b16 %v446
      %v938 = vunpack.c.l.b16 %v447
      %v939 = vunpack.c.h.b16 %v447
      %v940 = vunpack.c.l.b16 %v448
      %v941 = vunpack.c.l.b16 %v449
      %v942 = vunpack.c.h.b16 %v449
      %v943 = vunpack.c.l.b16 %v450
      %v944 = vunpack.c.h.b16 %v450
      %v945 = vunpack.c.l.b16 %v451
      %v946 = vunpack.c.h.b16 %v451
      %v947 = vunpack.c.l.b16 %v452
      %v948 = vunpack.c.h.b16 %v452
      %v949 = vunpack.c.l.b16 %v453
      %v950 = vunpack.c.l.b16 %v454
      %v951 = vunpack.c.h.b16 %v454
      %v952 = vunpack.c.l.b16 %v455
      %v953 = vunpack.c.h.b16 %v455
      %v954 = vunpack.c.l.b16 %v456
      %v955 = vunpack.c.h.b16 %v456
      %v956 = vunpack.c.l.b16 %v457
      %v957 = vunpack.c.h.b16 %v457
      %v958 = vunpack.c.l.b16 %v458
      %v959 = vunpack.c.l.b16 %v459
      %v960 = vunpack.c.h.b16 %v459
      %v961 = vunpack.c.l.b16 %v460
      %v962 = vunpack.c.h.b16 %v460
      %v963 = vunpack.c.l.b16 %v461
      %v964 = vunpack.c.h.b16 %v461
      %v965 = vunpack.c.l.b16 %v462
      %v966 = vunpack.c.h.b16 %v462
      %v967 = vunpack.c.l.b16 %v463
      %v968 = vunpack.c.l.b16 %v464
      %v969 = vunpack.c.h.b16 %v464
      %v970 = vunpack.c.l.b16 %v465
      %v971 = vunpack.c.h.b16 %v465
      %v972 = vunpack.c.l.b16 %v466
      %v973 = vunpack.c.h.b16 %v466
      %v974 = vunpack.c.l.b16 %v467
      %v975 = vunpack.c.h.b16 %v467
      %v976 = vunpack.c.l.b16 %v468
      %v977 = vunpack.c.l.b16 %v469
      %v978 = vunpack.c.h.b16 %v469
      %v979 = vunpack.c.l.b16 %v470
      %v980 = vunpack.c.h.b16 %v470
      %v981 = vunpack.c.l.b16 %v471
      %v982 = vunpack.c.h.b16 %v471
      %v983 = vunpack.c.l.b16 %v472
      %v984 = vunpack.c.h.b16 %v472
      %v985 = vunpack.c.l.b16 %v473
      %v986 = vunpack.c.l.b16 %v474
      %v987 = vunpack.c.h.b16 %v474
      %v988 = vunpack.c.l.b16 %v475
      %v989 = vunpack.c.h.b16 %v475
      %v990 = vunpack.c.l.b16 %v476
      %v991 = vunpack.c.h.b16 %v476
      %v992 = vunpack.c.l.b16 %v477
      %v993 = vunpack.c.h.b16 %v477
      %v994 = vunpack.c.l.b16 %v478
      %v995 = vunpack.c.l.b16 %v479
      %v996 = vunpack.c.h.b16 %v479
      %v997 = vunpack.c.l.b16 %v480
      %v998 = vunpack.c.h.b16 %v480
      %v999 = vunpack.c.l.b16 %v481
      %v1000 = vunpack.c.h.b16 %v481
      %v1001 = vunpack.c.l.b16 %v482
      %v1002 = vunpack.c.h.b16 %v482
      %v1003 = vunpack.c.l.b16 %v483
      %v1004 = vunpack.c.l.b16 %v484
      %v1005 = vunpack.c.h.b16 %v484
      %v1006 = vunpack.c.l.b16 %v485
      %v1007 = vunpack.c.h.b16 %v485
      %v1008 = vunpack.c.l.b16 %v486
      %v1009 = vunpack.c.h.b16 %v486
      %v1010 = vunpack.c.l.b16 %v487
      %v1011 = vunpack.c.h.b16 %v487
      %v1012 = vunpack.c.l.b16 %v488
      %v1013 = vunpack.c.l.b16 %v489
      %v1014 = vunpack.c.h.b16 %v489
      %v1015 = vunpack.c.l.b16 %v490
      %v1016 = vunpack.c.h.b16 %v490
      %v1017 = vunpack.c.l.b16 %v491
      %v1018 = vunpack.c.h.b16 %v491
      %v1019 = vunpack.c.l.b16 %v492
      %v1020 = vunpack.c.h.b16 %v492
      %v1021 = vunpack.c.l.b16 %v493
      %v1022 = vunpack.c.l.b16 %v494
      %v1023 = vunpack.c.h.b16 %v494
      %v1024 = vunpack.c.l.b16 %v495
      %v1025 = vunpack.c.h.b16 %v495
      %v1026 = vunpack.c.l.b16 %v496
      %v1027 = vunpack.c.h.b16 %v496
      %v1028 = vunpack.c.l.b16 %v497
      %v1029 = vunpack.c.h.b16 %v497
      %v1030 = vunpack.c.l.b16 %v498
      %v1031 = vunpack.c.l.b16 %v499
      %v1032 = vunpack.c.h.b16 %v499
      %v1033 = vunpack.c.l.b16 %v500
      %v1034 = vunpack.c.h.b16 %v500
      %v1035 = vunpack.c.l.b16 %v501
      %v1036 = vunpack.c.h.b16 %v501
      %v1037 = vunpack.c.l.b16 %v502
      %v1038 = vunpack.c.h.b16 %v502
      %v1039 = vunpack.c.l.b16 %v503
      %v1040 = vunpack.c.l.b16 %v504
      %v1041 = vunpack.c.h.b16 %v504
      %v1042 = vunpack.c.l.b16 %v505
      %v1043 = vunpack.c.h.b16 %v505
      %v1044 = vunpack.c.l.b16 %v506
      %v1045 = vunpack.c.h.b16 %v506
      %v1046 = vunpack.c.l.b16 %v507
      %v1047 = vunpack.c.h.b16 %v507
      %v1048 = vunpack.c.l.b16 %v508
      %v1049 = vunpack.c.l.b16 %v509
      %v1050 = vunpack.c.h.b16 %v509
      %v1051 = vunpack.c.l.b16 %v510
      %v1052 = vunpack.c.h.b16 %v510
      %v1053 = vunpack.c.l.b16 %v511
      %v1054 = vunpack.c.h.b16 %v511
      %v1055 = vunpack.c.l.b16 %v512
      %v1056 = vunpack.c.h.b16 %v512
      %v1057 = vunpack.c.l.b16 %v513
      %v1058 = vunpack.c.l.b16 %v514
      %v1059 = vunpack.c.h.b16 %v514
      %v1060 = vunpack.c.l.b16 %v515
      %v1061 = vunpack.c.h.b16 %v515
      %v1062 = vunpack.c.l.b16 %v516
      %v1063 = vunpack.c.h.b16 %v516
      %v1064 = vunpack.c.l.b16 %v517
      %v1065 = vunpack.c.h.b16 %v517
      %v1066 = vunpack.c.l.b16 %v518
      %v1067 = vunpack.c.l.b16 %v519
      %v1068 = vunpack.c.h.b16 %v519
      %v1069 = vunpack.c.l.b16 %v520
      %v1070 = vunpack.c.h.b16 %v520
      %v1071 = vunpack.c.l.b16 %v521
      %v1072 = vunpack.c.h.b16 %v521
      %v1073 = vunpack.c.l.b16 %v522
      %v1074 = vunpack.c.h.b16 %v522
      %v1075 = vunpack.c.l.b16 %v523
      %v1076 = vunpack.c.l.b16 %v524
      %v1077 = vunpack.c.h.b16 %v524
      %v1078 = vunpack.c.l.b16 %v525
      %v1079 = vunpack.c.h.b16 %v525
      %v1080 = vunpack.c.l.b16 %v526
      %v1081 = vunpack.c.h.b16 %v526
      %v1082 = vunpack.c.l.b16 %v527
      %v1083 = vunpack.c.h.b16 %v527
      %v1084 = vunpack.c.l.b16 %v528
      %v1085 = vunpack.c.l.b16 %v529
      %v1086 = vunpack.c.h.b16 %v529
      %v1087 = vunpack.c.l.b16 %v530
      %v1088 = vunpack.c.h.b16 %v530
      %v1089 = vunpack.c.l.b16 %v531
      %v1090 = vunpack.c.h.b16 %v531
      %v1091 = vunpack.c.l.b16 %v532
      %v1092 = vunpack.c.h.b16 %v532
      %v1093 = vunpack.c.l.b16 %v533
      %v1094 = vunpack.c.l.b16 %v534
      %v1095 = vunpack.c.h.b16 %v534
      %v1096 = vunpack.c.l.b16 %v535
      %v1097 = vunpack.c.h.b16 %v535
      %v1098 = vunpack.c.l.b16 %v536
      %v1099 = vunpack.c.h.b16 %v536
      %v1100 = vunpack.c.l.b16 %v537
      %v1101 = vunpack.c.h.b16 %v537
      %v1102 = vunpack.c.l.b16 %v538
      %v1103 = vunpack.c.l.b16 %v539
      %v1104 = vunpack.c.h.b16 %v539
      %v1105 = vunpack.c.l.b16 %v540
      %v1106 = vunpack.c.h.b16 %v540
      %v1107 = vunpack.c.l.b16 %v541
      %v1108 = vunpack.c.h.b16 %v541
      %v1109 = vunpack.c.l.b16 %v542
      %v1110 = vunpack.c.h.b16 %v542
      %v1111 = vunpack.c.l.b16 %v543
      %v1112 = vunpack.c.l.b16 %v544
      %v1113 = vunpack.c.h.b16 %v544
      %v1114 = vunpack.c.l.b16 %v545
      %v1115 = vunpack.c.h.b16 %v545
      %v1116 = vunpack.c.l.b16 %v546
      %v1117 = vunpack.c.h.b16 %v546
      %v1118 = vunpack.c.l.b16 %v547
      %v1119 = vunpack.c.h.b16 %v547
      %v1120 = vunpack.c.l.b16 %v548
      %v1121 = vunpack.c.l.b16 %v549
      %v1122 = vunpack.c.h.b16 %v549
      %v1123 = vunpack.c.l.b16 %v550
      %v1124 = vunpack.c.h.b16 %v550
      %v1125 = vunpack.c.l.b16 %v551
      %v1126 = vunpack.c.h.b16 %v551
      %v1127 = vunpack.c.l.b16 %v552
      %v1128 = vunpack.c.h.b16 %v552
      %v1129 = vunpack.c.l.b16 %v553
      %v1130 = vunpack.c.l.b16 %v554
      %v1131 = vunpack.c.h.b16 %v554
      %v1132 = vunpack.c.l.b16 %v555
      %v1133 = vunpack.c.h.b16 %v555
      %v1134 = vunpack.c.l.b16 %v556
      %v1135 = vunpack.c.h.b16 %v556
      %v1136 = vunpack.c.l.b16 %v557
      %v1137 = vunpack.c.h.b16 %v557
      %v1138 = vunpack.c.l.b16 %v558
      %v1139 = vunpack.c.l.b16 %v559
      %v1140 = vunpack.c.h.b16 %v559
      %v1141 = vunpack.c.l.b16 %v560
      %v1142 = vunpack.c.h.b16 %v560
      %v1143 = vunpack.c.l.b16 %v561
      %v1144 = vunpack.c.h.b16 %v561
      %v1145 = vunpack.c.l.b16 %v562
      %v1146 = vunpack.c.h.b16 %v562
      %v1147 = vunpack.c.l.b16 %v563
      %v1148 = vunpack.c.l.b16 %v564
      %v1149 = vunpack.c.h.b16 %v564
      %v1150 = vunpack.c.l.b16 %v565
      %v1151 = vunpack.c.h.b16 %v565
      %v1152 = vunpack.c.l.b16 %v566
      %v1153 = vunpack.c.h.b16 %v566
      %v1154 = vunpack.c.l.b16 %v567
      %v1155 = vunpack.c.h.b16 %v567
      %v1156 = vunpack.c.l.b16 %v568
      %v1157 = vunpack.c.l.b16 %v569
      %v1158 = vunpack.c.h.b16 %v569
      %v1159 = vunpack.c.l.b16 %v570
      %v1160 = vunpack.c.h.b16 %v570
      %v1161 = vunpack.c.l.b16 %v571
      %v1162 = vunpack.c.h.b16 %v571
      %v1163 = vunpack.c.l.b16 %v572
      %v1164 = vunpack.c.h.b16 %v572
      %v1165 = vunpack.c.l.b16 %v573
      %v1166 = vunpack.c.l.b16 %v574
      %v1167 = vunpack.c.h.b16 %v574
      %v1168 = vunpack.c.l.b16 %v575
      %v1169 = vunpack.c.h.b16 %v575
      %v1170 = vunpack.c.l.b16 %v576
      %v1171 = vunpack.c.h.b16 %v576
      %v1172 = vunpack.c.l.b16 %v577
      %v1173 = vunpack.c.h.b16 %v577
      %v1174 = vunpack.c.l.b16 %v578
      %v1175 = vpack.c.b16 %v896, %v887
      %v1176 = vpack.c.b16 %v897, %v888
      %v1177 = vpack.c.b16 %v898, %v889
      %v1178 = vpack.c.b16 %v899, %v890
      %v1179 = vpack.c.b16 %v900, %v891
      %v1180 = vpack.c.b16 %v901, %v892
      %v1181 = vpack.c.b16 %v902, %v893
      %v1182 = vpack.c.b16 %v903, %v894
      %v1183 = vpack.c.b16 %v904, %v895
      %v1184 = vpack.c.b16 %v914, %v905
      %v1185 = vpack.c.b16 %v915, %v906
      %v1186 = vpack.c.b16 %v916, %v907
      %v1187 = vpack.c.b16 %v917, %v908
      %v1188 = vpack.c.b16 %v918, %v909
      %v1189 = vpack.c.b16 %v919, %v910
      %v1190 = vpack.c.b16 %v920, %v911
      %v1191 = vpack.c.b16 %v921, %v912
      %v1192 = vpack.c.b16 %v922, %v913
      %v1193 = vpack.c.b16 %v932, %v923
      %v1194 = vpack.c.b16 %v933, %v924
      %v1195 = vpack.c.b16 %v934, %v925
      %v1196 = vpack.c.b16 %v935, %v926
      %v1197 = vpack.c.b16 %v936, %v927
      %v1198 = vpack.c.b16 %v937, %v928
      %v1199 = vpack.c.b16 %v938, %v929
      %v1200 = vpack.c.b16 %v939, %v930
      %v1201 = vpack.c.b16 %v940, %v931
      %v1202 = vpack.c.b16 %v950, %v941
      %v1203 = vpack.c.b16 %v951, %v942
      %v1204 = vpack.c.b16 %v952, %v943
      %v1205 = vpack.c.b16 %v953, %v944
      %v1206 = vpack.c.b16 %v954, %v945
      %v1207 = vpack.c.b16 %v955, %v946
      %v1208 = vpack.c.b16 %v956, %v947
      %v1209 = vpack.c.b16 %v957, %v948
      %v1210 = vpack.c.b16 %v958, %v949
      %v1211 = vpack.c.b16 %v968, %v959
      %v1212 = vpack.c.b16 %v969, %v960
      %v1213 = vpack.c.b16 %v970, %v961
      %v1214 = vpack.c.b16 %v971, %v962
      %v1215 = vpack.c.b16 %v972, %v963
      %v1216 = vpack.c.b16 %v973, %v964
      %v1217 = vpack.c.b16 %v974, %v965
      %v1218 = vpack.c.b16 %v975, %v966
      %v1219 = vpack.c.b16 %v976, %v967
      %v1220 = vpack.c.b16 %v986, %v977
      %v1221 = vpack.c.b16 %v987, %v978
      %v1222 = vpack.c.b16 %v988, %v979
      %v1223 = vpack.c.b16 %v989, %v980
      %v1224 = vpack.c.b16 %v990, %v981
      %v1225 = vpack.c.b16 %v991, %v982
      %v1226 = vpack.c.b16 %v992, %v983
      %v1227 = vpack.c.b16 %v993, %v984
      %v1228 = vpack.c.b16 %v994, %v985
      %v1229 = vpack.c.b16 %v1004, %v995
      %v1230 = vpack.c.b16 %v1005, %v996
      %v1231 = vpack.c.b16 %v1006, %v997
      %v1232 = vpack.c.b16 %v1007, %v998
      %v1233 = vpack.c.b16 %v1008, %v999
      %v1234 = vpack.c.b16 %v1009, %v1000
      %v1235 = vpack.c.b16 %v1010, %v1001
      %v1236 = vpack.c.b16 %v1011, %v1002
      %v1237 = vpack.c.b16 %v1012, %v1003
      %v1238 = vpack.c.b16 %v1022, %v1013
      %v1239 = vpack.c.b16 %v1023, %v1014
      %v1240 = vpack.c.b16 %v1024, %v1015
      %v1241 = vpack.c.b16 %v1025, %v1016
      %v1242 = vpack.c.b16 %v1026, %v1017
      %v1243 = vpack.c.b16 %v1027, %v1018
      %v1244 = vpack.c.b16 %v1028, %v1019
      %v1245 = vpack.c.b16 %v1029, %v1020
      %v1246 = vpack.c.b16 %v1030, %v1021
      %v1247 = vpack.c.b16 %v1040, %v1031
      %v1248 = vpack.c.b16 %v1041, %v1032
      %v1249 = vpack.c.b16 %v1042, %v1033
      %v1250 = vpack.c.b16 %v1043, %v1034
      %v1251 = vpack.c.b16 %v1044, %v1035
      %v1252 = vpack.c.b16 %v1045, %v1036
      %v1253 = vpack.c.b16 %v1046, %v1037
      %v1254 = vpack.c.b16 %v1047, %v1038
      %v1255 = vpack.c.b16 %v1048, %v1039
      %v1256 = vpack.c.b16 %v1058, %v1049
      %v1257 = vpack.c.b16 %v1059, %v1050
      %v1258 = vpack.c.b16 %v1060, %v1051
      %v1259 = vpack.c.b16 %v1061, %v1052
      %v1260 = vpack.c.b16 %v1062, %v1053
      %v1261 = vpack.c.b16 %v1063, %v1054
      %v1262 = vpack.c.b16 %v1064, %v1055
      %v1263 = vpack.c.b16 %v1065, %v1056
      %v1264 = vpack.c.b16 %v1066, %v1057
      %v1265 = vpack.c.b16 %v1076, %v1067
      %v1266 = vpack.c.b16 %v1077, %v1068
      %v1267 = vpack.c.b16 %v1078, %v1069
      %v1268 = vpack.c.b16 %v1079, %v1070
      %v1269 = vpack.c.b16 %v1080, %v1071
      %v1270 = vpack.c.b16 %v1081, %v1072
      %v1271 = vpack.c.b16 %v1082, %v1073
      %v1272 = vpack.c.b16 %v1083, %v1074
      %v1273 = vpack.c.b16 %v1084, %v1075
      %v1274 = vpack.c.b16 %v1094, %v1085
      %v1275 = vpack.c.b16 %v1095, %v1086
      %v1276 = vpack.c.b16 %v1096, %v1087
      %v1277 = vpack.c.b16 %v1097, %v1088
      %v1278 = vpack.c.b16 %v1098, %v1089
      %v1279 = vpack.c.b16 %v1099, %v1090
      %v1280 = vpack.c.b16 %v1100, %v1091
      %v1281 = vpack.c.b16 %v1101, %v1092
      %v1282 = vpack.c.b16 %v1102, %v1093
      %v1283 = vpack.c.b16 %v1112, %v1103
      %v1284 = vpack.c.b16 %v1113, %v1104
      %v1285 = vpack.c.b16 %v1114, %v1105
      %v1286 = vpack.c.b16 %v1115, %v1106
      %v1287 = vpack.c.b16 %v1116, %v1107
      %v1288 = vpack.c.b16 %v1117, %v1108
      %v1289 = vpack.c.b16 %v1118, %v1109
      %v1290 = vpack.c.b16 %v1119, %v1110
      %v1291 = vpack.c.b16 %v1120, %v1111
      %v1292 = vpack.c.b16 %v1130, %v1121
      %v1293 = vpack.c.b16 %v1131, %v1122
      %v1294 = vpack.c.b16 %v1132, %v1123
      %v1295 = vpack.c.b16 %v1133, %v1124
      %v1296 = vpack.c.b16 %v1134, %v1125
      %v1297 = vpack.c.b16 %v1135, %v1126
      %v1298 = vpack.c.b16 %v1136, %v1127
      %v1299 = vpack.c.b16 %v1137, %v1128
      %v1300 = vpack.c.b16 %v1138, %v1129
      %v1301 = vpack.c.b16 %v1148, %v1139
      %v1302 = vpack.c.b16 %v1149, %v1140
      %v1303 = vpack.c.b16 %v1150, %v1141
      %v1304 = vpack.c.b16 %v1151, %v1142
      %v1305 = vpack.c.b16 %v1152, %v1143
      %v1306 = vpack.c.b16 %v1153, %v1144
      %v1307 = vpack.c.b16 %v1154, %v1145
      %v1308 = vpack.c.b16 %v1155, %v1146
      %v1309 = vpack.c.b16 %v1156, %v1147
      %v1310 = vpack.c.b16 %v1166, %v1157
      %v1311 = vpack.c.b16 %v1167, %v1158
      %v1312 = vpack.c.b16 %v1168, %v1159
      %v1313 = vpack.c.b16 %v1169, %v1160
      %v1314 = vpack.c.b16 %v1170, %v1161
      %v1315 = vpack.c.b16 %v1171, %v1162
      %v1316 = vpack.c.b16 %v1172, %v1163
      %v1317 = vpack.c.b16 %v1173, %v1164
      %v1318 = vpack.c.b16 %v1174, %v1165
      %v1607 = vunpack.c.l.b16 %v579
      %v1608 = vunpack.c.l.b16 %v580
      %v1609 = vunpack.c.l.b16 %v581
      %v1610 = vunpack.c.l.b16 %v582
      %v1611 = vunpack.c.l.b16 %v583
      %v1612 = vunpack.c.l.b16 %v584
      %v1613 = vunpack.c.l.b16 %v585
      %v1614 = vunpack.c.l.b16 %v586
      %v1615 = vunpack.c.l.b16 %v587
      %v1616 = vunpack.c.l.b16 %v588
      %v1617 = vunpack.c.l.b16 %v589
      %v1618 = vunpack.c.l.b16 %v590
      %v1619 = vunpack.c.l.b16 %v591
      %v1620 = vunpack.c.l.b16 %v592
      %v1621 = vunpack.c.l.b16 %v593
      %v1622 = vunpack.c.l.b16 %v594
      %v1623 = vunpack.c.l.b16 %v595
      %v1624 = vunpack.c.l.b16 %v596
      %v1625 = vunpack.c.l.b16 %v597
      %v1626 = vunpack.c.l.b16 %v598
      %v1627 = vunpack.c.l.b16 %v599
      %v1628 = vunpack.c.l.b16 %v600
      %v1629 = vunpack.c.l.b16 %v601
      %v1630 = vunpack.c.l.b16 %v602
      %v1631 = vunpack.c.l.b16 %v603
      %v1632 = vunpack.c.l.b16 %v604
      %v1633 = vunpack.c.l.b16 %v605
      %v1634 = vunpack.c.l.b16 %v606
      %v1635 = vunpack.c.l.b16 %v607
      %v1636 = vunpack.c.l.b16 %v608
      %v1637 = vunpack.c.l.b16 %v609
      %v1638 = vunpack.c.l.b16 %v610
      %v1639 = vunpack.c.l.b16 %v611
      %v1640 = vunpack.c.l.b16 %v612
      %v1641 = vunpack.c.l.b16 %v613
      %v1642 = vunpack.c.l.b16 %v614
      %v1643 = vunpack.c.l.b16 %v615
      %v1644 = vunpack.c.l.b16 %v616
      %v1645 = vunpack.c.l.b16 %v617
      %v1646 = vunpack.c.l.b16 %v618
      %v1647 = vunpack.c.l.b16 %v619
      %v1648 = vunpack.c.l.b16 %v620
      %v1649 = vunpack.c.l.b16 %v621
      %v1650 = vunpack.c.l.b16 %v622
      %v1651 = vunpack.c.l.b16 %v623
      %v1652 = vunpack.c.l.b16 %v624
      %v1653 = vunpack.c.l.b16 %v625
      %v1654 = vunpack.c.l.b16 %v626
      %v1655 = vunpack.c.l.b16 %v627
      %v1656 = vunpack.c.l.b16 %v628
      %v1657 = vunpack.c.l.b16 %v629
      %v1658 = vunpack.c.l.b16 %v630
      %v1659 = vunpack.c.l.b16 %v631
      %v1660 = vunpack.c.l.b16 %v632
      %v1661 = vunpack.c.l.b16 %v633
      %v1662 = vunpack.c.l.b16 %v634
      %v1663 = vunpack.c.l.b16 %v635
      %v1664 = vunpack.c.l.b16 %v636
      %v1665 = vunpack.c.l.b16 %v637
      %v1666 = vunpack.c.l.b16 %v638
      %v1667 = vunpack.c.l.b16 %v639
      %v1668 = vunpack.c.l.b16 %v640
      %v1669 = vunpack.c.l.b16 %v641
      %v1670 = vunpack.c.l.b16 %v642
      %v1671 = vunpack.c.l.b16 %v643
      %v1672 = vunpack.c.l.b16 %v644
      %v1673 = vunpack.c.l.b16 %v645
      %v1674 = vunpack.c.l.b16 %v646
      %v1675 = vunpack.c.l.b16 %v647
      %v1676 = vunpack.c.l.b16 %v648
      %v1677 = vunpack.c.l.b16 %v649
      %v1678 = vunpack.c.l.b16 %v650
      %v1679 = vunpack.c.l.b16 %v651
      %v1680 = vunpack.c.l.b16 %v652
      %v1681 = vunpack.c.l.b16 %v653
      %v1682 = vunpack.c.l.b16 %v654
      %v1683 = vunpack.c.l.b16 %v655
      %v1684 = vunpack.c.l.b16 %v656
      %v1685 = vunpack.c.l.b16 %v657
      %v1686 = vunpack.c.l.b16 %v658
      %v1687 = vunpack.c.l.b16 %v659
      %v1688 = vunpack.c.l.b16 %v660
      %v1689 = vunpack.c.l.b16 %v661
      %v1690 = vunpack.c.l.b16 %v662
      %v1691 = vunpack.c.l.b16 %v663
      %v1692 = vunpack.c.l.b16 %v664
      %v1693 = vunpack.c.l.b16 %v665
      %v1694 = vunpack.c.l.b16 %v666
      %v1695 = vunpack.c.l.b16 %v667
      %v1696 = vunpack.c.l.b16 %v668
      %v1697 = vunpack.c.l.b16 %v669
      %v1698 = vunpack.c.l.b16 %v670
      %v1699 = vunpack.c.l.b16 %v671
      %v1700 = vunpack.c.l.b16 %v672
      %v1701 = vunpack.c.l.b16 %v673
      %v1702 = vunpack.c.l.b16 %v674
      %v1703 = vunpack.c.l.b16 %v675
      %v1704 = vunpack.c.l.b16 %v676
      %v1705 = vunpack.c.l.b16 %v677
      %v1706 = vunpack.c.l.b16 %v678
      %v1707 = vunpack.c.l.b16 %v679
      %v1708 = vunpack.c.l.b16 %v680
      %v1709 = vunpack.c.l.b16 %v681
      %v1710 = vunpack.c.l.b16 %v682
      %v1711 = vunpack.c.l.b16 %v683
      %v1712 = vunpack.c.l.b16 %v684
      %v1713 = vunpack.c.l.b16 %v685
      %v1714 = vunpack.c.l.b16 %v686
      %v1715 = vunpack.c.l.b16 %v687
      %v1716 = vunpack.c.l.b16 %v688
      %v1717 = vunpack.c.l.b16 %v689
      %v1718 = vunpack.c.l.b16 %v690
      %v1719 = vunpack.c.l.b16 %v691
      %v1720 = vunpack.c.l.b16 %v692
      %v1721 = vunpack.c.l.b16 %v693
      %v1722 = vunpack.c.l.b16 %v694
      %v1723 = vunpack.c.l.b16 %v695
      %v1724 = vunpack.c.l.b16 %v696
      %v1725 = vunpack.c.l.b16 %v697
      %v1726 = vunpack.c.l.b16 %v698
      %v1727 = vunpack.c.l.b16 %v699
      %v1728 = vunpack.c.l.b16 %v700
      %v1729 = vunpack.c.l.b16 %v701
      %v1730 = vunpack.c.l.b16 %v702
      %v1731 = vunpack.c.l.b16 %v703
      %v1732 = vunpack.c.l.b16 %v704
      %v1733 = vunpack.c.l.b16 %v705
      %v1734 = vunpack.c.l.b16 %v706
      %v1735 = vunpack.c.l.b16 %v707
      %v1736 = vunpack.c.l.b16 %v708
      %v1737 = vunpack.c.l.b16 %v709
      %v1738 = vunpack.c.l.b16 %v710
      %v1739 = vunpack.c.l.b16 %v711
      %v1740 = vunpack.c.l.b16 %v712
      %v1741 = vunpack.c.l.b16 %v713
      %v1742 = vunpack.c.l.b16 %v714
      %v1743 = vunpack.c.l.b16 %v715
      %v1744 = vunpack.c.l.b16 %v716
      %v1745 = vunpack.c.l.b16 %v717
      %v1746 = vunpack.c.l.b16 %v718
      %v1747 = vunpack.c.l.b16 %v719
      %v1748 = vunpack.c.l.b16 %v720
      %v1749 = vunpack.c.l.b16 %v721
      %v1750 = vunpack.c.l.b16 %v722
      %v1751 = vpack.c.b16 %v1608, %v1607
      %v1752 = vpack.c.b16 %v1610, %v1609
      %v1753 = vpack.c.b16 %v1612, %v1611
      %v1754 = vpack.c.b16 %v1614, %v1613
      %v1755 = vpack.c.b16 %v1616, %v1615
      %v1756 = vpack.c.b16 %v1618, %v1617
      %v1757 = vpack.c.b16 %v1620, %v1619
      %v1758 = vpack.c.b16 %v1622, %v1621
      %v1759 = vpack.c.b16 %v1624, %v1623
      %v1760 = vpack.c.b16 %v1626, %v1625
      %v1761 = vpack.c.b16 %v1628, %v1627
      %v1762 = vpack.c.b16 %v1630, %v1629
      %v1763 = vpack.c.b16 %v1632, %v1631
      %v1764 = vpack.c.b16 %v1634, %v1633
      %v1765 = vpack.c.b16 %v1636, %v1635
      %v1766 = vpack.c.b16 %v1638, %v1637
      %v1767 = vpack.c.b16 %v1640, %v1639
      %v1768 = vpack.c.b16 %v1642, %v1641
      %v1769 = vpack.c.b16 %v1644, %v1643
      %v1770 = vpack.c.b16 %v1646, %v1645
      %v1771 = vpack.c.b16 %v1648, %v1647
      %v1772 = vpack.c.b16 %v1650, %v1649
      %v1773 = vpack.c.b16 %v1652, %v1651
      %v1774 = vpack.c.b16 %v1654, %v1653
      %v1775 = vpack.c.b16 %v1656, %v1655
      %v1776 = vpack.c.b16 %v1658, %v1657
      %v1777 = vpack.c.b16 %v1660, %v1659
      %v1778 = vpack.c.b16 %v1662, %v1661
      %v1779 = vpack.c.b16 %v1664, %v1663
      %v1780 = vpack.c.b16 %v1666, %v1665
      %v1781 = vpack.c.b16 %v1668, %v1667
      %v1782 = vpack.c.b16 %v1670, %v1669
      %v1783 = vpack.c.b16 %v1672, %v1671
      %v1784 = vpack.c.b16 %v1674, %v1673
      %v1785 = vpack.c.b16 %v1676, %v1675
      %v1786 = vpack.c.b16 %v1678, %v1677
      %v1787 = vpack.c.b16 %v1680, %v1679
      %v1788 = vpack.c.b16 %v1682, %v1681
      %v1789 = vpack.c.b16 %v1684, %v1683
      %v1790 = vpack.c.b16 %v1686, %v1685
      %v1791 = vpack.c.b16 %v1688, %v1687
      %v1792 = vpack.c.b16 %v1690, %v1689
      %v1793 = vpack.c.b16 %v1692, %v1691
      %v1794 = vpack.c.b16 %v1694, %v1693
      %v1795 = vpack.c.b16 %v1696, %v1695
      %v1796 = vpack.c.b16 %v1698, %v1697
      %v1797 = vpack.c.b16 %v1700, %v1699
      %v1798 = vpack.c.b16 %v1702, %v1701
      %v1799 = vpack.c.b16 %v1704, %v1703
      %v1800 = vpack.c.b16 %v1706, %v1705
      %v1801 = vpack.c.b16 %v1708, %v1707
      %v1802 = vpack.c.b16 %v1710, %v1709
      %v1803 = vpack.c.b16 %v1712, %v1711
      %v1804 = vpack.c.b16 %v1714, %v1713
      %v1805 = vpack.c.b16 %v1716, %v1715
      %v1806 = vpack.c.b16 %v1718, %v1717
      %v1807 = vpack.c.b16 %v1720, %v1719
      %v1808 = vpack.c.b16 %v1722, %v1721
      %v1809 = vpack.c.b16 %v1724, %v1723
      %v1810 = vpack.c.b16 %v1726, %v1725
      %v1811 = vpack.c.b16 %v1728, %v1727
      %v1812 = vpack.c.b16 %v1730, %v1729
      %v1813 = vpack.c.b16 %v1732, %v1731
      %v1814 = vpack.c.b16 %v1734, %v1733
      %v1815 = vpack.c.b16 %v1736, %v1735
      %v1816 = vpack.c.b16 %v1738, %v1737
      %v1817 = vpack.c.b16 %v1740, %v1739
      %v1818 = vpack.c.b16 %v1742, %v1741
      %v1819 = vpack.c.b16 %v1744, %v1743
      %v1820 = vpack.c.b16 %v1746, %v1745
      %v1821 = vpack.c.b16 %v1748, %v1747
      %v1822 = vpack.c.b16 %v1750, %v1749
      %1895 = vmatpush.bf16.msra.mxu0 %v1758
      %1896 = vmatpush.bf16.msra.mxu0 %v1757
      %1897 = vmatpush.bf16.msra.mxu0 %v1756
      %1898 = vmatpush.bf16.msra.mxu0 %v1755
      %1899 = vmatpush.bf16.msra.mxu0 %v1754
      %1900 = vmatpush.bf16.msra.mxu0 %v1753
      %1901 = vmatpush.bf16.msra.mxu0 %v1752
      %1902 = vmatpush.bf16.msra.mxu0 %v1751
      %1903 = vmatmul.bf16.gmra.mxu0 %v1175
      %v1904 = vpop.f32.mrf.mxu0
      %v1905 = vadd.f32 %v725, %v1904
      %v1906 = vpop.f32.mrf.mxu0
      %v1907 = vadd.f32 %v725, %v1906
      %1908 = vmatmul.bf16.gmra.mxu0 %v1184
      %v1909 = vpop.f32.mrf.mxu0
      %v1910 = vadd.f32 %v725, %v1909
      %v1911 = vpop.f32.mrf.mxu0
      %v1912 = vadd.f32 %v725, %v1911
      %1913 = vmatmul.bf16.gmra.mxu0 %v1193
      %v1914 = vpop.f32.mrf.mxu0
      %v1915 = vadd.f32 %v725, %v1914
      %v1916 = vpop.f32.mrf.mxu0
      %v1917 = vadd.f32 %v725, %v1916
      %1918 = vmatmul.bf16.gmra.mxu0 %v1202
      %v1919 = vpop.f32.mrf.mxu0
      %v1920 = vadd.f32 %v725, %v1919
      %v1921 = vpop.f32.mrf.mxu0
      %v1922 = vadd.f32 %v725, %v1921
      %1923 = vmatmul.bf16.gmra.mxu0 %v1211
      %v1924 = vpop.f32.mrf.mxu0
      %v1925 = vadd.f32 %v725, %v1924
      %v1926 = vpop.f32.mrf.mxu0
      %v1927 = vadd.f32 %v725, %v1926
      %1928 = vmatmul.bf16.gmra.mxu0 %v1220
      %v1929 = vpop.f32.mrf.mxu0
      %v1930 = vadd.f32 %v725, %v1929
      %v1931 = vpop.f32.mrf.mxu0
      %v1932 = vadd.f32 %v725, %v1931
      %1933 = vmatmul.bf16.gmra.mxu0 %v1229
      %v1934 = vpop.f32.mrf.mxu0
      %v1935 = vadd.f32 %v725, %v1934
      %v1936 = vpop.f32.mrf.mxu0
      %v1937 = vadd.f32 %v725, %v1936
      %1938 = vmatmul.bf16.gmra.mxu0 %v1238
      %v1939 = vpop.f32.mrf.mxu0
      %v1940 = vadd.f32 %v725, %v1939
      %v1941 = vpop.f32.mrf.mxu0
      %v1942 = vadd.f32 %v725, %v1941
      %1943 = vmatmul.bf16.gmra.mxu0 %v1247
      %v1944 = vpop.f32.mrf.mxu0
      %v1945 = vadd.f32 %v725, %v1944
      %v1946 = vpop.f32.mrf.mxu0
      %v1947 = vadd.f32 %v725, %v1946
      %1948 = vmatmul.bf16.gmra.mxu0 %v1256
      %v1949 = vpop.f32.mrf.mxu0
      %v1950 = vadd.f32 %v725, %v1949
      %v1951 = vpop.f32.mrf.mxu0
      %v1952 = vadd.f32 %v725, %v1951
      %1953 = vmatmul.bf16.gmra.mxu0 %v1265
      %v1954 = vpop.f32.mrf.mxu0
      %v1955 = vadd.f32 %v725, %v1954
      %v1956 = vpop.f32.mrf.mxu0
      %v1957 = vadd.f32 %v725, %v1956
      %1958 = vmatmul.bf16.gmra.mxu0 %v1274
      %v1959 = vpop.f32.mrf.mxu0
      %v1960 = vadd.f32 %v725, %v1959
      %v1961 = vpop.f32.mrf.mxu0
      %v1962 = vadd.f32 %v725, %v1961
      %1963 = vmatmul.bf16.gmra.mxu0 %v1283
      %v1964 = vpop.f32.mrf.mxu0
      %v1965 = vadd.f32 %v725, %v1964
      %v1966 = vpop.f32.mrf.mxu0
      %v1967 = vadd.f32 %v725, %v1966
      %1968 = vmatmul.bf16.gmra.mxu0 %v1292
      %v1969 = vpop.f32.mrf.mxu0
      %v1970 = vadd.f32 %v725, %v1969
      %v1971 = vpop.f32.mrf.mxu0
      %v1972 = vadd.f32 %v725, %v1971
      %1973 = vmatmul.bf16.gmra.mxu0 %v1301
      %v1974 = vpop.f32.mrf.mxu0
      %v1975 = vadd.f32 %v725, %v1974
      %v1976 = vpop.f32.mrf.mxu0
      %v1977 = vadd.f32 %v725, %v1976
      %1978 = vmatmul.bf16.gmra.mxu0 %v1310
      %v1979 = vpop.f32.mrf.mxu0
      %v1980 = vadd.f32 %v725, %v1979
      %v1981 = vpop.f32.mrf.mxu0
      %v1982 = vadd.f32 %v725, %v1981
      %1983 = vdwg.mxu0
      %1984 = vmatpush.bf16.msra.mxu0 %v1766
      %1985 = vmatpush.bf16.msra.mxu0 %v1765
      %1986 = vmatpush.bf16.msra.mxu0 %v1764
      %1987 = vmatpush.bf16.msra.mxu0 %v1763
      %1988 = vmatpush.bf16.msra.mxu0 %v1762
      %1989 = vmatpush.bf16.msra.mxu0 %v1761
      %1990 = vmatpush.bf16.msra.mxu0 %v1760
      %1991 = vmatpush.bf16.msra.mxu0 %v1759
      %1992 = vmatmul.bf16.gmra.mxu0 %v1176
      %v1993 = vpop.f32.mrf.mxu0
      %v1994 = vadd.f32 %v1905, %v1993
      %v1995 = vpop.f32.mrf.mxu0
      %v1996 = vadd.f32 %v1907, %v1995
      %1997 = vmatmul.bf16.gmra.mxu0 %v1185
      %v1998 = vpop.f32.mrf.mxu0
      %v1999 = vadd.f32 %v1910, %v1998
      %v2000 = vpop.f32.mrf.mxu0
      %v2001 = vadd.f32 %v1912, %v2000
      %2002 = vmatmul.bf16.gmra.mxu0 %v1194
      %v2003 = vpop.f32.mrf.mxu0
      %v2004 = vadd.f32 %v1915, %v2003
      %v2005 = vpop.f32.mrf.mxu0
      %v2006 = vadd.f32 %v1917, %v2005
      %2007 = vmatmul.bf16.gmra.mxu0 %v1203
      %v2008 = vpop.f32.mrf.mxu0
      %v2009 = vadd.f32 %v1920, %v2008
      %v2010 = vpop.f32.mrf.mxu0
      %v2011 = vadd.f32 %v1922, %v2010
      %2012 = vmatmul.bf16.gmra.mxu0 %v1212
      %v2013 = vpop.f32.mrf.mxu0
      %v2014 = vadd.f32 %v1925, %v2013
      %v2015 = vpop.f32.mrf.mxu0
      %v2016 = vadd.f32 %v1927, %v2015
      %2017 = vmatmul.bf16.gmra.mxu0 %v1221
      %v2018 = vpop.f32.mrf.mxu0
      %v2019 = vadd.f32 %v1930, %v2018
      %v2020 = vpop.f32.mrf.mxu0
      %v2021 = vadd.f32 %v1932, %v2020
      %2022 = vmatmul.bf16.gmra.mxu0 %v1230
      %v2023 = vpop.f32.mrf.mxu0
      %v2024 = vadd.f32 %v1935, %v2023
      %v2025 = vpop.f32.mrf.mxu0
      %v2026 = vadd.f32 %v1937, %v2025
      %2027 = vmatmul.bf16.gmra.mxu0 %v1239
      %v2028 = vpop.f32.mrf.mxu0
      %v2029 = vadd.f32 %v1940, %v2028
      %v2030 = vpop.f32.mrf.mxu0
      %v2031 = vadd.f32 %v1942, %v2030
      %2032 = vmatmul.bf16.gmra.mxu0 %v1248
      %v2033 = vpop.f32.mrf.mxu0
      %v2034 = vadd.f32 %v1945, %v2033
      %v2035 = vpop.f32.mrf.mxu0
      %v2036 = vadd.f32 %v1947, %v2035
      %2037 = vmatmul.bf16.gmra.mxu0 %v1257
      %v2038 = vpop.f32.mrf.mxu0
      %v2039 = vadd.f32 %v1950, %v2038
      %v2040 = vpop.f32.mrf.mxu0
      %v2041 = vadd.f32 %v1952, %v2040
      %2042 = vmatmul.bf16.gmra.mxu0 %v1266
      %v2043 = vpop.f32.mrf.mxu0
      %v2044 = vadd.f32 %v1955, %v2043
      %v2045 = vpop.f32.mrf.mxu0
      %v2046 = vadd.f32 %v1957, %v2045
      %2047 = vmatmul.bf16.gmra.mxu0 %v1275
      %v2048 = vpop.f32.mrf.mxu0
      %v2049 = vadd.f32 %v1960, %v2048
      %v2050 = vpop.f32.mrf.mxu0
      %v2051 = vadd.f32 %v1962, %v2050
      %2052 = vmatmul.bf16.gmra.mxu0 %v1284
      %v2053 = vpop.f32.mrf.mxu0
      %v2054 = vadd.f32 %v1965, %v2053
      %v2055 = vpop.f32.mrf.mxu0
      %v2056 = vadd.f32 %v1967, %v2055
      %2057 = vmatmul.bf16.gmra.mxu0 %v1293
      %v2058 = vpop.f32.mrf.mxu0
      %v2059 = vadd.f32 %v1970, %v2058
      %v2060 = vpop.f32.mrf.mxu0
      %v2061 = vadd.f32 %v1972, %v2060
      %2062 = vmatmul.bf16.gmra.mxu0 %v1302
      %v2063 = vpop.f32.mrf.mxu0
      %v2064 = vadd.f32 %v1975, %v2063
      %v2065 = vpop.f32.mrf.mxu0
      %v2066 = vadd.f32 %v1977, %v2065
      %2067 = vmatmul.bf16.gmra.mxu0 %v1311
      %v2068 = vpop.f32.mrf.mxu0
      %v2069 = vadd.f32 %v1980, %v2068
      %v2070 = vpop.f32.mrf.mxu0
      %v2071 = vadd.f32 %v1982, %v2070
      %2072 = vdwg.mxu0
      %2073 = vmatpush.bf16.msra.mxu0 %v1774
      %2074 = vmatpush.bf16.msra.mxu0 %v1773
      %2075 = vmatpush.bf16.msra.mxu0 %v1772
      %2076 = vmatpush.bf16.msra.mxu0 %v1771
      %2077 = vmatpush.bf16.msra.mxu0 %v1770
      %2078 = vmatpush.bf16.msra.mxu0 %v1769
      %2079 = vmatpush.bf16.msra.mxu0 %v1768
      %2080 = vmatpush.bf16.msra.mxu0 %v1767
      %2081 = vmatmul.bf16.gmra.mxu0 %v1177
      %v2082 = vpop.f32.mrf.mxu0
      %v2083 = vadd.f32 %v1994, %v2082
      %v2084 = vpop.f32.mrf.mxu0
      %v2085 = vadd.f32 %v1996, %v2084
      %2086 = vmatmul.bf16.gmra.mxu0 %v1186
      %v2087 = vpop.f32.mrf.mxu0
      %v2088 = vadd.f32 %v1999, %v2087
      %v2089 = vpop.f32.mrf.mxu0
      %v2090 = vadd.f32 %v2001, %v2089
      %2091 = vmatmul.bf16.gmra.mxu0 %v1195
      %v2092 = vpop.f32.mrf.mxu0
      %v2093 = vadd.f32 %v2004, %v2092
      %v2094 = vpop.f32.mrf.mxu0
      %v2095 = vadd.f32 %v2006, %v2094
      %2096 = vmatmul.bf16.gmra.mxu0 %v1204
      %v2097 = vpop.f32.mrf.mxu0
      %v2098 = vadd.f32 %v2009, %v2097
      %v2099 = vpop.f32.mrf.mxu0
      %v2100 = vadd.f32 %v2011, %v2099
      %2101 = vmatmul.bf16.gmra.mxu0 %v1213
      %v2102 = vpop.f32.mrf.mxu0
      %v2103 = vadd.f32 %v2014, %v2102
      %v2104 = vpop.f32.mrf.mxu0
      %v2105 = vadd.f32 %v2016, %v2104
      %2106 = vmatmul.bf16.gmra.mxu0 %v1222
      %v2107 = vpop.f32.mrf.mxu0
      %v2108 = vadd.f32 %v2019, %v2107
      %v2109 = vpop.f32.mrf.mxu0
      %v2110 = vadd.f32 %v2021, %v2109
      %2111 = vmatmul.bf16.gmra.mxu0 %v1231
      %v2112 = vpop.f32.mrf.mxu0
      %v2113 = vadd.f32 %v2024, %v2112
      %v2114 = vpop.f32.mrf.mxu0
      %v2115 = vadd.f32 %v2026, %v2114
      %2116 = vmatmul.bf16.gmra.mxu0 %v1240
      %v2117 = vpop.f32.mrf.mxu0
      %v2118 = vadd.f32 %v2029, %v2117
      %v2119 = vpop.f32.mrf.mxu0
      %v2120 = vadd.f32 %v2031, %v2119
      %2121 = vmatmul.bf16.gmra.mxu0 %v1249
      %v2122 = vpop.f32.mrf.mxu0
      %v2123 = vadd.f32 %v2034, %v2122
      %v2124 = vpop.f32.mrf.mxu0
      %v2125 = vadd.f32 %v2036, %v2124
      %2126 = vmatmul.bf16.gmra.mxu0 %v1258
      %v2127 = vpop.f32.mrf.mxu0
      %v2128 = vadd.f32 %v2039, %v2127
      %v2129 = vpop.f32.mrf.mxu0
      %v2130 = vadd.f32 %v2041, %v2129
      %2131 = vmatmul.bf16.gmra.mxu0 %v1267
      %v2132 = vpop.f32.mrf.mxu0
      %v2133 = vadd.f32 %v2044, %v2132
      %v2134 = vpop.f32.mrf.mxu0
      %v2135 = vadd.f32 %v2046, %v2134
      %2136 = vmatmul.bf16.gmra.mxu0 %v1276
      %v2137 = vpop.f32.mrf.mxu0
      %v2138 = vadd.f32 %v2049, %v2137
      %v2139 = vpop.f32.mrf.mxu0
      %v2140 = vadd.f32 %v2051, %v2139
      %2141 = vmatmul.bf16.gmra.mxu0 %v1285
      %v2142 = vpop.f32.mrf.mxu0
      %v2143 = vadd.f32 %v2054, %v2142
      %v2144 = vpop.f32.mrf.mxu0
      %v2145 = vadd.f32 %v2056, %v2144
      %2146 = vmatmul.bf16.gmra.mxu0 %v1294
      %v2147 = vpop.f32.mrf.mxu0
      %v2148 = vadd.f32 %v2059, %v2147
      %v2149 = vpop.f32.mrf.mxu0
      %v2150 = vadd.f32 %v2061, %v2149
      %2151 = vmatmul.bf16.gmra.mxu0 %v1303
      %v2152 = vpop.f32.mrf.mxu0
      %v2153 = vadd.f32 %v2064, %v2152
      %v2154 = vpop.f32.mrf.mxu0
      %v2155 = vadd.f32 %v2066, %v2154
      %2156 = vmatmul.bf16.gmra.mxu0 %v1312
      %v2157 = vpop.f32.mrf.mxu0
      %v2158 = vadd.f32 %v2069, %v2157
      %v2159 = vpop.f32.mrf.mxu0
      %v2160 = vadd.f32 %v2071, %v2159
      %2161 = vdwg.mxu0
      %2162 = vmatpush.bf16.msra.mxu0 %v1782
      %2163 = vmatpush.bf16.msra.mxu0 %v1781
      %2164 = vmatpush.bf16.msra.mxu0 %v1780
      %2165 = vmatpush.bf16.msra.mxu0 %v1779
      %2166 = vmatpush.bf16.msra.mxu0 %v1778
      %2167 = vmatpush.bf16.msra.mxu0 %v1777
      %2168 = vmatpush.bf16.msra.mxu0 %v1776
      %2169 = vmatpush.bf16.msra.mxu0 %v1775
      %2170 = vmatmul.bf16.gmra.mxu0 %v1178
      %v2171 = vpop.f32.mrf.mxu0
      %v2172 = vadd.f32 %v2083, %v2171
      %v2173 = vpop.f32.mrf.mxu0
      %v2174 = vadd.f32 %v2085, %v2173
      %2175 = vmatmul.bf16.gmra.mxu0 %v1187
      %v2176 = vpop.f32.mrf.mxu0
      %v2177 = vadd.f32 %v2088, %v2176
      %v2178 = vpop.f32.mrf.mxu0
      %v2179 = vadd.f32 %v2090, %v2178
      %2180 = vmatmul.bf16.gmra.mxu0 %v1196
      %v2181 = vpop.f32.mrf.mxu0
      %v2182 = vadd.f32 %v2093, %v2181
      %v2183 = vpop.f32.mrf.mxu0
      %v2184 = vadd.f32 %v2095, %v2183
      %2185 = vmatmul.bf16.gmra.mxu0 %v1205
      %v2186 = vpop.f32.mrf.mxu0
      %v2187 = vadd.f32 %v2098, %v2186
      %v2188 = vpop.f32.mrf.mxu0
      %v2189 = vadd.f32 %v2100, %v2188
      %2190 = vmatmul.bf16.gmra.mxu0 %v1214
      %v2191 = vpop.f32.mrf.mxu0
      %v2192 = vadd.f32 %v2103, %v2191
      %v2193 = vpop.f32.mrf.mxu0
      %v2194 = vadd.f32 %v2105, %v2193
      %2195 = vmatmul.bf16.gmra.mxu0 %v1223
      %v2196 = vpop.f32.mrf.mxu0
      %v2197 = vadd.f32 %v2108, %v2196
      %v2198 = vpop.f32.mrf.mxu0
      %v2199 = vadd.f32 %v2110, %v2198
      %2200 = vmatmul.bf16.gmra.mxu0 %v1232
      %v2201 = vpop.f32.mrf.mxu0
      %v2202 = vadd.f32 %v2113, %v2201
      %v2203 = vpop.f32.mrf.mxu0
      %v2204 = vadd.f32 %v2115, %v2203
      %2205 = vmatmul.bf16.gmra.mxu0 %v1241
      %v2206 = vpop.f32.mrf.mxu0
      %v2207 = vadd.f32 %v2118, %v2206
      %v2208 = vpop.f32.mrf.mxu0
      %v2209 = vadd.f32 %v2120, %v2208
      %2210 = vmatmul.bf16.gmra.mxu0 %v1250
      %v2211 = vpop.f32.mrf.mxu0
      %v2212 = vadd.f32 %v2123, %v2211
      %v2213 = vpop.f32.mrf.mxu0
      %v2214 = vadd.f32 %v2125, %v2213
      %2215 = vmatmul.bf16.gmra.mxu0 %v1259
      %v2216 = vpop.f32.mrf.mxu0
      %v2217 = vadd.f32 %v2128, %v2216
      %v2218 = vpop.f32.mrf.mxu0
      %v2219 = vadd.f32 %v2130, %v2218
      %2220 = vmatmul.bf16.gmra.mxu0 %v1268
      %v2221 = vpop.f32.mrf.mxu0
      %v2222 = vadd.f32 %v2133, %v2221
      %v2223 = vpop.f32.mrf.mxu0
      %v2224 = vadd.f32 %v2135, %v2223
      %2225 = vmatmul.bf16.gmra.mxu0 %v1277
      %v2226 = vpop.f32.mrf.mxu0
      %v2227 = vadd.f32 %v2138, %v2226
      %v2228 = vpop.f32.mrf.mxu0
      %v2229 = vadd.f32 %v2140, %v2228
      %2230 = vmatmul.bf16.gmra.mxu0 %v1286
      %v2231 = vpop.f32.mrf.mxu0
      %v2232 = vadd.f32 %v2143, %v2231
      %v2233 = vpop.f32.mrf.mxu0
      %v2234 = vadd.f32 %v2145, %v2233
      %2235 = vmatmul.bf16.gmra.mxu0 %v1295
      %v2236 = vpop.f32.mrf.mxu0
      %v2237 = vadd.f32 %v2148, %v2236
      %v2238 = vpop.f32.mrf.mxu0
      %v2239 = vadd.f32 %v2150, %v2238
      %2240 = vmatmul.bf16.gmra.mxu0 %v1304
      %v2241 = vpop.f32.mrf.mxu0
      %v2242 = vadd.f32 %v2153, %v2241
      %v2243 = vpop.f32.mrf.mxu0
      %v2244 = vadd.f32 %v2155, %v2243
      %2245 = vmatmul.bf16.gmra.mxu0 %v1313
      %v2246 = vpop.f32.mrf.mxu0
      %v2247 = vadd.f32 %v2158, %v2246
      %v2248 = vpop.f32.mrf.mxu0
      %v2249 = vadd.f32 %v2160, %v2248
      %2250 = vdwg.mxu0
      %2251 = vmatpush.bf16.msra.mxu0 %v1790
      %2252 = vmatpush.bf16.msra.mxu0 %v1789
      %2253 = vmatpush.bf16.msra.mxu0 %v1788
      %2254 = vmatpush.bf16.msra.mxu0 %v1787
      %2255 = vmatpush.bf16.msra.mxu0 %v1786
      %2256 = vmatpush.bf16.msra.mxu0 %v1785
      %2257 = vmatpush.bf16.msra.mxu0 %v1784
      %2258 = vmatpush.bf16.msra.mxu0 %v1783
      %2259 = vmatmul.bf16.gmra.mxu0 %v1179
      %v2260 = vpop.f32.mrf.mxu0
      %v2261 = vadd.f32 %v2172, %v2260
      %v2262 = vpop.f32.mrf.mxu0
      %v2263 = vadd.f32 %v2174, %v2262
      %2264 = vmatmul.bf16.gmra.mxu0 %v1188
      %v2265 = vpop.f32.mrf.mxu0
      %v2266 = vadd.f32 %v2177, %v2265
      %v2267 = vpop.f32.mrf.mxu0
      %v2268 = vadd.f32 %v2179, %v2267
      %2269 = vmatmul.bf16.gmra.mxu0 %v1197
      %v2270 = vpop.f32.mrf.mxu0
      %v2271 = vadd.f32 %v2182, %v2270
      %v2272 = vpop.f32.mrf.mxu0
      %v2273 = vadd.f32 %v2184, %v2272
      %2274 = vmatmul.bf16.gmra.mxu0 %v1206
      %v2275 = vpop.f32.mrf.mxu0
      %v2276 = vadd.f32 %v2187, %v2275
      %v2277 = vpop.f32.mrf.mxu0
      %v2278 = vadd.f32 %v2189, %v2277
      %2279 = vmatmul.bf16.gmra.mxu0 %v1215
      %v2280 = vpop.f32.mrf.mxu0
      %v2281 = vadd.f32 %v2192, %v2280
      %v2282 = vpop.f32.mrf.mxu0
      %v2283 = vadd.f32 %v2194, %v2282
      %2284 = vmatmul.bf16.gmra.mxu0 %v1224
      %v2285 = vpop.f32.mrf.mxu0
      %v2286 = vadd.f32 %v2197, %v2285
      %v2287 = vpop.f32.mrf.mxu0
      %v2288 = vadd.f32 %v2199, %v2287
      %2289 = vmatmul.bf16.gmra.mxu0 %v1233
      %v2290 = vpop.f32.mrf.mxu0
      %v2291 = vadd.f32 %v2202, %v2290
      %v2292 = vpop.f32.mrf.mxu0
      %v2293 = vadd.f32 %v2204, %v2292
      %2294 = vmatmul.bf16.gmra.mxu0 %v1242
      %v2295 = vpop.f32.mrf.mxu0
      %v2296 = vadd.f32 %v2207, %v2295
      %v2297 = vpop.f32.mrf.mxu0
      %v2298 = vadd.f32 %v2209, %v2297
      %2299 = vmatmul.bf16.gmra.mxu0 %v1251
      %v2300 = vpop.f32.mrf.mxu0
      %v2301 = vadd.f32 %v2212, %v2300
      %v2302 = vpop.f32.mrf.mxu0
      %v2303 = vadd.f32 %v2214, %v2302
      %2304 = vmatmul.bf16.gmra.mxu0 %v1260
      %v2305 = vpop.f32.mrf.mxu0
      %v2306 = vadd.f32 %v2217, %v2305
      %v2307 = vpop.f32.mrf.mxu0
      %v2308 = vadd.f32 %v2219, %v2307
      %2309 = vmatmul.bf16.gmra.mxu0 %v1269
      %v2310 = vpop.f32.mrf.mxu0
      %v2311 = vadd.f32 %v2222, %v2310
      %v2312 = vpop.f32.mrf.mxu0
      %v2313 = vadd.f32 %v2224, %v2312
      %2314 = vmatmul.bf16.gmra.mxu0 %v1278
      %v2315 = vpop.f32.mrf.mxu0
      %v2316 = vadd.f32 %v2227, %v2315
      %v2317 = vpop.f32.mrf.mxu0
      %v2318 = vadd.f32 %v2229, %v2317
      %2319 = vmatmul.bf16.gmra.mxu0 %v1287
      %v2320 = vpop.f32.mrf.mxu0
      %v2321 = vadd.f32 %v2232, %v2320
      %v2322 = vpop.f32.mrf.mxu0
      %v2323 = vadd.f32 %v2234, %v2322
      %2324 = vmatmul.bf16.gmra.mxu0 %v1296
      %v2325 = vpop.f32.mrf.mxu0
      %v2326 = vadd.f32 %v2237, %v2325
      %v2327 = vpop.f32.mrf.mxu0
      %v2328 = vadd.f32 %v2239, %v2327
      %2329 = vmatmul.bf16.gmra.mxu0 %v1305
      %v2330 = vpop.f32.mrf.mxu0
      %v2331 = vadd.f32 %v2242, %v2330
      %v2332 = vpop.f32.mrf.mxu0
      %v2333 = vadd.f32 %v2244, %v2332
      %2334 = vmatmul.bf16.gmra.mxu0 %v1314
      %v2335 = vpop.f32.mrf.mxu0
      %v2336 = vadd.f32 %v2247, %v2335
      %v2337 = vpop.f32.mrf.mxu0
      %v2338 = vadd.f32 %v2249, %v2337
      %2339 = vdwg.mxu0
      %2340 = vmatpush.bf16.msra.mxu0 %v1798
      %2341 = vmatpush.bf16.msra.mxu0 %v1797
      %2342 = vmatpush.bf16.msra.mxu0 %v1796
      %2343 = vmatpush.bf16.msra.mxu0 %v1795
      %2344 = vmatpush.bf16.msra.mxu0 %v1794
      %2345 = vmatpush.bf16.msra.mxu0 %v1793
      %2346 = vmatpush.bf16.msra.mxu0 %v1792
      %2347 = vmatpush.bf16.msra.mxu0 %v1791
      %2348 = vmatmul.bf16.gmra.mxu0 %v1180
      %v2349 = vpop.f32.mrf.mxu0
      %v2350 = vadd.f32 %v2261, %v2349
      %v2351 = vpop.f32.mrf.mxu0
      %v2352 = vadd.f32 %v2263, %v2351
      %2353 = vmatmul.bf16.gmra.mxu0 %v1189
      %v2354 = vpop.f32.mrf.mxu0
      %v2355 = vadd.f32 %v2266, %v2354
      %v2356 = vpop.f32.mrf.mxu0
      %v2357 = vadd.f32 %v2268, %v2356
      %2358 = vmatmul.bf16.gmra.mxu0 %v1198
      %v2359 = vpop.f32.mrf.mxu0
      %v2360 = vadd.f32 %v2271, %v2359
      %v2361 = vpop.f32.mrf.mxu0
      %v2362 = vadd.f32 %v2273, %v2361
      %2363 = vmatmul.bf16.gmra.mxu0 %v1207
      %v2364 = vpop.f32.mrf.mxu0
      %v2365 = vadd.f32 %v2276, %v2364
      %v2366 = vpop.f32.mrf.mxu0
      %v2367 = vadd.f32 %v2278, %v2366
      %2368 = vmatmul.bf16.gmra.mxu0 %v1216
      %v2369 = vpop.f32.mrf.mxu0
      %v2370 = vadd.f32 %v2281, %v2369
      %v2371 = vpop.f32.mrf.mxu0
      %v2372 = vadd.f32 %v2283, %v2371
      %2373 = vmatmul.bf16.gmra.mxu0 %v1225
      %v2374 = vpop.f32.mrf.mxu0
      %v2375 = vadd.f32 %v2286, %v2374
      %v2376 = vpop.f32.mrf.mxu0
      %v2377 = vadd.f32 %v2288, %v2376
      %2378 = vmatmul.bf16.gmra.mxu0 %v1234
      %v2379 = vpop.f32.mrf.mxu0
      %v2380 = vadd.f32 %v2291, %v2379
      %v2381 = vpop.f32.mrf.mxu0
      %v2382 = vadd.f32 %v2293, %v2381
      %2383 = vmatmul.bf16.gmra.mxu0 %v1243
      %v2384 = vpop.f32.mrf.mxu0
      %v2385 = vadd.f32 %v2296, %v2384
      %v2386 = vpop.f32.mrf.mxu0
      %v2387 = vadd.f32 %v2298, %v2386
      %2388 = vmatmul.bf16.gmra.mxu0 %v1252
      %v2389 = vpop.f32.mrf.mxu0
      %v2390 = vadd.f32 %v2301, %v2389
      %v2391 = vpop.f32.mrf.mxu0
      %v2392 = vadd.f32 %v2303, %v2391
      %2393 = vmatmul.bf16.gmra.mxu0 %v1261
      %v2394 = vpop.f32.mrf.mxu0
      %v2395 = vadd.f32 %v2306, %v2394
      %v2396 = vpop.f32.mrf.mxu0
      %v2397 = vadd.f32 %v2308, %v2396
      %2398 = vmatmul.bf16.gmra.mxu0 %v1270
      %v2399 = vpop.f32.mrf.mxu0
      %v2400 = vadd.f32 %v2311, %v2399
      %v2401 = vpop.f32.mrf.mxu0
      %v2402 = vadd.f32 %v2313, %v2401
      %2403 = vmatmul.bf16.gmra.mxu0 %v1279
      %v2404 = vpop.f32.mrf.mxu0
      %v2405 = vadd.f32 %v2316, %v2404
      %v2406 = vpop.f32.mrf.mxu0
      %v2407 = vadd.f32 %v2318, %v2406
      %2408 = vmatmul.bf16.gmra.mxu0 %v1288
      %v2409 = vpop.f32.mrf.mxu0
      %v2410 = vadd.f32 %v2321, %v2409
      %v2411 = vpop.f32.mrf.mxu0
      %v2412 = vadd.f32 %v2323, %v2411
      %2413 = vmatmul.bf16.gmra.mxu0 %v1297
      %v2414 = vpop.f32.mrf.mxu0
      %v2415 = vadd.f32 %v2326, %v2414
      %v2416 = vpop.f32.mrf.mxu0
      %v2417 = vadd.f32 %v2328, %v2416
      %2418 = vmatmul.bf16.gmra.mxu0 %v1306
      %v2419 = vpop.f32.mrf.mxu0
      %v2420 = vadd.f32 %v2331, %v2419
      %v2421 = vpop.f32.mrf.mxu0
      %v2422 = vadd.f32 %v2333, %v2421
      %2423 = vmatmul.bf16.gmra.mxu0 %v1315
      %v2424 = vpop.f32.mrf.mxu0
      %v2425 = vadd.f32 %v2336, %v2424
      %v2426 = vpop.f32.mrf.mxu0
      %v2427 = vadd.f32 %v2338, %v2426
      %2428 = vdwg.mxu0
      %2429 = vmatpush.bf16.msra.mxu0 %v1806
      %2430 = vmatpush.bf16.msra.mxu0 %v1805
      %2431 = vmatpush.bf16.msra.mxu0 %v1804
      %2432 = vmatpush.bf16.msra.mxu0 %v1803
      %2433 = vmatpush.bf16.msra.mxu0 %v1802
      %2434 = vmatpush.bf16.msra.mxu0 %v1801
      %2435 = vmatpush.bf16.msra.mxu0 %v1800
      %2436 = vmatpush.bf16.msra.mxu0 %v1799
      %2437 = vmatmul.bf16.gmra.mxu0 %v1181
      %v2438 = vpop.f32.mrf.mxu0
      %v2439 = vadd.f32 %v2350, %v2438
      %v2440 = vpop.f32.mrf.mxu0
      %v2441 = vadd.f32 %v2352, %v2440
      %2442 = vmatmul.bf16.gmra.mxu0 %v1190
      %v2443 = vpop.f32.mrf.mxu0
      %v2444 = vadd.f32 %v2355, %v2443
      %v2445 = vpop.f32.mrf.mxu0
      %v2446 = vadd.f32 %v2357, %v2445
      %2447 = vmatmul.bf16.gmra.mxu0 %v1199
      %v2448 = vpop.f32.mrf.mxu0
      %v2449 = vadd.f32 %v2360, %v2448
      %v2450 = vpop.f32.mrf.mxu0
      %v2451 = vadd.f32 %v2362, %v2450
      %2452 = vmatmul.bf16.gmra.mxu0 %v1208
      %v2453 = vpop.f32.mrf.mxu0
      %v2454 = vadd.f32 %v2365, %v2453
      %v2455 = vpop.f32.mrf.mxu0
      %v2456 = vadd.f32 %v2367, %v2455
      %2457 = vmatmul.bf16.gmra.mxu0 %v1217
      %v2458 = vpop.f32.mrf.mxu0
      %v2459 = vadd.f32 %v2370, %v2458
      %v2460 = vpop.f32.mrf.mxu0
      %v2461 = vadd.f32 %v2372, %v2460
      %2462 = vmatmul.bf16.gmra.mxu0 %v1226
      %v2463 = vpop.f32.mrf.mxu0
      %v2464 = vadd.f32 %v2375, %v2463
      %v2465 = vpop.f32.mrf.mxu0
      %v2466 = vadd.f32 %v2377, %v2465
      %2467 = vmatmul.bf16.gmra.mxu0 %v1235
      %v2468 = vpop.f32.mrf.mxu0
      %v2469 = vadd.f32 %v2380, %v2468
      %v2470 = vpop.f32.mrf.mxu0
      %v2471 = vadd.f32 %v2382, %v2470
      %2472 = vmatmul.bf16.gmra.mxu0 %v1244
      %v2473 = vpop.f32.mrf.mxu0
      %v2474 = vadd.f32 %v2385, %v2473
      %v2475 = vpop.f32.mrf.mxu0
      %v2476 = vadd.f32 %v2387, %v2475
      %2477 = vmatmul.bf16.gmra.mxu0 %v1253
      %v2478 = vpop.f32.mrf.mxu0
      %v2479 = vadd.f32 %v2390, %v2478
      %v2480 = vpop.f32.mrf.mxu0
      %v2481 = vadd.f32 %v2392, %v2480
      %2482 = vmatmul.bf16.gmra.mxu0 %v1262
      %v2483 = vpop.f32.mrf.mxu0
      %v2484 = vadd.f32 %v2395, %v2483
      %v2485 = vpop.f32.mrf.mxu0
      %v2486 = vadd.f32 %v2397, %v2485
      %2487 = vmatmul.bf16.gmra.mxu0 %v1271
      %v2488 = vpop.f32.mrf.mxu0
      %v2489 = vadd.f32 %v2400, %v2488
      %v2490 = vpop.f32.mrf.mxu0
      %v2491 = vadd.f32 %v2402, %v2490
      %2492 = vmatmul.bf16.gmra.mxu0 %v1280
      %v2493 = vpop.f32.mrf.mxu0
      %v2494 = vadd.f32 %v2405, %v2493
      %v2495 = vpop.f32.mrf.mxu0
      %v2496 = vadd.f32 %v2407, %v2495
      %2497 = vmatmul.bf16.gmra.mxu0 %v1289
      %v2498 = vpop.f32.mrf.mxu0
      %v2499 = vadd.f32 %v2410, %v2498
      %v2500 = vpop.f32.mrf.mxu0
      %v2501 = vadd.f32 %v2412, %v2500
      %2502 = vmatmul.bf16.gmra.mxu0 %v1298
      %v2503 = vpop.f32.mrf.mxu0
      %v2504 = vadd.f32 %v2415, %v2503
      %v2505 = vpop.f32.mrf.mxu0
      %v2506 = vadd.f32 %v2417, %v2505
      %2507 = vmatmul.bf16.gmra.mxu0 %v1307
      %v2508 = vpop.f32.mrf.mxu0
      %v2509 = vadd.f32 %v2420, %v2508
      %v2510 = vpop.f32.mrf.mxu0
      %v2511 = vadd.f32 %v2422, %v2510
      %2512 = vmatmul.bf16.gmra.mxu0 %v1316
      %v2513 = vpop.f32.mrf.mxu0
      %v2514 = vadd.f32 %v2425, %v2513
      %v2515 = vpop.f32.mrf.mxu0
      %v2516 = vadd.f32 %v2427, %v2515
      %2517 = vdwg.mxu0
      %2518 = vmatpush.bf16.msra.mxu0 %v1814
      %2519 = vmatpush.bf16.msra.mxu0 %v1813
      %2520 = vmatpush.bf16.msra.mxu0 %v1812
      %2521 = vmatpush.bf16.msra.mxu0 %v1811
      %2522 = vmatpush.bf16.msra.mxu0 %v1810
      %2523 = vmatpush.bf16.msra.mxu0 %v1809
      %2524 = vmatpush.bf16.msra.mxu0 %v1808
      %2525 = vmatpush.bf16.msra.mxu0 %v1807
      %2526 = vmatmul.bf16.gmra.mxu0 %v1182
      %v2527 = vpop.f32.mrf.mxu0
      %v2528 = vadd.f32 %v2439, %v2527
      %v2529 = vpop.f32.mrf.mxu0
      %v2530 = vadd.f32 %v2441, %v2529
      %2531 = vmatmul.bf16.gmra.mxu0 %v1191
      %v2532 = vpop.f32.mrf.mxu0
      %v2533 = vadd.f32 %v2444, %v2532
      %v2534 = vpop.f32.mrf.mxu0
      %v2535 = vadd.f32 %v2446, %v2534
      %2536 = vmatmul.bf16.gmra.mxu0 %v1200
      %v2537 = vpop.f32.mrf.mxu0
      %v2538 = vadd.f32 %v2449, %v2537
      %v2539 = vpop.f32.mrf.mxu0
      %v2540 = vadd.f32 %v2451, %v2539
      %2541 = vmatmul.bf16.gmra.mxu0 %v1209
      %v2542 = vpop.f32.mrf.mxu0
      %v2543 = vadd.f32 %v2454, %v2542
      %v2544 = vpop.f32.mrf.mxu0
      %v2545 = vadd.f32 %v2456, %v2544
      %2546 = vmatmul.bf16.gmra.mxu0 %v1218
      %v2547 = vpop.f32.mrf.mxu0
      %v2548 = vadd.f32 %v2459, %v2547
      %v2549 = vpop.f32.mrf.mxu0
      %v2550 = vadd.f32 %v2461, %v2549
      %2551 = vmatmul.bf16.gmra.mxu0 %v1227
      %v2552 = vpop.f32.mrf.mxu0
      %v2553 = vadd.f32 %v2464, %v2552
      %v2554 = vpop.f32.mrf.mxu0
      %v2555 = vadd.f32 %v2466, %v2554
      %2556 = vmatmul.bf16.gmra.mxu0 %v1236
      %v2557 = vpop.f32.mrf.mxu0
      %v2558 = vadd.f32 %v2469, %v2557
      %v2559 = vpop.f32.mrf.mxu0
      %v2560 = vadd.f32 %v2471, %v2559
      %2561 = vmatmul.bf16.gmra.mxu0 %v1245
      %v2562 = vpop.f32.mrf.mxu0
      %v2563 = vadd.f32 %v2474, %v2562
      %v2564 = vpop.f32.mrf.mxu0
      %v2565 = vadd.f32 %v2476, %v2564
      %2566 = vmatmul.bf16.gmra.mxu0 %v1254
      %v2567 = vpop.f32.mrf.mxu0
      %v2568 = vadd.f32 %v2479, %v2567
      %v2569 = vpop.f32.mrf.mxu0
      %v2570 = vadd.f32 %v2481, %v2569
      %2571 = vmatmul.bf16.gmra.mxu0 %v1263
      %v2572 = vpop.f32.mrf.mxu0
      %v2573 = vadd.f32 %v2484, %v2572
      %v2574 = vpop.f32.mrf.mxu0
      %v2575 = vadd.f32 %v2486, %v2574
      %2576 = vmatmul.bf16.gmra.mxu0 %v1272
      %v2577 = vpop.f32.mrf.mxu0
      %v2578 = vadd.f32 %v2489, %v2577
      %v2579 = vpop.f32.mrf.mxu0
      %v2580 = vadd.f32 %v2491, %v2579
      %2581 = vmatmul.bf16.gmra.mxu0 %v1281
      %v2582 = vpop.f32.mrf.mxu0
      %v2583 = vadd.f32 %v2494, %v2582
      %v2584 = vpop.f32.mrf.mxu0
      %v2585 = vadd.f32 %v2496, %v2584
      %2586 = vmatmul.bf16.gmra.mxu0 %v1290
      %v2587 = vpop.f32.mrf.mxu0
      %v2588 = vadd.f32 %v2499, %v2587
      %v2589 = vpop.f32.mrf.mxu0
      %v2590 = vadd.f32 %v2501, %v2589
      %2591 = vmatmul.bf16.gmra.mxu0 %v1299
      %v2592 = vpop.f32.mrf.mxu0
      %v2593 = vadd.f32 %v2504, %v2592
      %v2594 = vpop.f32.mrf.mxu0
      %v2595 = vadd.f32 %v2506, %v2594
      %2596 = vmatmul.bf16.gmra.mxu0 %v1308
      %v2597 = vpop.f32.mrf.mxu0
      %v2598 = vadd.f32 %v2509, %v2597
      %v2599 = vpop.f32.mrf.mxu0
      %v2600 = vadd.f32 %v2511, %v2599
      %2601 = vmatmul.bf16.gmra.mxu0 %v1317
      %v2602 = vpop.f32.mrf.mxu0
      %v2603 = vadd.f32 %v2514, %v2602
      %v2604 = vpop.f32.mrf.mxu0
      %v2605 = vadd.f32 %v2516, %v2604
      %2606 = vdwg.mxu0
      %2607 = vmatpush.bf16.msra.mxu0 %v1822
      %2608 = vmatpush.bf16.msra.mxu0 %v1821
      %2609 = vmatpush.bf16.msra.mxu0 %v1820
      %2610 = vmatpush.bf16.msra.mxu0 %v1819
      %2611 = vmatpush.bf16.msra.mxu0 %v1818
      %2612 = vmatpush.bf16.msra.mxu0 %v1817
      %2613 = vmatpush.bf16.msra.mxu0 %v1816
      %2614 = vmatpush.bf16.msra.mxu0 %v1815
      %2615 = vmatmul.bf16.gmra.mxu0 %v1183
      %v2616 = vpop.f32.mrf.mxu0
      %v2617 = vadd.f32 %v2528, %v2616
      %v2618 = vpop.f32.mrf.mxu0
      %v2619 = vadd.f32 %v2530, %v2618
      %2620 = vmatmul.bf16.gmra.mxu0 %v1192
      %v2621 = vpop.f32.mrf.mxu0
      %v2622 = vadd.f32 %v2533, %v2621
      %v2623 = vpop.f32.mrf.mxu0
      %v2624 = vadd.f32 %v2535, %v2623
      %2625 = vmatmul.bf16.gmra.mxu0 %v1201
      %v2626 = vpop.f32.mrf.mxu0
      %v2627 = vadd.f32 %v2538, %v2626
      %v2628 = vpop.f32.mrf.mxu0
      %v2629 = vadd.f32 %v2540, %v2628
      %2630 = vmatmul.bf16.gmra.mxu0 %v1210
      %v2631 = vpop.f32.mrf.mxu0
      %v2632 = vadd.f32 %v2543, %v2631
      %v2633 = vpop.f32.mrf.mxu0
      %v2634 = vadd.f32 %v2545, %v2633
      %2635 = vmatmul.bf16.gmra.mxu0 %v1219
      %v2636 = vpop.f32.mrf.mxu0
      %v2637 = vadd.f32 %v2548, %v2636
      %v2638 = vpop.f32.mrf.mxu0
      %v2639 = vadd.f32 %v2550, %v2638
      %2640 = vmatmul.bf16.gmra.mxu0 %v1228
      %v2641 = vpop.f32.mrf.mxu0
      %v2642 = vadd.f32 %v2553, %v2641
      %v2643 = vpop.f32.mrf.mxu0
      %v2644 = vadd.f32 %v2555, %v2643
      %2645 = vmatmul.bf16.gmra.mxu0 %v1237
      %v2646 = vpop.f32.mrf.mxu0
      %v2647 = vadd.f32 %v2558, %v2646
      %v2648 = vpop.f32.mrf.mxu0
      %v2649 = vadd.f32 %v2560, %v2648
      %2650 = vmatmul.bf16.gmra.mxu0 %v1246
      %v2651 = vpop.f32.mrf.mxu0
      %v2652 = vadd.f32 %v2563, %v2651
      %v2653 = vpop.f32.mrf.mxu0
      %v2654 = vadd.f32 %v2565, %v2653
      %2655 = vmatmul.bf16.gmra.mxu0 %v1255
      %v2656 = vpop.f32.mrf.mxu0
      %v2657 = vadd.f32 %v2568, %v2656
      %v2658 = vpop.f32.mrf.mxu0
      %v2659 = vadd.f32 %v2570, %v2658
      %2660 = vmatmul.bf16.gmra.mxu0 %v1264
      %v2661 = vpop.f32.mrf.mxu0
      %v2662 = vadd.f32 %v2573, %v2661
      %v2663 = vpop.f32.mrf.mxu0
      %v2664 = vadd.f32 %v2575, %v2663
      %2665 = vmatmul.bf16.gmra.mxu0 %v1273
      %v2666 = vpop.f32.mrf.mxu0
      %v2667 = vadd.f32 %v2578, %v2666
      %v2668 = vpop.f32.mrf.mxu0
      %v2669 = vadd.f32 %v2580, %v2668
      %2670 = vmatmul.bf16.gmra.mxu0 %v1282
      %v2671 = vpop.f32.mrf.mxu0
      %v2672 = vadd.f32 %v2583, %v2671
      %v2673 = vpop.f32.mrf.mxu0
      %v2674 = vadd.f32 %v2585, %v2673
      %2675 = vmatmul.bf16.gmra.mxu0 %v1291
      %v2676 = vpop.f32.mrf.mxu0
      %v2677 = vadd.f32 %v2588, %v2676
      %v2678 = vpop.f32.mrf.mxu0
      %v2679 = vadd.f32 %v2590, %v2678
      %2680 = vmatmul.bf16.gmra.mxu0 %v1300
      %v2681 = vpop.f32.mrf.mxu0
      %v2682 = vadd.f32 %v2593, %v2681
      %v2683 = vpop.f32.mrf.mxu0
      %v2684 = vadd.f32 %v2595, %v2683
      %2685 = vmatmul.bf16.gmra.mxu0 %v1309
      %v2686 = vpop.f32.mrf.mxu0
      %v2687 = vadd.f32 %v2598, %v2686
      %v2688 = vpop.f32.mrf.mxu0
      %v2689 = vadd.f32 %v2600, %v2688
      %2690 = vmatmul.bf16.gmra.mxu0 %v1318
      %v2691 = vpop.f32.mrf.mxu0
      %v2692 = vadd.f32 %v2603, %v2691
      %v2693 = vpop.f32.mrf.mxu0
      %v2694 = vadd.f32 %v2605, %v2693
      %2695 = vdwg.mxu0
      %v2696 = vmax.f32 %v2617, 0.0
      %v2697 = vmax.f32 %v2619, 0.0
      %v2698 = vmax.f32 %v2622, 0.0
      %v2699 = vmax.f32 %v2624, 0.0
      %v2700 = vmax.f32 %v2627, 0.0
      %v2701 = vmax.f32 %v2629, 0.0
      %v2702 = vmax.f32 %v2632, 0.0
      %v2703 = vmax.f32 %v2634, 0.0
      %v2704 = vmax.f32 %v2637, 0.0
      %v2705 = vmax.f32 %v2639, 0.0
      %v2706 = vmax.f32 %v2642, 0.0
      %v2707 = vmax.f32 %v2644, 0.0
      %v2708 = vmax.f32 %v2647, 0.0
      %v2709 = vmax.f32 %v2649, 0.0
      %v2710 = vmax.f32 %v2652, 0.0
      %v2711 = vmax.f32 %v2654, 0.0
      %v2712 = vmax.f32 %v2657, 0.0
      %v2713 = vmax.f32 %v2659, 0.0
      %v2714 = vmax.f32 %v2662, 0.0
      %v2715 = vmax.f32 %v2664, 0.0
      %v2716 = vmax.f32 %v2667, 0.0
      %v2717 = vmax.f32 %v2669, 0.0
      %v2718 = vmax.f32 %v2672, 0.0
      %v2719 = vmax.f32 %v2674, 0.0
      %v2720 = vmax.f32 %v2677, 0.0
      %v2721 = vmax.f32 %v2679, 0.0
      %v2722 = vmax.f32 %v2682, 0.0
      %v2723 = vmax.f32 %v2684, 0.0
      %v2724 = vmax.f32 %v2687, 0.0
      %v2725 = vmax.f32 %v2689, 0.0
      %v2726 = vmax.f32 %v2692, 0.0
      %v2727 = vmax.f32 %v2694, 0.0
      %v2728 = vld [vmem:[%s394] sm:$0xff]
      %v2729 = vld [vmem:[%s394 + $0x8] sm:$0xff]
      %v2730 = vld [vmem:[%s394 + $0x10] sm:$0xff]
      %v2731 = vld [vmem:[%s394 + $0x18] sm:$0xff]
      %v2732 = vld [vmem:[%s394 + $0x20] sm:$0xf]
      %v2733 = vld [vmem:[%s394 + $0x24] sm:$0xff]
      %v2734 = vld [vmem:[%s394 + $0x2c] sm:$0xff]
      %v2735 = vld [vmem:[%s394 + $0x34] sm:$0xff]
      %v2736 = vld [vmem:[%s394 + $0x3c] sm:$0xff]
      %v2737 = vld [vmem:[%s394 + $0x44] sm:$0xf]
      %v2738 = vld [vmem:[%s394 + $0x48] sm:$0xff]
      %v2739 = vld [vmem:[%s394 + $0x50] sm:$0xff]
      %v2740 = vld [vmem:[%s394 + $0x58] sm:$0xff]
      %v2741 = vld [vmem:[%s394 + $0x60] sm:$0xff]
      %v2742 = vld [vmem:[%s394 + $0x68] sm:$0xf]
      %v2743 = vld [vmem:[%s394 + $0x6c] sm:$0xff]
      %v2744 = vld [vmem:[%s394 + $0x74] sm:$0xff]
      %v2745 = vld [vmem:[%s394 + $0x7c] sm:$0xff]
      %v2746 = vld [vmem:[%s394 + $0x84] sm:$0xff]
      %v2747 = vld [vmem:[%s394 + $0x8c] sm:$0xf]
      %v2748 = vld [vmem:[%s394 + $0x90] sm:$0xff]
      %v2749 = vld [vmem:[%s394 + $0x98] sm:$0xff]
      %v2750 = vld [vmem:[%s394 + $0xa0] sm:$0xff]
      %v2751 = vld [vmem:[%s394 + $0xa8] sm:$0xff]
      %v2752 = vld [vmem:[%s394 + $0xb0] sm:$0xf]
      %v2753 = vld [vmem:[%s394 + $0xb4] sm:$0xff]
      %v2754 = vld [vmem:[%s394 + $0xbc] sm:$0xff]
      %v2755 = vld [vmem:[%s394 + $0xc4] sm:$0xff]
      %v2756 = vld [vmem:[%s394 + $0xcc] sm:$0xff]
      %v2757 = vld [vmem:[%s394 + $0xd4] sm:$0xf]
      %v2758 = vld [vmem:[%s394 + $0xd8] sm:$0xff]
      %v2759 = vld [vmem:[%s394 + $0xe0] sm:$0xff]
      %v2760 = vld [vmem:[%s394 + $0xe8] sm:$0xff]
      %v2761 = vld [vmem:[%s394 + $0xf0] sm:$0xff]
      %v2762 = vld [vmem:[%s394 + $0xf8] sm:$0xf]
      %v2763 = vld [vmem:[%s394 + $0xfc] sm:$0xff]
      %v2764 = vld [vmem:[%s394 + $0x104] sm:$0xff]
      %v2765 = vld [vmem:[%s394 + $0x10c] sm:$0xff]
      %v2766 = vld [vmem:[%s394 + $0x114] sm:$0xff]
      %v2767 = vld [vmem:[%s394 + $0x11c] sm:$0xf]
      %v2768 = vld [vmem:[%s394 + $0x120] sm:$0xff]
      %v2769 = vld [vmem:[%s394 + $0x128] sm:$0xff]
      %v2770 = vld [vmem:[%s394 + $0x130] sm:$0xff]
      %v2771 = vld [vmem:[%s394 + $0x138] sm:$0xff]
      %v2772 = vld [vmem:[%s394 + $0x140] sm:$0xf]
      %v2773 = vld [vmem:[%s394 + $0x144] sm:$0xff]
      %v2774 = vld [vmem:[%s394 + $0x14c] sm:$0xff]
      %v2775 = vld [vmem:[%s394 + $0x154] sm:$0xff]
      %v2776 = vld [vmem:[%s394 + $0x15c] sm:$0xff]
      %v2777 = vld [vmem:[%s394 + $0x164] sm:$0xf]
      %v2778 = vld [vmem:[%s394 + $0x168] sm:$0xff]
      %v2779 = vld [vmem:[%s394 + $0x170] sm:$0xff]
      %v2780 = vld [vmem:[%s394 + $0x178] sm:$0xff]
      %v2781 = vld [vmem:[%s394 + $0x180] sm:$0xff]
      %v2782 = vld [vmem:[%s394 + $0x188] sm:$0xf]
      %v2783 = vld [vmem:[%s394 + $0x18c] sm:$0xff]
      %v2784 = vld [vmem:[%s394 + $0x194] sm:$0xff]
      %v2785 = vld [vmem:[%s394 + $0x19c] sm:$0xff]
      %v2786 = vld [vmem:[%s394 + $0x1a4] sm:$0xff]
      %v2787 = vld [vmem:[%s394 + $0x1ac] sm:$0xf]
      %v2788 = vld [vmem:[%s394 + $0x1b0] sm:$0xff]
      %v2789 = vld [vmem:[%s394 + $0x1b8] sm:$0xff]
      %v2790 = vld [vmem:[%s394 + $0x1c0] sm:$0xff]
      %v2791 = vld [vmem:[%s394 + $0x1c8] sm:$0xff]
      %v2792 = vld [vmem:[%s394 + $0x1d0] sm:$0xf]
      %v2793 = vld [vmem:[%s394 + $0x1d4] sm:$0xff]
      %v2794 = vld [vmem:[%s394 + $0x1dc] sm:$0xff]
      %v2795 = vld [vmem:[%s394 + $0x1e4] sm:$0xff]
      %v2796 = vld [vmem:[%s394 + $0x1ec] sm:$0xff]
      %v2797 = vld [vmem:[%s394 + $0x1f4] sm:$0xf]
      %v2798 = vld [vmem:[%s394 + $0x1f8] sm:$0xff]
      %v2799 = vld [vmem:[%s394 + $0x200] sm:$0xff]
      %v2800 = vld [vmem:[%s394 + $0x208] sm:$0xff]
      %v2801 = vld [vmem:[%s394 + $0x210] sm:$0xff]
      %v2802 = vld [vmem:[%s394 + $0x218] sm:$0xf]
      %v2803 = vld [vmem:[%s394 + $0x21c] sm:$0xff]
      %v2804 = vld [vmem:[%s394 + $0x224] sm:$0xff]
      %v2805 = vld [vmem:[%s394 + $0x22c] sm:$0xff]
      %v2806 = vld [vmem:[%s394 + $0x234] sm:$0xff]
      %v2807 = vld [vmem:[%s394 + $0x23c] sm:$0xf]
      %v2808 = vld [vmem:[%s394 + $0x240] sm:$0xff]
      %v2809 = vld [vmem:[%s394 + $0x248] sm:$0xff]
      %v2810 = vld [vmem:[%s394 + $0x250] sm:$0xff]
      %v2811 = vld [vmem:[%s394 + $0x258] sm:$0xff]
      %v2812 = vld [vmem:[%s394 + $0x260] sm:$0xf]
      %v2813 = vld [vmem:[%s394 + $0x264] sm:$0xff]
      %v2814 = vld [vmem:[%s394 + $0x26c] sm:$0xff]
      %v2815 = vld [vmem:[%s394 + $0x274] sm:$0xff]
      %v2816 = vld [vmem:[%s394 + $0x27c] sm:$0xff]
      %v2817 = vld [vmem:[%s394 + $0x284] sm:$0xf]
      %v2818 = vld [vmem:[%s394 + $0x288] sm:$0xff]
      %v2819 = vld [vmem:[%s394 + $0x290] sm:$0xff]
      %v2820 = vld [vmem:[%s394 + $0x298] sm:$0xff]
      %v2821 = vld [vmem:[%s394 + $0x2a0] sm:$0xff]
      %v2822 = vld [vmem:[%s394 + $0x2a8] sm:$0xf]
      %v2823 = vld [vmem:[%s394 + $0x2ac] sm:$0xff]
      %v2824 = vld [vmem:[%s394 + $0x2b4] sm:$0xff]
      %v2825 = vld [vmem:[%s394 + $0x2bc] sm:$0xff]
      %v2826 = vld [vmem:[%s394 + $0x2c4] sm:$0xff]
      %v2827 = vld [vmem:[%s394 + $0x2cc] sm:$0xf]
      %v2828 = vld [vmem:[%s394 + $0x2d0] sm:$0xff]
      %v2829 = vld [vmem:[%s394 + $0x2d8] sm:$0xff]
      %v2830 = vld [vmem:[%s394 + $0x2e0] sm:$0xff]
      %v2831 = vld [vmem:[%s394 + $0x2e8] sm:$0xff]
      %v2832 = vld [vmem:[%s394 + $0x2f0] sm:$0xf]
      %v2833 = vld [vmem:[%s394 + $0x2f4] sm:$0xff]
      %v2834 = vld [vmem:[%s394 + $0x2fc] sm:$0xff]
      %v2835 = vld [vmem:[%s394 + $0x304] sm:$0xff]
      %v2836 = vld [vmem:[%s394 + $0x30c] sm:$0xff]
      %v2837 = vld [vmem:[%s394 + $0x314] sm:$0xf]
      %v2838 = vld [vmem:[%s394 + $0x318] sm:$0xff]
      %v2839 = vld [vmem:[%s394 + $0x320] sm:$0xff]
      %v2840 = vld [vmem:[%s394 + $0x328] sm:$0xff]
      %v2841 = vld [vmem:[%s394 + $0x330] sm:$0xff]
      %v2842 = vld [vmem:[%s394 + $0x338] sm:$0xf]
      %v2843 = vld [vmem:[%s394 + $0x33c] sm:$0xff]
      %v2844 = vld [vmem:[%s394 + $0x344] sm:$0xff]
      %v2845 = vld [vmem:[%s394 + $0x34c] sm:$0xff]
      %v2846 = vld [vmem:[%s394 + $0x354] sm:$0xff]
      %v2847 = vld [vmem:[%s394 + $0x35c] sm:$0xf]
      %v2848 = vld [vmem:[%s394 + $0x360] sm:$0xff]
      %v2849 = vld [vmem:[%s394 + $0x368] sm:$0xff]
      %v2850 = vld [vmem:[%s394 + $0x370] sm:$0xff]
      %v2851 = vld [vmem:[%s394 + $0x378] sm:$0xff]
      %v2852 = vld [vmem:[%s394 + $0x380] sm:$0xf]
      %v2853 = vld [vmem:[%s394 + $0x384] sm:$0xff]
      %v2854 = vld [vmem:[%s394 + $0x38c] sm:$0xff]
      %v2855 = vld [vmem:[%s394 + $0x394] sm:$0xff]
      %v2856 = vld [vmem:[%s394 + $0x39c] sm:$0xff]
      %v2857 = vld [vmem:[%s394 + $0x3a4] sm:$0xf]
      %v2858 = vld [vmem:[%s394 + $0x3a8] sm:$0xff]
      %v2859 = vld [vmem:[%s394 + $0x3b0] sm:$0xff]
      %v2860 = vld [vmem:[%s394 + $0x3b8] sm:$0xff]
      %v2861 = vld [vmem:[%s394 + $0x3c0] sm:$0xff]
      %v2862 = vld [vmem:[%s394 + $0x3c8] sm:$0xf]
      %v2863 = vld [vmem:[%s394 + $0x3cc] sm:$0xff]
      %v2864 = vld [vmem:[%s394 + $0x3d4] sm:$0xff]
      %v2865 = vld [vmem:[%s394 + $0x3dc] sm:$0xff]
      %v2866 = vld [vmem:[%s394 + $0x3e4] sm:$0xff]
      %v2867 = vld [vmem:[%s394 + $0x3ec] sm:$0xf]
      %v2868 = vld [vmem:[%s394 + $0x3f0] sm:$0xff]
      %v2869 = vld [vmem:[%s394 + $0x3f8] sm:$0xff]
      %v2870 = vld [vmem:[%s394 + $0x400] sm:$0xff]
      %v2871 = vld [vmem:[%s394 + $0x408] sm:$0xff]
      %v2872 = vld [vmem:[%s394 + $0x410] sm:$0xf]
      %v2873 = vld [vmem:[%s394 + $0x414] sm:$0xff]
      %v2874 = vld [vmem:[%s394 + $0x41c] sm:$0xff]
      %v2875 = vld [vmem:[%s394 + $0x424] sm:$0xff]
      %v2876 = vld [vmem:[%s394 + $0x42c] sm:$0xff]
      %v2877 = vld [vmem:[%s394 + $0x434] sm:$0xf]
      %v2878 = vld [vmem:[%s394 + $0x438] sm:$0xff]
      %v2879 = vld [vmem:[%s394 + $0x440] sm:$0xff]
      %v2880 = vld [vmem:[%s394 + $0x448] sm:$0xff]
      %v2881 = vld [vmem:[%s394 + $0x450] sm:$0xff]
      %v2882 = vld [vmem:[%s394 + $0x458] sm:$0xf]
      %v2883 = vld [vmem:[%s394 + $0x45c] sm:$0xff]
      %v2884 = vld [vmem:[%s394 + $0x464] sm:$0xff]
      %v2885 = vld [vmem:[%s394 + $0x46c] sm:$0xff]
      %v2886 = vld [vmem:[%s394 + $0x474] sm:$0xff]
      %v2887 = vld [vmem:[%s394 + $0x47c] sm:$0xf]
      %v2888 = vld [vmem:[%s3] sm:$0xf]
      %v2889 = vld [vmem:[%s3 + $0x4] sm:$0xf]
      %v2890 = vld [vmem:[%s3 + $0x8] sm:$0xf]
      %v2891 = vld [vmem:[%s3 + $0xc] sm:$0xf]
      %v2892 = vld [vmem:[%s3 + $0x10] sm:$0xf]
      %v2893 = vld [vmem:[%s3 + $0x14] sm:$0xf]
      %v2894 = vld [vmem:[%s3 + $0x18] sm:$0xf]
      %v2895 = vld [vmem:[%s3 + $0x1c] sm:$0xf]
      %v2896 = vld [vmem:[%s3 + $0x20] sm:$0xf]
      %v2897 = vld [vmem:[%s3 + $0x24] sm:$0xf]
      %v2898 = vld [vmem:[%s3 + $0x28] sm:$0xf]
      %v2899 = vld [vmem:[%s3 + $0x2c] sm:$0xf]
      %v2900 = vld [vmem:[%s3 + $0x30] sm:$0xf]
      %v2901 = vld [vmem:[%s3 + $0x34] sm:$0xf]
      %v2902 = vld [vmem:[%s3 + $0x38] sm:$0xf]
      %v2903 = vld [vmem:[%s3 + $0x3c] sm:$0xf]
      %v2904 = vld [vmem:[%s3 + $0x40] sm:$0xf]
      %v2905 = vld [vmem:[%s3 + $0x44] sm:$0xf]
      %v2906 = vld [vmem:[%s3 + $0x48] sm:$0xf]
      %v2907 = vld [vmem:[%s3 + $0x4c] sm:$0xf]
      %v2908 = vld [vmem:[%s3 + $0x50] sm:$0xf]
      %v2909 = vld [vmem:[%s3 + $0x54] sm:$0xf]
      %v2910 = vld [vmem:[%s3 + $0x58] sm:$0xf]
      %v2911 = vld [vmem:[%s3 + $0x5c] sm:$0xf]
      %v2912 = vld [vmem:[%s3 + $0x60] sm:$0xf]
      %v2913 = vld [vmem:[%s3 + $0x64] sm:$0xf]
      %v2914 = vld [vmem:[%s3 + $0x68] sm:$0xf]
      %v2915 = vld [vmem:[%s3 + $0x6c] sm:$0xf]
      %v2916 = vld [vmem:[%s3 + $0x70] sm:$0xf]
      %v2917 = vld [vmem:[%s3 + $0x74] sm:$0xf]
      %v2918 = vld [vmem:[%s3 + $0x78] sm:$0xf]
      %v2919 = vld [vmem:[%s3 + $0x7c] sm:$0xf]
      %v2920 = vld [vmem:[%s3 + $0x80] sm:$0xf]
      %v2921 = vld [vmem:[%s3 + $0x84] sm:$0xf]
      %v2922 = vld [vmem:[%s3 + $0x88] sm:$0xf]
      %v2923 = vld [vmem:[%s3 + $0x8c] sm:$0xf]
      %v2924 = vld [vmem:[%s3 + $0x90] sm:$0xf]
      %v2925 = vld [vmem:[%s3 + $0x94] sm:$0xf]
      %v2926 = vld [vmem:[%s3 + $0x98] sm:$0xf]
      %v2927 = vld [vmem:[%s3 + $0x9c] sm:$0xf]
      %v2928 = vld [vmem:[%s3 + $0xa0] sm:$0xf]
      %v2929 = vld [vmem:[%s3 + $0xa4] sm:$0xf]
      %v2930 = vld [vmem:[%s3 + $0xa8] sm:$0xf]
      %v2931 = vld [vmem:[%s3 + $0xac] sm:$0xf]
      %v2932 = vld [vmem:[%s3 + $0xb0] sm:$0xf]
      %v2933 = vld [vmem:[%s3 + $0xb4] sm:$0xf]
      %v2934 = vld [vmem:[%s3 + $0xb8] sm:$0xf]
      %v2935 = vld [vmem:[%s3 + $0xbc] sm:$0xf]
      %v2936 = vld [vmem:[%s3 + $0xc0] sm:$0xf]
      %v2937 = vld [vmem:[%s3 + $0xc4] sm:$0xf]
      %v2938 = vld [vmem:[%s3 + $0xc8] sm:$0xf]
      %v2939 = vld [vmem:[%s3 + $0xcc] sm:$0xf]
      %v2940 = vld [vmem:[%s3 + $0xd0] sm:$0xf]
      %v2941 = vld [vmem:[%s3 + $0xd4] sm:$0xf]
      %v2942 = vld [vmem:[%s3 + $0xd8] sm:$0xf]
      %v2943 = vld [vmem:[%s3 + $0xdc] sm:$0xf]
      %v2944 = vld [vmem:[%s3 + $0xe0] sm:$0xf]
      %v2945 = vld [vmem:[%s3 + $0xe4] sm:$0xf]
      %v2946 = vld [vmem:[%s3 + $0xe8] sm:$0xf]
      %v2947 = vld [vmem:[%s3 + $0xec] sm:$0xf]
      %v2948 = vld [vmem:[%s3 + $0xf0] sm:$0xf]
      %v2949 = vld [vmem:[%s3 + $0xf4] sm:$0xf]
      %v2950 = vld [vmem:[%s3 + $0xf8] sm:$0xf]
      %v2951 = vld [vmem:[%s3 + $0xfc] sm:$0xf]
      %v2952 = vld [vmem:[%s3 + $0x100] sm:$0xf]
      %v2953 = vld [vmem:[%s3 + $0x104] sm:$0xf]
      %v2954 = vld [vmem:[%s3 + $0x108] sm:$0xf]
      %v2955 = vld [vmem:[%s3 + $0x10c] sm:$0xf]
      %v2956 = vld [vmem:[%s3 + $0x110] sm:$0xf]
      %v2957 = vld [vmem:[%s3 + $0x114] sm:$0xf]
      %v2958 = vld [vmem:[%s3 + $0x118] sm:$0xf]
      %v2959 = vld [vmem:[%s3 + $0x11c] sm:$0xf]
      %v2960 = vld [vmem:[%s3 + $0x120] sm:$0xf]
      %v2961 = vld [vmem:[%s3 + $0x124] sm:$0xf]
      %v2962 = vld [vmem:[%s3 + $0x128] sm:$0xf]
      %v2963 = vld [vmem:[%s3 + $0x12c] sm:$0xf]
      %v2964 = vld [vmem:[%s3 + $0x130] sm:$0xf]
      %v2965 = vld [vmem:[%s3 + $0x134] sm:$0xf]
      %v2966 = vld [vmem:[%s3 + $0x138] sm:$0xf]
      %v2967 = vld [vmem:[%s3 + $0x13c] sm:$0xf]
      %v2968 = vld [vmem:[%s3 + $0x140] sm:$0xf]
      %v2969 = vld [vmem:[%s3 + $0x144] sm:$0xf]
      %v2970 = vld [vmem:[%s3 + $0x148] sm:$0xf]
      %v2971 = vld [vmem:[%s3 + $0x14c] sm:$0xf]
      %v2972 = vld [vmem:[%s3 + $0x150] sm:$0xf]
      %v2973 = vld [vmem:[%s3 + $0x154] sm:$0xf]
      %v2974 = vld [vmem:[%s3 + $0x158] sm:$0xf]
      %v2975 = vld [vmem:[%s3 + $0x15c] sm:$0xf]
      %v2976 = vld [vmem:[%s3 + $0x160] sm:$0xf]
      %v2977 = vld [vmem:[%s3 + $0x164] sm:$0xf]
      %v2978 = vld [vmem:[%s3 + $0x168] sm:$0xf]
      %v2979 = vld [vmem:[%s3 + $0x16c] sm:$0xf]
      %v2980 = vld [vmem:[%s3 + $0x170] sm:$0xf]
      %v2981 = vld [vmem:[%s3 + $0x174] sm:$0xf]
      %v2982 = vld [vmem:[%s3 + $0x178] sm:$0xf]
      %v2983 = vld [vmem:[%s3 + $0x17c] sm:$0xf]
      %v2984 = vld [vmem:[%s3 + $0x180] sm:$0xf]
      %v2985 = vld [vmem:[%s3 + $0x184] sm:$0xf]
      %v2986 = vld [vmem:[%s3 + $0x188] sm:$0xf]
      %v2987 = vld [vmem:[%s3 + $0x18c] sm:$0xf]
      %v2988 = vld [vmem:[%s3 + $0x190] sm:$0xf]
      %v2989 = vld [vmem:[%s3 + $0x194] sm:$0xf]
      %v2990 = vld [vmem:[%s3 + $0x198] sm:$0xf]
      %v2991 = vld [vmem:[%s3 + $0x19c] sm:$0xf]
      %v2992 = vld [vmem:[%s3 + $0x1a0] sm:$0xf]
      %v2993 = vld [vmem:[%s3 + $0x1a4] sm:$0xf]
      %v2994 = vld [vmem:[%s3 + $0x1a8] sm:$0xf]
      %v2995 = vld [vmem:[%s3 + $0x1ac] sm:$0xf]
      %v2996 = vld [vmem:[%s3 + $0x1b0] sm:$0xf]
      %v2997 = vld [vmem:[%s3 + $0x1b4] sm:$0xf]
      %v2998 = vld [vmem:[%s3 + $0x1b8] sm:$0xf]
      %v2999 = vld [vmem:[%s3 + $0x1bc] sm:$0xf]
      %v3000 = vld [vmem:[%s3 + $0x1c0] sm:$0xf]
      %v3001 = vld [vmem:[%s3 + $0x1c4] sm:$0xf]
      %v3002 = vld [vmem:[%s3 + $0x1c8] sm:$0xf]
      %v3003 = vld [vmem:[%s3 + $0x1cc] sm:$0xf]
      %v3004 = vld [vmem:[%s3 + $0x1d0] sm:$0xf]
      %v3005 = vld [vmem:[%s3 + $0x1d4] sm:$0xf]
      %v3006 = vld [vmem:[%s3 + $0x1d8] sm:$0xf]
      %v3007 = vld [vmem:[%s3 + $0x1dc] sm:$0xf]
      %v3008 = vld [vmem:[%s3 + $0x1e0] sm:$0xf]
      %v3009 = vld [vmem:[%s3 + $0x1e4] sm:$0xf]
      %v3010 = vld [vmem:[%s3 + $0x1e8] sm:$0xf]
      %v3011 = vld [vmem:[%s3 + $0x1ec] sm:$0xf]
      %v3012 = vld [vmem:[%s3 + $0x1f0] sm:$0xf]
      %v3013 = vld [vmem:[%s3 + $0x1f4] sm:$0xf]
      %v3014 = vld [vmem:[%s3 + $0x1f8] sm:$0xf]
      %v3015 = vld [vmem:[%s3 + $0x1fc] sm:$0xf]
      %v3016 = vld [vmem:[%s3 + $0x200] sm:$0xf]
      %v3017 = vld [vmem:[%s3 + $0x204] sm:$0xf]
      %v3018 = vld [vmem:[%s3 + $0x208] sm:$0xf]
      %v3019 = vld [vmem:[%s3 + $0x20c] sm:$0xf]
      %v3020 = vld [vmem:[%s3 + $0x210] sm:$0xf]
      %v3021 = vld [vmem:[%s3 + $0x214] sm:$0xf]
      %v3022 = vld [vmem:[%s3 + $0x218] sm:$0xf]
      %v3023 = vld [vmem:[%s3 + $0x21c] sm:$0xf]
      %v3024 = vld [vmem:[%s3 + $0x220] sm:$0xf]
      %v3025 = vld [vmem:[%s3 + $0x224] sm:$0xf]
      %v3026 = vld [vmem:[%s3 + $0x228] sm:$0xf]
      %v3027 = vld [vmem:[%s3 + $0x22c] sm:$0xf]
      %v3028 = vld [vmem:[%s3 + $0x230] sm:$0xf]
      %v3029 = vld [vmem:[%s3 + $0x234] sm:$0xf]
      %v3030 = vld [vmem:[%s3 + $0x238] sm:$0xf]
      %v3031 = vld [vmem:[%s3 + $0x23c] sm:$0xf]
      %v3032 = vld [vmem:[%s5] sm:$0x1]
      %v3034 = vperm.slane %v3032, 0
      %v3196 = vunpack.c.l.b16 %v2728
      %v3197 = vunpack.c.h.b16 %v2728
      %v3198 = vunpack.c.l.b16 %v2729
      %v3199 = vunpack.c.h.b16 %v2729
      %v3200 = vunpack.c.l.b16 %v2730
      %v3201 = vunpack.c.h.b16 %v2730
      %v3202 = vunpack.c.l.b16 %v2731
      %v3203 = vunpack.c.h.b16 %v2731
      %v3204 = vunpack.c.l.b16 %v2732
      %v3205 = vunpack.c.l.b16 %v2733
      %v3206 = vunpack.c.h.b16 %v2733
      %v3207 = vunpack.c.l.b16 %v2734
      %v3208 = vunpack.c.h.b16 %v2734
      %v3209 = vunpack.c.l.b16 %v2735
      %v3210 = vunpack.c.h.b16 %v2735
      %v3211 = vunpack.c.l.b16 %v2736
      %v3212 = vunpack.c.h.b16 %v2736
      %v3213 = vunpack.c.l.b16 %v2737
      %v3214 = vunpack.c.l.b16 %v2738
      %v3215 = vunpack.c.h.b16 %v2738
      %v3216 = vunpack.c.l.b16 %v2739
      %v3217 = vunpack.c.h.b16 %v2739
      %v3218 = vunpack.c.l.b16 %v2740
      %v3219 = vunpack.c.h.b16 %v2740
      %v3220 = vunpack.c.l.b16 %v2741
      %v3221 = vunpack.c.h.b16 %v2741
      %v3222 = vunpack.c.l.b16 %v2742
      %v3223 = vunpack.c.l.b16 %v2743
      %v3224 = vunpack.c.h.b16 %v2743
      %v3225 = vunpack.c.l.b16 %v2744
      %v3226 = vunpack.c.h.b16 %v2744
      %v3227 = vunpack.c.l.b16 %v2745
      %v3228 = vunpack.c.h.b16 %v2745
      %v3229 = vunpack.c.l.b16 %v2746
      %v3230 = vunpack.c.h.b16 %v2746
      %v3231 = vunpack.c.l.b16 %v2747
      %v3232 = vunpack.c.l.b16 %v2748
      %v3233 = vunpack.c.h.b16 %v2748
      %v3234 = vunpack.c.l.b16 %v2749
      %v3235 = vunpack.c.h.b16 %v2749
      %v3236 = vunpack.c.l.b16 %v2750
      %v3237 = vunpack.c.h.b16 %v2750
      %v3238 = vunpack.c.l.b16 %v2751
      %v3239 = vunpack.c.h.b16 %v2751
      %v3240 = vunpack.c.l.b16 %v2752
      %v3241 = vunpack.c.l.b16 %v2753
      %v3242 = vunpack.c.h.b16 %v2753
      %v3243 = vunpack.c.l.b16 %v2754
      %v3244 = vunpack.c.h.b16 %v2754
      %v3245 = vunpack.c.l.b16 %v2755
      %v3246 = vunpack.c.h.b16 %v2755
      %v3247 = vunpack.c.l.b16 %v2756
      %v3248 = vunpack.c.h.b16 %v2756
      %v3249 = vunpack.c.l.b16 %v2757
      %v3250 = vunpack.c.l.b16 %v2758
      %v3251 = vunpack.c.h.b16 %v2758
      %v3252 = vunpack.c.l.b16 %v2759
      %v3253 = vunpack.c.h.b16 %v2759
      %v3254 = vunpack.c.l.b16 %v2760
      %v3255 = vunpack.c.h.b16 %v2760
      %v3256 = vunpack.c.l.b16 %v2761
      %v3257 = vunpack.c.h.b16 %v2761
      %v3258 = vunpack.c.l.b16 %v2762
      %v3259 = vunpack.c.l.b16 %v2763
      %v3260 = vunpack.c.h.b16 %v2763
      %v3261 = vunpack.c.l.b16 %v2764
      %v3262 = vunpack.c.h.b16 %v2764
      %v3263 = vunpack.c.l.b16 %v2765
      %v3264 = vunpack.c.h.b16 %v2765
      %v3265 = vunpack.c.l.b16 %v2766
      %v3266 = vunpack.c.h.b16 %v2766
      %v3267 = vunpack.c.l.b16 %v2767
      %v3268 = vunpack.c.l.b16 %v2768
      %v3269 = vunpack.c.h.b16 %v2768
      %v3270 = vunpack.c.l.b16 %v2769
      %v3271 = vunpack.c.h.b16 %v2769
      %v3272 = vunpack.c.l.b16 %v2770
      %v3273 = vunpack.c.h.b16 %v2770
      %v3274 = vunpack.c.l.b16 %v2771
      %v3275 = vunpack.c.h.b16 %v2771
      %v3276 = vunpack.c.l.b16 %v2772
      %v3277 = vunpack.c.l.b16 %v2773
      %v3278 = vunpack.c.h.b16 %v2773
      %v3279 = vunpack.c.l.b16 %v2774
      %v3280 = vunpack.c.h.b16 %v2774
      %v3281 = vunpack.c.l.b16 %v2775
      %v3282 = vunpack.c.h.b16 %v2775
      %v3283 = vunpack.c.l.b16 %v2776
      %v3284 = vunpack.c.h.b16 %v2776
      %v3285 = vunpack.c.l.b16 %v2777
      %v3286 = vunpack.c.l.b16 %v2778
      %v3287 = vunpack.c.h.b16 %v2778
      %v3288 = vunpack.c.l.b16 %v2779
      %v3289 = vunpack.c.h.b16 %v2779
      %v3290 = vunpack.c.l.b16 %v2780
      %v3291 = vunpack.c.h.b16 %v2780
      %v3292 = vunpack.c.l.b16 %v2781
      %v3293 = vunpack.c.h.b16 %v2781
      %v3294 = vunpack.c.l.b16 %v2782
      %v3295 = vunpack.c.l.b16 %v2783
      %v3296 = vunpack.c.h.b16 %v2783
      %v3297 = vunpack.c.l.b16 %v2784
      %v3298 = vunpack.c.h.b16 %v2784
      %v3299 = vunpack.c.l.b16 %v2785
      %v3300 = vunpack.c.h.b16 %v2785
      %v3301 = vunpack.c.l.b16 %v2786
      %v3302 = vunpack.c.h.b16 %v2786
      %v3303 = vunpack.c.l.b16 %v2787
      %v3304 = vunpack.c.l.b16 %v2788
      %v3305 = vunpack.c.h.b16 %v2788
      %v3306 = vunpack.c.l.b16 %v2789
      %v3307 = vunpack.c.h.b16 %v2789
      %v3308 = vunpack.c.l.b16 %v2790
      %v3309 = vunpack.c.h.b16 %v2790
      %v3310 = vunpack.c.l.b16 %v2791
      %v3311 = vunpack.c.h.b16 %v2791
      %v3312 = vunpack.c.l.b16 %v2792
      %v3313 = vunpack.c.l.b16 %v2793
      %v3314 = vunpack.c.h.b16 %v2793
      %v3315 = vunpack.c.l.b16 %v2794
      %v3316 = vunpack.c.h.b16 %v2794
      %v3317 = vunpack.c.l.b16 %v2795
      %v3318 = vunpack.c.h.b16 %v2795
      %v3319 = vunpack.c.l.b16 %v2796
      %v3320 = vunpack.c.h.b16 %v2796
      %v3321 = vunpack.c.l.b16 %v2797
      %v3322 = vunpack.c.l.b16 %v2798
      %v3323 = vunpack.c.h.b16 %v2798
      %v3324 = vunpack.c.l.b16 %v2799
      %v3325 = vunpack.c.h.b16 %v2799
      %v3326 = vunpack.c.l.b16 %v2800
      %v3327 = vunpack.c.h.b16 %v2800
      %v3328 = vunpack.c.l.b16 %v2801
      %v3329 = vunpack.c.h.b16 %v2801
      %v3330 = vunpack.c.l.b16 %v2802
      %v3331 = vunpack.c.l.b16 %v2803
      %v3332 = vunpack.c.h.b16 %v2803
      %v3333 = vunpack.c.l.b16 %v2804
      %v3334 = vunpack.c.h.b16 %v2804
      %v3335 = vunpack.c.l.b16 %v2805
      %v3336 = vunpack.c.h.b16 %v2805
      %v3337 = vunpack.c.l.b16 %v2806
      %v3338 = vunpack.c.h.b16 %v2806
      %v3339 = vunpack.c.l.b16 %v2807
      %v3340 = vunpack.c.l.b16 %v2808
      %v3341 = vunpack.c.h.b16 %v2808
      %v3342 = vunpack.c.l.b16 %v2809
      %v3343 = vunpack.c.h.b16 %v2809
      %v3344 = vunpack.c.l.b16 %v2810
      %v3345 = vunpack.c.h.b16 %v2810
      %v3346 = vunpack.c.l.b16 %v2811
      %v3347 = vunpack.c.h.b16 %v2811
      %v3348 = vunpack.c.l.b16 %v2812
      %v3349 = vunpack.c.l.b16 %v2813
      %v3350 = vunpack.c.h.b16 %v2813
      %v3351 = vunpack.c.l.b16 %v2814
      %v3352 = vunpack.c.h.b16 %v2814
      %v3353 = vunpack.c.l.b16 %v2815
      %v3354 = vunpack.c.h.b16 %v2815
      %v3355 = vunpack.c.l.b16 %v2816
      %v3356 = vunpack.c.h.b16 %v2816
      %v3357 = vunpack.c.l.b16 %v2817
      %v3358 = vunpack.c.l.b16 %v2818
      %v3359 = vunpack.c.h.b16 %v2818
      %v3360 = vunpack.c.l.b16 %v2819
      %v3361 = vunpack.c.h.b16 %v2819
      %v3362 = vunpack.c.l.b16 %v2820
      %v3363 = vunpack.c.h.b16 %v2820
      %v3364 = vunpack.c.l.b16 %v2821
      %v3365 = vunpack.c.h.b16 %v2821
      %v3366 = vunpack.c.l.b16 %v2822
      %v3367 = vunpack.c.l.b16 %v2823
      %v3368 = vunpack.c.h.b16 %v2823
      %v3369 = vunpack.c.l.b16 %v2824
      %v3370 = vunpack.c.h.b16 %v2824
      %v3371 = vunpack.c.l.b16 %v2825
      %v3372 = vunpack.c.h.b16 %v2825
      %v3373 = vunpack.c.l.b16 %v2826
      %v3374 = vunpack.c.h.b16 %v2826
      %v3375 = vunpack.c.l.b16 %v2827
      %v3376 = vunpack.c.l.b16 %v2828
      %v3377 = vunpack.c.h.b16 %v2828
      %v3378 = vunpack.c.l.b16 %v2829
      %v3379 = vunpack.c.h.b16 %v2829
      %v3380 = vunpack.c.l.b16 %v2830
      %v3381 = vunpack.c.h.b16 %v2830
      %v3382 = vunpack.c.l.b16 %v2831
      %v3383 = vunpack.c.h.b16 %v2831
      %v3384 = vunpack.c.l.b16 %v2832
      %v3385 = vunpack.c.l.b16 %v2833
      %v3386 = vunpack.c.h.b16 %v2833
      %v3387 = vunpack.c.l.b16 %v2834
      %v3388 = vunpack.c.h.b16 %v2834
      %v3389 = vunpack.c.l.b16 %v2835
      %v3390 = vunpack.c.h.b16 %v2835
      %v3391 = vunpack.c.l.b16 %v2836
      %v3392 = vunpack.c.h.b16 %v2836
      %v3393 = vunpack.c.l.b16 %v2837
      %v3394 = vunpack.c.l.b16 %v2838
      %v3395 = vunpack.c.h.b16 %v2838
      %v3396 = vunpack.c.l.b16 %v2839
      %v3397 = vunpack.c.h.b16 %v2839
      %v3398 = vunpack.c.l.b16 %v2840
      %v3399 = vunpack.c.h.b16 %v2840
      %v3400 = vunpack.c.l.b16 %v2841
      %v3401 = vunpack.c.h.b16 %v2841
      %v3402 = vunpack.c.l.b16 %v2842
      %v3403 = vunpack.c.l.b16 %v2843
      %v3404 = vunpack.c.h.b16 %v2843
      %v3405 = vunpack.c.l.b16 %v2844
      %v3406 = vunpack.c.h.b16 %v2844
      %v3407 = vunpack.c.l.b16 %v2845
      %v3408 = vunpack.c.h.b16 %v2845
      %v3409 = vunpack.c.l.b16 %v2846
      %v3410 = vunpack.c.h.b16 %v2846
      %v3411 = vunpack.c.l.b16 %v2847
      %v3412 = vunpack.c.l.b16 %v2848
      %v3413 = vunpack.c.h.b16 %v2848
      %v3414 = vunpack.c.l.b16 %v2849
      %v3415 = vunpack.c.h.b16 %v2849
      %v3416 = vunpack.c.l.b16 %v2850
      %v3417 = vunpack.c.h.b16 %v2850
      %v3418 = vunpack.c.l.b16 %v2851
      %v3419 = vunpack.c.h.b16 %v2851
      %v3420 = vunpack.c.l.b16 %v2852
      %v3421 = vunpack.c.l.b16 %v2853
      %v3422 = vunpack.c.h.b16 %v2853
      %v3423 = vunpack.c.l.b16 %v2854
      %v3424 = vunpack.c.h.b16 %v2854
      %v3425 = vunpack.c.l.b16 %v2855
      %v3426 = vunpack.c.h.b16 %v2855
      %v3427 = vunpack.c.l.b16 %v2856
      %v3428 = vunpack.c.h.b16 %v2856
      %v3429 = vunpack.c.l.b16 %v2857
      %v3430 = vunpack.c.l.b16 %v2858
      %v3431 = vunpack.c.h.b16 %v2858
      %v3432 = vunpack.c.l.b16 %v2859
      %v3433 = vunpack.c.h.b16 %v2859
      %v3434 = vunpack.c.l.b16 %v2860
      %v3435 = vunpack.c.h.b16 %v2860
      %v3436 = vunpack.c.l.b16 %v2861
      %v3437 = vunpack.c.h.b16 %v2861
      %v3438 = vunpack.c.l.b16 %v2862
      %v3439 = vunpack.c.l.b16 %v2863
      %v3440 = vunpack.c.h.b16 %v2863
      %v3441 = vunpack.c.l.b16 %v2864
      %v3442 = vunpack.c.h.b16 %v2864
      %v3443 = vunpack.c.l.b16 %v2865
      %v3444 = vunpack.c.h.b16 %v2865
      %v3445 = vunpack.c.l.b16 %v2866
      %v3446 = vunpack.c.h.b16 %v2866
      %v3447 = vunpack.c.l.b16 %v2867
      %v3448 = vunpack.c.l.b16 %v2868
      %v3449 = vunpack.c.h.b16 %v2868
      %v3450 = vunpack.c.l.b16 %v2869
      %v3451 = vunpack.c.h.b16 %v2869
      %v3452 = vunpack.c.l.b16 %v2870
      %v3453 = vunpack.c.h.b16 %v2870
      %v3454 = vunpack.c.l.b16 %v2871
      %v3455 = vunpack.c.h.b16 %v2871
      %v3456 = vunpack.c.l.b16 %v2872
      %v3457 = vunpack.c.l.b16 %v2873
      %v3458 = vunpack.c.h.b16 %v2873
      %v3459 = vunpack.c.l.b16 %v2874
      %v3460 = vunpack.c.h.b16 %v2874
      %v3461 = vunpack.c.l.b16 %v2875
      %v3462 = vunpack.c.h.b16 %v2875
      %v3463 = vunpack.c.l.b16 %v2876
      %v3464 = vunpack.c.h.b16 %v2876
      %v3465 = vunpack.c.l.b16 %v2877
      %v3466 = vunpack.c.l.b16 %v2878
      %v3467 = vunpack.c.h.b16 %v2878
      %v3468 = vunpack.c.l.b16 %v2879
      %v3469 = vunpack.c.h.b16 %v2879
      %v3470 = vunpack.c.l.b16 %v2880
      %v3471 = vunpack.c.h.b16 %v2880
      %v3472 = vunpack.c.l.b16 %v2881
      %v3473 = vunpack.c.h.b16 %v2881
      %v3474 = vunpack.c.l.b16 %v2882
      %v3475 = vunpack.c.l.b16 %v2883
      %v3476 = vunpack.c.h.b16 %v2883
      %v3477 = vunpack.c.l.b16 %v2884
      %v3478 = vunpack.c.h.b16 %v2884
      %v3479 = vunpack.c.l.b16 %v2885
      %v3480 = vunpack.c.h.b16 %v2885
      %v3481 = vunpack.c.l.b16 %v2886
      %v3482 = vunpack.c.h.b16 %v2886
      %v3483 = vunpack.c.l.b16 %v2887
      %v3484 = vpack.c.b16 %v3205, %v3196
      %v3485 = vpack.c.b16 %v3206, %v3197
      %v3486 = vpack.c.b16 %v3207, %v3198
      %v3487 = vpack.c.b16 %v3208, %v3199
      %v3488 = vpack.c.b16 %v3209, %v3200
      %v3489 = vpack.c.b16 %v3210, %v3201
      %v3490 = vpack.c.b16 %v3211, %v3202
      %v3491 = vpack.c.b16 %v3212, %v3203
      %v3492 = vpack.c.b16 %v3213, %v3204
      %v3493 = vpack.c.b16 %v3223, %v3214
      %v3494 = vpack.c.b16 %v3224, %v3215
      %v3495 = vpack.c.b16 %v3225, %v3216
      %v3496 = vpack.c.b16 %v3226, %v3217
      %v3497 = vpack.c.b16 %v3227, %v3218
      %v3498 = vpack.c.b16 %v3228, %v3219
      %v3499 = vpack.c.b16 %v3229, %v3220
      %v3500 = vpack.c.b16 %v3230, %v3221
      %v3501 = vpack.c.b16 %v3231, %v3222
      %v3502 = vpack.c.b16 %v3241, %v3232
      %v3503 = vpack.c.b16 %v3242, %v3233
      %v3504 = vpack.c.b16 %v3243, %v3234
      %v3505 = vpack.c.b16 %v3244, %v3235
      %v3506 = vpack.c.b16 %v3245, %v3236
      %v3507 = vpack.c.b16 %v3246, %v3237
      %v3508 = vpack.c.b16 %v3247, %v3238
      %v3509 = vpack.c.b16 %v3248, %v3239
      %v3510 = vpack.c.b16 %v3249, %v3240
      %v3511 = vpack.c.b16 %v3259, %v3250
      %v3512 = vpack.c.b16 %v3260, %v3251
      %v3513 = vpack.c.b16 %v3261, %v3252
      %v3514 = vpack.c.b16 %v3262, %v3253
      %v3515 = vpack.c.b16 %v3263, %v3254
      %v3516 = vpack.c.b16 %v3264, %v3255
      %v3517 = vpack.c.b16 %v3265, %v3256
      %v3518 = vpack.c.b16 %v3266, %v3257
      %v3519 = vpack.c.b16 %v3267, %v3258
      %v3520 = vpack.c.b16 %v3277, %v3268
      %v3521 = vpack.c.b16 %v3278, %v3269
      %v3522 = vpack.c.b16 %v3279, %v3270
      %v3523 = vpack.c.b16 %v3280, %v3271
      %v3524 = vpack.c.b16 %v3281, %v3272
      %v3525 = vpack.c.b16 %v3282, %v3273
      %v3526 = vpack.c.b16 %v3283, %v3274
      %v3527 = vpack.c.b16 %v3284, %v3275
      %v3528 = vpack.c.b16 %v3285, %v3276
      %v3529 = vpack.c.b16 %v3295, %v3286
      %v3530 = vpack.c.b16 %v3296, %v3287
      %v3531 = vpack.c.b16 %v3297, %v3288
      %v3532 = vpack.c.b16 %v3298, %v3289
      %v3533 = vpack.c.b16 %v3299, %v3290
      %v3534 = vpack.c.b16 %v3300, %v3291
      %v3535 = vpack.c.b16 %v3301, %v3292
      %v3536 = vpack.c.b16 %v3302, %v3293
      %v3537 = vpack.c.b16 %v3303, %v3294
      %v3538 = vpack.c.b16 %v3313, %v3304
      %v3539 = vpack.c.b16 %v3314, %v3305
      %v3540 = vpack.c.b16 %v3315, %v3306
      %v3541 = vpack.c.b16 %v3316, %v3307
      %v3542 = vpack.c.b16 %v3317, %v3308
      %v3543 = vpack.c.b16 %v3318, %v3309
      %v3544 = vpack.c.b16 %v3319, %v3310
      %v3545 = vpack.c.b16 %v3320, %v3311
      %v3546 = vpack.c.b16 %v3321, %v3312
      %v3547 = vpack.c.b16 %v3331, %v3322
      %v3548 = vpack.c.b16 %v3332, %v3323
      %v3549 = vpack.c.b16 %v3333, %v3324
      %v3550 = vpack.c.b16 %v3334, %v3325
      %v3551 = vpack.c.b16 %v3335, %v3326
      %v3552 = vpack.c.b16 %v3336, %v3327
      %v3553 = vpack.c.b16 %v3337, %v3328
      %v3554 = vpack.c.b16 %v3338, %v3329
      %v3555 = vpack.c.b16 %v3339, %v3330
      %v3556 = vpack.c.b16 %v3349, %v3340
      %v3557 = vpack.c.b16 %v3350, %v3341
      %v3558 = vpack.c.b16 %v3351, %v3342
      %v3559 = vpack.c.b16 %v3352, %v3343
      %v3560 = vpack.c.b16 %v3353, %v3344
      %v3561 = vpack.c.b16 %v3354, %v3345
      %v3562 = vpack.c.b16 %v3355, %v3346
      %v3563 = vpack.c.b16 %v3356, %v3347
      %v3564 = vpack.c.b16 %v3357, %v3348
      %v3565 = vpack.c.b16 %v3367, %v3358
      %v3566 = vpack.c.b16 %v3368, %v3359
      %v3567 = vpack.c.b16 %v3369, %v3360
      %v3568 = vpack.c.b16 %v3370, %v3361
      %v3569 = vpack.c.b16 %v3371, %v3362
      %v3570 = vpack.c.b16 %v3372, %v3363
      %v3571 = vpack.c.b16 %v3373, %v3364
      %v3572 = vpack.c.b16 %v3374, %v3365
      %v3573 = vpack.c.b16 %v3375, %v3366
      %v3574 = vpack.c.b16 %v3385, %v3376
      %v3575 = vpack.c.b16 %v3386, %v3377
      %v3576 = vpack.c.b16 %v3387, %v3378
      %v3577 = vpack.c.b16 %v3388, %v3379
      %v3578 = vpack.c.b16 %v3389, %v3380
      %v3579 = vpack.c.b16 %v3390, %v3381
      %v3580 = vpack.c.b16 %v3391, %v3382
      %v3581 = vpack.c.b16 %v3392, %v3383
      %v3582 = vpack.c.b16 %v3393, %v3384
      %v3583 = vpack.c.b16 %v3403, %v3394
      %v3584 = vpack.c.b16 %v3404, %v3395
      %v3585 = vpack.c.b16 %v3405, %v3396
      %v3586 = vpack.c.b16 %v3406, %v3397
      %v3587 = vpack.c.b16 %v3407, %v3398
      %v3588 = vpack.c.b16 %v3408, %v3399
      %v3589 = vpack.c.b16 %v3409, %v3400
      %v3590 = vpack.c.b16 %v3410, %v3401
      %v3591 = vpack.c.b16 %v3411, %v3402
      %v3592 = vpack.c.b16 %v3421, %v3412
      %v3593 = vpack.c.b16 %v3422, %v3413
      %v3594 = vpack.c.b16 %v3423, %v3414
      %v3595 = vpack.c.b16 %v3424, %v3415
      %v3596 = vpack.c.b16 %v3425, %v3416
      %v3597 = vpack.c.b16 %v3426, %v3417
      %v3598 = vpack.c.b16 %v3427, %v3418
      %v3599 = vpack.c.b16 %v3428, %v3419
      %v3600 = vpack.c.b16 %v3429, %v3420
      %v3601 = vpack.c.b16 %v3439, %v3430
      %v3602 = vpack.c.b16 %v3440, %v3431
      %v3603 = vpack.c.b16 %v3441, %v3432
      %v3604 = vpack.c.b16 %v3442, %v3433
      %v3605 = vpack.c.b16 %v3443, %v3434
      %v3606 = vpack.c.b16 %v3444, %v3435
      %v3607 = vpack.c.b16 %v3445, %v3436
      %v3608 = vpack.c.b16 %v3446, %v3437
      %v3609 = vpack.c.b16 %v3447, %v3438
      %v3610 = vpack.c.b16 %v3457, %v3448
      %v3611 = vpack.c.b16 %v3458, %v3449
      %v3612 = vpack.c.b16 %v3459, %v3450
      %v3613 = vpack.c.b16 %v3460, %v3451
      %v3614 = vpack.c.b16 %v3461, %v3452
      %v3615 = vpack.c.b16 %v3462, %v3453
      %v3616 = vpack.c.b16 %v3463, %v3454
      %v3617 = vpack.c.b16 %v3464, %v3455
      %v3618 = vpack.c.b16 %v3465, %v3456
      %v3619 = vpack.c.b16 %v3475, %v3466
      %v3620 = vpack.c.b16 %v3476, %v3467
      %v3621 = vpack.c.b16 %v3477, %v3468
      %v3622 = vpack.c.b16 %v3478, %v3469
      %v3623 = vpack.c.b16 %v3479, %v3470
      %v3624 = vpack.c.b16 %v3480, %v3471
      %v3625 = vpack.c.b16 %v3481, %v3472
      %v3626 = vpack.c.b16 %v3482, %v3473
      %v3627 = vpack.c.b16 %v3483, %v3474
      %v3916 = vunpack.c.l.b16 %v2888
      %v3917 = vunpack.c.l.b16 %v2889
      %v3918 = vunpack.c.l.b16 %v2890
      %v3919 = vunpack.c.l.b16 %v2891
      %v3920 = vunpack.c.l.b16 %v2892
      %v3921 = vunpack.c.l.b16 %v2893
      %v3922 = vunpack.c.l.b16 %v2894
      %v3923 = vunpack.c.l.b16 %v2895
      %v3924 = vunpack.c.l.b16 %v2896
      %v3925 = vunpack.c.l.b16 %v2897
      %v3926 = vunpack.c.l.b16 %v2898
      %v3927 = vunpack.c.l.b16 %v2899
      %v3928 = vunpack.c.l.b16 %v2900
      %v3929 = vunpack.c.l.b16 %v2901
      %v3930 = vunpack.c.l.b16 %v2902
      %v3931 = vunpack.c.l.b16 %v2903
      %v3932 = vunpack.c.l.b16 %v2904
      %v3933 = vunpack.c.l.b16 %v2905
      %v3934 = vunpack.c.l.b16 %v2906
      %v3935 = vunpack.c.l.b16 %v2907
      %v3936 = vunpack.c.l.b16 %v2908
      %v3937 = vunpack.c.l.b16 %v2909
      %v3938 = vunpack.c.l.b16 %v2910
      %v3939 = vunpack.c.l.b16 %v2911
      %v3940 = vunpack.c.l.b16 %v2912
      %v3941 = vunpack.c.l.b16 %v2913
      %v3942 = vunpack.c.l.b16 %v2914
      %v3943 = vunpack.c.l.b16 %v2915
      %v3944 = vunpack.c.l.b16 %v2916
      %v3945 = vunpack.c.l.b16 %v2917
      %v3946 = vunpack.c.l.b16 %v2918
      %v3947 = vunpack.c.l.b16 %v2919
      %v3948 = vunpack.c.l.b16 %v2920
      %v3949 = vunpack.c.l.b16 %v2921
      %v3950 = vunpack.c.l.b16 %v2922
      %v3951 = vunpack.c.l.b16 %v2923
      %v3952 = vunpack.c.l.b16 %v2924
      %v3953 = vunpack.c.l.b16 %v2925
      %v3954 = vunpack.c.l.b16 %v2926
      %v3955 = vunpack.c.l.b16 %v2927
      %v3956 = vunpack.c.l.b16 %v2928
      %v3957 = vunpack.c.l.b16 %v2929
      %v3958 = vunpack.c.l.b16 %v2930
      %v3959 = vunpack.c.l.b16 %v2931
      %v3960 = vunpack.c.l.b16 %v2932
      %v3961 = vunpack.c.l.b16 %v2933
      %v3962 = vunpack.c.l.b16 %v2934
      %v3963 = vunpack.c.l.b16 %v2935
      %v3964 = vunpack.c.l.b16 %v2936
      %v3965 = vunpack.c.l.b16 %v2937
      %v3966 = vunpack.c.l.b16 %v2938
      %v3967 = vunpack.c.l.b16 %v2939
      %v3968 = vunpack.c.l.b16 %v2940
      %v3969 = vunpack.c.l.b16 %v2941
      %v3970 = vunpack.c.l.b16 %v2942
      %v3971 = vunpack.c.l.b16 %v2943
      %v3972 = vunpack.c.l.b16 %v2944
      %v3973 = vunpack.c.l.b16 %v2945
      %v3974 = vunpack.c.l.b16 %v2946
      %v3975 = vunpack.c.l.b16 %v2947
      %v3976 = vunpack.c.l.b16 %v2948
      %v3977 = vunpack.c.l.b16 %v2949
      %v3978 = vunpack.c.l.b16 %v2950
      %v3979 = vunpack.c.l.b16 %v2951
      %v3980 = vunpack.c.l.b16 %v2952
      %v3981 = vunpack.c.l.b16 %v2953
      %v3982 = vunpack.c.l.b16 %v2954
      %v3983 = vunpack.c.l.b16 %v2955
      %v3984 = vunpack.c.l.b16 %v2956
      %v3985 = vunpack.c.l.b16 %v2957
      %v3986 = vunpack.c.l.b16 %v2958
      %v3987 = vunpack.c.l.b16 %v2959
      %v3988 = vunpack.c.l.b16 %v2960
      %v3989 = vunpack.c.l.b16 %v2961
      %v3990 = vunpack.c.l.b16 %v2962
      %v3991 = vunpack.c.l.b16 %v2963
      %v3992 = vunpack.c.l.b16 %v2964
      %v3993 = vunpack.c.l.b16 %v2965
      %v3994 = vunpack.c.l.b16 %v2966
      %v3995 = vunpack.c.l.b16 %v2967
      %v3996 = vunpack.c.l.b16 %v2968
      %v3997 = vunpack.c.l.b16 %v2969
      %v3998 = vunpack.c.l.b16 %v2970
      %v3999 = vunpack.c.l.b16 %v2971
      %v4000 = vunpack.c.l.b16 %v2972
      %v4001 = vunpack.c.l.b16 %v2973
      %v4002 = vunpack.c.l.b16 %v2974
      %v4003 = vunpack.c.l.b16 %v2975
      %v4004 = vunpack.c.l.b16 %v2976
      %v4005 = vunpack.c.l.b16 %v2977
      %v4006 = vunpack.c.l.b16 %v2978
      %v4007 = vunpack.c.l.b16 %v2979
      %v4008 = vunpack.c.l.b16 %v2980
      %v4009 = vunpack.c.l.b16 %v2981
      %v4010 = vunpack.c.l.b16 %v2982
      %v4011 = vunpack.c.l.b16 %v2983
      %v4012 = vunpack.c.l.b16 %v2984
      %v4013 = vunpack.c.l.b16 %v2985
      %v4014 = vunpack.c.l.b16 %v2986
      %v4015 = vunpack.c.l.b16 %v2987
      %v4016 = vunpack.c.l.b16 %v2988
      %v4017 = vunpack.c.l.b16 %v2989
      %v4018 = vunpack.c.l.b16 %v2990
      %v4019 = vunpack.c.l.b16 %v2991
      %v4020 = vunpack.c.l.b16 %v2992
      %v4021 = vunpack.c.l.b16 %v2993
      %v4022 = vunpack.c.l.b16 %v2994
      %v4023 = vunpack.c.l.b16 %v2995
      %v4024 = vunpack.c.l.b16 %v2996
      %v4025 = vunpack.c.l.b16 %v2997
      %v4026 = vunpack.c.l.b16 %v2998
      %v4027 = vunpack.c.l.b16 %v2999
      %v4028 = vunpack.c.l.b16 %v3000
      %v4029 = vunpack.c.l.b16 %v3001
      %v4030 = vunpack.c.l.b16 %v3002
      %v4031 = vunpack.c.l.b16 %v3003
      %v4032 = vunpack.c.l.b16 %v3004
      %v4033 = vunpack.c.l.b16 %v3005
      %v4034 = vunpack.c.l.b16 %v3006
      %v4035 = vunpack.c.l.b16 %v3007
      %v4036 = vunpack.c.l.b16 %v3008
      %v4037 = vunpack.c.l.b16 %v3009
      %v4038 = vunpack.c.l.b16 %v3010
      %v4039 = vunpack.c.l.b16 %v3011
      %v4040 = vunpack.c.l.b16 %v3012
      %v4041 = vunpack.c.l.b16 %v3013
      %v4042 = vunpack.c.l.b16 %v3014
      %v4043 = vunpack.c.l.b16 %v3015
      %v4044 = vunpack.c.l.b16 %v3016
      %v4045 = vunpack.c.l.b16 %v3017
      %v4046 = vunpack.c.l.b16 %v3018
      %v4047 = vunpack.c.l.b16 %v3019
      %v4048 = vunpack.c.l.b16 %v3020
      %v4049 = vunpack.c.l.b16 %v3021
      %v4050 = vunpack.c.l.b16 %v3022
      %v4051 = vunpack.c.l.b16 %v3023
      %v4052 = vunpack.c.l.b16 %v3024
      %v4053 = vunpack.c.l.b16 %v3025
      %v4054 = vunpack.c.l.b16 %v3026
      %v4055 = vunpack.c.l.b16 %v3027
      %v4056 = vunpack.c.l.b16 %v3028
      %v4057 = vunpack.c.l.b16 %v3029
      %v4058 = vunpack.c.l.b16 %v3030
      %v4059 = vunpack.c.l.b16 %v3031
      %v4060 = vpack.c.b16 %v3917, %v3916
      %v4061 = vpack.c.b16 %v3919, %v3918
      %v4062 = vpack.c.b16 %v3921, %v3920
      %v4063 = vpack.c.b16 %v3923, %v3922
      %v4064 = vpack.c.b16 %v3925, %v3924
      %v4065 = vpack.c.b16 %v3927, %v3926
      %v4066 = vpack.c.b16 %v3929, %v3928
      %v4067 = vpack.c.b16 %v3931, %v3930
      %v4068 = vpack.c.b16 %v3933, %v3932
      %v4069 = vpack.c.b16 %v3935, %v3934
      %v4070 = vpack.c.b16 %v3937, %v3936
      %v4071 = vpack.c.b16 %v3939, %v3938
      %v4072 = vpack.c.b16 %v3941, %v3940
      %v4073 = vpack.c.b16 %v3943, %v3942
      %v4074 = vpack.c.b16 %v3945, %v3944
      %v4075 = vpack.c.b16 %v3947, %v3946
      %v4076 = vpack.c.b16 %v3949, %v3948
      %v4077 = vpack.c.b16 %v3951, %v3950
      %v4078 = vpack.c.b16 %v3953, %v3952
      %v4079 = vpack.c.b16 %v3955, %v3954
      %v4080 = vpack.c.b16 %v3957, %v3956
      %v4081 = vpack.c.b16 %v3959, %v3958
      %v4082 = vpack.c.b16 %v3961, %v3960
      %v4083 = vpack.c.b16 %v3963, %v3962
      %v4084 = vpack.c.b16 %v3965, %v3964
      %v4085 = vpack.c.b16 %v3967, %v3966
      %v4086 = vpack.c.b16 %v3969, %v3968
      %v4087 = vpack.c.b16 %v3971, %v3970
      %v4088 = vpack.c.b16 %v3973, %v3972
      %v4089 = vpack.c.b16 %v3975, %v3974
      %v4090 = vpack.c.b16 %v3977, %v3976
      %v4091 = vpack.c.b16 %v3979, %v3978
      %v4092 = vpack.c.b16 %v3981, %v3980
      %v4093 = vpack.c.b16 %v3983, %v3982
      %v4094 = vpack.c.b16 %v3985, %v3984
      %v4095 = vpack.c.b16 %v3987, %v3986
      %v4096 = vpack.c.b16 %v3989, %v3988
      %v4097 = vpack.c.b16 %v3991, %v3990
      %v4098 = vpack.c.b16 %v3993, %v3992
      %v4099 = vpack.c.b16 %v3995, %v3994
      %v4100 = vpack.c.b16 %v3997, %v3996
      %v4101 = vpack.c.b16 %v3999, %v3998
      %v4102 = vpack.c.b16 %v4001, %v4000
      %v4103 = vpack.c.b16 %v4003, %v4002
      %v4104 = vpack.c.b16 %v4005, %v4004
      %v4105 = vpack.c.b16 %v4007, %v4006
      %v4106 = vpack.c.b16 %v4009, %v4008
      %v4107 = vpack.c.b16 %v4011, %v4010
      %v4108 = vpack.c.b16 %v4013, %v4012
      %v4109 = vpack.c.b16 %v4015, %v4014
      %v4110 = vpack.c.b16 %v4017, %v4016
      %v4111 = vpack.c.b16 %v4019, %v4018
      %v4112 = vpack.c.b16 %v4021, %v4020
      %v4113 = vpack.c.b16 %v4023, %v4022
      %v4114 = vpack.c.b16 %v4025, %v4024
      %v4115 = vpack.c.b16 %v4027, %v4026
      %v4116 = vpack.c.b16 %v4029, %v4028
      %v4117 = vpack.c.b16 %v4031, %v4030
      %v4118 = vpack.c.b16 %v4033, %v4032
      %v4119 = vpack.c.b16 %v4035, %v4034
      %v4120 = vpack.c.b16 %v4037, %v4036
      %v4121 = vpack.c.b16 %v4039, %v4038
      %v4122 = vpack.c.b16 %v4041, %v4040
      %v4123 = vpack.c.b16 %v4043, %v4042
      %v4124 = vpack.c.b16 %v4045, %v4044
      %v4125 = vpack.c.b16 %v4047, %v4046
      %v4126 = vpack.c.b16 %v4049, %v4048
      %v4127 = vpack.c.b16 %v4051, %v4050
      %v4128 = vpack.c.b16 %v4053, %v4052
      %v4129 = vpack.c.b16 %v4055, %v4054
      %v4130 = vpack.c.b16 %v4057, %v4056
      %v4131 = vpack.c.b16 %v4059, %v4058
      %4204 = vmatpush.bf16.msra.mxu0 %v4067
      %4205 = vmatpush.bf16.msra.mxu0 %v4066
      %4206 = vmatpush.bf16.msra.mxu0 %v4065
      %4207 = vmatpush.bf16.msra.mxu0 %v4064
      %4208 = vmatpush.bf16.msra.mxu0 %v4063
      %4209 = vmatpush.bf16.msra.mxu0 %v4062
      %4210 = vmatpush.bf16.msra.mxu0 %v4061
      %4211 = vmatpush.bf16.msra.mxu0 %v4060
      %4212 = vmatmul.bf16.gmra.mxu0 %v3484
      %v4213 = vpop.f32.mrf.mxu0
      %v4214 = vadd.f32 %v3034, %v4213
      %v4215 = vpop.f32.mrf.mxu0
      %v4216 = vadd.f32 %v3034, %v4215
      %4217 = vmatmul.bf16.gmra.mxu0 %v3493
      %v4218 = vpop.f32.mrf.mxu0
      %v4219 = vadd.f32 %v3034, %v4218
      %v4220 = vpop.f32.mrf.mxu0
      %v4221 = vadd.f32 %v3034, %v4220
      %4222 = vmatmul.bf16.gmra.mxu0 %v3502
      %v4223 = vpop.f32.mrf.mxu0
      %v4224 = vadd.f32 %v3034, %v4223
      %v4225 = vpop.f32.mrf.mxu0
      %v4226 = vadd.f32 %v3034, %v4225
      %4227 = vmatmul.bf16.gmra.mxu0 %v3511
      %v4228 = vpop.f32.mrf.mxu0
      %v4229 = vadd.f32 %v3034, %v4228
      %v4230 = vpop.f32.mrf.mxu0
      %v4231 = vadd.f32 %v3034, %v4230
      %4232 = vmatmul.bf16.gmra.mxu0 %v3520
      %v4233 = vpop.f32.mrf.mxu0
      %v4234 = vadd.f32 %v3034, %v4233
      %v4235 = vpop.f32.mrf.mxu0
      %v4236 = vadd.f32 %v3034, %v4235
      %4237 = vmatmul.bf16.gmra.mxu0 %v3529
      %v4238 = vpop.f32.mrf.mxu0
      %v4239 = vadd.f32 %v3034, %v4238
      %v4240 = vpop.f32.mrf.mxu0
      %v4241 = vadd.f32 %v3034, %v4240
      %4242 = vmatmul.bf16.gmra.mxu0 %v3538
      %v4243 = vpop.f32.mrf.mxu0
      %v4244 = vadd.f32 %v3034, %v4243
      %v4245 = vpop.f32.mrf.mxu0
      %v4246 = vadd.f32 %v3034, %v4245
      %4247 = vmatmul.bf16.gmra.mxu0 %v3547
      %v4248 = vpop.f32.mrf.mxu0
      %v4249 = vadd.f32 %v3034, %v4248
      %v4250 = vpop.f32.mrf.mxu0
      %v4251 = vadd.f32 %v3034, %v4250
      %4252 = vmatmul.bf16.gmra.mxu0 %v3556
      %v4253 = vpop.f32.mrf.mxu0
      %v4254 = vadd.f32 %v3034, %v4253
      %v4255 = vpop.f32.mrf.mxu0
      %v4256 = vadd.f32 %v3034, %v4255
      %4257 = vmatmul.bf16.gmra.mxu0 %v3565
      %v4258 = vpop.f32.mrf.mxu0
      %v4259 = vadd.f32 %v3034, %v4258
      %v4260 = vpop.f32.mrf.mxu0
      %v4261 = vadd.f32 %v3034, %v4260
      %4262 = vmatmul.bf16.gmra.mxu0 %v3574
      %v4263 = vpop.f32.mrf.mxu0
      %v4264 = vadd.f32 %v3034, %v4263
      %v4265 = vpop.f32.mrf.mxu0
      %v4266 = vadd.f32 %v3034, %v4265
      %4267 = vmatmul.bf16.gmra.mxu0 %v3583
      %v4268 = vpop.f32.mrf.mxu0
      %v4269 = vadd.f32 %v3034, %v4268
      %v4270 = vpop.f32.mrf.mxu0
      %v4271 = vadd.f32 %v3034, %v4270
      %4272 = vmatmul.bf16.gmra.mxu0 %v3592
      %v4273 = vpop.f32.mrf.mxu0
      %v4274 = vadd.f32 %v3034, %v4273
      %v4275 = vpop.f32.mrf.mxu0
      %v4276 = vadd.f32 %v3034, %v4275
      %4277 = vmatmul.bf16.gmra.mxu0 %v3601
      %v4278 = vpop.f32.mrf.mxu0
      %v4279 = vadd.f32 %v3034, %v4278
      %v4280 = vpop.f32.mrf.mxu0
      %v4281 = vadd.f32 %v3034, %v4280
      %4282 = vmatmul.bf16.gmra.mxu0 %v3610
      %v4283 = vpop.f32.mrf.mxu0
      %v4284 = vadd.f32 %v3034, %v4283
      %v4285 = vpop.f32.mrf.mxu0
      %v4286 = vadd.f32 %v3034, %v4285
      %4287 = vmatmul.bf16.gmra.mxu0 %v3619
      %v4288 = vpop.f32.mrf.mxu0
      %v4289 = vadd.f32 %v3034, %v4288
      %v4290 = vpop.f32.mrf.mxu0
      %v4291 = vadd.f32 %v3034, %v4290
      %4292 = vdwg.mxu0
      %4293 = vmatpush.bf16.msra.mxu0 %v4075
      %4294 = vmatpush.bf16.msra.mxu0 %v4074
      %4295 = vmatpush.bf16.msra.mxu0 %v4073
      %4296 = vmatpush.bf16.msra.mxu0 %v4072
      %4297 = vmatpush.bf16.msra.mxu0 %v4071
      %4298 = vmatpush.bf16.msra.mxu0 %v4070
      %4299 = vmatpush.bf16.msra.mxu0 %v4069
      %4300 = vmatpush.bf16.msra.mxu0 %v4068
      %4301 = vmatmul.bf16.gmra.mxu0 %v3485
      %v4302 = vpop.f32.mrf.mxu0
      %v4303 = vadd.f32 %v4214, %v4302
      %v4304 = vpop.f32.mrf.mxu0
      %v4305 = vadd.f32 %v4216, %v4304
      %4306 = vmatmul.bf16.gmra.mxu0 %v3494
      %v4307 = vpop.f32.mrf.mxu0
      %v4308 = vadd.f32 %v4219, %v4307
      %v4309 = vpop.f32.mrf.mxu0
      %v4310 = vadd.f32 %v4221, %v4309
      %4311 = vmatmul.bf16.gmra.mxu0 %v3503
      %v4312 = vpop.f32.mrf.mxu0
      %v4313 = vadd.f32 %v4224, %v4312
      %v4314 = vpop.f32.mrf.mxu0
      %v4315 = vadd.f32 %v4226, %v4314
      %4316 = vmatmul.bf16.gmra.mxu0 %v3512
      %v4317 = vpop.f32.mrf.mxu0
      %v4318 = vadd.f32 %v4229, %v4317
      %v4319 = vpop.f32.mrf.mxu0
      %v4320 = vadd.f32 %v4231, %v4319
      %4321 = vmatmul.bf16.gmra.mxu0 %v3521
      %v4322 = vpop.f32.mrf.mxu0
      %v4323 = vadd.f32 %v4234, %v4322
      %v4324 = vpop.f32.mrf.mxu0
      %v4325 = vadd.f32 %v4236, %v4324
      %4326 = vmatmul.bf16.gmra.mxu0 %v3530
      %v4327 = vpop.f32.mrf.mxu0
      %v4328 = vadd.f32 %v4239, %v4327
      %v4329 = vpop.f32.mrf.mxu0
      %v4330 = vadd.f32 %v4241, %v4329
      %4331 = vmatmul.bf16.gmra.mxu0 %v3539
      %v4332 = vpop.f32.mrf.mxu0
      %v4333 = vadd.f32 %v4244, %v4332
      %v4334 = vpop.f32.mrf.mxu0
      %v4335 = vadd.f32 %v4246, %v4334
      %4336 = vmatmul.bf16.gmra.mxu0 %v3548
      %v4337 = vpop.f32.mrf.mxu0
      %v4338 = vadd.f32 %v4249, %v4337
      %v4339 = vpop.f32.mrf.mxu0
      %v4340 = vadd.f32 %v4251, %v4339
      %4341 = vmatmul.bf16.gmra.mxu0 %v3557
      %v4342 = vpop.f32.mrf.mxu0
      %v4343 = vadd.f32 %v4254, %v4342
      %v4344 = vpop.f32.mrf.mxu0
      %v4345 = vadd.f32 %v4256, %v4344
      %4346 = vmatmul.bf16.gmra.mxu0 %v3566
      %v4347 = vpop.f32.mrf.mxu0
      %v4348 = vadd.f32 %v4259, %v4347
      %v4349 = vpop.f32.mrf.mxu0
      %v4350 = vadd.f32 %v4261, %v4349
      %4351 = vmatmul.bf16.gmra.mxu0 %v3575
      %v4352 = vpop.f32.mrf.mxu0
      %v4353 = vadd.f32 %v4264, %v4352
      %v4354 = vpop.f32.mrf.mxu0
      %v4355 = vadd.f32 %v4266, %v4354
      %4356 = vmatmul.bf16.gmra.mxu0 %v3584
      %v4357 = vpop.f32.mrf.mxu0
      %v4358 = vadd.f32 %v4269, %v4357
      %v4359 = vpop.f32.mrf.mxu0
      %v4360 = vadd.f32 %v4271, %v4359
      %4361 = vmatmul.bf16.gmra.mxu0 %v3593
      %v4362 = vpop.f32.mrf.mxu0
      %v4363 = vadd.f32 %v4274, %v4362
      %v4364 = vpop.f32.mrf.mxu0
      %v4365 = vadd.f32 %v4276, %v4364
      %4366 = vmatmul.bf16.gmra.mxu0 %v3602
      %v4367 = vpop.f32.mrf.mxu0
      %v4368 = vadd.f32 %v4279, %v4367
      %v4369 = vpop.f32.mrf.mxu0
      %v4370 = vadd.f32 %v4281, %v4369
      %4371 = vmatmul.bf16.gmra.mxu0 %v3611
      %v4372 = vpop.f32.mrf.mxu0
      %v4373 = vadd.f32 %v4284, %v4372
      %v4374 = vpop.f32.mrf.mxu0
      %v4375 = vadd.f32 %v4286, %v4374
      %4376 = vmatmul.bf16.gmra.mxu0 %v3620
      %v4377 = vpop.f32.mrf.mxu0
      %v4378 = vadd.f32 %v4289, %v4377
      %v4379 = vpop.f32.mrf.mxu0
      %v4380 = vadd.f32 %v4291, %v4379
      %4381 = vdwg.mxu0
      %4382 = vmatpush.bf16.msra.mxu0 %v4083
      %4383 = vmatpush.bf16.msra.mxu0 %v4082
      %4384 = vmatpush.bf16.msra.mxu0 %v4081
      %4385 = vmatpush.bf16.msra.mxu0 %v4080
      %4386 = vmatpush.bf16.msra.mxu0 %v4079
      %4387 = vmatpush.bf16.msra.mxu0 %v4078
      %4388 = vmatpush.bf16.msra.mxu0 %v4077
      %4389 = vmatpush.bf16.msra.mxu0 %v4076
      %4390 = vmatmul.bf16.gmra.mxu0 %v3486
      %v4391 = vpop.f32.mrf.mxu0
      %v4392 = vadd.f32 %v4303, %v4391
      %v4393 = vpop.f32.mrf.mxu0
      %v4394 = vadd.f32 %v4305, %v4393
      %4395 = vmatmul.bf16.gmra.mxu0 %v3495
      %v4396 = vpop.f32.mrf.mxu0
      %v4397 = vadd.f32 %v4308, %v4396
      %v4398 = vpop.f32.mrf.mxu0
      %v4399 = vadd.f32 %v4310, %v4398
      %4400 = vmatmul.bf16.gmra.mxu0 %v3504
      %v4401 = vpop.f32.mrf.mxu0
      %v4402 = vadd.f32 %v4313, %v4401
      %v4403 = vpop.f32.mrf.mxu0
      %v4404 = vadd.f32 %v4315, %v4403
      %4405 = vmatmul.bf16.gmra.mxu0 %v3513
      %v4406 = vpop.f32.mrf.mxu0
      %v4407 = vadd.f32 %v4318, %v4406
      %v4408 = vpop.f32.mrf.mxu0
      %v4409 = vadd.f32 %v4320, %v4408
      %4410 = vmatmul.bf16.gmra.mxu0 %v3522
      %v4411 = vpop.f32.mrf.mxu0
      %v4412 = vadd.f32 %v4323, %v4411
      %v4413 = vpop.f32.mrf.mxu0
      %v4414 = vadd.f32 %v4325, %v4413
      %4415 = vmatmul.bf16.gmra.mxu0 %v3531
      %v4416 = vpop.f32.mrf.mxu0
      %v4417 = vadd.f32 %v4328, %v4416
      %v4418 = vpop.f32.mrf.mxu0
      %v4419 = vadd.f32 %v4330, %v4418
      %4420 = vmatmul.bf16.gmra.mxu0 %v3540
      %v4421 = vpop.f32.mrf.mxu0
      %v4422 = vadd.f32 %v4333, %v4421
      %v4423 = vpop.f32.mrf.mxu0
      %v4424 = vadd.f32 %v4335, %v4423
      %4425 = vmatmul.bf16.gmra.mxu0 %v3549
      %v4426 = vpop.f32.mrf.mxu0
      %v4427 = vadd.f32 %v4338, %v4426
      %v4428 = vpop.f32.mrf.mxu0
      %v4429 = vadd.f32 %v4340, %v4428
      %4430 = vmatmul.bf16.gmra.mxu0 %v3558
      %v4431 = vpop.f32.mrf.mxu0
      %v4432 = vadd.f32 %v4343, %v4431
      %v4433 = vpop.f32.mrf.mxu0
      %v4434 = vadd.f32 %v4345, %v4433
      %4435 = vmatmul.bf16.gmra.mxu0 %v3567
      %v4436 = vpop.f32.mrf.mxu0
      %v4437 = vadd.f32 %v4348, %v4436
      %v4438 = vpop.f32.mrf.mxu0
      %v4439 = vadd.f32 %v4350, %v4438
      %4440 = vmatmul.bf16.gmra.mxu0 %v3576
      %v4441 = vpop.f32.mrf.mxu0
      %v4442 = vadd.f32 %v4353, %v4441
      %v4443 = vpop.f32.mrf.mxu0
      %v4444 = vadd.f32 %v4355, %v4443
      %4445 = vmatmul.bf16.gmra.mxu0 %v3585
      %v4446 = vpop.f32.mrf.mxu0
      %v4447 = vadd.f32 %v4358, %v4446
      %v4448 = vpop.f32.mrf.mxu0
      %v4449 = vadd.f32 %v4360, %v4448
      %4450 = vmatmul.bf16.gmra.mxu0 %v3594
      %v4451 = vpop.f32.mrf.mxu0
      %v4452 = vadd.f32 %v4363, %v4451
      %v4453 = vpop.f32.mrf.mxu0
      %v4454 = vadd.f32 %v4365, %v4453
      %4455 = vmatmul.bf16.gmra.mxu0 %v3603
      %v4456 = vpop.f32.mrf.mxu0
      %v4457 = vadd.f32 %v4368, %v4456
      %v4458 = vpop.f32.mrf.mxu0
      %v4459 = vadd.f32 %v4370, %v4458
      %4460 = vmatmul.bf16.gmra.mxu0 %v3612
      %v4461 = vpop.f32.mrf.mxu0
      %v4462 = vadd.f32 %v4373, %v4461
      %v4463 = vpop.f32.mrf.mxu0
      %v4464 = vadd.f32 %v4375, %v4463
      %4465 = vmatmul.bf16.gmra.mxu0 %v3621
      %v4466 = vpop.f32.mrf.mxu0
      %v4467 = vadd.f32 %v4378, %v4466
      %v4468 = vpop.f32.mrf.mxu0
      %v4469 = vadd.f32 %v4380, %v4468
      %4470 = vdwg.mxu0
      %4471 = vmatpush.bf16.msra.mxu0 %v4091
      %4472 = vmatpush.bf16.msra.mxu0 %v4090
      %4473 = vmatpush.bf16.msra.mxu0 %v4089
      %4474 = vmatpush.bf16.msra.mxu0 %v4088
      %4475 = vmatpush.bf16.msra.mxu0 %v4087
      %4476 = vmatpush.bf16.msra.mxu0 %v4086
      %4477 = vmatpush.bf16.msra.mxu0 %v4085
      %4478 = vmatpush.bf16.msra.mxu0 %v4084
      %4479 = vmatmul.bf16.gmra.mxu0 %v3487
      %v4480 = vpop.f32.mrf.mxu0
      %v4481 = vadd.f32 %v4392, %v4480
      %v4482 = vpop.f32.mrf.mxu0
      %v4483 = vadd.f32 %v4394, %v4482
      %4484 = vmatmul.bf16.gmra.mxu0 %v3496
      %v4485 = vpop.f32.mrf.mxu0
      %v4486 = vadd.f32 %v4397, %v4485
      %v4487 = vpop.f32.mrf.mxu0
      %v4488 = vadd.f32 %v4399, %v4487
      %4489 = vmatmul.bf16.gmra.mxu0 %v3505
      %v4490 = vpop.f32.mrf.mxu0
      %v4491 = vadd.f32 %v4402, %v4490
      %v4492 = vpop.f32.mrf.mxu0
      %v4493 = vadd.f32 %v4404, %v4492
      %4494 = vmatmul.bf16.gmra.mxu0 %v3514
      %v4495 = vpop.f32.mrf.mxu0
      %v4496 = vadd.f32 %v4407, %v4495
      %v4497 = vpop.f32.mrf.mxu0
      %v4498 = vadd.f32 %v4409, %v4497
      %4499 = vmatmul.bf16.gmra.mxu0 %v3523
      %v4500 = vpop.f32.mrf.mxu0
      %v4501 = vadd.f32 %v4412, %v4500
      %v4502 = vpop.f32.mrf.mxu0
      %v4503 = vadd.f32 %v4414, %v4502
      %4504 = vmatmul.bf16.gmra.mxu0 %v3532
      %v4505 = vpop.f32.mrf.mxu0
      %v4506 = vadd.f32 %v4417, %v4505
      %v4507 = vpop.f32.mrf.mxu0
      %v4508 = vadd.f32 %v4419, %v4507
      %4509 = vmatmul.bf16.gmra.mxu0 %v3541
      %v4510 = vpop.f32.mrf.mxu0
      %v4511 = vadd.f32 %v4422, %v4510
      %v4512 = vpop.f32.mrf.mxu0
      %v4513 = vadd.f32 %v4424, %v4512
      %4514 = vmatmul.bf16.gmra.mxu0 %v3550
      %v4515 = vpop.f32.mrf.mxu0
      %v4516 = vadd.f32 %v4427, %v4515
      %v4517 = vpop.f32.mrf.mxu0
      %v4518 = vadd.f32 %v4429, %v4517
      %4519 = vmatmul.bf16.gmra.mxu0 %v3559
      %v4520 = vpop.f32.mrf.mxu0
      %v4521 = vadd.f32 %v4432, %v4520
      %v4522 = vpop.f32.mrf.mxu0
      %v4523 = vadd.f32 %v4434, %v4522
      %4524 = vmatmul.bf16.gmra.mxu0 %v3568
      %v4525 = vpop.f32.mrf.mxu0
      %v4526 = vadd.f32 %v4437, %v4525
      %v4527 = vpop.f32.mrf.mxu0
      %v4528 = vadd.f32 %v4439, %v4527
      %4529 = vmatmul.bf16.gmra.mxu0 %v3577
      %v4530 = vpop.f32.mrf.mxu0
      %v4531 = vadd.f32 %v4442, %v4530
      %v4532 = vpop.f32.mrf.mxu0
      %v4533 = vadd.f32 %v4444, %v4532
      %4534 = vmatmul.bf16.gmra.mxu0 %v3586
      %v4535 = vpop.f32.mrf.mxu0
      %v4536 = vadd.f32 %v4447, %v4535
      %v4537 = vpop.f32.mrf.mxu0
      %v4538 = vadd.f32 %v4449, %v4537
      %4539 = vmatmul.bf16.gmra.mxu0 %v3595
      %v4540 = vpop.f32.mrf.mxu0
      %v4541 = vadd.f32 %v4452, %v4540
      %v4542 = vpop.f32.mrf.mxu0
      %v4543 = vadd.f32 %v4454, %v4542
      %4544 = vmatmul.bf16.gmra.mxu0 %v3604
      %v4545 = vpop.f32.mrf.mxu0
      %v4546 = vadd.f32 %v4457, %v4545
      %v4547 = vpop.f32.mrf.mxu0
      %v4548 = vadd.f32 %v4459, %v4547
      %4549 = vmatmul.bf16.gmra.mxu0 %v3613
      %v4550 = vpop.f32.mrf.mxu0
      %v4551 = vadd.f32 %v4462, %v4550
      %v4552 = vpop.f32.mrf.mxu0
      %v4553 = vadd.f32 %v4464, %v4552
      %4554 = vmatmul.bf16.gmra.mxu0 %v3622
      %v4555 = vpop.f32.mrf.mxu0
      %v4556 = vadd.f32 %v4467, %v4555
      %v4557 = vpop.f32.mrf.mxu0
      %v4558 = vadd.f32 %v4469, %v4557
      %4559 = vdwg.mxu0
      %4560 = vmatpush.bf16.msra.mxu0 %v4099
      %4561 = vmatpush.bf16.msra.mxu0 %v4098
      %4562 = vmatpush.bf16.msra.mxu0 %v4097
      %4563 = vmatpush.bf16.msra.mxu0 %v4096
      %4564 = vmatpush.bf16.msra.mxu0 %v4095
      %4565 = vmatpush.bf16.msra.mxu0 %v4094
      %4566 = vmatpush.bf16.msra.mxu0 %v4093
      %4567 = vmatpush.bf16.msra.mxu0 %v4092
      %4568 = vmatmul.bf16.gmra.mxu0 %v3488
      %v4569 = vpop.f32.mrf.mxu0
      %v4570 = vadd.f32 %v4481, %v4569
      %v4571 = vpop.f32.mrf.mxu0
      %v4572 = vadd.f32 %v4483, %v4571
      %4573 = vmatmul.bf16.gmra.mxu0 %v3497
      %v4574 = vpop.f32.mrf.mxu0
      %v4575 = vadd.f32 %v4486, %v4574
      %v4576 = vpop.f32.mrf.mxu0
      %v4577 = vadd.f32 %v4488, %v4576
      %4578 = vmatmul.bf16.gmra.mxu0 %v3506
      %v4579 = vpop.f32.mrf.mxu0
      %v4580 = vadd.f32 %v4491, %v4579
      %v4581 = vpop.f32.mrf.mxu0
      %v4582 = vadd.f32 %v4493, %v4581
      %4583 = vmatmul.bf16.gmra.mxu0 %v3515
      %v4584 = vpop.f32.mrf.mxu0
      %v4585 = vadd.f32 %v4496, %v4584
      %v4586 = vpop.f32.mrf.mxu0
      %v4587 = vadd.f32 %v4498, %v4586
      %4588 = vmatmul.bf16.gmra.mxu0 %v3524
      %v4589 = vpop.f32.mrf.mxu0
      %v4590 = vadd.f32 %v4501, %v4589
      %v4591 = vpop.f32.mrf.mxu0
      %v4592 = vadd.f32 %v4503, %v4591
      %4593 = vmatmul.bf16.gmra.mxu0 %v3533
      %v4594 = vpop.f32.mrf.mxu0
      %v4595 = vadd.f32 %v4506, %v4594
      %v4596 = vpop.f32.mrf.mxu0
      %v4597 = vadd.f32 %v4508, %v4596
      %4598 = vmatmul.bf16.gmra.mxu0 %v3542
      %v4599 = vpop.f32.mrf.mxu0
      %v4600 = vadd.f32 %v4511, %v4599
      %v4601 = vpop.f32.mrf.mxu0
      %v4602 = vadd.f32 %v4513, %v4601
      %4603 = vmatmul.bf16.gmra.mxu0 %v3551
      %v4604 = vpop.f32.mrf.mxu0
      %v4605 = vadd.f32 %v4516, %v4604
      %v4606 = vpop.f32.mrf.mxu0
      %v4607 = vadd.f32 %v4518, %v4606
      %4608 = vmatmul.bf16.gmra.mxu0 %v3560
      %v4609 = vpop.f32.mrf.mxu0
      %v4610 = vadd.f32 %v4521, %v4609
      %v4611 = vpop.f32.mrf.mxu0
      %v4612 = vadd.f32 %v4523, %v4611
      %4613 = vmatmul.bf16.gmra.mxu0 %v3569
      %v4614 = vpop.f32.mrf.mxu0
      %v4615 = vadd.f32 %v4526, %v4614
      %v4616 = vpop.f32.mrf.mxu0
      %v4617 = vadd.f32 %v4528, %v4616
      %4618 = vmatmul.bf16.gmra.mxu0 %v3578
      %v4619 = vpop.f32.mrf.mxu0
      %v4620 = vadd.f32 %v4531, %v4619
      %v4621 = vpop.f32.mrf.mxu0
      %v4622 = vadd.f32 %v4533, %v4621
      %4623 = vmatmul.bf16.gmra.mxu0 %v3587
      %v4624 = vpop.f32.mrf.mxu0
      %v4625 = vadd.f32 %v4536, %v4624
      %v4626 = vpop.f32.mrf.mxu0
      %v4627 = vadd.f32 %v4538, %v4626
      %4628 = vmatmul.bf16.gmra.mxu0 %v3596
      %v4629 = vpop.f32.mrf.mxu0
      %v4630 = vadd.f32 %v4541, %v4629
      %v4631 = vpop.f32.mrf.mxu0
      %v4632 = vadd.f32 %v4543, %v4631
      %4633 = vmatmul.bf16.gmra.mxu0 %v3605
      %v4634 = vpop.f32.mrf.mxu0
      %v4635 = vadd.f32 %v4546, %v4634
      %v4636 = vpop.f32.mrf.mxu0
      %v4637 = vadd.f32 %v4548, %v4636
      %4638 = vmatmul.bf16.gmra.mxu0 %v3614
      %v4639 = vpop.f32.mrf.mxu0
      %v4640 = vadd.f32 %v4551, %v4639
      %v4641 = vpop.f32.mrf.mxu0
      %v4642 = vadd.f32 %v4553, %v4641
      %4643 = vmatmul.bf16.gmra.mxu0 %v3623
      %v4644 = vpop.f32.mrf.mxu0
      %v4645 = vadd.f32 %v4556, %v4644
      %v4646 = vpop.f32.mrf.mxu0
      %v4647 = vadd.f32 %v4558, %v4646
      %4648 = vdwg.mxu0
      %4649 = vmatpush.bf16.msra.mxu0 %v4107
      %4650 = vmatpush.bf16.msra.mxu0 %v4106
      %4651 = vmatpush.bf16.msra.mxu0 %v4105
      %4652 = vmatpush.bf16.msra.mxu0 %v4104
      %4653 = vmatpush.bf16.msra.mxu0 %v4103
      %4654 = vmatpush.bf16.msra.mxu0 %v4102
      %4655 = vmatpush.bf16.msra.mxu0 %v4101
      %4656 = vmatpush.bf16.msra.mxu0 %v4100
      %4657 = vmatmul.bf16.gmra.mxu0 %v3489
      %v4658 = vpop.f32.mrf.mxu0
      %v4659 = vadd.f32 %v4570, %v4658
      %v4660 = vpop.f32.mrf.mxu0
      %v4661 = vadd.f32 %v4572, %v4660
      %4662 = vmatmul.bf16.gmra.mxu0 %v3498
      %v4663 = vpop.f32.mrf.mxu0
      %v4664 = vadd.f32 %v4575, %v4663
      %v4665 = vpop.f32.mrf.mxu0
      %v4666 = vadd.f32 %v4577, %v4665
      %4667 = vmatmul.bf16.gmra.mxu0 %v3507
      %v4668 = vpop.f32.mrf.mxu0
      %v4669 = vadd.f32 %v4580, %v4668
      %v4670 = vpop.f32.mrf.mxu0
      %v4671 = vadd.f32 %v4582, %v4670
      %4672 = vmatmul.bf16.gmra.mxu0 %v3516
      %v4673 = vpop.f32.mrf.mxu0
      %v4674 = vadd.f32 %v4585, %v4673
      %v4675 = vpop.f32.mrf.mxu0
      %v4676 = vadd.f32 %v4587, %v4675
      %4677 = vmatmul.bf16.gmra.mxu0 %v3525
      %v4678 = vpop.f32.mrf.mxu0
      %v4679 = vadd.f32 %v4590, %v4678
      %v4680 = vpop.f32.mrf.mxu0
      %v4681 = vadd.f32 %v4592, %v4680
      %4682 = vmatmul.bf16.gmra.mxu0 %v3534
      %v4683 = vpop.f32.mrf.mxu0
      %v4684 = vadd.f32 %v4595, %v4683
      %v4685 = vpop.f32.mrf.mxu0
      %v4686 = vadd.f32 %v4597, %v4685
      %4687 = vmatmul.bf16.gmra.mxu0 %v3543
      %v4688 = vpop.f32.mrf.mxu0
      %v4689 = vadd.f32 %v4600, %v4688
      %v4690 = vpop.f32.mrf.mxu0
      %v4691 = vadd.f32 %v4602, %v4690
      %4692 = vmatmul.bf16.gmra.mxu0 %v3552
      %v4693 = vpop.f32.mrf.mxu0
      %v4694 = vadd.f32 %v4605, %v4693
      %v4695 = vpop.f32.mrf.mxu0
      %v4696 = vadd.f32 %v4607, %v4695
      %4697 = vmatmul.bf16.gmra.mxu0 %v3561
      %v4698 = vpop.f32.mrf.mxu0
      %v4699 = vadd.f32 %v4610, %v4698
      %v4700 = vpop.f32.mrf.mxu0
      %v4701 = vadd.f32 %v4612, %v4700
      %4702 = vmatmul.bf16.gmra.mxu0 %v3570
      %v4703 = vpop.f32.mrf.mxu0
      %v4704 = vadd.f32 %v4615, %v4703
      %v4705 = vpop.f32.mrf.mxu0
      %v4706 = vadd.f32 %v4617, %v4705
      %4707 = vmatmul.bf16.gmra.mxu0 %v3579
      %v4708 = vpop.f32.mrf.mxu0
      %v4709 = vadd.f32 %v4620, %v4708
      %v4710 = vpop.f32.mrf.mxu0
      %v4711 = vadd.f32 %v4622, %v4710
      %4712 = vmatmul.bf16.gmra.mxu0 %v3588
      %v4713 = vpop.f32.mrf.mxu0
      %v4714 = vadd.f32 %v4625, %v4713
      %v4715 = vpop.f32.mrf.mxu0
      %v4716 = vadd.f32 %v4627, %v4715
      %4717 = vmatmul.bf16.gmra.mxu0 %v3597
      %v4718 = vpop.f32.mrf.mxu0
      %v4719 = vadd.f32 %v4630, %v4718
      %v4720 = vpop.f32.mrf.mxu0
      %v4721 = vadd.f32 %v4632, %v4720
      %4722 = vmatmul.bf16.gmra.mxu0 %v3606
      %v4723 = vpop.f32.mrf.mxu0
      %v4724 = vadd.f32 %v4635, %v4723
      %v4725 = vpop.f32.mrf.mxu0
      %v4726 = vadd.f32 %v4637, %v4725
      %4727 = vmatmul.bf16.gmra.mxu0 %v3615
      %v4728 = vpop.f32.mrf.mxu0
      %v4729 = vadd.f32 %v4640, %v4728
      %v4730 = vpop.f32.mrf.mxu0
      %v4731 = vadd.f32 %v4642, %v4730
      %4732 = vmatmul.bf16.gmra.mxu0 %v3624
      %v4733 = vpop.f32.mrf.mxu0
      %v4734 = vadd.f32 %v4645, %v4733
      %v4735 = vpop.f32.mrf.mxu0
      %v4736 = vadd.f32 %v4647, %v4735
      %4737 = vdwg.mxu0
      %4738 = vmatpush.bf16.msra.mxu0 %v4115
      %4739 = vmatpush.bf16.msra.mxu0 %v4114
      %4740 = vmatpush.bf16.msra.mxu0 %v4113
      %4741 = vmatpush.bf16.msra.mxu0 %v4112
      %4742 = vmatpush.bf16.msra.mxu0 %v4111
      %4743 = vmatpush.bf16.msra.mxu0 %v4110
      %4744 = vmatpush.bf16.msra.mxu0 %v4109
      %4745 = vmatpush.bf16.msra.mxu0 %v4108
      %4746 = vmatmul.bf16.gmra.mxu0 %v3490
      %v4747 = vpop.f32.mrf.mxu0
      %v4748 = vadd.f32 %v4659, %v4747
      %v4749 = vpop.f32.mrf.mxu0
      %v4750 = vadd.f32 %v4661, %v4749
      %4751 = vmatmul.bf16.gmra.mxu0 %v3499
      %v4752 = vpop.f32.mrf.mxu0
      %v4753 = vadd.f32 %v4664, %v4752
      %v4754 = vpop.f32.mrf.mxu0
      %v4755 = vadd.f32 %v4666, %v4754
      %4756 = vmatmul.bf16.gmra.mxu0 %v3508
      %v4757 = vpop.f32.mrf.mxu0
      %v4758 = vadd.f32 %v4669, %v4757
      %v4759 = vpop.f32.mrf.mxu0
      %v4760 = vadd.f32 %v4671, %v4759
      %4761 = vmatmul.bf16.gmra.mxu0 %v3517
      %v4762 = vpop.f32.mrf.mxu0
      %v4763 = vadd.f32 %v4674, %v4762
      %v4764 = vpop.f32.mrf.mxu0
      %v4765 = vadd.f32 %v4676, %v4764
      %4766 = vmatmul.bf16.gmra.mxu0 %v3526
      %v4767 = vpop.f32.mrf.mxu0
      %v4768 = vadd.f32 %v4679, %v4767
      %v4769 = vpop.f32.mrf.mxu0
      %v4770 = vadd.f32 %v4681, %v4769
      %4771 = vmatmul.bf16.gmra.mxu0 %v3535
      %v4772 = vpop.f32.mrf.mxu0
      %v4773 = vadd.f32 %v4684, %v4772
      %v4774 = vpop.f32.mrf.mxu0
      %v4775 = vadd.f32 %v4686, %v4774
      %4776 = vmatmul.bf16.gmra.mxu0 %v3544
      %v4777 = vpop.f32.mrf.mxu0
      %v4778 = vadd.f32 %v4689, %v4777
      %v4779 = vpop.f32.mrf.mxu0
      %v4780 = vadd.f32 %v4691, %v4779
      %4781 = vmatmul.bf16.gmra.mxu0 %v3553
      %v4782 = vpop.f32.mrf.mxu0
      %v4783 = vadd.f32 %v4694, %v4782
      %v4784 = vpop.f32.mrf.mxu0
      %v4785 = vadd.f32 %v4696, %v4784
      %4786 = vmatmul.bf16.gmra.mxu0 %v3562
      %v4787 = vpop.f32.mrf.mxu0
      %v4788 = vadd.f32 %v4699, %v4787
      %v4789 = vpop.f32.mrf.mxu0
      %v4790 = vadd.f32 %v4701, %v4789
      %4791 = vmatmul.bf16.gmra.mxu0 %v3571
      %v4792 = vpop.f32.mrf.mxu0
      %v4793 = vadd.f32 %v4704, %v4792
      %v4794 = vpop.f32.mrf.mxu0
      %v4795 = vadd.f32 %v4706, %v4794
      %4796 = vmatmul.bf16.gmra.mxu0 %v3580
      %v4797 = vpop.f32.mrf.mxu0
      %v4798 = vadd.f32 %v4709, %v4797
      %v4799 = vpop.f32.mrf.mxu0
      %v4800 = vadd.f32 %v4711, %v4799
      %4801 = vmatmul.bf16.gmra.mxu0 %v3589
      %v4802 = vpop.f32.mrf.mxu0
      %v4803 = vadd.f32 %v4714, %v4802
      %v4804 = vpop.f32.mrf.mxu0
      %v4805 = vadd.f32 %v4716, %v4804
      %4806 = vmatmul.bf16.gmra.mxu0 %v3598
      %v4807 = vpop.f32.mrf.mxu0
      %v4808 = vadd.f32 %v4719, %v4807
      %v4809 = vpop.f32.mrf.mxu0
      %v4810 = vadd.f32 %v4721, %v4809
      %4811 = vmatmul.bf16.gmra.mxu0 %v3607
      %v4812 = vpop.f32.mrf.mxu0
      %v4813 = vadd.f32 %v4724, %v4812
      %v4814 = vpop.f32.mrf.mxu0
      %v4815 = vadd.f32 %v4726, %v4814
      %4816 = vmatmul.bf16.gmra.mxu0 %v3616
      %v4817 = vpop.f32.mrf.mxu0
      %v4818 = vadd.f32 %v4729, %v4817
      %v4819 = vpop.f32.mrf.mxu0
      %v4820 = vadd.f32 %v4731, %v4819
      %4821 = vmatmul.bf16.gmra.mxu0 %v3625
      %v4822 = vpop.f32.mrf.mxu0
      %v4823 = vadd.f32 %v4734, %v4822
      %v4824 = vpop.f32.mrf.mxu0
      %v4825 = vadd.f32 %v4736, %v4824
      %4826 = vdwg.mxu0
      %4827 = vmatpush.bf16.msra.mxu0 %v4123
      %4828 = vmatpush.bf16.msra.mxu0 %v4122
      %4829 = vmatpush.bf16.msra.mxu0 %v4121
      %4830 = vmatpush.bf16.msra.mxu0 %v4120
      %4831 = vmatpush.bf16.msra.mxu0 %v4119
      %4832 = vmatpush.bf16.msra.mxu0 %v4118
      %4833 = vmatpush.bf16.msra.mxu0 %v4117
      %4834 = vmatpush.bf16.msra.mxu0 %v4116
      %4835 = vmatmul.bf16.gmra.mxu0 %v3491
      %v4836 = vpop.f32.mrf.mxu0
      %v4837 = vadd.f32 %v4748, %v4836
      %v4838 = vpop.f32.mrf.mxu0
      %v4839 = vadd.f32 %v4750, %v4838
      %4840 = vmatmul.bf16.gmra.mxu0 %v3500
      %v4841 = vpop.f32.mrf.mxu0
      %v4842 = vadd.f32 %v4753, %v4841
      %v4843 = vpop.f32.mrf.mxu0
      %v4844 = vadd.f32 %v4755, %v4843
      %4845 = vmatmul.bf16.gmra.mxu0 %v3509
      %v4846 = vpop.f32.mrf.mxu0
      %v4847 = vadd.f32 %v4758, %v4846
      %v4848 = vpop.f32.mrf.mxu0
      %v4849 = vadd.f32 %v4760, %v4848
      %4850 = vmatmul.bf16.gmra.mxu0 %v3518
      %v4851 = vpop.f32.mrf.mxu0
      %v4852 = vadd.f32 %v4763, %v4851
      %v4853 = vpop.f32.mrf.mxu0
      %v4854 = vadd.f32 %v4765, %v4853
      %4855 = vmatmul.bf16.gmra.mxu0 %v3527
      %v4856 = vpop.f32.mrf.mxu0
      %v4857 = vadd.f32 %v4768, %v4856
      %v4858 = vpop.f32.mrf.mxu0
      %v4859 = vadd.f32 %v4770, %v4858
      %4860 = vmatmul.bf16.gmra.mxu0 %v3536
      %v4861 = vpop.f32.mrf.mxu0
      %v4862 = vadd.f32 %v4773, %v4861
      %v4863 = vpop.f32.mrf.mxu0
      %v4864 = vadd.f32 %v4775, %v4863
      %4865 = vmatmul.bf16.gmra.mxu0 %v3545
      %v4866 = vpop.f32.mrf.mxu0
      %v4867 = vadd.f32 %v4778, %v4866
      %v4868 = vpop.f32.mrf.mxu0
      %v4869 = vadd.f32 %v4780, %v4868
      %4870 = vmatmul.bf16.gmra.mxu0 %v3554
      %v4871 = vpop.f32.mrf.mxu0
      %v4872 = vadd.f32 %v4783, %v4871
      %v4873 = vpop.f32.mrf.mxu0
      %v4874 = vadd.f32 %v4785, %v4873
      %4875 = vmatmul.bf16.gmra.mxu0 %v3563
      %v4876 = vpop.f32.mrf.mxu0
      %v4877 = vadd.f32 %v4788, %v4876
      %v4878 = vpop.f32.mrf.mxu0
      %v4879 = vadd.f32 %v4790, %v4878
      %4880 = vmatmul.bf16.gmra.mxu0 %v3572
      %v4881 = vpop.f32.mrf.mxu0
      %v4882 = vadd.f32 %v4793, %v4881
      %v4883 = vpop.f32.mrf.mxu0
      %v4884 = vadd.f32 %v4795, %v4883
      %4885 = vmatmul.bf16.gmra.mxu0 %v3581
      %v4886 = vpop.f32.mrf.mxu0
      %v4887 = vadd.f32 %v4798, %v4886
      %v4888 = vpop.f32.mrf.mxu0
      %v4889 = vadd.f32 %v4800, %v4888
      %4890 = vmatmul.bf16.gmra.mxu0 %v3590
      %v4891 = vpop.f32.mrf.mxu0
      %v4892 = vadd.f32 %v4803, %v4891
      %v4893 = vpop.f32.mrf.mxu0
      %v4894 = vadd.f32 %v4805, %v4893
      %4895 = vmatmul.bf16.gmra.mxu0 %v3599
      %v4896 = vpop.f32.mrf.mxu0
      %v4897 = vadd.f32 %v4808, %v4896
      %v4898 = vpop.f32.mrf.mxu0
      %v4899 = vadd.f32 %v4810, %v4898
      %4900 = vmatmul.bf16.gmra.mxu0 %v3608
      %v4901 = vpop.f32.mrf.mxu0
      %v4902 = vadd.f32 %v4813, %v4901
      %v4903 = vpop.f32.mrf.mxu0
      %v4904 = vadd.f32 %v4815, %v4903
      %4905 = vmatmul.bf16.gmra.mxu0 %v3617
      %v4906 = vpop.f32.mrf.mxu0
      %v4907 = vadd.f32 %v4818, %v4906
      %v4908 = vpop.f32.mrf.mxu0
      %v4909 = vadd.f32 %v4820, %v4908
      %4910 = vmatmul.bf16.gmra.mxu0 %v3626
      %v4911 = vpop.f32.mrf.mxu0
      %v4912 = vadd.f32 %v4823, %v4911
      %v4913 = vpop.f32.mrf.mxu0
      %v4914 = vadd.f32 %v4825, %v4913
      %4915 = vdwg.mxu0
      %4916 = vmatpush.bf16.msra.mxu0 %v4131
      %4917 = vmatpush.bf16.msra.mxu0 %v4130
      %4918 = vmatpush.bf16.msra.mxu0 %v4129
      %4919 = vmatpush.bf16.msra.mxu0 %v4128
      %4920 = vmatpush.bf16.msra.mxu0 %v4127
      %4921 = vmatpush.bf16.msra.mxu0 %v4126
      %4922 = vmatpush.bf16.msra.mxu0 %v4125
      %4923 = vmatpush.bf16.msra.mxu0 %v4124
      %4924 = vmatmul.bf16.gmra.mxu0 %v3492
      %v4925 = vpop.f32.mrf.mxu0
      %v4926 = vadd.f32 %v4837, %v4925
      %v4927 = vpop.f32.mrf.mxu0
      %v4928 = vadd.f32 %v4839, %v4927
      %4929 = vmatmul.bf16.gmra.mxu0 %v3501
      %v4930 = vpop.f32.mrf.mxu0
      %v4931 = vadd.f32 %v4842, %v4930
      %v4932 = vpop.f32.mrf.mxu0
      %v4933 = vadd.f32 %v4844, %v4932
      %4934 = vmatmul.bf16.gmra.mxu0 %v3510
      %v4935 = vpop.f32.mrf.mxu0
      %v4936 = vadd.f32 %v4847, %v4935
      %v4937 = vpop.f32.mrf.mxu0
      %v4938 = vadd.f32 %v4849, %v4937
      %4939 = vmatmul.bf16.gmra.mxu0 %v3519
      %v4940 = vpop.f32.mrf.mxu0
      %v4941 = vadd.f32 %v4852, %v4940
      %v4942 = vpop.f32.mrf.mxu0
      %v4943 = vadd.f32 %v4854, %v4942
      %4944 = vmatmul.bf16.gmra.mxu0 %v3528
      %v4945 = vpop.f32.mrf.mxu0
      %v4946 = vadd.f32 %v4857, %v4945
      %v4947 = vpop.f32.mrf.mxu0
      %v4948 = vadd.f32 %v4859, %v4947
      %4949 = vmatmul.bf16.gmra.mxu0 %v3537
      %v4950 = vpop.f32.mrf.mxu0
      %v4951 = vadd.f32 %v4862, %v4950
      %v4952 = vpop.f32.mrf.mxu0
      %v4953 = vadd.f32 %v4864, %v4952
      %4954 = vmatmul.bf16.gmra.mxu0 %v3546
      %v4955 = vpop.f32.mrf.mxu0
      %v4956 = vadd.f32 %v4867, %v4955
      %v4957 = vpop.f32.mrf.mxu0
      %v4958 = vadd.f32 %v4869, %v4957
      %4959 = vmatmul.bf16.gmra.mxu0 %v3555
      %v4960 = vpop.f32.mrf.mxu0
      %v4961 = vadd.f32 %v4872, %v4960
      %v4962 = vpop.f32.mrf.mxu0
      %v4963 = vadd.f32 %v4874, %v4962
      %4964 = vmatmul.bf16.gmra.mxu0 %v3564
      %v4965 = vpop.f32.mrf.mxu0
      %v4966 = vadd.f32 %v4877, %v4965
      %v4967 = vpop.f32.mrf.mxu0
      %v4968 = vadd.f32 %v4879, %v4967
      %4969 = vmatmul.bf16.gmra.mxu0 %v3573
      %v4970 = vpop.f32.mrf.mxu0
      %v4971 = vadd.f32 %v4882, %v4970
      %v4972 = vpop.f32.mrf.mxu0
      %v4973 = vadd.f32 %v4884, %v4972
      %4974 = vmatmul.bf16.gmra.mxu0 %v3582
      %v4975 = vpop.f32.mrf.mxu0
      %v4976 = vadd.f32 %v4887, %v4975
      %v4977 = vpop.f32.mrf.mxu0
      %v4978 = vadd.f32 %v4889, %v4977
      %4979 = vmatmul.bf16.gmra.mxu0 %v3591
      %v4980 = vpop.f32.mrf.mxu0
      %v4981 = vadd.f32 %v4892, %v4980
      %v4982 = vpop.f32.mrf.mxu0
      %v4983 = vadd.f32 %v4894, %v4982
      %4984 = vmatmul.bf16.gmra.mxu0 %v3600
      %v4985 = vpop.f32.mrf.mxu0
      %v4986 = vadd.f32 %v4897, %v4985
      %v4987 = vpop.f32.mrf.mxu0
      %v4988 = vadd.f32 %v4899, %v4987
      %4989 = vmatmul.bf16.gmra.mxu0 %v3609
      %v4990 = vpop.f32.mrf.mxu0
      %v4991 = vadd.f32 %v4902, %v4990
      %v4992 = vpop.f32.mrf.mxu0
      %v4993 = vadd.f32 %v4904, %v4992
      %4994 = vmatmul.bf16.gmra.mxu0 %v3618
      %v4995 = vpop.f32.mrf.mxu0
      %v4996 = vadd.f32 %v4907, %v4995
      %v4997 = vpop.f32.mrf.mxu0
      %v4998 = vadd.f32 %v4909, %v4997
      %4999 = vmatmul.bf16.gmra.mxu0 %v3627
      %v5000 = vpop.f32.mrf.mxu0
      %v5001 = vadd.f32 %v4912, %v5000
      %v5002 = vpop.f32.mrf.mxu0
      %v5003 = vadd.f32 %v4914, %v5002
      %5004 = vdwg.mxu0
      %v5005 = vmax.f32 %v4926, 0.0
      %v5006 = vmax.f32 %v4928, 0.0
      %v5007 = vmax.f32 %v4931, 0.0
      %v5008 = vmax.f32 %v4933, 0.0
      %v5009 = vmax.f32 %v4936, 0.0
      %v5010 = vmax.f32 %v4938, 0.0
      %v5011 = vmax.f32 %v4941, 0.0
      %v5012 = vmax.f32 %v4943, 0.0
      %v5013 = vmax.f32 %v4946, 0.0
      %v5014 = vmax.f32 %v4948, 0.0
      %v5015 = vmax.f32 %v4951, 0.0
      %v5016 = vmax.f32 %v4953, 0.0
      %v5017 = vmax.f32 %v4956, 0.0
      %v5018 = vmax.f32 %v4958, 0.0
      %v5019 = vmax.f32 %v4961, 0.0
      %v5020 = vmax.f32 %v4963, 0.0
      %v5021 = vmax.f32 %v4966, 0.0
      %v5022 = vmax.f32 %v4968, 0.0
      %v5023 = vmax.f32 %v4971, 0.0
      %v5024 = vmax.f32 %v4973, 0.0
      %v5025 = vmax.f32 %v4976, 0.0
      %v5026 = vmax.f32 %v4978, 0.0
      %v5027 = vmax.f32 %v4981, 0.0
      %v5028 = vmax.f32 %v4983, 0.0
      %v5029 = vmax.f32 %v4986, 0.0
      %v5030 = vmax.f32 %v4988, 0.0
      %v5031 = vmax.f32 %v4991, 0.0
      %v5032 = vmax.f32 %v4993, 0.0
      %v5033 = vmax.f32 %v4996, 0.0
      %v5034 = vmax.f32 %v4998, 0.0
      %v5035 = vmax.f32 %v5001, 0.0
      %v5036 = vmax.f32 %v5003, 0.0
      %v5037 = vpack.c.bf16 %v2696, %v2696
      %v5038 = vpack.c.bf16 %v2697, %v2697
      %v5039 = vpack.c.bf16 %v2698, %v2698
      %v5040 = vpack.c.bf16 %v2699, %v2699
      %v5041 = vpack.c.bf16 %v2700, %v2700
      %v5042 = vpack.c.bf16 %v2701, %v2701
      %v5043 = vpack.c.bf16 %v2702, %v2702
      %v5044 = vpack.c.bf16 %v2703, %v2703
      %v5045 = vpack.c.bf16 %v2704, %v2704
      %v5046 = vpack.c.bf16 %v2705, %v2705
      %v5047 = vpack.c.bf16 %v2706, %v2706
      %v5048 = vpack.c.bf16 %v2707, %v2707
      %v5049 = vpack.c.bf16 %v2708, %v2708
      %v5050 = vpack.c.bf16 %v2709, %v2709
      %v5051 = vpack.c.bf16 %v2710, %v2710
      %v5052 = vpack.c.bf16 %v2711, %v2711
      %v5053 = vpack.c.bf16 %v2712, %v2712
      %v5054 = vpack.c.bf16 %v2713, %v2713
      %v5055 = vpack.c.bf16 %v2714, %v2714
      %v5056 = vpack.c.bf16 %v2715, %v2715
      %v5057 = vpack.c.bf16 %v2716, %v2716
      %v5058 = vpack.c.bf16 %v2717, %v2717
      %v5059 = vpack.c.bf16 %v2718, %v2718
      %v5060 = vpack.c.bf16 %v2719, %v2719
      %v5061 = vpack.c.bf16 %v2720, %v2720
      %v5062 = vpack.c.bf16 %v2721, %v2721
      %v5063 = vpack.c.bf16 %v2722, %v2722
      %v5064 = vpack.c.bf16 %v2723, %v2723
      %v5065 = vpack.c.bf16 %v2724, %v2724
      %v5066 = vpack.c.bf16 %v2725, %v2725
      %v5067 = vpack.c.bf16 %v2726, %v2726
      %v5068 = vpack.c.bf16 %v2727, %v2727
      %5069 = vst [vmem:[%s404] sm:$0xf] %v5037
      %5070 = vst [vmem:[%s404 + $0x4] sm:$0xf] %v5038
      %5071 = vst [vmem:[%s404 + $0x8] sm:$0xf] %v5039
      %5072 = vst [vmem:[%s404 + $0xc] sm:$0xf] %v5040
      %5073 = vst [vmem:[%s404 + $0x10] sm:$0xf] %v5041
      %5074 = vst [vmem:[%s404 + $0x14] sm:$0xf] %v5042
      %5075 = vst [vmem:[%s404 + $0x18] sm:$0xf] %v5043
      %5076 = vst [vmem:[%s404 + $0x1c] sm:$0xf] %v5044
      %5077 = vst [vmem:[%s404 + $0x20] sm:$0xf] %v5045
      %5078 = vst [vmem:[%s404 + $0x24] sm:$0xf] %v5046
      %5079 = vst [vmem:[%s404 + $0x28] sm:$0xf] %v5047
      %5080 = vst [vmem:[%s404 + $0x2c] sm:$0xf] %v5048
      %5081 = vst [vmem:[%s404 + $0x30] sm:$0xf] %v5049
      %5082 = vst [vmem:[%s404 + $0x34] sm:$0xf] %v5050
      %5083 = vst [vmem:[%s404 + $0x38] sm:$0xf] %v5051
      %5084 = vst [vmem:[%s404 + $0x3c] sm:$0xf] %v5052
      %5085 = vst [vmem:[%s404 + $0x40] sm:$0xf] %v5053
      %5086 = vst [vmem:[%s404 + $0x44] sm:$0xf] %v5054
      %5087 = vst [vmem:[%s404 + $0x48] sm:$0xf] %v5055
      %5088 = vst [vmem:[%s404 + $0x4c] sm:$0xf] %v5056
      %5089 = vst [vmem:[%s404 + $0x50] sm:$0xf] %v5057
      %5090 = vst [vmem:[%s404 + $0x54] sm:$0xf] %v5058
      %5091 = vst [vmem:[%s404 + $0x58] sm:$0xf] %v5059
      %5092 = vst [vmem:[%s404 + $0x5c] sm:$0xf] %v5060
      %5093 = vst [vmem:[%s404 + $0x60] sm:$0xf] %v5061
      %5094 = vst [vmem:[%s404 + $0x64] sm:$0xf] %v5062
      %5095 = vst [vmem:[%s404 + $0x68] sm:$0xf] %v5063
      %5096 = vst [vmem:[%s404 + $0x6c] sm:$0xf] %v5064
      %5097 = vst [vmem:[%s404 + $0x70] sm:$0xf] %v5065
      %5098 = vst [vmem:[%s404 + $0x74] sm:$0xf] %v5066
      %5099 = vst [vmem:[%s404 + $0x78] sm:$0xf] %v5067
      %5100 = vst [vmem:[%s404 + $0x7c] sm:$0xf] %v5068
      %v5101 = vpack.c.bf16 %v5005, %v5005
      %v5102 = vpack.c.bf16 %v5006, %v5006
      %v5103 = vpack.c.bf16 %v5007, %v5007
      %v5104 = vpack.c.bf16 %v5008, %v5008
      %v5105 = vpack.c.bf16 %v5009, %v5009
      %v5106 = vpack.c.bf16 %v5010, %v5010
      %v5107 = vpack.c.bf16 %v5011, %v5011
      %v5108 = vpack.c.bf16 %v5012, %v5012
      %v5109 = vpack.c.bf16 %v5013, %v5013
      %v5110 = vpack.c.bf16 %v5014, %v5014
      %v5111 = vpack.c.bf16 %v5015, %v5015
      %v5112 = vpack.c.bf16 %v5016, %v5016
      %v5113 = vpack.c.bf16 %v5017, %v5017
      %v5114 = vpack.c.bf16 %v5018, %v5018
      %v5115 = vpack.c.bf16 %v5019, %v5019
      %v5116 = vpack.c.bf16 %v5020, %v5020
      %v5117 = vpack.c.bf16 %v5021, %v5021
      %v5118 = vpack.c.bf16 %v5022, %v5022
      %v5119 = vpack.c.bf16 %v5023, %v5023
      %v5120 = vpack.c.bf16 %v5024, %v5024
      %v5121 = vpack.c.bf16 %v5025, %v5025
      %v5122 = vpack.c.bf16 %v5026, %v5026
      %v5123 = vpack.c.bf16 %v5027, %v5027
      %v5124 = vpack.c.bf16 %v5028, %v5028
      %v5125 = vpack.c.bf16 %v5029, %v5029
      %v5126 = vpack.c.bf16 %v5030, %v5030
      %v5127 = vpack.c.bf16 %v5031, %v5031
      %v5128 = vpack.c.bf16 %v5032, %v5032
      %v5129 = vpack.c.bf16 %v5033, %v5033
      %v5130 = vpack.c.bf16 %v5034, %v5034
      %v5131 = vpack.c.bf16 %v5035, %v5035
      %v5132 = vpack.c.bf16 %v5036, %v5036
      %5133 = vst [vmem:[%s414] sm:$0xf] %v5101
      %5134 = vst [vmem:[%s414 + $0x4] sm:$0xf] %v5102
      %5135 = vst [vmem:[%s414 + $0x8] sm:$0xf] %v5103
      %5136 = vst [vmem:[%s414 + $0xc] sm:$0xf] %v5104
      %5137 = vst [vmem:[%s414 + $0x10] sm:$0xf] %v5105
      %5138 = vst [vmem:[%s414 + $0x14] sm:$0xf] %v5106
      %5139 = vst [vmem:[%s414 + $0x18] sm:$0xf] %v5107
      %5140 = vst [vmem:[%s414 + $0x1c] sm:$0xf] %v5108
      %5141 = vst [vmem:[%s414 + $0x20] sm:$0xf] %v5109
      %5142 = vst [vmem:[%s414 + $0x24] sm:$0xf] %v5110
      %5143 = vst [vmem:[%s414 + $0x28] sm:$0xf] %v5111
      %5144 = vst [vmem:[%s414 + $0x2c] sm:$0xf] %v5112
      %5145 = vst [vmem:[%s414 + $0x30] sm:$0xf] %v5113
      %5146 = vst [vmem:[%s414 + $0x34] sm:$0xf] %v5114
      %5147 = vst [vmem:[%s414 + $0x38] sm:$0xf] %v5115
      %5148 = vst [vmem:[%s414 + $0x3c] sm:$0xf] %v5116
      %5149 = vst [vmem:[%s414 + $0x40] sm:$0xf] %v5117
      %5150 = vst [vmem:[%s414 + $0x44] sm:$0xf] %v5118
      %5151 = vst [vmem:[%s414 + $0x48] sm:$0xf] %v5119
      %5152 = vst [vmem:[%s414 + $0x4c] sm:$0xf] %v5120
      %5153 = vst [vmem:[%s414 + $0x50] sm:$0xf] %v5121
      %5154 = vst [vmem:[%s414 + $0x54] sm:$0xf] %v5122
      %5155 = vst [vmem:[%s414 + $0x58] sm:$0xf] %v5123
      %5156 = vst [vmem:[%s414 + $0x5c] sm:$0xf] %v5124
      %5157 = vst [vmem:[%s414 + $0x60] sm:$0xf] %v5125
      %5158 = vst [vmem:[%s414 + $0x64] sm:$0xf] %v5126
      %5159 = vst [vmem:[%s414 + $0x68] sm:$0xf] %v5127
      %5160 = vst [vmem:[%s414 + $0x6c] sm:$0xf] %v5128
      %5161 = vst [vmem:[%s414 + $0x70] sm:$0xf] %v5129
      %5162 = vst [vmem:[%s414 + $0x74] sm:$0xf] %v5130
      %5163 = vst [vmem:[%s414 + $0x78] sm:$0xf] %v5131
      %5164 = vst [vmem:[%s414 + $0x7c] sm:$0xf] %v5132
      %p5165 = scmp.eq.s32.totalorder %s25, 0
      // Predicated region
      $region45: #{_lambda_.5} parent=43 // pred_check
        %p5166 = pneg %p5165
      $region46: #{_lambda_.5} parent=43 // pred_check_branch
        %5168 = sbr.rel (%p5166) target = $region48
      $region47: #{_lambda_.5} parent=43 // pred_region
        %5169 = vst [vmem:[%s418] sm:$0x1] 0.0
      $region48: #{_lambda_.5} parent=43 // pred_fallthru
        _
      %s5170 = smul.u32 %s25, 256
      %v5171 = vlaneseq
      %v5172 = vshrl.u32 %v5171, 7
      %v5173 = vadd.s32 %v5172, 8
      %v5174 = vadd.s32 %v5172, 16
      %v5175 = vadd.s32 %v5172, 24
      %v5176 = vadd.s32 %v5172, 32
      %v5177 = vadd.s32 %v5172, 40
      %v5178 = vadd.s32 %v5172, 48
      %v5179 = vadd.s32 %v5172, 56
      %v5180 = vadd.s32 %v5172, 64
      %v5181 = vadd.s32 %v5172, 72
      %v5182 = vadd.s32 %v5172, 80
      %v5183 = vadd.s32 %v5172, 88
      %v5184 = vadd.s32 %v5172, 96
      %v5185 = vadd.s32 %v5172, 104
      %v5186 = vadd.s32 %v5172, 112
      %v5187 = vadd.s32 %v5172, 120
      %v5188 = vadd.s32 %v5172, 128
      %v5189 = vadd.s32 %v5172, 136
      %v5190 = vadd.s32 %v5172, 144
      %v5191 = vadd.s32 %v5172, 152
      %v5192 = vadd.s32 %v5172, 160
      %v5193 = vadd.s32 %v5172, 168
      %v5194 = vadd.s32 %v5172, 176
      %v5195 = vadd.s32 %v5172, 184
      %v5196 = vadd.s32 %v5172, 192
      %v5197 = vadd.s32 %v5172, 200
      %v5198 = vadd.s32 %v5172, 208
      %v5199 = vadd.s32 %v5172, 216
      %v5200 = vadd.s32 %v5172, 224
      %v5201 = vadd.s32 %v5172, 232
      %v5202 = vadd.s32 %v5172, 240
      %v5203 = vadd.s32 %v5172, 248
      %v5204 = vstv %s5170
      %v5205 = vadd.s32 %v5204, %v5172
      %v5206 = vadd.s32 %v5204, %v5173
      %v5207 = vadd.s32 %v5204, %v5174
      %v5208 = vadd.s32 %v5204, %v5175
      %v5209 = vadd.s32 %v5204, %v5176
      %v5210 = vadd.s32 %v5204, %v5177
      %v5211 = vadd.s32 %v5204, %v5178
      %v5212 = vadd.s32 %v5204, %v5179
      %v5213 = vadd.s32 %v5204, %v5180
      %v5214 = vadd.s32 %v5204, %v5181
      %v5215 = vadd.s32 %v5204, %v5182
      %v5216 = vadd.s32 %v5204, %v5183
      %v5217 = vadd.s32 %v5204, %v5184
      %v5218 = vadd.s32 %v5204, %v5185
      %v5219 = vadd.s32 %v5204, %v5186
      %v5220 = vadd.s32 %v5204, %v5187
      %v5221 = vadd.s32 %v5204, %v5188
      %v5222 = vadd.s32 %v5204, %v5189
      %v5223 = vadd.s32 %v5204, %v5190
      %v5224 = vadd.s32 %v5204, %v5191
      %v5225 = vadd.s32 %v5204, %v5192
      %v5226 = vadd.s32 %v5204, %v5193
      %v5227 = vadd.s32 %v5204, %v5194
      %v5228 = vadd.s32 %v5204, %v5195
      %v5229 = vadd.s32 %v5204, %v5196
      %v5230 = vadd.s32 %v5204, %v5197
      %v5231 = vadd.s32 %v5204, %v5198
      %v5232 = vadd.s32 %v5204, %v5199
      %v5233 = vadd.s32 %v5204, %v5200
      %v5234 = vadd.s32 %v5204, %v5201
      %v5235 = vadd.s32 %v5204, %v5202
      %v5236 = vadd.s32 %v5204, %v5203
      %vm5237 = vcmp.lt.s32.totalorder %v5205, 256
      %vm5238 = vcmp.lt.s32.totalorder %v5206, 256
      %vm5239 = vcmp.lt.s32.totalorder %v5207, 256
      %vm5240 = vcmp.lt.s32.totalorder %v5208, 256
      %vm5241 = vcmp.lt.s32.totalorder %v5209, 256
      %vm5242 = vcmp.lt.s32.totalorder %v5210, 256
      %vm5243 = vcmp.lt.s32.totalorder %v5211, 256
      %vm5244 = vcmp.lt.s32.totalorder %v5212, 256
      %vm5245 = vcmp.lt.s32.totalorder %v5213, 256
      %vm5246 = vcmp.lt.s32.totalorder %v5214, 256
      %vm5247 = vcmp.lt.s32.totalorder %v5215, 256
      %vm5248 = vcmp.lt.s32.totalorder %v5216, 256
      %vm5249 = vcmp.lt.s32.totalorder %v5217, 256
      %vm5250 = vcmp.lt.s32.totalorder %v5218, 256
      %vm5251 = vcmp.lt.s32.totalorder %v5219, 256
      %vm5252 = vcmp.lt.s32.totalorder %v5220, 256
      %vm5253 = vcmp.lt.s32.totalorder %v5221, 256
      %vm5254 = vcmp.lt.s32.totalorder %v5222, 256
      %vm5255 = vcmp.lt.s32.totalorder %v5223, 256
      %vm5256 = vcmp.lt.s32.totalorder %v5224, 256
      %vm5257 = vcmp.lt.s32.totalorder %v5225, 256
      %vm5258 = vcmp.lt.s32.totalorder %v5226, 256
      %vm5259 = vcmp.lt.s32.totalorder %v5227, 256
      %vm5260 = vcmp.lt.s32.totalorder %v5228, 256
      %vm5261 = vcmp.lt.s32.totalorder %v5229, 256
      %vm5262 = vcmp.lt.s32.totalorder %v5230, 256
      %vm5263 = vcmp.lt.s32.totalorder %v5231, 256
      %vm5264 = vcmp.lt.s32.totalorder %v5232, 256
      %vm5265 = vcmp.lt.s32.totalorder %v5233, 256
      %vm5266 = vcmp.lt.s32.totalorder %v5234, 256
      %vm5267 = vcmp.lt.s32.totalorder %v5235, 256
      %vm5268 = vcmp.lt.s32.totalorder %v5236, 256
      %v5269 = vadd.f32 %v2696, %v5005
      %v5270 = vadd.f32 %v2697, %v5006
      %v5271 = vadd.f32 %v2698, %v5007
      %v5272 = vadd.f32 %v2699, %v5008
      %v5273 = vadd.f32 %v2700, %v5009
      %v5274 = vadd.f32 %v2701, %v5010
      %v5275 = vadd.f32 %v2702, %v5011
      %v5276 = vadd.f32 %v2703, %v5012
      %v5277 = vadd.f32 %v2704, %v5013
      %v5278 = vadd.f32 %v2705, %v5014
      %v5279 = vadd.f32 %v2706, %v5015
      %v5280 = vadd.f32 %v2707, %v5016
      %v5281 = vadd.f32 %v2708, %v5017
      %v5282 = vadd.f32 %v2709, %v5018
      %v5283 = vadd.f32 %v2710, %v5019
      %v5284 = vadd.f32 %v2711, %v5020
      %v5285 = vadd.f32 %v2712, %v5021
      %v5286 = vadd.f32 %v2713, %v5022
      %v5287 = vadd.f32 %v2714, %v5023
      %v5288 = vadd.f32 %v2715, %v5024
      %v5289 = vadd.f32 %v2716, %v5025
      %v5290 = vadd.f32 %v2717, %v5026
      %v5291 = vadd.f32 %v2718, %v5027
      %v5292 = vadd.f32 %v2719, %v5028
      %v5293 = vadd.f32 %v2720, %v5029
      %v5294 = vadd.f32 %v2721, %v5030
      %v5295 = vadd.f32 %v2722, %v5031
      %v5296 = vadd.f32 %v2723, %v5032
      %v5297 = vadd.f32 %v2724, %v5033
      %v5298 = vadd.f32 %v2725, %v5034
      %v5299 = vadd.f32 %v2726, %v5035
      %v5300 = vadd.f32 %v2727, %v5036
      %v5301 = vsel %vm5237, 1, 0
      %v5302 = vsel %vm5238, 1, 0
      %v5303 = vsel %vm5239, 1, 0
      %v5304 = vsel %vm5240, 1, 0
      %v5305 = vsel %vm5241, 1, 0
      %v5306 = vsel %vm5242, 1, 0
      %v5307 = vsel %vm5243, 1, 0
      %v5308 = vsel %vm5244, 1, 0
      %v5309 = vsel %vm5245, 1, 0
      %v5310 = vsel %vm5246, 1, 0
      %v5311 = vsel %vm5247, 1, 0
      %v5312 = vsel %vm5248, 1, 0
      %v5313 = vsel %vm5249, 1, 0
      %v5314 = vsel %vm5250, 1, 0
      %v5315 = vsel %vm5251, 1, 0
      %v5316 = vsel %vm5252, 1, 0
      %v5317 = vsel %vm5253, 1, 0
      %v5318 = vsel %vm5254, 1, 0
      %v5319 = vsel %vm5255, 1, 0
      %v5320 = vsel %vm5256, 1, 0
      %v5321 = vsel %vm5257, 1, 0
      %v5322 = vsel %vm5258, 1, 0
      %v5323 = vsel %vm5259, 1, 0
      %v5324 = vsel %vm5260, 1, 0
      %v5325 = vsel %vm5261, 1, 0
      %v5326 = vsel %vm5262, 1, 0
      %v5327 = vsel %vm5263, 1, 0
      %v5328 = vsel %vm5264, 1, 0
      %v5329 = vsel %vm5265, 1, 0
      %v5330 = vsel %vm5266, 1, 0
      %v5331 = vsel %vm5267, 1, 0
      %v5332 = vsel %vm5268, 1, 0
      %vm5333 = vcmp.eq.s32.totalorder %v5301, 1
      %vm5334 = vcmp.eq.s32.totalorder %v5302, 1
      %vm5335 = vcmp.eq.s32.totalorder %v5303, 1
      %vm5336 = vcmp.eq.s32.totalorder %v5304, 1
      %vm5337 = vcmp.eq.s32.totalorder %v5305, 1
      %vm5338 = vcmp.eq.s32.totalorder %v5306, 1
      %vm5339 = vcmp.eq.s32.totalorder %v5307, 1
      %vm5340 = vcmp.eq.s32.totalorder %v5308, 1
      %vm5341 = vcmp.eq.s32.totalorder %v5309, 1
      %vm5342 = vcmp.eq.s32.totalorder %v5310, 1
      %vm5343 = vcmp.eq.s32.totalorder %v5311, 1
      %vm5344 = vcmp.eq.s32.totalorder %v5312, 1
      %vm5345 = vcmp.eq.s32.totalorder %v5313, 1
      %vm5346 = vcmp.eq.s32.totalorder %v5314, 1
      %vm5347 = vcmp.eq.s32.totalorder %v5315, 1
      %vm5348 = vcmp.eq.s32.totalorder %v5316, 1
      %vm5349 = vcmp.eq.s32.totalorder %v5317, 1
      %vm5350 = vcmp.eq.s32.totalorder %v5318, 1
      %vm5351 = vcmp.eq.s32.totalorder %v5319, 1
      %vm5352 = vcmp.eq.s32.totalorder %v5320, 1
      %vm5353 = vcmp.eq.s32.totalorder %v5321, 1
      %vm5354 = vcmp.eq.s32.totalorder %v5322, 1
      %vm5355 = vcmp.eq.s32.totalorder %v5323, 1
      %vm5356 = vcmp.eq.s32.totalorder %v5324, 1
      %vm5357 = vcmp.eq.s32.totalorder %v5325, 1
      %vm5358 = vcmp.eq.s32.totalorder %v5326, 1
      %vm5359 = vcmp.eq.s32.totalorder %v5327, 1
      %vm5360 = vcmp.eq.s32.totalorder %v5328, 1
      %vm5361 = vcmp.eq.s32.totalorder %v5329, 1
      %vm5362 = vcmp.eq.s32.totalorder %v5330, 1
      %vm5363 = vcmp.eq.s32.totalorder %v5331, 1
      %vm5364 = vcmp.eq.s32.totalorder %v5332, 1
      %v5365 = vsel %vm5333, %v5269, 0.0
      %v5366 = vsel %vm5334, %v5270, 0.0
      %v5367 = vsel %vm5335, %v5271, 0.0
      %v5368 = vsel %vm5336, %v5272, 0.0
      %v5369 = vsel %vm5337, %v5273, 0.0
      %v5370 = vsel %vm5338, %v5274, 0.0
      %v5371 = vsel %vm5339, %v5275, 0.0
      %v5372 = vsel %vm5340, %v5276, 0.0
      %v5373 = vsel %vm5341, %v5277, 0.0
      %v5374 = vsel %vm5342, %v5278, 0.0
      %v5375 = vsel %vm5343, %v5279, 0.0
      %v5376 = vsel %vm5344, %v5280, 0.0
      %v5377 = vsel %vm5345, %v5281, 0.0
      %v5378 = vsel %vm5346, %v5282, 0.0
      %v5379 = vsel %vm5347, %v5283, 0.0
      %v5380 = vsel %vm5348, %v5284, 0.0
      %v5381 = vsel %vm5349, %v5285, 0.0
      %v5382 = vsel %vm5350, %v5286, 0.0
      %v5383 = vsel %vm5351, %v5287, 0.0
      %v5384 = vsel %vm5352, %v5288, 0.0
      %v5385 = vsel %vm5353, %v5289, 0.0
      %v5386 = vsel %vm5354, %v5290, 0.0
      %v5387 = vsel %vm5355, %v5291, 0.0
      %v5388 = vsel %vm5356, %v5292, 0.0
      %v5389 = vsel %vm5357, %v5293, 0.0
      %v5390 = vsel %vm5358, %v5294, 0.0
      %v5391 = vsel %vm5359, %v5295, 0.0
      %v5392 = vsel %vm5360, %v5296, 0.0
      %v5393 = vsel %vm5361, %v5297, 0.0
      %v5394 = vsel %vm5362, %v5298, 0.0
      %v5395 = vsel %vm5363, %v5299, 0.0
      %v5396 = vsel %vm5364, %v5300, 0.0
      %v5397 = vld [vmem:[%s418] sm:$0x1]
      %v5398 = vadd.f32 %v5365, %v5366
      %v5399 = vadd.f32 %v5398, %v5367
      %v5400 = vadd.f32 %v5399, %v5368
      %v5401 = vadd.f32 %v5400, %v5369
      %v5402 = vadd.f32 %v5401, %v5370
      %v5403 = vadd.f32 %v5402, %v5371
      %v5404 = vadd.f32 %v5403, %v5372
      %v5405 = vadd.f32 %v5404, %v5373
      %v5406 = vadd.f32 %v5405, %v5374
      %v5407 = vadd.f32 %v5406, %v5375
      %v5408 = vadd.f32 %v5407, %v5376
      %v5409 = vadd.f32 %v5408, %v5377
      %v5410 = vadd.f32 %v5409, %v5378
      %v5411 = vadd.f32 %v5410, %v5379
      %v5412 = vadd.f32 %v5411, %v5380
      %v5413 = vadd.f32 %v5412, %v5381
      %v5414 = vadd.f32 %v5413, %v5382
      %v5415 = vadd.f32 %v5414, %v5383
      %v5416 = vadd.f32 %v5415, %v5384
      %v5417 = vadd.f32 %v5416, %v5385
      %v5418 = vadd.f32 %v5417, %v5386
      %v5419 = vadd.f32 %v5418, %v5387
      %v5420 = vadd.f32 %v5419, %v5388
      %v5421 = vadd.f32 %v5420, %v5389
      %v5422 = vadd.f32 %v5421, %v5390
      %v5423 = vadd.f32 %v5422, %v5391
      %v5424 = vadd.f32 %v5423, %v5392
      %v5425 = vadd.f32 %v5424, %v5393
      %v5426 = vadd.f32 %v5425, %v5394
      %v5427 = vadd.f32 %v5426, %v5395
      %v5428 = vadd.f32 %v5427, %v5396
      %v5429 = vrot.slane %v5428, 4
      %v5430 = vadd.f32 %v5428, %v5429
      %v5431 = vrot.slane %v5430, 2
      %v5432 = vadd.f32 %v5430, %v5431
      %v5433 = vrot.slane %v5432, 1
      %v5434 = vadd.f32 %v5432, %v5433
      %v5435 = vadd.f32 %v5397, %v5434
      %5436 = vst [vmem:[%s418] sm:$0x1] %v5435
      // Predicated region
      $region49: #{_lambda_.5} parent=43 // pred_check
        %p5437 = pneg %p5165
      $region50: #{_lambda_.5} parent=43 // pred_check_branch
        %5439 = sbr.rel (%p5437) target = $region52
      $region51: #{_lambda_.5} parent=43 // pred_region
        %v5440 = vld [vmem:[%s418] sm:$0x1]
        %v5441 = vmul.f32 %v5440, 0.00390625
        %5442 = vst [vmem:[%s418] sm:$0x1] %v5441
      $region52: #{_lambda_.5} parent=43 // pred_fallthru
        _
      %s5443 = smul.u32 32, %s25
      %p5444 = scmp.lt.s32.totalorder %s24, 1
      %s5445 = scalar_select %p5444, %s24, 1
      %p5446 = scmp.lt.s32.totalorder %s5443, 31
      %s5447 = scalar_select %p5446, %s5443, 31
      %s5448 = smul.addr %s5445, 32
      %s5449 = sadd.s32 %s5447, %s5448
      %s5450 = smul.addr %s5449, 4
      %s5451 = scalar_lea.vmem %s6, %s5450
      %s5452 = smul.u32 32, %s25
      %p5453 = scmp.lt.s32.totalorder %s24, 1
      %s5454 = scalar_select %p5453, %s24, 1
      %p5455 = scmp.lt.s32.totalorder %s5452, 31
      %s5456 = scalar_select %p5455, %s5452, 31
      %s5457 = smul.addr %s5454, 32
      %s5458 = sadd.s32 %s5456, %s5457
      %s5459 = smul.addr %s5458, 4
      %s5460 = scalar_lea.vmem %s7, %s5459
      %p5461 = scmp.lt.s32.totalorder %s24, 1
      %s5462 = scalar_select %p5461, %s24, 1
      %s5463 = scalar_lea.vmem %s8, %s5462
      // Predicated region
      $region53: #{_lambda_.5} parent=43 // pred_check
        %p5464 = pneg %p192
      $region54: #{_lambda_.5} parent=43 // pred_check_branch
        %5466 = sbr.rel (%p5464) target = $region56
      $region55: #{_lambda_.5} parent=43 // pred_region
        %s5467 = smul.u32 32, %s25
      $region56: #{_lambda_.5} parent=43 // pred_fallthru
        _
      // Predicated region
      $region57: #{_lambda_.5} parent=43 // pred_check
        %p5468 = pneg %p220
      $region58: #{_lambda_.5} parent=43 // pred_check_branch
        %5470 = sbr.rel (%p5468) target = $region60
      $region59: #{_lambda_.5} parent=43 // pred_region
        %s5471 = smul.u32 32, %s25
      $region60: #{_lambda_.5} parent=43 // pred_fallthru
        _
      // Predicated region
      $region61: #{_lambda_.5} parent=43 // pred_check
        %p5472 = pneg %p246
      $region62: #{_lambda_.5} parent=43 // pred_check_branch
        %5474 = sbr.rel (%p5472) target = $region64
      $region63: #{_lambda_.5} parent=43 // pred_region
        _
      $region64: #{_lambda_.5} parent=43 // pred_fallthru
        _
    $region44: #{_lambda_.5} parent=5 // pred_fallthru
      _
    %p5475 = scmp.le.s32.totalorder 2, %s15
    // Predicated region
    $region65: #{_lambda_.5} parent=5 // pred_check
      %p5476 = pneg %p5475
    $region66: #{_lambda_.5} parent=5 // pred_check_branch
      %5478 = sbr.rel (%p5476) target = $region68
    $region67: #{_lambda_.5} parent=5 // pred_region
      %s5479 = ssub.s32 %s15, 2
      // Predicated region
      $region69: #{_lambda_.5} parent=67 // pred_check
        %p5480 = pneg %p198
      $region70: #{_lambda_.5} parent=67 // pred_check_branch
        %5482 = sbr.rel (%p5480) target = $region72
      $region71: #{_lambda_.5} parent=67 // pred_region
        %s5483 = smul.u32 32, %s27
        %p5484 = scmp.lt.s32.totalorder %s26, 1
        %s5485 = scalar_select %p5484, %s26, 1
        %p5486 = scmp.lt.s32.totalorder %s5483, 31
        %s5487 = scalar_select %p5486, %s5483, 31
        %s5488 = smul.addr %s5485, 32
        %s5489 = sadd.s32 %s5487, %s5488
        %s5490 = smul.addr %s5489, 4
        %s5491 = scalar_lea.vmem %s6, %s5490
      $region72: #{_lambda_.5} parent=67 // pred_fallthru
        _
      // Predicated region
      $region73: #{_lambda_.5} parent=67 // pred_check
        %p5492 = pneg %p226
      $region74: #{_lambda_.5} parent=67 // pred_check_branch
        %5494 = sbr.rel (%p5492) target = $region76
      $region75: #{_lambda_.5} parent=67 // pred_region
        %s5495 = smul.u32 32, %s27
        %p5496 = scmp.lt.s32.totalorder %s26, 1
        %s5497 = scalar_select %p5496, %s26, 1
        %p5498 = scmp.lt.s32.totalorder %s5495, 31
        %s5499 = scalar_select %p5498, %s5495, 31
        %s5500 = smul.addr %s5497, 32
        %s5501 = sadd.s32 %s5499, %s5500
        %s5502 = smul.addr %s5501, 4
        %s5503 = scalar_lea.vmem %s7, %s5502
      $region76: #{_lambda_.5} parent=67 // pred_fallthru
        _
      // Predicated region
      $region77: #{_lambda_.5} parent=67 // pred_check
        %p5504 = pneg %p252
      $region78: #{_lambda_.5} parent=67 // pred_check_branch
        %5506 = sbr.rel (%p5504) target = $region80
      $region79: #{_lambda_.5} parent=67 // pred_region
        %p5507 = scmp.lt.s32.totalorder %s26, 1
        %s5508 = scalar_select %p5507, %s26, 1
        %s5509 = scalar_lea.vmem %s8, %s5508
      $region80: #{_lambda_.5} parent=67 // pred_fallthru
        _
    $region68: #{_lambda_.5} parent=5 // pred_fallthru
      _
  $region6: #{_lambda_.5} parent=0 // loop_footer
    %s19 = sadd.s32 1, %s15
  $region7: #{_lambda_.5} parent=0 // loop_footer_branch
    %14 = sbr.rel target = $region3
  $region8: #{_lambda_.5} parent=0 // loop_exit
    _

</llo_original>
